<compile_context>
chip_gen: v6e
topology: v6e:2x2x1
jax: 0.10.0
libtpu: 0.0.40
codegen_flags: <defaults>
</compile_context>

<pallas_src>
import jax
import jax.numpy as jnp
from jax.experimental import pallas as pl
from jax.experimental.pallas import tpu as pltpu

# ---- stand-ins for the training-repo globals ----
NODE_INT_VEC_LEN = 8
EDGE_INT_VEC_LEN = 8
DOUBLE_GN = True
PROP_DISLOCATION = False          # dislocation mode one-hots disabled
NODE_LEN = 8                      # norm.nodeLen (identity norm => normed == raw)
EDGE_LEN = 8                      # norm.edgeLen

_MLP_ORDER = ("edgeInt", "nodeInt", "edgeUpdate", "nodeUpdate")


# ---------------------------- fused Pallas kernel ----------------------------

def _double_gn_kernel(*refs):
    # refs = [nodes, edges, senders, receivers, partners, *80 weight/bias refs,
    #         nodes_out, edges_out]
    n_param = len(refs) - 7
    nodes_ref, edges_ref, s_ref, r_ref, p_ref = refs[:5]
    params = [ref[...] for ref in refs[5:5 + n_param]]        # weights load once
    nodes_out_ref, edges_out_ref = refs[5 + n_param:]

    nodes = nodes_ref[...]
    edges = edges_ref[...]
    N = nodes.shape[0]
    E = edges.shape[0]

    # One-hot gather / scatter matrices, built ONCE and reused by both GN blocks.
    node_cols = jax.lax.broadcasted_iota(jnp.int32, (E, N), 1)
    edge_cols = jax.lax.broadcasted_iota(jnp.int32, (E, E), 1)
    s_oh = (node_cols == s_ref[...]).astype(jnp.float32)      # (E, N) nodes[senders]
    r_oh = (node_cols == r_ref[...]).astype(jnp.float32)      # (E, N) nodes[receivers]
    p_oh = (edge_cols == p_ref[...]).astype(jnp.float32)      # (E, E) edges[partners]

    def mlp(h, ps):
        # getMLP: Linear->ReLU x4 -> Linear, all in VMEM (ps = [w1,b1,...,w5,b5]).
        for i in range(4):
            h = jnp.maximum(
                jnp.dot(h, ps[2 * i], preferred_element_type=jnp.float32)
                + ps[2 * i + 1], 0.0)
        return jnp.dot(h, ps[8], preferred_element_type=jnp.float32) + ps[9]

    def gn_block(nv, ev, ps):
        # ps = 40 arrays: edgeInt, nodeInt, edgeUpdate, nodeUpdate (10 each).
        edge_int_p, node_int_p = ps[0:10], ps[10:20]
        edge_upd_p, node_upd_p = ps[20:30], ps[30:40]

        nv_s = jnp.dot(s_oh, nv, preferred_element_type=jnp.float32)  # nodes[senders]
        nv_r = jnp.dot(r_oh, nv, preferred_element_type=jnp.float32)  # nodes[receivers]
        ev_p = jnp.dot(p_oh, ev, preferred_element_type=jnp.float32)  # edges[partners]

        # getIntPairs('n') / ('e'); norm treated as identity.
        node_pairs = jnp.concatenate([nv_s, nv_r, ev], axis=-1)
        # TODO(synk): GraphStack.getPairTorch not provided; edge pairing uses the
        # deterministic partners[] approximation (same as the reference wrapper).
        edge_pairs = jnp.concatenate([ev, ev_p, nv_s], axis=-1)

        node_int_vec = mlp(node_pairs, node_int_p)                    # (E, 8)
        edge_int_vec = mlp(edge_pairs, edge_int_p)                    # (E, 8)

        # convolveIntVec (index_put_ accumulate) onto receivers: r_oh^T @ vec.
        node_int_lat = jax.lax.dot_general(
            r_oh, node_int_vec,
            dimension_numbers=(((0,), (0,)), ((), ())),
            preferred_element_type=jnp.float32)                       # (N, 8)
        edge_int_lat = edge_int_vec        # edge_map == arange(E): identity scatter

        n_out = mlp(jnp.concatenate([nv, node_int_lat], axis=-1), node_upd_p)
        e_out = mlp(jnp.concatenate([ev, edge_int_lat], axis=-1), edge_upd_p)
        return n_out, e_out

    half = n_param // 2
    nodes_lat, edges_lat = gn_block(nodes, edges, params[:half])       # GN1
    nodes_cat = jnp.concatenate([nodes, nodes_lat], axis=-1)
    edges_cat = jnp.concatenate([edges, edges_lat], axis=-1)
    nodes_out, edges_out = gn_block(nodes_cat, edges_cat, params[half:])  # GN2

    nodes_out_ref[...] = nodes_out.astype(nodes_out_ref.dtype)
    edges_out_ref[...] = edges_out.astype(edges_out_ref.dtype)


# ---------------------------- parameter init ----------------------------

def init_mlp(key, in_len, out_len, last_len):
    # getMLP(in, out, width, override=last_len):
    #   Linear(in,8L) ReLU Linear(8L,4L) ReLU Linear(4L,2L) ReLU Linear(2L,L) ReLU Linear(L,out)
    # initWeights(): weight ~ N(0, 0.02), bias = 0.  Weights stored [in, out].
    dims = [in_len, last_len * 8, last_len * 4, last_len * 2, last_len, out_len]
    params = []
    for i in range(5):
        key, sub = jax.random.split(key)
        w = jax.random.normal(sub, (dims[i], dims[i + 1]), jnp.float32) * 0.02
        b = jnp.zeros((1, dims[i + 1]), jnp.float32)
        params.append((w, b))
    return params, key


def init_gn_block(key, scale, overrides):
    # Mirrors GNBlock.getModels shape arithmetic (identity norm).
    lat_scale = scale - 1
    node_len = NODE_LEN + NODE_LEN * lat_scale
    edge_len = EDGE_LEN + EDGE_LEN * lat_scale
    node_int_base = NODE_LEN * 2 + EDGE_LEN
    edge_int_base = EDGE_LEN * 2 + NODE_LEN
    node_int_len = node_int_base + node_int_base * lat_scale
    edge_int_len = edge_int_base + edge_int_base * lat_scale
    p = {}
    p["edgeInt"], key = init_mlp(key, edge_int_len, EDGE_INT_VEC_LEN, overrides[0])
    p["nodeInt"], key = init_mlp(key, node_int_len, NODE_INT_VEC_LEN, overrides[1])
    p["edgeUpdate"], key = init_mlp(key, edge_len + EDGE_INT_VEC_LEN, EDGE_LEN, overrides[2])
    p["nodeUpdate"], key = init_mlp(key, node_len + NODE_INT_VEC_LEN, NODE_LEN, overrides[3])
    return p, key


# ---------------------------- forward pass ----------------------------

def _mlp_flops(params, rows):
    return rows * sum(2 * w.shape[0] * w.shape[1] for w, _ in params)


def double_gn_forward(gn1, gn2, adj_mat, senders, receivers, partners, nodes, edges):
    N, E = nodes.shape[0], edges.shape[0]

    flat_params = []
    for blk in (gn1, gn2):
        for name in _MLP_ORDER:
            for w, b in blk[name]:
                flat_params += [w, b]

    s_col = senders.reshape(-1, 1).astype(jnp.int32)
    r_col = receivers.reshape(-1, 1).astype(jnp.int32)
    p_col = partners.reshape(-1, 1).astype(jnp.int32)
    inputs = [nodes, edges, s_col, r_col, p_col] + flat_params

    # Advisory cost estimate for the single fused call.
    flops = 0
    for blk in (gn1, gn2):
        flops += _mlp_flops(blk["edgeInt"], E) + _mlp_flops(blk["nodeInt"], E)
        flops += _mlp_flops(blk["edgeUpdate"], E) + _mlp_flops(blk["nodeUpdate"], N)
    # one-hot gathers (2x nodes, 1x edges) + receiver scatter, per GN block
    flops += 2 * (2 * (2 * E * N * 2 * NODE_LEN) + 2 * E * E * 2 * EDGE_LEN
                  + 2 * E * N * NODE_INT_VEC_LEN)
    bytes_accessed = sum(int(a.size) * a.dtype.itemsize for a in inputs)
    bytes_accessed += (N * NODE_LEN + E * EDGE_LEN) * 4

    vmem = pl.BlockSpec(memory_space=pltpu.MemorySpace.VMEM)
    nodes_out, edges_out = pl.pallas_call(
        _double_gn_kernel,
        out_shape=(jax.ShapeDtypeStruct((N, NODE_LEN), jnp.float32),
                   jax.ShapeDtypeStruct((E, EDGE_LEN), jnp.float32)),
        in_specs=[vmem] * len(inputs),
        out_specs=(vmem, vmem),
        cost_estimate=pl.CostEstimate(flops=int(flops), transcendentals=0,
                                      bytes_accessed=int(bytes_accessed)),
    )(*inputs)
    # DoubleGN returns adjMatOut = adjMat.clone().detach()
    return adj_mat, nodes_out, edges_out


# TODO(synk): if multiple graphs/timesteps are ever processed at once, stack them
# along the row axis (and add a 'parallel' grid axis for v7x's second TensorCore)
# so each matmul fills the MXU; at N=8/E=16 the forward is launch-bound, not
# compute-bound, so fusion is the win applied here.


# ---------------------------- driver ----------------------------

if __name__ == "__main__":
    key = jax.random.PRNGKey(0)
    N, E = 8, 16
    k1, k2, k3, k4, key = jax.random.split(key, 5)
    senders = jax.random.randint(k1, (E,), 0, N, dtype=jnp.int32)
    receivers = jax.random.randint(k2, (E,), 0, N, dtype=jnp.int32)
    partners = (jnp.arange(E, dtype=jnp.int32) + 1) % E
    nodes = jax.random.normal(k3, (N, NODE_LEN), jnp.float32)
    edges = jax.random.normal(k4, (E, EDGE_LEN), jnp.float32)
    adj_mat = jnp.zeros((N, E), jnp.float32)
    adj_mat = adj_mat.at[senders, jnp.arange(E)].set(1.0)
    adj_mat = adj_mat.at[receivers, jnp.arange(E)].add(1.0)

    # DoubleGN.getModels with a small modelSize (GN2 doubles each override).
    model_size = [16, 16, 16, 8]
    gn1, key = init_gn_block(key, 1, model_size)
    gn2, key = init_gn_block(key, 2, [s * 2 for s in model_size])

    fwd = jax.jit(double_gn_forward)
    adj_out, nodes_out, edges_out = fwd(
        gn1, gn2, adj_mat, senders, receivers, partners, nodes, edges)
    jax.block_until_ready((adj_out, nodes_out, edges_out))

    assert adj_out.shape == (N, E)
    assert nodes_out.shape == (N, NODE_LEN)
    assert edges_out.shape == (E, EDGE_LEN)
    assert bool(jnp.all(jnp.isfinite(nodes_out))) and bool(jnp.all(jnp.isfinite(edges_out)))
    print("KERNEL_OK")
</pallas_src>

<mosaic_0001>
module attributes {stable_mosaic.version = 11 : i64} {
  func.func @_double_gn_kernel(%arg0: memref<8x8xf32, #tpu.memory_space<vmem>>, %arg1: memref<16x8xf32, #tpu.memory_space<vmem>>, %arg2: memref<16x1xi32, #tpu.memory_space<vmem>>, %arg3: memref<16x1xi32, #tpu.memory_space<vmem>>, %arg4: memref<16x1xi32, #tpu.memory_space<vmem>>, %arg5: memref<24x128xf32, #tpu.memory_space<vmem>>, %arg6: memref<1x128xf32, #tpu.memory_space<vmem>>, %arg7: memref<128x64xf32, #tpu.memory_space<vmem>>, %arg8: memref<1x64xf32, #tpu.memory_space<vmem>>, %arg9: memref<64x32xf32, #tpu.memory_space<vmem>>, %arg10: memref<1x32xf32, #tpu.memory_space<vmem>>, %arg11: memref<32x16xf32, #tpu.memory_space<vmem>>, %arg12: memref<1x16xf32, #tpu.memory_space<vmem>>, %arg13: memref<16x8xf32, #tpu.memory_space<vmem>>, %arg14: memref<1x8xf32, #tpu.memory_space<vmem>>, %arg15: memref<24x128xf32, #tpu.memory_space<vmem>>, %arg16: memref<1x128xf32, #tpu.memory_space<vmem>>, %arg17: memref<128x64xf32, #tpu.memory_space<vmem>>, %arg18: memref<1x64xf32, #tpu.memory_space<vmem>>, %arg19: memref<64x32xf32, #tpu.memory_space<vmem>>, %arg20: memref<1x32xf32, #tpu.memory_space<vmem>>, %arg21: memref<32x16xf32, #tpu.memory_space<vmem>>, %arg22: memref<1x16xf32, #tpu.memory_space<vmem>>, %arg23: memref<16x8xf32, #tpu.memory_space<vmem>>, %arg24: memref<1x8xf32, #tpu.memory_space<vmem>>, %arg25: memref<16x128xf32, #tpu.memory_space<vmem>>, %arg26: memref<1x128xf32, #tpu.memory_space<vmem>>, %arg27: memref<128x64xf32, #tpu.memory_space<vmem>>, %arg28: memref<1x64xf32, #tpu.memory_space<vmem>>, %arg29: memref<64x32xf32, #tpu.memory_space<vmem>>, %arg30: memref<1x32xf32, #tpu.memory_space<vmem>>, %arg31: memref<32x16xf32, #tpu.memory_space<vmem>>, %arg32: memref<1x16xf32, #tpu.memory_space<vmem>>, %arg33: memref<16x8xf32, #tpu.memory_space<vmem>>, %arg34: memref<1x8xf32, #tpu.memory_space<vmem>>, %arg35: memref<16x64xf32, #tpu.memory_space<vmem>>, %arg36: memref<1x64xf32, #tpu.memory_space<vmem>>, %arg37: memref<64x32xf32, #tpu.memory_space<vmem>>, %arg38: memref<1x32xf32, #tpu.memory_space<vmem>>, %arg39: memref<32x16xf32, #tpu.memory_space<vmem>>, %arg40: memref<1x16xf32, #tpu.memory_space<vmem>>, %arg41: memref<16x8xf32, #tpu.memory_space<vmem>>, %arg42: memref<1x8xf32, #tpu.memory_space<vmem>>, %arg43: memref<8x8xf32, #tpu.memory_space<vmem>>, %arg44: memref<1x8xf32, #tpu.memory_space<vmem>>, %arg45: memref<48x256xf32, #tpu.memory_space<vmem>>, %arg46: memref<1x256xf32, #tpu.memory_space<vmem>>, %arg47: memref<256x128xf32, #tpu.memory_space<vmem>>, %arg48: memref<1x128xf32, #tpu.memory_space<vmem>>, %arg49: memref<128x64xf32, #tpu.memory_space<vmem>>, %arg50: memref<1x64xf32, #tpu.memory_space<vmem>>, %arg51: memref<64x32xf32, #tpu.memory_space<vmem>>, %arg52: memref<1x32xf32, #tpu.memory_space<vmem>>, %arg53: memref<32x8xf32, #tpu.memory_space<vmem>>, %arg54: memref<1x8xf32, #tpu.memory_space<vmem>>, %arg55: memref<48x256xf32, #tpu.memory_space<vmem>>, %arg56: memref<1x256xf32, #tpu.memory_space<vmem>>, %arg57: memref<256x128xf32, #tpu.memory_space<vmem>>, %arg58: memref<1x128xf32, #tpu.memory_space<vmem>>, %arg59: memref<128x64xf32, #tpu.memory_space<vmem>>, %arg60: memref<1x64xf32, #tpu.memory_space<vmem>>, %arg61: memref<64x32xf32, #tpu.memory_space<vmem>>, %arg62: memref<1x32xf32, #tpu.memory_space<vmem>>, %arg63: memref<32x8xf32, #tpu.memory_space<vmem>>, %arg64: memref<1x8xf32, #tpu.memory_space<vmem>>, %arg65: memref<24x256xf32, #tpu.memory_space<vmem>>, %arg66: memref<1x256xf32, #tpu.memory_space<vmem>>, %arg67: memref<256x128xf32, #tpu.memory_space<vmem>>, %arg68: memref<1x128xf32, #tpu.memory_space<vmem>>, %arg69: memref<128x64xf32, #tpu.memory_space<vmem>>, %arg70: memref<1x64xf32, #tpu.memory_space<vmem>>, %arg71: memref<64x32xf32, #tpu.memory_space<vmem>>, %arg72: memref<1x32xf32, #tpu.memory_space<vmem>>, %arg73: memref<32x8xf32, #tpu.memory_space<vmem>>, %arg74: memref<1x8xf32, #tpu.memory_space<vmem>>, %arg75: memref<24x128xf32, #tpu.memory_space<vmem>>, %arg76: memref<1x128xf32, #tpu.memory_space<vmem>>, %arg77: memref<128x64xf32, #tpu.memory_space<vmem>>, %arg78: memref<1x64xf32, #tpu.memory_space<vmem>>, %arg79: memref<64x32xf32, #tpu.memory_space<vmem>>, %arg80: memref<1x32xf32, #tpu.memory_space<vmem>>, %arg81: memref<32x16xf32, #tpu.memory_space<vmem>>, %arg82: memref<1x16xf32, #tpu.memory_space<vmem>>, %arg83: memref<16x8xf32, #tpu.memory_space<vmem>>, %arg84: memref<1x8xf32, #tpu.memory_space<vmem>>, %arg85: memref<8x8xf32, #tpu.memory_space<vmem>>, %arg86: memref<16x8xf32, #tpu.memory_space<vmem>>) attributes {dimension_semantics = [], scalar_prefetch = 0 : i64, scratch_operands = 0 : i64, tpu.core_type = #tpu.core_type<tc>} {
    %c0 = arith.constant 0 : index
    %c0_0 = arith.constant 0 : index
    %0 = vector.load %arg5[%c0, %c0_0] : memref<24x128xf32, #tpu.memory_space<vmem>>, vector<24x128xf32>
    %c0_1 = arith.constant 0 : index
    %c0_2 = arith.constant 0 : index
    %1 = vector.load %arg6[%c0_1, %c0_2] : memref<1x128xf32, #tpu.memory_space<vmem>>, vector<1x128xf32>
    %c0_3 = arith.constant 0 : index
    %c0_4 = arith.constant 0 : index
    %2 = vector.load %arg7[%c0_3, %c0_4] : memref<128x64xf32, #tpu.memory_space<vmem>>, vector<128x64xf32>
    %c0_5 = arith.constant 0 : index
    %c0_6 = arith.constant 0 : index
    %3 = vector.load %arg8[%c0_5, %c0_6] : memref<1x64xf32, #tpu.memory_space<vmem>>, vector<1x64xf32>
    %c0_7 = arith.constant 0 : index
    %c0_8 = arith.constant 0 : index
    %4 = vector.load %arg9[%c0_7, %c0_8] : memref<64x32xf32, #tpu.memory_space<vmem>>, vector<64x32xf32>
    %c0_9 = arith.constant 0 : index
    %c0_10 = arith.constant 0 : index
    %5 = vector.load %arg10[%c0_9, %c0_10] : memref<1x32xf32, #tpu.memory_space<vmem>>, vector<1x32xf32>
    %c0_11 = arith.constant 0 : index
    %c0_12 = arith.constant 0 : index
    %6 = vector.load %arg11[%c0_11, %c0_12] : memref<32x16xf32, #tpu.memory_space<vmem>>, vector<32x16xf32>
    %c0_13 = arith.constant 0 : index
    %c0_14 = arith.constant 0 : index
    %7 = vector.load %arg12[%c0_13, %c0_14] : memref<1x16xf32, #tpu.memory_space<vmem>>, vector<1x16xf32>
    %c0_15 = arith.constant 0 : index
    %c0_16 = arith.constant 0 : index
    %8 = vector.load %arg13[%c0_15, %c0_16] : memref<16x8xf32, #tpu.memory_space<vmem>>, vector<16x8xf32>
    %c0_17 = arith.constant 0 : index
    %c0_18 = arith.constant 0 : index
    %9 = vector.load %arg14[%c0_17, %c0_18] : memref<1x8xf32, #tpu.memory_space<vmem>>, vector<1x8xf32>
    %c0_19 = arith.constant 0 : index
    %c0_20 = arith.constant 0 : index
    %10 = vector.load %arg15[%c0_19, %c0_20] : memref<24x128xf32, #tpu.memory_space<vmem>>, vector<24x128xf32>
    %c0_21 = arith.constant 0 : index
    %c0_22 = arith.constant 0 : index
    %11 = vector.load %arg16[%c0_21, %c0_22] : memref<1x128xf32, #tpu.memory_space<vmem>>, vector<1x128xf32>
    %c0_23 = arith.constant 0 : index
    %c0_24 = arith.constant 0 : index
    %12 = vector.load %arg17[%c0_23, %c0_24] : memref<128x64xf32, #tpu.memory_space<vmem>>, vector<128x64xf32>
    %c0_25 = arith.constant 0 : index
    %c0_26 = arith.constant 0 : index
    %13 = vector.load %arg18[%c0_25, %c0_26] : memref<1x64xf32, #tpu.memory_space<vmem>>, vector<1x64xf32>
    %c0_27 = arith.constant 0 : index
    %c0_28 = arith.constant 0 : index
    %14 = vector.load %arg19[%c0_27, %c0_28] : memref<64x32xf32, #tpu.memory_space<vmem>>, vector<64x32xf32>
    %c0_29 = arith.constant 0 : index
    %c0_30 = arith.constant 0 : index
    %15 = vector.load %arg20[%c0_29, %c0_30] : memref<1x32xf32, #tpu.memory_space<vmem>>, vector<1x32xf32>
    %c0_31 = arith.constant 0 : index
    %c0_32 = arith.constant 0 : index
    %16 = vector.load %arg21[%c0_31, %c0_32] : memref<32x16xf32, #tpu.memory_space<vmem>>, vector<32x16xf32>
    %c0_33 = arith.constant 0 : index
    %c0_34 = arith.constant 0 : index
    %17 = vector.load %arg22[%c0_33, %c0_34] : memref<1x16xf32, #tpu.memory_space<vmem>>, vector<1x16xf32>
    %c0_35 = arith.constant 0 : index
    %c0_36 = arith.constant 0 : index
    %18 = vector.load %arg23[%c0_35, %c0_36] : memref<16x8xf32, #tpu.memory_space<vmem>>, vector<16x8xf32>
    %c0_37 = arith.constant 0 : index
    %c0_38 = arith.constant 0 : index
    %19 = vector.load %arg24[%c0_37, %c0_38] : memref<1x8xf32, #tpu.memory_space<vmem>>, vector<1x8xf32>
    %c0_39 = arith.constant 0 : index
    %c0_40 = arith.constant 0 : index
    %20 = vector.load %arg25[%c0_39, %c0_40] : memref<16x128xf32, #tpu.memory_space<vmem>>, vector<16x128xf32>
    %c0_41 = arith.constant 0 : index
    %c0_42 = arith.constant 0 : index
    %21 = vector.load %arg26[%c0_41, %c0_42] : memref<1x128xf32, #tpu.memory_space<vmem>>, vector<1x128xf32>
    %c0_43 = arith.constant 0 : index
    %c0_44 = arith.constant 0 : index
    %22 = vector.load %arg27[%c0_43, %c0_44] : memref<128x64xf32, #tpu.memory_space<vmem>>, vector<128x64xf32>
    %c0_45 = arith.constant 0 : index
    %c0_46 = arith.constant 0 : index
    %23 = vector.load %arg28[%c0_45, %c0_46] : memref<1x64xf32, #tpu.memory_space<vmem>>, vector<1x64xf32>
    %c0_47 = arith.constant 0 : index
    %c0_48 = arith.constant 0 : index
    %24 = vector.load %arg29[%c0_47, %c0_48] : memref<64x32xf32, #tpu.memory_space<vmem>>, vector<64x32xf32>
    %c0_49 = arith.constant 0 : index
    %c0_50 = arith.constant 0 : index
    %25 = vector.load %arg30[%c0_49, %c0_50] : memref<1x32xf32, #tpu.memory_space<vmem>>, vector<1x32xf32>
    %c0_51 = arith.constant 0 : index
    %c0_52 = arith.constant 0 : index
    %26 = vector.load %arg31[%c0_51, %c0_52] : memref<32x16xf32, #tpu.memory_space<vmem>>, vector<32x16xf32>
    %c0_53 = arith.constant 0 : index
    %c0_54 = arith.constant 0 : index
    %27 = vector.load %arg32[%c0_53, %c0_54] : memref<1x16xf32, #tpu.memory_space<vmem>>, vector<1x16xf32>
    %c0_55 = arith.constant 0 : index
    %c0_56 = arith.constant 0 : index
    %28 = vector.load %arg33[%c0_55, %c0_56] : memref<16x8xf32, #tpu.memory_space<vmem>>, vector<16x8xf32>
    %c0_57 = arith.constant 0 : index
    %c0_58 = arith.constant 0 : index
    %29 = vector.load %arg34[%c0_57, %c0_58] : memref<1x8xf32, #tpu.memory_space<vmem>>, vector<1x8xf32>
    %c0_59 = arith.constant 0 : index
    %c0_60 = arith.constant 0 : index
    %30 = vector.load %arg35[%c0_59, %c0_60] : memref<16x64xf32, #tpu.memory_space<vmem>>, vector<16x64xf32>
    %c0_61 = arith.constant 0 : index
    %c0_62 = arith.constant 0 : index
    %31 = vector.load %arg36[%c0_61, %c0_62] : memref<1x64xf32, #tpu.memory_space<vmem>>, vector<1x64xf32>
    %c0_63 = arith.constant 0 : index
    %c0_64 = arith.constant 0 : index
    %32 = vector.load %arg37[%c0_63, %c0_64] : memref<64x32xf32, #tpu.memory_space<vmem>>, vector<64x32xf32>
    %c0_65 = arith.constant 0 : index
    %c0_66 = arith.constant 0 : index
    %33 = vector.load %arg38[%c0_65, %c0_66] : memref<1x32xf32, #tpu.memory_space<vmem>>, vector<1x32xf32>
    %c0_67 = arith.constant 0 : index
    %c0_68 = arith.constant 0 : index
    %34 = vector.load %arg39[%c0_67, %c0_68] : memref<32x16xf32, #tpu.memory_space<vmem>>, vector<32x16xf32>
    %c0_69 = arith.constant 0 : index
    %c0_70 = arith.constant 0 : index
    %35 = vector.load %arg40[%c0_69, %c0_70] : memref<1x16xf32, #tpu.memory_space<vmem>>, vector<1x16xf32>
    %c0_71 = arith.constant 0 : index
    %c0_72 = arith.constant 0 : index
    %36 = vector.load %arg41[%c0_71, %c0_72] : memref<16x8xf32, #tpu.memory_space<vmem>>, vector<16x8xf32>
    %c0_73 = arith.constant 0 : index
    %c0_74 = arith.constant 0 : index
    %37 = vector.load %arg42[%c0_73, %c0_74] : memref<1x8xf32, #tpu.memory_space<vmem>>, vector<1x8xf32>
    %c0_75 = arith.constant 0 : index
    %c0_76 = arith.constant 0 : index
    %38 = vector.load %arg43[%c0_75, %c0_76] : memref<8x8xf32, #tpu.memory_space<vmem>>, vector<8x8xf32>
    %c0_77 = arith.constant 0 : index
    %c0_78 = arith.constant 0 : index
    %39 = vector.load %arg44[%c0_77, %c0_78] : memref<1x8xf32, #tpu.memory_space<vmem>>, vector<1x8xf32>
    %c0_79 = arith.constant 0 : index
    %c0_80 = arith.constant 0 : index
    %40 = vector.load %arg45[%c0_79, %c0_80] : memref<48x256xf32, #tpu.memory_space<vmem>>, vector<48x256xf32>
    %c0_81 = arith.constant 0 : index
    %c0_82 = arith.constant 0 : index
    %41 = vector.load %arg46[%c0_81, %c0_82] : memref<1x256xf32, #tpu.memory_space<vmem>>, vector<1x256xf32>
    %c0_83 = arith.constant 0 : index
    %c0_84 = arith.constant 0 : index
    %42 = vector.load %arg47[%c0_83, %c0_84] : memref<256x128xf32, #tpu.memory_space<vmem>>, vector<256x128xf32>
    %c0_85 = arith.constant 0 : index
    %c0_86 = arith.constant 0 : index
    %43 = vector.load %arg48[%c0_85, %c0_86] : memref<1x128xf32, #tpu.memory_space<vmem>>, vector<1x128xf32>
    %c0_87 = arith.constant 0 : index
    %c0_88 = arith.constant 0 : index
    %44 = vector.load %arg49[%c0_87, %c0_88] : memref<128x64xf32, #tpu.memory_space<vmem>>, vector<128x64xf32>
    %c0_89 = arith.constant 0 : index
    %c0_90 = arith.constant 0 : index
    %45 = vector.load %arg50[%c0_89, %c0_90] : memref<1x64xf32, #tpu.memory_space<vmem>>, vector<1x64xf32>
    %c0_91 = arith.constant 0 : index
    %c0_92 = arith.constant 0 : index
    %46 = vector.load %arg51[%c0_91, %c0_92] : memref<64x32xf32, #tpu.memory_space<vmem>>, vector<64x32xf32>
    %c0_93 = arith.constant 0 : index
    %c0_94 = arith.constant 0 : index
    %47 = vector.load %arg52[%c0_93, %c0_94] : memref<1x32xf32, #tpu.memory_space<vmem>>, vector<1x32xf32>
    %c0_95 = arith.constant 0 : index
    %c0_96 = arith.constant 0 : index
    %48 = vector.load %arg53[%c0_95, %c0_96] : memref<32x8xf32, #tpu.memory_space<vmem>>, vector<32x8xf32>
    %c0_97 = arith.constant 0 : index
    %c0_98 = arith.constant 0 : index
    %49 = vector.load %arg54[%c0_97, %c0_98] : memref<1x8xf32, #tpu.memory_space<vmem>>, vector<1x8xf32>
    %c0_99 = arith.constant 0 : index
    %c0_100 = arith.constant 0 : index
    %50 = vector.load %arg55[%c0_99, %c0_100] : memref<48x256xf32, #tpu.memory_space<vmem>>, vector<48x256xf32>
    %c0_101 = arith.constant 0 : index
    %c0_102 = arith.constant 0 : index
    %51 = vector.load %arg56[%c0_101, %c0_102] : memref<1x256xf32, #tpu.memory_space<vmem>>, vector<1x256xf32>
    %c0_103 = arith.constant 0 : index
    %c0_104 = arith.constant 0 : index
    %52 = vector.load %arg57[%c0_103, %c0_104] : memref<256x128xf32, #tpu.memory_space<vmem>>, vector<256x128xf32>
    %c0_105 = arith.constant 0 : index
    %c0_106 = arith.constant 0 : index
    %53 = vector.load %arg58[%c0_105, %c0_106] : memref<1x128xf32, #tpu.memory_space<vmem>>, vector<1x128xf32>
    %c0_107 = arith.constant 0 : index
    %c0_108 = arith.constant 0 : index
    %54 = vector.load %arg59[%c0_107, %c0_108] : memref<128x64xf32, #tpu.memory_space<vmem>>, vector<128x64xf32>
    %c0_109 = arith.constant 0 : index
    %c0_110 = arith.constant 0 : index
    %55 = vector.load %arg60[%c0_109, %c0_110] : memref<1x64xf32, #tpu.memory_space<vmem>>, vector<1x64xf32>
    %c0_111 = arith.constant 0 : index
    %c0_112 = arith.constant 0 : index
    %56 = vector.load %arg61[%c0_111, %c0_112] : memref<64x32xf32, #tpu.memory_space<vmem>>, vector<64x32xf32>
    %c0_113 = arith.constant 0 : index
    %c0_114 = arith.constant 0 : index
    %57 = vector.load %arg62[%c0_113, %c0_114] : memref<1x32xf32, #tpu.memory_space<vmem>>, vector<1x32xf32>
    %c0_115 = arith.constant 0 : index
    %c0_116 = arith.constant 0 : index
    %58 = vector.load %arg63[%c0_115, %c0_116] : memref<32x8xf32, #tpu.memory_space<vmem>>, vector<32x8xf32>
    %c0_117 = arith.constant 0 : index
    %c0_118 = arith.constant 0 : index
    %59 = vector.load %arg64[%c0_117, %c0_118] : memref<1x8xf32, #tpu.memory_space<vmem>>, vector<1x8xf32>
    %c0_119 = arith.constant 0 : index
    %c0_120 = arith.constant 0 : index
    %60 = vector.load %arg65[%c0_119, %c0_120] : memref<24x256xf32, #tpu.memory_space<vmem>>, vector<24x256xf32>
    %c0_121 = arith.constant 0 : index
    %c0_122 = arith.constant 0 : index
    %61 = vector.load %arg66[%c0_121, %c0_122] : memref<1x256xf32, #tpu.memory_space<vmem>>, vector<1x256xf32>
    %c0_123 = arith.constant 0 : index
    %c0_124 = arith.constant 0 : index
    %62 = vector.load %arg67[%c0_123, %c0_124] : memref<256x128xf32, #tpu.memory_space<vmem>>, vector<256x128xf32>
    %c0_125 = arith.constant 0 : index
    %c0_126 = arith.constant 0 : index
    %63 = vector.load %arg68[%c0_125, %c0_126] : memref<1x128xf32, #tpu.memory_space<vmem>>, vector<1x128xf32>
    %c0_127 = arith.constant 0 : index
    %c0_128 = arith.constant 0 : index
    %64 = vector.load %arg69[%c0_127, %c0_128] : memref<128x64xf32, #tpu.memory_space<vmem>>, vector<128x64xf32>
    %c0_129 = arith.constant 0 : index
    %c0_130 = arith.constant 0 : index
    %65 = vector.load %arg70[%c0_129, %c0_130] : memref<1x64xf32, #tpu.memory_space<vmem>>, vector<1x64xf32>
    %c0_131 = arith.constant 0 : index
    %c0_132 = arith.constant 0 : index
    %66 = vector.load %arg71[%c0_131, %c0_132] : memref<64x32xf32, #tpu.memory_space<vmem>>, vector<64x32xf32>
    %c0_133 = arith.constant 0 : index
    %c0_134 = arith.constant 0 : index
    %67 = vector.load %arg72[%c0_133, %c0_134] : memref<1x32xf32, #tpu.memory_space<vmem>>, vector<1x32xf32>
    %c0_135 = arith.constant 0 : index
    %c0_136 = arith.constant 0 : index
    %68 = vector.load %arg73[%c0_135, %c0_136] : memref<32x8xf32, #tpu.memory_space<vmem>>, vector<32x8xf32>
    %c0_137 = arith.constant 0 : index
    %c0_138 = arith.constant 0 : index
    %69 = vector.load %arg74[%c0_137, %c0_138] : memref<1x8xf32, #tpu.memory_space<vmem>>, vector<1x8xf32>
    %c0_139 = arith.constant 0 : index
    %c0_140 = arith.constant 0 : index
    %70 = vector.load %arg75[%c0_139, %c0_140] : memref<24x128xf32, #tpu.memory_space<vmem>>, vector<24x128xf32>
    %c0_141 = arith.constant 0 : index
    %c0_142 = arith.constant 0 : index
    %71 = vector.load %arg76[%c0_141, %c0_142] : memref<1x128xf32, #tpu.memory_space<vmem>>, vector<1x128xf32>
    %c0_143 = arith.constant 0 : index
    %c0_144 = arith.constant 0 : index
    %72 = vector.load %arg77[%c0_143, %c0_144] : memref<128x64xf32, #tpu.memory_space<vmem>>, vector<128x64xf32>
    %c0_145 = arith.constant 0 : index
    %c0_146 = arith.constant 0 : index
    %73 = vector.load %arg78[%c0_145, %c0_146] : memref<1x64xf32, #tpu.memory_space<vmem>>, vector<1x64xf32>
    %c0_147 = arith.constant 0 : index
    %c0_148 = arith.constant 0 : index
    %74 = vector.load %arg79[%c0_147, %c0_148] : memref<64x32xf32, #tpu.memory_space<vmem>>, vector<64x32xf32>
    %c0_149 = arith.constant 0 : index
    %c0_150 = arith.constant 0 : index
    %75 = vector.load %arg80[%c0_149, %c0_150] : memref<1x32xf32, #tpu.memory_space<vmem>>, vector<1x32xf32>
    %c0_151 = arith.constant 0 : index
    %c0_152 = arith.constant 0 : index
    %76 = vector.load %arg81[%c0_151, %c0_152] : memref<32x16xf32, #tpu.memory_space<vmem>>, vector<32x16xf32>
    %c0_153 = arith.constant 0 : index
    %c0_154 = arith.constant 0 : index
    %77 = vector.load %arg82[%c0_153, %c0_154] : memref<1x16xf32, #tpu.memory_space<vmem>>, vector<1x16xf32>
    %c0_155 = arith.constant 0 : index
    %c0_156 = arith.constant 0 : index
    %78 = vector.load %arg83[%c0_155, %c0_156] : memref<16x8xf32, #tpu.memory_space<vmem>>, vector<16x8xf32>
    %c0_157 = arith.constant 0 : index
    %c0_158 = arith.constant 0 : index
    %79 = vector.load %arg84[%c0_157, %c0_158] : memref<1x8xf32, #tpu.memory_space<vmem>>, vector<1x8xf32>
    %c0_159 = arith.constant 0 : index
    %c0_160 = arith.constant 0 : index
    %80 = vector.load %arg0[%c0_159, %c0_160] : memref<8x8xf32, #tpu.memory_space<vmem>>, vector<8x8xf32>
    %c0_161 = arith.constant 0 : index
    %c0_162 = arith.constant 0 : index
    %81 = vector.load %arg1[%c0_161, %c0_162] : memref<16x8xf32, #tpu.memory_space<vmem>>, vector<16x8xf32>
    %82 = tpu.iota {dimensions = array<i32: 1>} : vector<16x8xi32>
    %83 = tpu.iota {dimensions = array<i32: 1>} : vector<16x16xi32>
    %c0_163 = arith.constant 0 : index
    %c0_164 = arith.constant 0 : index
    %84 = vector.load %arg2[%c0_163, %c0_164] : memref<16x1xi32, #tpu.memory_space<vmem>>, vector<16x1xi32>
    %85 = vector.broadcast %84 : vector<16x1xi32> to vector<16x8xi32>
    %86 = arith.cmpi eq, %82, %85 : vector<16x8xi32>
    %87 = arith.extui %86 : vector<16x8xi1> to vector<16x8xi32>
    %88 = arith.sitofp %87 : vector<16x8xi32> to vector<16x8xf32>
    %c0_165 = arith.constant 0 : index
    %c0_166 = arith.constant 0 : index
    %89 = vector.load %arg3[%c0_165, %c0_166] : memref<16x1xi32, #tpu.memory_space<vmem>>, vector<16x1xi32>
    %90 = vector.broadcast %89 : vector<16x1xi32> to vector<16x8xi32>
    %91 = arith.cmpi eq, %82, %90 : vector<16x8xi32>
    %92 = arith.extui %91 : vector<16x8xi1> to vector<16x8xi32>
    %93 = arith.sitofp %92 : vector<16x8xi32> to vector<16x8xf32>
    %c0_167 = arith.constant 0 : index
    %c0_168 = arith.constant 0 : index
    %94 = vector.load %arg4[%c0_167, %c0_168] : memref<16x1xi32, #tpu.memory_space<vmem>>, vector<16x1xi32>
    %95 = vector.broadcast %94 : vector<16x1xi32> to vector<16x16xi32>
    %96 = arith.cmpi eq, %83, %95 : vector<16x16xi32>
    %97 = arith.extui %96 : vector<16x16xi1> to vector<16x16xi32>
    %98 = arith.sitofp %97 : vector<16x16xi32> to vector<16x16xf32>
    %cst = arith.constant dense<0.000000e+00> : vector<16x8xf32>
    %99 = tpu.matmul %88, %80, %cst {dimension_numbers = #tpu.dot_dimension_numbers<[1], [0], [0], [1], [0, 0, 1, 1], [], []>} : vector<16x8xf32>, vector<8x8xf32>, vector<16x8xf32> -> vector<16x8xf32>
    %cst_169 = arith.constant dense<0.000000e+00> : vector<16x8xf32>
    %100 = tpu.matmul %93, %80, %cst_169 {dimension_numbers = #tpu.dot_dimension_numbers<[1], [0], [0], [1], [0, 0, 1, 1], [], []>} : vector<16x8xf32>, vector<8x8xf32>, vector<16x8xf32> -> vector<16x8xf32>
    %cst_170 = arith.constant dense<0.000000e+00> : vector<16x8xf32>
    %101 = tpu.matmul %98, %81, %cst_170 {dimension_numbers = #tpu.dot_dimension_numbers<[1], [0], [0], [1], [0, 0, 1, 1], [], []>} : vector<16x16xf32>, vector<16x8xf32>, vector<16x8xf32> -> vector<16x8xf32>
    %102 = tpu.concatenate %99, %100, %81 in 1 : vector<16x8xf32>, vector<16x8xf32>, vector<16x8xf32> -> vector<16x24xf32>
    %103 = tpu.concatenate %81, %101, %99 in 1 : vector<16x8xf32>, vector<16x8xf32>, vector<16x8xf32> -> vector<16x24xf32>
    %cst_171 = arith.constant dense<0.000000e+00> : vector<16x128xf32>
    %104 = tpu.matmul %102, %10, %cst_171 {dimension_numbers = #tpu.dot_dimension_numbers<[1], [0], [0], [1], [0, 0, 1, 1], [], []>} : vector<16x24xf32>, vector<24x128xf32>, vector<16x128xf32> -> vector<16x128xf32>
    %105 = vector.broadcast %11 : vector<1x128xf32> to vector<16x128xf32>
    %106 = arith.addf %104, %105 : vector<16x128xf32>
    %cst_172 = arith.constant 0.000000e+00 : f32
    %107 = vector.broadcast %cst_172 : f32 to vector<16x128xf32>
    %108 = arith.maximumf %106, %107 : vector<16x128xf32>
    %cst_173 = arith.constant dense<0.000000e+00> : vector<16x64xf32>
    %109 = tpu.matmul %108, %12, %cst_173 {dimension_numbers = #tpu.dot_dimension_numbers<[1], [0], [0], [1], [0, 0, 1, 1], [], []>} : vector<16x128xf32>, vector<128x64xf32>, vector<16x64xf32> -> vector<16x64xf32>
    %110 = vector.broadcast %13 : vector<1x64xf32> to vector<16x64xf32>
    %111 = arith.addf %109, %110 : vector<16x64xf32>
    %cst_174 = arith.constant 0.000000e+00 : f32
    %112 = vector.broadcast %cst_174 : f32 to vector<16x64xf32>
    %113 = arith.maximumf %111, %112 : vector<16x64xf32>
    %cst_175 = arith.constant dense<0.000000e+00> : vector<16x32xf32>
    %114 = tpu.matmul %113, %14, %cst_175 {dimension_numbers = #tpu.dot_dimension_numbers<[1], [0], [0], [1], [0, 0, 1, 1], [], []>} : vector<16x64xf32>, vector<64x32xf32>, vector<16x32xf32> -> vector<16x32xf32>
    %115 = vector.broadcast %15 : vector<1x32xf32> to vector<16x32xf32>
    %116 = arith.addf %114, %115 : vector<16x32xf32>
    %cst_176 = arith.constant 0.000000e+00 : f32
    %117 = vector.broadcast %cst_176 : f32 to vector<16x32xf32>
    %118 = arith.maximumf %116, %117 : vector<16x32xf32>
    %cst_177 = arith.constant dense<0.000000e+00> : vector<16x16xf32>
    %119 = tpu.matmul %118, %16, %cst_177 {dimension_numbers = #tpu.dot_dimension_numbers<[1], [0], [0], [1], [0, 0, 1, 1], [], []>} : vector<16x32xf32>, vector<32x16xf32>, vector<16x16xf32> -> vector<16x16xf32>
    %120 = vector.broadcast %17 : vector<1x16xf32> to vector<16x16xf32>
    %121 = arith.addf %119, %120 : vector<16x16xf32>
    %cst_178 = arith.constant 0.000000e+00 : f32
    %122 = vector.broadcast %cst_178 : f32 to vector<16x16xf32>
    %123 = arith.maximumf %121, %122 : vector<16x16xf32>
    %cst_179 = arith.constant dense<0.000000e+00> : vector<16x8xf32>
    %124 = tpu.matmul %123, %18, %cst_179 {dimension_numbers = #tpu.dot_dimension_numbers<[1], [0], [0], [1], [0, 0, 1, 1], [], []>} : vector<16x16xf32>, vector<16x8xf32>, vector<16x8xf32> -> vector<16x8xf32>
    %125 = vector.broadcast %19 : vector<1x8xf32> to vector<16x8xf32>
    %126 = arith.addf %124, %125 : vector<16x8xf32>
    %cst_180 = arith.constant dense<0.000000e+00> : vector<16x128xf32>
    %127 = tpu.matmul %103, %0, %cst_180 {dimension_numbers = #tpu.dot_dimension_numbers<[1], [0], [0], [1], [0, 0, 1, 1], [], []>} : vector<16x24xf32>, vector<24x128xf32>, vector<16x128xf32> -> vector<16x128xf32>
    %128 = vector.broadcast %1 : vector<1x128xf32> to vector<16x128xf32>
    %129 = arith.addf %127, %128 : vector<16x128xf32>
    %cst_181 = arith.constant 0.000000e+00 : f32
    %130 = vector.broadcast %cst_181 : f32 to vector<16x128xf32>
    %131 = arith.maximumf %129, %130 : vector<16x128xf32>
    %cst_182 = arith.constant dense<0.000000e+00> : vector<16x64xf32>
    %132 = tpu.matmul %131, %2, %cst_182 {dimension_numbers = #tpu.dot_dimension_numbers<[1], [0], [0], [1], [0, 0, 1, 1], [], []>} : vector<16x128xf32>, vector<128x64xf32>, vector<16x64xf32> -> vector<16x64xf32>
    %133 = vector.broadcast %3 : vector<1x64xf32> to vector<16x64xf32>
    %134 = arith.addf %132, %133 : vector<16x64xf32>
    %cst_183 = arith.constant 0.000000e+00 : f32
    %135 = vector.broadcast %cst_183 : f32 to vector<16x64xf32>
    %136 = arith.maximumf %134, %135 : vector<16x64xf32>
    %cst_184 = arith.constant dense<0.000000e+00> : vector<16x32xf32>
    %137 = tpu.matmul %136, %4, %cst_184 {dimension_numbers = #tpu.dot_dimension_numbers<[1], [0], [0], [1], [0, 0, 1, 1], [], []>} : vector<16x64xf32>, vector<64x32xf32>, vector<16x32xf32> -> vector<16x32xf32>
    %138 = vector.broadcast %5 : vector<1x32xf32> to vector<16x32xf32>
    %139 = arith.addf %137, %138 : vector<16x32xf32>
    %cst_185 = arith.constant 0.000000e+00 : f32
    %140 = vector.broadcast %cst_185 : f32 to vector<16x32xf32>
    %141 = arith.maximumf %139, %140 : vector<16x32xf32>
    %cst_186 = arith.constant dense<0.000000e+00> : vector<16x16xf32>
    %142 = tpu.matmul %141, %6, %cst_186 {dimension_numbers = #tpu.dot_dimension_numbers<[1], [0], [0], [1], [0, 0, 1, 1], [], []>} : vector<16x32xf32>, vector<32x16xf32>, vector<16x16xf32> -> vector<16x16xf32>
    %143 = vector.broadcast %7 : vector<1x16xf32> to vector<16x16xf32>
    %144 = arith.addf %142, %143 : vector<16x16xf32>
    %cst_187 = arith.constant 0.000000e+00 : f32
    %145 = vector.broadcast %cst_187 : f32 to vector<16x16xf32>
    %146 = arith.maximumf %144, %145 : vector<16x16xf32>
    %cst_188 = arith.constant dense<0.000000e+00> : vector<16x8xf32>
    %147 = tpu.matmul %146, %8, %cst_188 {dimension_numbers = #tpu.dot_dimension_numbers<[1], [0], [0], [1], [0, 0, 1, 1], [], []>} : vector<16x16xf32>, vector<16x8xf32>, vector<16x8xf32> -> vector<16x8xf32>
    %148 = vector.broadcast %9 : vector<1x8xf32> to vector<16x8xf32>
    %149 = arith.addf %147, %148 : vector<16x8xf32>
    %cst_189 = arith.constant dense<0.000000e+00> : vector<8x8xf32>
    %150 = tpu.matmul %93, %126, %cst_189 {dimension_numbers = #tpu.dot_dimension_numbers<[0], [0], [1], [1], [0, 1, 1, 1], [], []>} : vector<16x8xf32>, vector<16x8xf32>, vector<8x8xf32> -> vector<8x8xf32>
    %151 = tpu.concatenate %80, %150 in 1 : vector<8x8xf32>, vector<8x8xf32> -> vector<8x16xf32>
    %cst_190 = arith.constant dense<0.000000e+00> : vector<8x64xf32>
    %152 = tpu.matmul %151, %30, %cst_190 {dimension_numbers = #tpu.dot_dimension_numbers<[1], [0], [0], [1], [0, 0, 1, 1], [], []>} : vector<8x16xf32>, vector<16x64xf32>, vector<8x64xf32> -> vector<8x64xf32>
    %153 = vector.broadcast %31 : vector<1x64xf32> to vector<8x64xf32>
    %154 = arith.addf %152, %153 : vector<8x64xf32>
    %cst_191 = arith.constant 0.000000e+00 : f32
    %155 = vector.broadcast %cst_191 : f32 to vector<8x64xf32>
    %156 = arith.maximumf %154, %155 : vector<8x64xf32>
    %cst_192 = arith.constant dense<0.000000e+00> : vector<8x32xf32>
    %157 = tpu.matmul %156, %32, %cst_192 {dimension_numbers = #tpu.dot_dimension_numbers<[1], [0], [0], [1], [0, 0, 1, 1], [], []>} : vector<8x64xf32>, vector<64x32xf32>, vector<8x32xf32> -> vector<8x32xf32>
    %158 = vector.broadcast %33 : vector<1x32xf32> to vector<8x32xf32>
    %159 = arith.addf %157, %158 : vector<8x32xf32>
    %cst_193 = arith.constant 0.000000e+00 : f32
    %160 = vector.broadcast %cst_193 : f32 to vector<8x32xf32>
    %161 = arith.maximumf %159, %160 : vector<8x32xf32>
    %cst_194 = arith.constant dense<0.000000e+00> : vector<8x16xf32>
    %162 = tpu.matmul %161, %34, %cst_194 {dimension_numbers = #tpu.dot_dimension_numbers<[1], [0], [0], [1], [0, 0, 1, 1], [], []>} : vector<8x32xf32>, vector<32x16xf32>, vector<8x16xf32> -> vector<8x16xf32>
    %163 = vector.broadcast %35 : vector<1x16xf32> to vector<8x16xf32>
    %164 = arith.addf %162, %163 : vector<8x16xf32>
    %cst_195 = arith.constant 0.000000e+00 : f32
    %165 = vector.broadcast %cst_195 : f32 to vector<8x16xf32>
    %166 = arith.maximumf %164, %165 : vector<8x16xf32>
    %cst_196 = arith.constant dense<0.000000e+00> : vector<8x8xf32>
    %167 = tpu.matmul %166, %36, %cst_196 {dimension_numbers = #tpu.dot_dimension_numbers<[1], [0], [0], [1], [0, 0, 1, 1], [], []>} : vector<8x16xf32>, vector<16x8xf32>, vector<8x8xf32> -> vector<8x8xf32>
    %168 = vector.broadcast %37 : vector<1x8xf32> to vector<8x8xf32>
    %169 = arith.addf %167, %168 : vector<8x8xf32>
    %cst_197 = arith.constant 0.000000e+00 : f32
    %170 = vector.broadcast %cst_197 : f32 to vector<8x8xf32>
    %171 = arith.maximumf %169, %170 : vector<8x8xf32>
    %cst_198 = arith.constant dense<0.000000e+00> : vector<8x8xf32>
    %172 = tpu.matmul %171, %38, %cst_198 {dimension_numbers = #tpu.dot_dimension_numbers<[1], [0], [0], [1], [0, 0, 1, 1], [], []>} : vector<8x8xf32>, vector<8x8xf32>, vector<8x8xf32> -> vector<8x8xf32>
    %173 = vector.broadcast %39 : vector<1x8xf32> to vector<8x8xf32>
    %174 = arith.addf %172, %173 : vector<8x8xf32>
    %175 = tpu.concatenate %81, %149 in 1 : vector<16x8xf32>, vector<16x8xf32> -> vector<16x16xf32>
    %cst_199 = arith.constant dense<0.000000e+00> : vector<16x128xf32>
    %176 = tpu.matmul %175, %20, %cst_199 {dimension_numbers = #tpu.dot_dimension_numbers<[1], [0], [0], [1], [0, 0, 1, 1], [], []>} : vector<16x16xf32>, vector<16x128xf32>, vector<16x128xf32> -> vector<16x128xf32>
    %177 = vector.broadcast %21 : vector<1x128xf32> to vector<16x128xf32>
    %178 = arith.addf %176, %177 : vector<16x128xf32>
    %cst_200 = arith.constant 0.000000e+00 : f32
    %179 = vector.broadcast %cst_200 : f32 to vector<16x128xf32>
    %180 = arith.maximumf %178, %179 : vector<16x128xf32>
    %cst_201 = arith.constant dense<0.000000e+00> : vector<16x64xf32>
    %181 = tpu.matmul %180, %22, %cst_201 {dimension_numbers = #tpu.dot_dimension_numbers<[1], [0], [0], [1], [0, 0, 1, 1], [], []>} : vector<16x128xf32>, vector<128x64xf32>, vector<16x64xf32> -> vector<16x64xf32>
    %182 = vector.broadcast %23 : vector<1x64xf32> to vector<16x64xf32>
    %183 = arith.addf %181, %182 : vector<16x64xf32>
    %cst_202 = arith.constant 0.000000e+00 : f32
    %184 = vector.broadcast %cst_202 : f32 to vector<16x64xf32>
    %185 = arith.maximumf %183, %184 : vector<16x64xf32>
    %cst_203 = arith.constant dense<0.000000e+00> : vector<16x32xf32>
    %186 = tpu.matmul %185, %24, %cst_203 {dimension_numbers = #tpu.dot_dimension_numbers<[1], [0], [0], [1], [0, 0, 1, 1], [], []>} : vector<16x64xf32>, vector<64x32xf32>, vector<16x32xf32> -> vector<16x32xf32>
    %187 = vector.broadcast %25 : vector<1x32xf32> to vector<16x32xf32>
    %188 = arith.addf %186, %187 : vector<16x32xf32>
    %cst_204 = arith.constant 0.000000e+00 : f32
    %189 = vector.broadcast %cst_204 : f32 to vector<16x32xf32>
    %190 = arith.maximumf %188, %189 : vector<16x32xf32>
    %cst_205 = arith.constant dense<0.000000e+00> : vector<16x16xf32>
    %191 = tpu.matmul %190, %26, %cst_205 {dimension_numbers = #tpu.dot_dimension_numbers<[1], [0], [0], [1], [0, 0, 1, 1], [], []>} : vector<16x32xf32>, vector<32x16xf32>, vector<16x16xf32> -> vector<16x16xf32>
    %192 = vector.broadcast %27 : vector<1x16xf32> to vector<16x16xf32>
    %193 = arith.addf %191, %192 : vector<16x16xf32>
    %cst_206 = arith.constant 0.000000e+00 : f32
    %194 = vector.broadcast %cst_206 : f32 to vector<16x16xf32>
    %195 = arith.maximumf %193, %194 : vector<16x16xf32>
    %cst_207 = arith.constant dense<0.000000e+00> : vector<16x8xf32>
    %196 = tpu.matmul %195, %28, %cst_207 {dimension_numbers = #tpu.dot_dimension_numbers<[1], [0], [0], [1], [0, 0, 1, 1], [], []>} : vector<16x16xf32>, vector<16x8xf32>, vector<16x8xf32> -> vector<16x8xf32>
    %197 = vector.broadcast %29 : vector<1x8xf32> to vector<16x8xf32>
    %198 = arith.addf %196, %197 : vector<16x8xf32>
    %199 = tpu.concatenate %80, %174 in 1 : vector<8x8xf32>, vector<8x8xf32> -> vector<8x16xf32>
    %200 = tpu.concatenate %81, %198 in 1 : vector<16x8xf32>, vector<16x8xf32> -> vector<16x16xf32>
    %cst_208 = arith.constant dense<0.000000e+00> : vector<16x16xf32>
    %201 = tpu.matmul %88, %199, %cst_208 {dimension_numbers = #tpu.dot_dimension_numbers<[1], [0], [0], [1], [0, 0, 1, 1], [], []>} : vector<16x8xf32>, vector<8x16xf32>, vector<16x16xf32> -> vector<16x16xf32>
    %cst_209 = arith.constant dense<0.000000e+00> : vector<16x16xf32>
    %202 = tpu.matmul %93, %199, %cst_209 {dimension_numbers = #tpu.dot_dimension_numbers<[1], [0], [0], [1], [0, 0, 1, 1], [], []>} : vector<16x8xf32>, vector<8x16xf32>, vector<16x16xf32> -> vector<16x16xf32>
    %cst_210 = arith.constant dense<0.000000e+00> : vector<16x16xf32>
    %203 = tpu.matmul %98, %200, %cst_210 {dimension_numbers = #tpu.dot_dimension_numbers<[1], [0], [0], [1], [0, 0, 1, 1], [], []>} : vector<16x16xf32>, vector<16x16xf32>, vector<16x16xf32> -> vector<16x16xf32>
    %204 = tpu.concatenate %201, %202, %200 in 1 : vector<16x16xf32>, vector<16x16xf32>, vector<16x16xf32> -> vector<16x48xf32>
    %205 = tpu.concatenate %200, %203, %201 in 1 : vector<16x16xf32>, vector<16x16xf32>, vector<16x16xf32> -> vector<16x48xf32>
    %cst_211 = arith.constant dense<0.000000e+00> : vector<16x256xf32>
    %206 = tpu.matmul %204, %50, %cst_211 {dimension_numbers = #tpu.dot_dimension_numbers<[1], [0], [0], [1], [0, 0, 1, 1], [], []>} : vector<16x48xf32>, vector<48x256xf32>, vector<16x256xf32> -> vector<16x256xf32>
    %207 = vector.broadcast %51 : vector<1x256xf32> to vector<16x256xf32>
    %208 = arith.addf %206, %207 : vector<16x256xf32>
    %cst_212 = arith.constant 0.000000e+00 : f32
    %209 = vector.broadcast %cst_212 : f32 to vector<16x256xf32>
    %210 = arith.maximumf %208, %209 : vector<16x256xf32>
    %cst_213 = arith.constant dense<0.000000e+00> : vector<16x128xf32>
    %211 = tpu.matmul %210, %52, %cst_213 {dimension_numbers = #tpu.dot_dimension_numbers<[1], [0], [0], [1], [0, 0, 1, 1], [], []>} : vector<16x256xf32>, vector<256x128xf32>, vector<16x128xf32> -> vector<16x128xf32>
    %212 = vector.broadcast %53 : vector<1x128xf32> to vector<16x128xf32>
    %213 = arith.addf %211, %212 : vector<16x128xf32>
    %cst_214 = arith.constant 0.000000e+00 : f32
    %214 = vector.broadcast %cst_214 : f32 to vector<16x128xf32>
    %215 = arith.maximumf %213, %214 : vector<16x128xf32>
    %cst_215 = arith.constant dense<0.000000e+00> : vector<16x64xf32>
    %216 = tpu.matmul %215, %54, %cst_215 {dimension_numbers = #tpu.dot_dimension_numbers<[1], [0], [0], [1], [0, 0, 1, 1], [], []>} : vector<16x128xf32>, vector<128x64xf32>, vector<16x64xf32> -> vector<16x64xf32>
    %217 = vector.broadcast %55 : vector<1x64xf32> to vector<16x64xf32>
    %218 = arith.addf %216, %217 : vector<16x64xf32>
    %cst_216 = arith.constant 0.000000e+00 : f32
    %219 = vector.broadcast %cst_216 : f32 to vector<16x64xf32>
    %220 = arith.maximumf %218, %219 : vector<16x64xf32>
    %cst_217 = arith.constant dense<0.000000e+00> : vector<16x32xf32>
    %221 = tpu.matmul %220, %56, %cst_217 {dimension_numbers = #tpu.dot_dimension_numbers<[1], [0], [0], [1], [0, 0, 1, 1], [], []>} : vector<16x64xf32>, vector<64x32xf32>, vector<16x32xf32> -> vector<16x32xf32>
    %222 = vector.broadcast %57 : vector<1x32xf32> to vector<16x32xf32>
    %223 = arith.addf %221, %222 : vector<16x32xf32>
    %cst_218 = arith.constant 0.000000e+00 : f32
    %224 = vector.broadcast %cst_218 : f32 to vector<16x32xf32>
    %225 = arith.maximumf %223, %224 : vector<16x32xf32>
    %cst_219 = arith.constant dense<0.000000e+00> : vector<16x8xf32>
    %226 = tpu.matmul %225, %58, %cst_219 {dimension_numbers = #tpu.dot_dimension_numbers<[1], [0], [0], [1], [0, 0, 1, 1], [], []>} : vector<16x32xf32>, vector<32x8xf32>, vector<16x8xf32> -> vector<16x8xf32>
    %227 = vector.broadcast %59 : vector<1x8xf32> to vector<16x8xf32>
    %228 = arith.addf %226, %227 : vector<16x8xf32>
    %cst_220 = arith.constant dense<0.000000e+00> : vector<16x256xf32>
    %229 = tpu.matmul %205, %40, %cst_220 {dimension_numbers = #tpu.dot_dimension_numbers<[1], [0], [0], [1], [0, 0, 1, 1], [], []>} : vector<16x48xf32>, vector<48x256xf32>, vector<16x256xf32> -> vector<16x256xf32>
    %230 = vector.broadcast %41 : vector<1x256xf32> to vector<16x256xf32>
    %231 = arith.addf %229, %230 : vector<16x256xf32>
    %cst_221 = arith.constant 0.000000e+00 : f32
    %232 = vector.broadcast %cst_221 : f32 to vector<16x256xf32>
    %233 = arith.maximumf %231, %232 : vector<16x256xf32>
    %cst_222 = arith.constant dense<0.000000e+00> : vector<16x128xf32>
    %234 = tpu.matmul %233, %42, %cst_222 {dimension_numbers = #tpu.dot_dimension_numbers<[1], [0], [0], [1], [0, 0, 1, 1], [], []>} : vector<16x256xf32>, vector<256x128xf32>, vector<16x128xf32> -> vector<16x128xf32>
    %235 = vector.broadcast %43 : vector<1x128xf32> to vector<16x128xf32>
    %236 = arith.addf %234, %235 : vector<16x128xf32>
    %cst_223 = arith.constant 0.000000e+00 : f32
    %237 = vector.broadcast %cst_223 : f32 to vector<16x128xf32>
    %238 = arith.maximumf %236, %237 : vector<16x128xf32>
    %cst_224 = arith.constant dense<0.000000e+00> : vector<16x64xf32>
    %239 = tpu.matmul %238, %44, %cst_224 {dimension_numbers = #tpu.dot_dimension_numbers<[1], [0], [0], [1], [0, 0, 1, 1], [], []>} : vector<16x128xf32>, vector<128x64xf32>, vector<16x64xf32> -> vector<16x64xf32>
    %240 = vector.broadcast %45 : vector<1x64xf32> to vector<16x64xf32>
    %241 = arith.addf %239, %240 : vector<16x64xf32>
    %cst_225 = arith.constant 0.000000e+00 : f32
    %242 = vector.broadcast %cst_225 : f32 to vector<16x64xf32>
    %243 = arith.maximumf %241, %242 : vector<16x64xf32>
    %cst_226 = arith.constant dense<0.000000e+00> : vector<16x32xf32>
    %244 = tpu.matmul %243, %46, %cst_226 {dimension_numbers = #tpu.dot_dimension_numbers<[1], [0], [0], [1], [0, 0, 1, 1], [], []>} : vector<16x64xf32>, vector<64x32xf32>, vector<16x32xf32> -> vector<16x32xf32>
    %245 = vector.broadcast %47 : vector<1x32xf32> to vector<16x32xf32>
    %246 = arith.addf %244, %245 : vector<16x32xf32>
    %cst_227 = arith.constant 0.000000e+00 : f32
    %247 = vector.broadcast %cst_227 : f32 to vector<16x32xf32>
    %248 = arith.maximumf %246, %247 : vector<16x32xf32>
    %cst_228 = arith.constant dense<0.000000e+00> : vector<16x8xf32>
    %249 = tpu.matmul %248, %48, %cst_228 {dimension_numbers = #tpu.dot_dimension_numbers<[1], [0], [0], [1], [0, 0, 1, 1], [], []>} : vector<16x32xf32>, vector<32x8xf32>, vector<16x8xf32> -> vector<16x8xf32>
    %250 = vector.broadcast %49 : vector<1x8xf32> to vector<16x8xf32>
    %251 = arith.addf %249, %250 : vector<16x8xf32>
    %cst_229 = arith.constant dense<0.000000e+00> : vector<8x8xf32>
    %252 = tpu.matmul %93, %228, %cst_229 {dimension_numbers = #tpu.dot_dimension_numbers<[0], [0], [1], [1], [0, 1, 1, 1], [], []>} : vector<16x8xf32>, vector<16x8xf32>, vector<8x8xf32> -> vector<8x8xf32>
    %253 = tpu.concatenate %199, %252 in 1 : vector<8x16xf32>, vector<8x8xf32> -> vector<8x24xf32>
    %cst_230 = arith.constant dense<0.000000e+00> : vector<8x128xf32>
    %254 = tpu.matmul %253, %70, %cst_230 {dimension_numbers = #tpu.dot_dimension_numbers<[1], [0], [0], [1], [0, 0, 1, 1], [], []>} : vector<8x24xf32>, vector<24x128xf32>, vector<8x128xf32> -> vector<8x128xf32>
    %255 = vector.broadcast %71 : vector<1x128xf32> to vector<8x128xf32>
    %256 = arith.addf %254, %255 : vector<8x128xf32>
    %cst_231 = arith.constant 0.000000e+00 : f32
    %257 = vector.broadcast %cst_231 : f32 to vector<8x128xf32>
    %258 = arith.maximumf %256, %257 : vector<8x128xf32>
    %cst_232 = arith.constant dense<0.000000e+00> : vector<8x64xf32>
    %259 = tpu.matmul %258, %72, %cst_232 {dimension_numbers = #tpu.dot_dimension_numbers<[1], [0], [0], [1], [0, 0, 1, 1], [], []>} : vector<8x128xf32>, vector<128x64xf32>, vector<8x64xf32> -> vector<8x64xf32>
    %260 = vector.broadcast %73 : vector<1x64xf32> to vector<8x64xf32>
    %261 = arith.addf %259, %260 : vector<8x64xf32>
    %cst_233 = arith.constant 0.000000e+00 : f32
    %262 = vector.broadcast %cst_233 : f32 to vector<8x64xf32>
    %263 = arith.maximumf %261, %262 : vector<8x64xf32>
    %cst_234 = arith.constant dense<0.000000e+00> : vector<8x32xf32>
    %264 = tpu.matmul %263, %74, %cst_234 {dimension_numbers = #tpu.dot_dimension_numbers<[1], [0], [0], [1], [0, 0, 1, 1], [], []>} : vector<8x64xf32>, vector<64x32xf32>, vector<8x32xf32> -> vector<8x32xf32>
    %265 = vector.broadcast %75 : vector<1x32xf32> to vector<8x32xf32>
    %266 = arith.addf %264, %265 : vector<8x32xf32>
    %cst_235 = arith.constant 0.000000e+00 : f32
    %267 = vector.broadcast %cst_235 : f32 to vector<8x32xf32>
    %268 = arith.maximumf %266, %267 : vector<8x32xf32>
    %cst_236 = arith.constant dense<0.000000e+00> : vector<8x16xf32>
    %269 = tpu.matmul %268, %76, %cst_236 {dimension_numbers = #tpu.dot_dimension_numbers<[1], [0], [0], [1], [0, 0, 1, 1], [], []>} : vector<8x32xf32>, vector<32x16xf32>, vector<8x16xf32> -> vector<8x16xf32>
    %270 = vector.broadcast %77 : vector<1x16xf32> to vector<8x16xf32>
    %271 = arith.addf %269, %270 : vector<8x16xf32>
    %cst_237 = arith.constant 0.000000e+00 : f32
    %272 = vector.broadcast %cst_237 : f32 to vector<8x16xf32>
    %273 = arith.maximumf %271, %272 : vector<8x16xf32>
    %cst_238 = arith.constant dense<0.000000e+00> : vector<8x8xf32>
    %274 = tpu.matmul %273, %78, %cst_238 {dimension_numbers = #tpu.dot_dimension_numbers<[1], [0], [0], [1], [0, 0, 1, 1], [], []>} : vector<8x16xf32>, vector<16x8xf32>, vector<8x8xf32> -> vector<8x8xf32>
    %275 = vector.broadcast %79 : vector<1x8xf32> to vector<8x8xf32>
    %276 = arith.addf %274, %275 : vector<8x8xf32>
    %277 = tpu.concatenate %200, %251 in 1 : vector<16x16xf32>, vector<16x8xf32> -> vector<16x24xf32>
    %cst_239 = arith.constant dense<0.000000e+00> : vector<16x256xf32>
    %278 = tpu.matmul %277, %60, %cst_239 {dimension_numbers = #tpu.dot_dimension_numbers<[1], [0], [0], [1], [0, 0, 1, 1], [], []>} : vector<16x24xf32>, vector<24x256xf32>, vector<16x256xf32> -> vector<16x256xf32>
    %279 = vector.broadcast %61 : vector<1x256xf32> to vector<16x256xf32>
    %280 = arith.addf %278, %279 : vector<16x256xf32>
    %cst_240 = arith.constant 0.000000e+00 : f32
    %281 = vector.broadcast %cst_240 : f32 to vector<16x256xf32>
    %282 = arith.maximumf %280, %281 : vector<16x256xf32>
    %cst_241 = arith.constant dense<0.000000e+00> : vector<16x128xf32>
    %283 = tpu.matmul %282, %62, %cst_241 {dimension_numbers = #tpu.dot_dimension_numbers<[1], [0], [0], [1], [0, 0, 1, 1], [], []>} : vector<16x256xf32>, vector<256x128xf32>, vector<16x128xf32> -> vector<16x128xf32>
    %284 = vector.broadcast %63 : vector<1x128xf32> to vector<16x128xf32>
    %285 = arith.addf %283, %284 : vector<16x128xf32>
    %cst_242 = arith.constant 0.000000e+00 : f32
    %286 = vector.broadcast %cst_242 : f32 to vector<16x128xf32>
    %287 = arith.maximumf %285, %286 : vector<16x128xf32>
    %cst_243 = arith.constant dense<0.000000e+00> : vector<16x64xf32>
    %288 = tpu.matmul %287, %64, %cst_243 {dimension_numbers = #tpu.dot_dimension_numbers<[1], [0], [0], [1], [0, 0, 1, 1], [], []>} : vector<16x128xf32>, vector<128x64xf32>, vector<16x64xf32> -> vector<16x64xf32>
    %289 = vector.broadcast %65 : vector<1x64xf32> to vector<16x64xf32>
    %290 = arith.addf %288, %289 : vector<16x64xf32>
    %cst_244 = arith.constant 0.000000e+00 : f32
    %291 = vector.broadcast %cst_244 : f32 to vector<16x64xf32>
    %292 = arith.maximumf %290, %291 : vector<16x64xf32>
    %cst_245 = arith.constant dense<0.000000e+00> : vector<16x32xf32>
    %293 = tpu.matmul %292, %66, %cst_245 {dimension_numbers = #tpu.dot_dimension_numbers<[1], [0], [0], [1], [0, 0, 1, 1], [], []>} : vector<16x64xf32>, vector<64x32xf32>, vector<16x32xf32> -> vector<16x32xf32>
    %294 = vector.broadcast %67 : vector<1x32xf32> to vector<16x32xf32>
    %295 = arith.addf %293, %294 : vector<16x32xf32>
    %cst_246 = arith.constant 0.000000e+00 : f32
    %296 = vector.broadcast %cst_246 : f32 to vector<16x32xf32>
    %297 = arith.maximumf %295, %296 : vector<16x32xf32>
    %cst_247 = arith.constant dense<0.000000e+00> : vector<16x8xf32>
    %298 = tpu.matmul %297, %68, %cst_247 {dimension_numbers = #tpu.dot_dimension_numbers<[1], [0], [0], [1], [0, 0, 1, 1], [], []>} : vector<16x32xf32>, vector<32x8xf32>, vector<16x8xf32> -> vector<16x8xf32>
    %299 = vector.broadcast %69 : vector<1x8xf32> to vector<16x8xf32>
    %300 = arith.addf %298, %299 : vector<16x8xf32>
    %c0_248 = arith.constant 0 : index
    %c0_249 = arith.constant 0 : index
    %301 = vector.load %arg85[%c0_248, %c0_249] : memref<8x8xf32, #tpu.memory_space<vmem>>, vector<8x8xf32>
    tpu.vector_store %arg85[%c0_248, %c0_249], %276 {strides = array<i32>} : memref<8x8xf32, #tpu.memory_space<vmem>>, vector<8x8xf32>,
    %c0_250 = arith.constant 0 : index
    %c0_251 = arith.constant 0 : index
    %302 = vector.load %arg86[%c0_250, %c0_251] : memref<16x8xf32, #tpu.memory_space<vmem>>, vector<16x8xf32>
    tpu.vector_store %arg86[%c0_250, %c0_251], %300 {strides = array<i32>} : memref<16x8xf32, #tpu.memory_space<vmem>>, vector<16x8xf32>,
    return
  }
}

</mosaic_0001>

<llo_original>
// kernel: double_gn_forward.1
$region0: #{double_gn_forward.1}
  #allocation0 [shape = 'u32[]', space=smem, size = 0x4, offset = 0x4, fixed_abs, tag = 'smem constant byte address 0x4 - core index']
  #allocation1 [shape = 'u32[144,128]{1,0:T(1,128)}', space=vmem, size = 0x12000, scoped, tag = 'internal scratch']
  %s0 = inlined_call_operand.smem [shape: u32[87], index: -1, kind: input, shape index: {}]
  %s1 = sld [smem:[%s0]]
  %s2 = scalar_lea.smem %s0, 1
  %s3 = sld [smem:[%s2]]
  %s4 = scalar_lea.smem %s0, 2
  %s5 = sld [smem:[%s4]]
  %s6 = scalar_lea.smem %s0, 3
  %s7 = sld [smem:[%s6]]
  %s8 = scalar_lea.smem %s0, 4
  %s9 = sld [smem:[%s8]]
  %s10 = scalar_lea.smem %s0, 5
  %s11 = sld [smem:[%s10]]
  %s12 = scalar_lea.smem %s0, 6
  %s13 = sld [smem:[%s12]]
  %s14 = scalar_lea.smem %s0, 7
  %s15 = sld [smem:[%s14]]
  %s16 = scalar_lea.smem %s0, 8
  %s17 = sld [smem:[%s16]]
  %s18 = scalar_lea.smem %s0, 9
  %s19 = sld [smem:[%s18]]
  %s20 = scalar_lea.smem %s0, 10
  %s21 = sld [smem:[%s20]]
  %s22 = scalar_lea.smem %s0, 11
  %s23 = sld [smem:[%s22]]
  %s24 = scalar_lea.smem %s0, 12
  %s25 = sld [smem:[%s24]]
  %s26 = scalar_lea.smem %s0, 13
  %s27 = sld [smem:[%s26]]
  %s28 = scalar_lea.smem %s0, 14
  %s29 = sld [smem:[%s28]]
  %s30 = scalar_lea.smem %s0, 15
  %s31 = sld [smem:[%s30]]
  %s32 = scalar_lea.smem %s0, 16
  %s33 = sld [smem:[%s32]]
  %s34 = scalar_lea.smem %s0, 17
  %s35 = sld [smem:[%s34]]
  %s36 = scalar_lea.smem %s0, 18
  %s37 = sld [smem:[%s36]]
  %s38 = scalar_lea.smem %s0, 19
  %s39 = sld [smem:[%s38]]
  %s40 = scalar_lea.smem %s0, 20
  %s41 = sld [smem:[%s40]]
  %s42 = scalar_lea.smem %s0, 21
  %s43 = sld [smem:[%s42]]
  %s44 = scalar_lea.smem %s0, 22
  %s45 = sld [smem:[%s44]]
  %s46 = scalar_lea.smem %s0, 23
  %s47 = sld [smem:[%s46]]
  %s48 = scalar_lea.smem %s0, 24
  %s49 = sld [smem:[%s48]]
  %s50 = scalar_lea.smem %s0, 25
  %s51 = sld [smem:[%s50]]
  %s52 = scalar_lea.smem %s0, 26
  %s53 = sld [smem:[%s52]]
  %s54 = scalar_lea.smem %s0, 27
  %s55 = sld [smem:[%s54]]
  %s56 = scalar_lea.smem %s0, 28
  %s57 = sld [smem:[%s56]]
  %s58 = scalar_lea.smem %s0, 29
  %s59 = sld [smem:[%s58]]
  %s60 = scalar_lea.smem %s0, 30
  %s61 = sld [smem:[%s60]]
  %s62 = scalar_lea.smem %s0, 31
  %s63 = sld [smem:[%s62]]
  %s64 = scalar_lea.smem %s0, 32
  %s65 = sld [smem:[%s64]]
  %s66 = scalar_lea.smem %s0, 33
  %s67 = sld [smem:[%s66]]
  %s68 = scalar_lea.smem %s0, 34
  %s69 = sld [smem:[%s68]]
  %s70 = scalar_lea.smem %s0, 35
  %s71 = sld [smem:[%s70]]
  %s72 = scalar_lea.smem %s0, 36
  %s73 = sld [smem:[%s72]]
  %s74 = scalar_lea.smem %s0, 37
  %s75 = sld [smem:[%s74]]
  %s76 = scalar_lea.smem %s0, 38
  %s77 = sld [smem:[%s76]]
  %s78 = scalar_lea.smem %s0, 39
  %s79 = sld [smem:[%s78]]
  %s80 = scalar_lea.smem %s0, 40
  %s81 = sld [smem:[%s80]]
  %s82 = scalar_lea.smem %s0, 41
  %s83 = sld [smem:[%s82]]
  %s84 = scalar_lea.smem %s0, 42
  %s85 = sld [smem:[%s84]]
  %s86 = scalar_lea.smem %s0, 43
  %s87 = sld [smem:[%s86]]
  %s88 = scalar_lea.smem %s0, 44
  %s89 = sld [smem:[%s88]]
  %s90 = scalar_lea.smem %s0, 45
  %s91 = sld [smem:[%s90]]
  %s92 = scalar_lea.smem %s0, 46
  %s93 = sld [smem:[%s92]]
  %s94 = scalar_lea.smem %s0, 47
  %s95 = sld [smem:[%s94]]
  %s96 = scalar_lea.smem %s0, 48
  %s97 = sld [smem:[%s96]]
  %s98 = scalar_lea.smem %s0, 49
  %s99 = sld [smem:[%s98]]
  %s100 = scalar_lea.smem %s0, 50
  %s101 = sld [smem:[%s100]]
  %s102 = scalar_lea.smem %s0, 51
  %s103 = sld [smem:[%s102]]
  %s104 = scalar_lea.smem %s0, 52
  %s105 = sld [smem:[%s104]]
  %s106 = scalar_lea.smem %s0, 53
  %s107 = sld [smem:[%s106]]
  %s108 = scalar_lea.smem %s0, 54
  %s109 = sld [smem:[%s108]]
  %s110 = scalar_lea.smem %s0, 55
  %s111 = sld [smem:[%s110]]
  %s112 = scalar_lea.smem %s0, 56
  %s113 = sld [smem:[%s112]]
  %s114 = scalar_lea.smem %s0, 57
  %s115 = sld [smem:[%s114]]
  %s116 = scalar_lea.smem %s0, 58
  %s117 = sld [smem:[%s116]]
  %s118 = scalar_lea.smem %s0, 59
  %s119 = sld [smem:[%s118]]
  %s120 = scalar_lea.smem %s0, 60
  %s121 = sld [smem:[%s120]]
  %s122 = scalar_lea.smem %s0, 61
  %s123 = sld [smem:[%s122]]
  %s124 = scalar_lea.smem %s0, 62
  %s125 = sld [smem:[%s124]]
  %s126 = scalar_lea.smem %s0, 63
  %s127 = sld [smem:[%s126]]
  %s128 = scalar_lea.smem %s0, 64
  %s129 = sld [smem:[%s128]]
  %s130 = scalar_lea.smem %s0, 65
  %s131 = sld [smem:[%s130]]
  %s132 = scalar_lea.smem %s0, 66
  %s133 = sld [smem:[%s132]]
  %s134 = scalar_lea.smem %s0, 67
  %s135 = sld [smem:[%s134]]
  %s136 = scalar_lea.smem %s0, 68
  %s137 = sld [smem:[%s136]]
  %s138 = scalar_lea.smem %s0, 69
  %s139 = sld [smem:[%s138]]
  %s140 = scalar_lea.smem %s0, 70
  %s141 = sld [smem:[%s140]]
  %s142 = scalar_lea.smem %s0, 71
  %s143 = sld [smem:[%s142]]
  %s144 = scalar_lea.smem %s0, 72
  %s145 = sld [smem:[%s144]]
  %s146 = scalar_lea.smem %s0, 73
  %s147 = sld [smem:[%s146]]
  %s148 = scalar_lea.smem %s0, 74
  %s149 = sld [smem:[%s148]]
  %s150 = scalar_lea.smem %s0, 75
  %s151 = sld [smem:[%s150]]
  %s152 = scalar_lea.smem %s0, 76
  %s153 = sld [smem:[%s152]]
  %s154 = scalar_lea.smem %s0, 77
  %s155 = sld [smem:[%s154]]
  %s156 = scalar_lea.smem %s0, 78
  %s157 = sld [smem:[%s156]]
  %s158 = scalar_lea.smem %s0, 79
  %s159 = sld [smem:[%s158]]
  %s160 = scalar_lea.smem %s0, 80
  %s161 = sld [smem:[%s160]]
  %s162 = scalar_lea.smem %s0, 81
  %s163 = sld [smem:[%s162]]
  %s164 = scalar_lea.smem %s0, 82
  %s165 = sld [smem:[%s164]]
  %s166 = scalar_lea.smem %s0, 83
  %s167 = sld [smem:[%s166]]
  %s168 = scalar_lea.smem %s0, 84
  %s169 = sld [smem:[%s168]]
  %s170 = scalar_lea.smem %s0, 85
  %s171 = sld [smem:[%s170]]
  %s172 = scalar_lea.smem %s0, 86
  %s173 = sld [smem:[%s172]]
  %174 = xla_tuple %s171, %s173
  %s175 = sld [smem:[#allocation0]]
  $region510: #{double_gn_forward.1} parent=0
    _
  %s177 = ssub.s32 1, %s175
  %s178 = scalar_select 0, %s177, %s175
  $region1: #{double_gn_forward.1} parent=0
    #allocation2 [shape = 'u8[512]{0}', space=vmem, size = 0x400, scoped, tag = 'input window, operand 6, single buffered']
    #allocation3 [shape = 's32[1]{0}', space=sflag, size = 0x4, scoped, tag = 'scoped memory for double_gn_forward.1']
    #allocation4 [shape = 's32[1]{0}', space=sflag, size = 0x4, scoped, tag = 'scoped memory for double_gn_forward.1']
    #allocation5 [shape = 'u8[512]{0}', space=vmem, size = 0x400, scoped, tag = 'input window, operand 8, single buffered']
    #allocation6 [shape = 's32[1]{0}', space=sflag, size = 0x4, scoped, tag = 'scoped memory for double_gn_forward.1']
    #allocation7 [shape = 'u8[512]{0}', space=vmem, size = 0x400, scoped, tag = 'input window, operand 10, single buffered']
    #allocation8 [shape = 'u8[512]{0}', space=vmem, size = 0x400, scoped, tag = 'input window, operand 12, single buffered']
    #allocation9 [shape = 's32[1]{0}', space=sflag, size = 0x4, scoped, tag = 'scoped memory for double_gn_forward.1']
    #allocation10 [shape = 'u8[512]{0}', space=vmem, size = 0x400, scoped, tag = 'input window, operand 14, single buffered']
    #allocation11 [shape = 'u8[512]{0}', space=vmem, size = 0x400, scoped, tag = 'input window, operand 16, single buffered']
    #allocation12 [shape = 's32[1]{0}', space=sflag, size = 0x4, scoped, tag = 'scoped memory for double_gn_forward.1']
    #allocation13 [shape = 'u8[512]{0}', space=vmem, size = 0x400, scoped, tag = 'input window, operand 18, single buffered']
    #allocation14 [shape = 'u8[512]{0}', space=vmem, size = 0x400, scoped, tag = 'input window, operand 20, single buffered']
    #allocation15 [shape = 's32[1]{0}', space=sflag, size = 0x4, scoped, tag = 'scoped memory for double_gn_forward.1']
    #allocation16 [shape = 'u8[512]{0}', space=vmem, size = 0x400, scoped, tag = 'input window, operand 22, single buffered']
    #allocation17 [shape = 'u8[512]{0}', space=vmem, size = 0x400, scoped, tag = 'input window, operand 24, single buffered']
    #allocation18 [shape = 's32[1]{0}', space=sflag, size = 0x4, scoped, tag = 'scoped memory for double_gn_forward.1']
    #allocation19 [shape = 'u8[512]{0}', space=vmem, size = 0x400, scoped, tag = 'input window, operand 26, single buffered']
    #allocation20 [shape = 'u8[512]{0}', space=vmem, size = 0x400, scoped, tag = 'input window, operand 28, single buffered']
    #allocation21 [shape = 's32[1]{0}', space=sflag, size = 0x4, scoped, tag = 'scoped memory for double_gn_forward.1']
    #allocation22 [shape = 'u8[512]{0}', space=vmem, size = 0x400, scoped, tag = 'input window, operand 30, single buffered']
    #allocation23 [shape = 'u8[512]{0}', space=vmem, size = 0x400, scoped, tag = 'input window, operand 32, single buffered']
    #allocation24 [shape = 's32[1]{0}', space=sflag, size = 0x4, scoped, tag = 'scoped memory for double_gn_forward.1']
    #allocation25 [shape = 'u8[512]{0}', space=vmem, size = 0x400, scoped, tag = 'input window, operand 34, single buffered']
    #allocation26 [shape = 'u8[512]{0}', space=vmem, size = 0x400, scoped, tag = 'input window, operand 36, single buffered']
    #allocation27 [shape = 's32[1]{0}', space=sflag, size = 0x4, scoped, tag = 'scoped memory for double_gn_forward.1']
    #allocation28 [shape = 'u8[512]{0}', space=vmem, size = 0x400, scoped, tag = 'input window, operand 38, single buffered']
    #allocation29 [shape = 'u8[512]{0}', space=vmem, size = 0x400, scoped, tag = 'input window, operand 40, single buffered']
    #allocation30 [shape = 's32[1]{0}', space=sflag, size = 0x4, scoped, tag = 'scoped memory for double_gn_forward.1']
    #allocation31 [shape = 'u8[512]{0}', space=vmem, size = 0x400, scoped, tag = 'input window, operand 42, single buffered']
    #allocation32 [shape = 'u8[512]{0}', space=vmem, size = 0x400, scoped, tag = 'input window, operand 44, single buffered']
    #allocation33 [shape = 's32[1]{0}', space=sflag, size = 0x4, scoped, tag = 'scoped memory for double_gn_forward.1']
    #allocation34 [shape = 'u8[512]{0}', space=vmem, size = 0x400, scoped, tag = 'input window, operand 48, single buffered']
    #allocation35 [shape = 'u8[512]{0}', space=vmem, size = 0x400, scoped, tag = 'input window, operand 50, single buffered']
    #allocation36 [shape = 's32[1]{0}', space=sflag, size = 0x4, scoped, tag = 'scoped memory for double_gn_forward.1']
    #allocation37 [shape = 'u8[512]{0}', space=vmem, size = 0x400, scoped, tag = 'input window, operand 52, single buffered']
    #allocation38 [shape = 'u8[512]{0}', space=vmem, size = 0x400, scoped, tag = 'input window, operand 54, single buffered']
    #allocation39 [shape = 's32[1]{0}', space=sflag, size = 0x4, scoped, tag = 'scoped memory for double_gn_forward.1']
    #allocation40 [shape = 'u8[512]{0}', space=vmem, size = 0x400, scoped, tag = 'input window, operand 58, single buffered']
    #allocation41 [shape = 'u8[512]{0}', space=vmem, size = 0x400, scoped, tag = 'input window, operand 60, single buffered']
    #allocation42 [shape = 's32[1]{0}', space=sflag, size = 0x4, scoped, tag = 'scoped memory for double_gn_forward.1']
    #allocation43 [shape = 'u8[512]{0}', space=vmem, size = 0x400, scoped, tag = 'input window, operand 62, single buffered']
    #allocation44 [shape = 'u8[512]{0}', space=vmem, size = 0x400, scoped, tag = 'input window, operand 64, single buffered']
    #allocation45 [shape = 's32[1]{0}', space=sflag, size = 0x4, scoped, tag = 'scoped memory for double_gn_forward.1']
    #allocation46 [shape = 'u8[1024]{0}', space=vmem, size = 0x400, scoped, tag = 'input window, operand 66, single buffered']
    #allocation47 [shape = 'u8[512]{0}', space=vmem, size = 0x400, scoped, tag = 'input window, operand 68, single buffered']
    #allocation48 [shape = 's32[1]{0}', space=sflag, size = 0x4, scoped, tag = 'scoped memory for double_gn_forward.1']
    #allocation49 [shape = 'u8[512]{0}', space=vmem, size = 0x400, scoped, tag = 'input window, operand 70, single buffered']
    #allocation50 [shape = 'u8[512]{0}', space=vmem, size = 0x400, scoped, tag = 'input window, operand 72, single buffered']
    #allocation51 [shape = 's32[1]{0}', space=sflag, size = 0x4, scoped, tag = 'scoped memory for double_gn_forward.1']
    #allocation52 [shape = 'u8[512]{0}', space=vmem, size = 0x400, scoped, tag = 'input window, operand 74, single buffered']
    #allocation53 [shape = 'u8[512]{0}', space=vmem, size = 0x400, scoped, tag = 'input window, operand 76, single buffered']
    #allocation54 [shape = 's32[1]{0}', space=sflag, size = 0x4, scoped, tag = 'scoped memory for double_gn_forward.1']
    #allocation55 [shape = 'u8[512]{0}', space=vmem, size = 0x400, scoped, tag = 'input window, operand 78, single buffered']
    #allocation56 [shape = 'u8[512]{0}', space=vmem, size = 0x400, scoped, tag = 'input window, operand 80, single buffered']
    #allocation57 [shape = 's32[1]{0}', space=sflag, size = 0x4, scoped, tag = 'scoped memory for double_gn_forward.1']
    #allocation58 [shape = 'u8[512]{0}', space=vmem, size = 0x400, scoped, tag = 'input window, operand 82, single buffered']
    #allocation59 [shape = 'u8[512]{0}', space=vmem, size = 0x400, scoped, tag = 'input window, operand 84, single buffered']
    #allocation60 [shape = 's32[1]{0}', space=sflag, size = 0x4, scoped, tag = 'scoped memory for double_gn_forward.1']
    #allocation61 [shape = 'u8[4096]{0}', space=vmem, size = 0x1000, scoped, tag = 'output window, operand 0, single buffered']
    %179 = vsyncpa [#allocation3], 0
    %180 = vsyncpa [#allocation6], 0
    %181 = vsyncpa [#allocation9], 0
    %182 = vsyncpa [#allocation12], 0
    %183 = vsyncpa [#allocation15], 0
    %184 = vsyncpa [#allocation18], 0
    %185 = vsyncpa [#allocation21], 0
    %186 = vsyncpa [#allocation24], 0
    %187 = vsyncpa [#allocation27], 0
    %188 = vsyncpa [#allocation30], 0
    %189 = vsyncpa [#allocation33], 0
    %190 = vsyncpa [#allocation36], 0
    %191 = vsyncpa [#allocation39], 0
    %192 = vsyncpa [#allocation42], 0
    %193 = vsyncpa [#allocation45], 0
    %194 = vsyncpa [#allocation48], 0
    %195 = vsyncpa [#allocation51], 0
    %196 = vsyncpa [#allocation54], 0
    %197 = vsyncpa [#allocation57], 0
    %198 = vsyncpa [#allocation60], 0
    %199 = vsyncpa [#allocation4], 0
    // Predicated region
    $region2: #{double_gn_forward.1} parent=1 // pred_check
      _
    $region3: #{double_gn_forward.1} parent=1 // pred_check_branch
      %201 = sbr.rel (0) target = $region5
    $region4: #{double_gn_forward.1} parent=1 // pred_region
      _
    $region5: #{double_gn_forward.1} parent=1 // pred_fallthru
      _
    // Predicated region
    $region6: #{double_gn_forward.1} parent=1 // pred_check
      _
    $region7: #{double_gn_forward.1} parent=1 // pred_check_branch
      %203 = sbr.rel (0) target = $region9
    $region8: #{double_gn_forward.1} parent=1 // pred_region
      _
    $region9: #{double_gn_forward.1} parent=1 // pred_fallthru
      _
    // Predicated region
    $region10: #{double_gn_forward.1} parent=1 // pred_check
      _
    $region11: #{double_gn_forward.1} parent=1 // pred_check_branch
      %205 = sbr.rel (0) target = $region13
    $region12: #{double_gn_forward.1} parent=1 // pred_region
      _
    $region13: #{double_gn_forward.1} parent=1 // pred_fallthru
      _
    // Predicated region
    $region14: #{double_gn_forward.1} parent=1 // pred_check
      _
    $region15: #{double_gn_forward.1} parent=1 // pred_check_branch
      %207 = sbr.rel (0) target = $region17
    $region16: #{double_gn_forward.1} parent=1 // pred_region
      _
    $region17: #{double_gn_forward.1} parent=1 // pred_fallthru
      _
    // Predicated region
    $region18: #{double_gn_forward.1} parent=1 // pred_check
      _
    $region19: #{double_gn_forward.1} parent=1 // pred_check_branch
      %209 = sbr.rel (0) target = $region21
    $region20: #{double_gn_forward.1} parent=1 // pred_region
      _
    $region21: #{double_gn_forward.1} parent=1 // pred_fallthru
      _
    // Predicated region
    $region22: #{double_gn_forward.1} parent=1 // pred_check
      _
    $region23: #{double_gn_forward.1} parent=1 // pred_check_branch
      %211 = sbr.rel (0) target = $region25
    $region24: #{double_gn_forward.1} parent=1 // pred_region
      _
    $region25: #{double_gn_forward.1} parent=1 // pred_fallthru
      _
    // Predicated region
    $region26: #{double_gn_forward.1} parent=1 // pred_check
      _
    $region27: #{double_gn_forward.1} parent=1 // pred_check_branch
      %213 = sbr.rel (0) target = $region29
    $region28: #{double_gn_forward.1} parent=1 // pred_region
      %s215 = ssub.s32 16, 16
      %216 = vsyncadd [#allocation3], %s215
      %s218 = sshll.u32 [#allocation2], 4
      %s219 = int_to_ptr.vmem [resolvable:$true] %s218
      %221 = dma.hbm_to_vmem [thread:$0]  %s13, 16, %s219, [#allocation3]
    $region29: #{double_gn_forward.1} parent=1 // pred_fallthru
      _
    // Predicated region
    $region30: #{double_gn_forward.1} parent=1 // pred_check
      _
    $region31: #{double_gn_forward.1} parent=1 // pred_check_branch
      %223 = sbr.rel (0) target = $region33
    $region32: #{double_gn_forward.1} parent=1 // pred_region
      _
    $region33: #{double_gn_forward.1} parent=1 // pred_fallthru
      _
    // Predicated region
    $region34: #{double_gn_forward.1} parent=1 // pred_check
      _
    $region35: #{double_gn_forward.1} parent=1 // pred_check_branch
      %225 = sbr.rel (0) target = $region37
    $region36: #{double_gn_forward.1} parent=1 // pred_region
      %s227 = ssub.s32 16, 16
      %228 = vsyncadd [#allocation6], %s227
      %s230 = sshll.u32 [#allocation5], 4
      %s231 = int_to_ptr.vmem [resolvable:$true] %s230
      %233 = dma.hbm_to_vmem [thread:$0]  %s17, 16, %s231, [#allocation6]
    $region37: #{double_gn_forward.1} parent=1 // pred_fallthru
      _
    // Predicated region
    $region38: #{double_gn_forward.1} parent=1 // pred_check
      _
    $region39: #{double_gn_forward.1} parent=1 // pred_check_branch
      %235 = sbr.rel (0) target = $region41
    $region40: #{double_gn_forward.1} parent=1 // pred_region
      _
    $region41: #{double_gn_forward.1} parent=1 // pred_fallthru
      _
    // Predicated region
    $region42: #{double_gn_forward.1} parent=1 // pred_check
      _
    $region43: #{double_gn_forward.1} parent=1 // pred_check_branch
      %237 = sbr.rel (0) target = $region45
    $region44: #{double_gn_forward.1} parent=1 // pred_region
      %s239 = ssub.s32 16, 16
      %240 = vsyncadd [#allocation6], %s239
      %s242 = sshll.u32 [#allocation7], 4
      %s243 = int_to_ptr.vmem [resolvable:$true] %s242
      %245 = dma.hbm_to_vmem [thread:$0]  %s21, 16, %s243, [#allocation6]
    $region45: #{double_gn_forward.1} parent=1 // pred_fallthru
      _
    // Predicated region
    $region46: #{double_gn_forward.1} parent=1 // pred_check
      _
    $region47: #{double_gn_forward.1} parent=1 // pred_check_branch
      %247 = sbr.rel (0) target = $region49
    $region48: #{double_gn_forward.1} parent=1 // pred_region
      _
    $region49: #{double_gn_forward.1} parent=1 // pred_fallthru
      _
    // Predicated region
    $region50: #{double_gn_forward.1} parent=1 // pred_check
      _
    $region51: #{double_gn_forward.1} parent=1 // pred_check_branch
      %249 = sbr.rel (0) target = $region53
    $region52: #{double_gn_forward.1} parent=1 // pred_region
      %s251 = ssub.s32 16, 16
      %252 = vsyncadd [#allocation9], %s251
      %s254 = sshll.u32 [#allocation8], 4
      %s255 = int_to_ptr.vmem [resolvable:$true] %s254
      %257 = dma.hbm_to_vmem [thread:$0]  %s25, 16, %s255, [#allocation9]
    $region53: #{double_gn_forward.1} parent=1 // pred_fallthru
      _
    // Predicated region
    $region54: #{double_gn_forward.1} parent=1 // pred_check
      _
    $region55: #{double_gn_forward.1} parent=1 // pred_check_branch
      %259 = sbr.rel (0) target = $region57
    $region56: #{double_gn_forward.1} parent=1 // pred_region
      _
    $region57: #{double_gn_forward.1} parent=1 // pred_fallthru
      _
    // Predicated region
    $region58: #{double_gn_forward.1} parent=1 // pred_check
      _
    $region59: #{double_gn_forward.1} parent=1 // pred_check_branch
      %261 = sbr.rel (0) target = $region61
    $region60: #{double_gn_forward.1} parent=1 // pred_region
      %s263 = ssub.s32 16, 16
      %264 = vsyncadd [#allocation9], %s263
      %s266 = sshll.u32 [#allocation10], 4
      %s267 = int_to_ptr.vmem [resolvable:$true] %s266
      %269 = dma.hbm_to_vmem [thread:$0]  %s29, 16, %s267, [#allocation9]
    $region61: #{double_gn_forward.1} parent=1 // pred_fallthru
      _
    // Predicated region
    $region62: #{double_gn_forward.1} parent=1 // pred_check
      _
    $region63: #{double_gn_forward.1} parent=1 // pred_check_branch
      %271 = sbr.rel (0) target = $region65
    $region64: #{double_gn_forward.1} parent=1 // pred_region
      _
    $region65: #{double_gn_forward.1} parent=1 // pred_fallthru
      _
    // Predicated region
    $region66: #{double_gn_forward.1} parent=1 // pred_check
      _
    $region67: #{double_gn_forward.1} parent=1 // pred_check_branch
      %273 = sbr.rel (0) target = $region69
    $region68: #{double_gn_forward.1} parent=1 // pred_region
      %s275 = ssub.s32 16, 16
      %276 = vsyncadd [#allocation12], %s275
      %s278 = sshll.u32 [#allocation11], 4
      %s279 = int_to_ptr.vmem [resolvable:$true] %s278
      %281 = dma.hbm_to_vmem [thread:$0]  %s33, 16, %s279, [#allocation12]
    $region69: #{double_gn_forward.1} parent=1 // pred_fallthru
      _
    // Predicated region
    $region70: #{double_gn_forward.1} parent=1 // pred_check
      _
    $region71: #{double_gn_forward.1} parent=1 // pred_check_branch
      %283 = sbr.rel (0) target = $region73
    $region72: #{double_gn_forward.1} parent=1 // pred_region
      _
    $region73: #{double_gn_forward.1} parent=1 // pred_fallthru
      _
    // Predicated region
    $region74: #{double_gn_forward.1} parent=1 // pred_check
      _
    $region75: #{double_gn_forward.1} parent=1 // pred_check_branch
      %285 = sbr.rel (0) target = $region77
    $region76: #{double_gn_forward.1} parent=1 // pred_region
      %s287 = ssub.s32 16, 16
      %288 = vsyncadd [#allocation12], %s287
      %s290 = sshll.u32 [#allocation13], 4
      %s291 = int_to_ptr.vmem [resolvable:$true] %s290
      %293 = dma.hbm_to_vmem [thread:$0]  %s37, 16, %s291, [#allocation12]
    $region77: #{double_gn_forward.1} parent=1 // pred_fallthru
      _
    // Predicated region
    $region78: #{double_gn_forward.1} parent=1 // pred_check
      _
    $region79: #{double_gn_forward.1} parent=1 // pred_check_branch
      %295 = sbr.rel (0) target = $region81
    $region80: #{double_gn_forward.1} parent=1 // pred_region
      _
    $region81: #{double_gn_forward.1} parent=1 // pred_fallthru
      _
    // Predicated region
    $region82: #{double_gn_forward.1} parent=1 // pred_check
      _
    $region83: #{double_gn_forward.1} parent=1 // pred_check_branch
      %297 = sbr.rel (0) target = $region85
    $region84: #{double_gn_forward.1} parent=1 // pred_region
      %s299 = ssub.s32 16, 16
      %300 = vsyncadd [#allocation15], %s299
      %s302 = sshll.u32 [#allocation14], 4
      %s303 = int_to_ptr.vmem [resolvable:$true] %s302
      %305 = dma.hbm_to_vmem [thread:$0]  %s41, 16, %s303, [#allocation15]
    $region85: #{double_gn_forward.1} parent=1 // pred_fallthru
      _
    // Predicated region
    $region86: #{double_gn_forward.1} parent=1 // pred_check
      _
    $region87: #{double_gn_forward.1} parent=1 // pred_check_branch
      %307 = sbr.rel (0) target = $region89
    $region88: #{double_gn_forward.1} parent=1 // pred_region
      _
    $region89: #{double_gn_forward.1} parent=1 // pred_fallthru
      _
    // Predicated region
    $region90: #{double_gn_forward.1} parent=1 // pred_check
      _
    $region91: #{double_gn_forward.1} parent=1 // pred_check_branch
      %309 = sbr.rel (0) target = $region93
    $region92: #{double_gn_forward.1} parent=1 // pred_region
      %s311 = ssub.s32 16, 16
      %312 = vsyncadd [#allocation15], %s311
      %s314 = sshll.u32 [#allocation16], 4
      %s315 = int_to_ptr.vmem [resolvable:$true] %s314
      %317 = dma.hbm_to_vmem [thread:$0]  %s45, 16, %s315, [#allocation15]
    $region93: #{double_gn_forward.1} parent=1 // pred_fallthru
      _
    // Predicated region
    $region94: #{double_gn_forward.1} parent=1 // pred_check
      _
    $region95: #{double_gn_forward.1} parent=1 // pred_check_branch
      %319 = sbr.rel (0) target = $region97
    $region96: #{double_gn_forward.1} parent=1 // pred_region
      _
    $region97: #{double_gn_forward.1} parent=1 // pred_fallthru
      _
    // Predicated region
    $region98: #{double_gn_forward.1} parent=1 // pred_check
      _
    $region99: #{double_gn_forward.1} parent=1 // pred_check_branch
      %321 = sbr.rel (0) target = $region101
    $region100: #{double_gn_forward.1} parent=1 // pred_region
      %s323 = ssub.s32 16, 16
      %324 = vsyncadd [#allocation18], %s323
      %s326 = sshll.u32 [#allocation17], 4
      %s327 = int_to_ptr.vmem [resolvable:$true] %s326
      %329 = dma.hbm_to_vmem [thread:$0]  %s49, 16, %s327, [#allocation18]
    $region101: #{double_gn_forward.1} parent=1 // pred_fallthru
      _
    // Predicated region
    $region102: #{double_gn_forward.1} parent=1 // pred_check
      _
    $region103: #{double_gn_forward.1} parent=1 // pred_check_branch
      %331 = sbr.rel (0) target = $region105
    $region104: #{double_gn_forward.1} parent=1 // pred_region
      _
    $region105: #{double_gn_forward.1} parent=1 // pred_fallthru
      _
    // Predicated region
    $region106: #{double_gn_forward.1} parent=1 // pred_check
      _
    $region107: #{double_gn_forward.1} parent=1 // pred_check_branch
      %333 = sbr.rel (0) target = $region109
    $region108: #{double_gn_forward.1} parent=1 // pred_region
      %s335 = ssub.s32 16, 16
      %336 = vsyncadd [#allocation18], %s335
      %s338 = sshll.u32 [#allocation19], 4
      %s339 = int_to_ptr.vmem [resolvable:$true] %s338
      %341 = dma.hbm_to_vmem [thread:$0]  %s53, 16, %s339, [#allocation18]
    $region109: #{double_gn_forward.1} parent=1 // pred_fallthru
      _
    // Predicated region
    $region110: #{double_gn_forward.1} parent=1 // pred_check
      _
    $region111: #{double_gn_forward.1} parent=1 // pred_check_branch
      %343 = sbr.rel (0) target = $region113
    $region112: #{double_gn_forward.1} parent=1 // pred_region
      _
    $region113: #{double_gn_forward.1} parent=1 // pred_fallthru
      _
    // Predicated region
    $region114: #{double_gn_forward.1} parent=1 // pred_check
      _
    $region115: #{double_gn_forward.1} parent=1 // pred_check_branch
      %345 = sbr.rel (0) target = $region117
    $region116: #{double_gn_forward.1} parent=1 // pred_region
      %s347 = ssub.s32 16, 16
      %348 = vsyncadd [#allocation21], %s347
      %s350 = sshll.u32 [#allocation20], 4
      %s351 = int_to_ptr.vmem [resolvable:$true] %s350
      %353 = dma.hbm_to_vmem [thread:$0]  %s57, 16, %s351, [#allocation21]
    $region117: #{double_gn_forward.1} parent=1 // pred_fallthru
      _
    // Predicated region
    $region118: #{double_gn_forward.1} parent=1 // pred_check
      _
    $region119: #{double_gn_forward.1} parent=1 // pred_check_branch
      %355 = sbr.rel (0) target = $region121
    $region120: #{double_gn_forward.1} parent=1 // pred_region
      _
    $region121: #{double_gn_forward.1} parent=1 // pred_fallthru
      _
    // Predicated region
    $region122: #{double_gn_forward.1} parent=1 // pred_check
      _
    $region123: #{double_gn_forward.1} parent=1 // pred_check_branch
      %357 = sbr.rel (0) target = $region125
    $region124: #{double_gn_forward.1} parent=1 // pred_region
      %s359 = ssub.s32 16, 16
      %360 = vsyncadd [#allocation21], %s359
      %s362 = sshll.u32 [#allocation22], 4
      %s363 = int_to_ptr.vmem [resolvable:$true] %s362
      %365 = dma.hbm_to_vmem [thread:$0]  %s61, 16, %s363, [#allocation21]
    $region125: #{double_gn_forward.1} parent=1 // pred_fallthru
      _
    // Predicated region
    $region126: #{double_gn_forward.1} parent=1 // pred_check
      _
    $region127: #{double_gn_forward.1} parent=1 // pred_check_branch
      %367 = sbr.rel (0) target = $region129
    $region128: #{double_gn_forward.1} parent=1 // pred_region
      _
    $region129: #{double_gn_forward.1} parent=1 // pred_fallthru
      _
    // Predicated region
    $region130: #{double_gn_forward.1} parent=1 // pred_check
      _
    $region131: #{double_gn_forward.1} parent=1 // pred_check_branch
      %369 = sbr.rel (0) target = $region133
    $region132: #{double_gn_forward.1} parent=1 // pred_region
      %s371 = ssub.s32 16, 16
      %372 = vsyncadd [#allocation24], %s371
      %s374 = sshll.u32 [#allocation23], 4
      %s375 = int_to_ptr.vmem [resolvable:$true] %s374
      %377 = dma.hbm_to_vmem [thread:$0]  %s65, 16, %s375, [#allocation24]
    $region133: #{double_gn_forward.1} parent=1 // pred_fallthru
      _
    // Predicated region
    $region134: #{double_gn_forward.1} parent=1 // pred_check
      _
    $region135: #{double_gn_forward.1} parent=1 // pred_check_branch
      %379 = sbr.rel (0) target = $region137
    $region136: #{double_gn_forward.1} parent=1 // pred_region
      _
    $region137: #{double_gn_forward.1} parent=1 // pred_fallthru
      _
    // Predicated region
    $region138: #{double_gn_forward.1} parent=1 // pred_check
      _
    $region139: #{double_gn_forward.1} parent=1 // pred_check_branch
      %381 = sbr.rel (0) target = $region141
    $region140: #{double_gn_forward.1} parent=1 // pred_region
      %s383 = ssub.s32 16, 16
      %384 = vsyncadd [#allocation24], %s383
      %s386 = sshll.u32 [#allocation25], 4
      %s387 = int_to_ptr.vmem [resolvable:$true] %s386
      %389 = dma.hbm_to_vmem [thread:$0]  %s69, 16, %s387, [#allocation24]
    $region141: #{double_gn_forward.1} parent=1 // pred_fallthru
      _
    // Predicated region
    $region142: #{double_gn_forward.1} parent=1 // pred_check
      _
    $region143: #{double_gn_forward.1} parent=1 // pred_check_branch
      %391 = sbr.rel (0) target = $region145
    $region144: #{double_gn_forward.1} parent=1 // pred_region
      _
    $region145: #{double_gn_forward.1} parent=1 // pred_fallthru
      _
    // Predicated region
    $region146: #{double_gn_forward.1} parent=1 // pred_check
      _
    $region147: #{double_gn_forward.1} parent=1 // pred_check_branch
      %393 = sbr.rel (0) target = $region149
    $region148: #{double_gn_forward.1} parent=1 // pred_region
      %s395 = ssub.s32 16, 16
      %396 = vsyncadd [#allocation27], %s395
      %s398 = sshll.u32 [#allocation26], 4
      %s399 = int_to_ptr.vmem [resolvable:$true] %s398
      %401 = dma.hbm_to_vmem [thread:$0]  %s73, 16, %s399, [#allocation27]
    $region149: #{double_gn_forward.1} parent=1 // pred_fallthru
      _
    // Predicated region
    $region150: #{double_gn_forward.1} parent=1 // pred_check
      _
    $region151: #{double_gn_forward.1} parent=1 // pred_check_branch
      %403 = sbr.rel (0) target = $region153
    $region152: #{double_gn_forward.1} parent=1 // pred_region
      _
    $region153: #{double_gn_forward.1} parent=1 // pred_fallthru
      _
    // Predicated region
    $region154: #{double_gn_forward.1} parent=1 // pred_check
      _
    $region155: #{double_gn_forward.1} parent=1 // pred_check_branch
      %405 = sbr.rel (0) target = $region157
    $region156: #{double_gn_forward.1} parent=1 // pred_region
      %s407 = ssub.s32 16, 16
      %408 = vsyncadd [#allocation27], %s407
      %s410 = sshll.u32 [#allocation28], 4
      %s411 = int_to_ptr.vmem [resolvable:$true] %s410
      %413 = dma.hbm_to_vmem [thread:$0]  %s77, 16, %s411, [#allocation27]
    $region157: #{double_gn_forward.1} parent=1 // pred_fallthru
      _
    // Predicated region
    $region158: #{double_gn_forward.1} parent=1 // pred_check
      _
    $region159: #{double_gn_forward.1} parent=1 // pred_check_branch
      %415 = sbr.rel (0) target = $region161
    $region160: #{double_gn_forward.1} parent=1 // pred_region
      _
    $region161: #{double_gn_forward.1} parent=1 // pred_fallthru
      _
    // Predicated region
    $region162: #{double_gn_forward.1} parent=1 // pred_check
      _
    $region163: #{double_gn_forward.1} parent=1 // pred_check_branch
      %417 = sbr.rel (0) target = $region165
    $region164: #{double_gn_forward.1} parent=1 // pred_region
      %s419 = ssub.s32 16, 16
      %420 = vsyncadd [#allocation30], %s419
      %s422 = sshll.u32 [#allocation29], 4
      %s423 = int_to_ptr.vmem [resolvable:$true] %s422
      %425 = dma.hbm_to_vmem [thread:$0]  %s81, 16, %s423, [#allocation30]
    $region165: #{double_gn_forward.1} parent=1 // pred_fallthru
      _
    // Predicated region
    $region166: #{double_gn_forward.1} parent=1 // pred_check
      _
    $region167: #{double_gn_forward.1} parent=1 // pred_check_branch
      %427 = sbr.rel (0) target = $region169
    $region168: #{double_gn_forward.1} parent=1 // pred_region
      _
    $region169: #{double_gn_forward.1} parent=1 // pred_fallthru
      _
    // Predicated region
    $region170: #{double_gn_forward.1} parent=1 // pred_check
      _
    $region171: #{double_gn_forward.1} parent=1 // pred_check_branch
      %429 = sbr.rel (0) target = $region173
    $region172: #{double_gn_forward.1} parent=1 // pred_region
      %s431 = ssub.s32 16, 16
      %432 = vsyncadd [#allocation30], %s431
      %s434 = sshll.u32 [#allocation31], 4
      %s435 = int_to_ptr.vmem [resolvable:$true] %s434
      %437 = dma.hbm_to_vmem [thread:$0]  %s85, 16, %s435, [#allocation30]
    $region173: #{double_gn_forward.1} parent=1 // pred_fallthru
      _
    // Predicated region
    $region174: #{double_gn_forward.1} parent=1 // pred_check
      _
    $region175: #{double_gn_forward.1} parent=1 // pred_check_branch
      %439 = sbr.rel (0) target = $region177
    $region176: #{double_gn_forward.1} parent=1 // pred_region
      _
    $region177: #{double_gn_forward.1} parent=1 // pred_fallthru
      _
    // Predicated region
    $region178: #{double_gn_forward.1} parent=1 // pred_check
      _
    $region179: #{double_gn_forward.1} parent=1 // pred_check_branch
      %441 = sbr.rel (0) target = $region181
    $region180: #{double_gn_forward.1} parent=1 // pred_region
      %s443 = ssub.s32 16, 16
      %444 = vsyncadd [#allocation33], %s443
      %s446 = sshll.u32 [#allocation32], 4
      %s447 = int_to_ptr.vmem [resolvable:$true] %s446
      %449 = dma.hbm_to_vmem [thread:$0]  %s89, 16, %s447, [#allocation33]
    $region181: #{double_gn_forward.1} parent=1 // pred_fallthru
      _
    // Predicated region
    $region182: #{double_gn_forward.1} parent=1 // pred_check
      _
    $region183: #{double_gn_forward.1} parent=1 // pred_check_branch
      %451 = sbr.rel (0) target = $region185
    $region184: #{double_gn_forward.1} parent=1 // pred_region
      _
    $region185: #{double_gn_forward.1} parent=1 // pred_fallthru
      _
    // Predicated region
    $region186: #{double_gn_forward.1} parent=1 // pred_check
      _
    $region187: #{double_gn_forward.1} parent=1 // pred_check_branch
      %453 = sbr.rel (0) target = $region189
    $region188: #{double_gn_forward.1} parent=1 // pred_region
      _
    $region189: #{double_gn_forward.1} parent=1 // pred_fallthru
      _
    // Predicated region
    $region190: #{double_gn_forward.1} parent=1 // pred_check
      _
    $region191: #{double_gn_forward.1} parent=1 // pred_check_branch
      %455 = sbr.rel (0) target = $region193
    $region192: #{double_gn_forward.1} parent=1 // pred_region
      _
    $region193: #{double_gn_forward.1} parent=1 // pred_fallthru
      _
    // Predicated region
    $region194: #{double_gn_forward.1} parent=1 // pred_check
      _
    $region195: #{double_gn_forward.1} parent=1 // pred_check_branch
      %457 = sbr.rel (0) target = $region197
    $region196: #{double_gn_forward.1} parent=1 // pred_region
      %s459 = ssub.s32 16, 16
      %460 = vsyncadd [#allocation33], %s459
      %s462 = sshll.u32 [#allocation34], 4
      %s463 = int_to_ptr.vmem [resolvable:$true] %s462
      %465 = dma.hbm_to_vmem [thread:$0]  %s97, 16, %s463, [#allocation33]
    $region197: #{double_gn_forward.1} parent=1 // pred_fallthru
      _
    // Predicated region
    $region198: #{double_gn_forward.1} parent=1 // pred_check
      _
    $region199: #{double_gn_forward.1} parent=1 // pred_check_branch
      %467 = sbr.rel (0) target = $region201
    $region200: #{double_gn_forward.1} parent=1 // pred_region
      _
    $region201: #{double_gn_forward.1} parent=1 // pred_fallthru
      _
    // Predicated region
    $region202: #{double_gn_forward.1} parent=1 // pred_check
      _
    $region203: #{double_gn_forward.1} parent=1 // pred_check_branch
      %469 = sbr.rel (0) target = $region205
    $region204: #{double_gn_forward.1} parent=1 // pred_region
      %s471 = ssub.s32 16, 16
      %472 = vsyncadd [#allocation36], %s471
      %s474 = sshll.u32 [#allocation35], 4
      %s475 = int_to_ptr.vmem [resolvable:$true] %s474
      %477 = dma.hbm_to_vmem [thread:$0]  %s101, 16, %s475, [#allocation36]
    $region205: #{double_gn_forward.1} parent=1 // pred_fallthru
      _
    // Predicated region
    $region206: #{double_gn_forward.1} parent=1 // pred_check
      _
    $region207: #{double_gn_forward.1} parent=1 // pred_check_branch
      %479 = sbr.rel (0) target = $region209
    $region208: #{double_gn_forward.1} parent=1 // pred_region
      _
    $region209: #{double_gn_forward.1} parent=1 // pred_fallthru
      _
    // Predicated region
    $region210: #{double_gn_forward.1} parent=1 // pred_check
      _
    $region211: #{double_gn_forward.1} parent=1 // pred_check_branch
      %481 = sbr.rel (0) target = $region213
    $region212: #{double_gn_forward.1} parent=1 // pred_region
      %s483 = ssub.s32 16, 16
      %484 = vsyncadd [#allocation36], %s483
      %s486 = sshll.u32 [#allocation37], 4
      %s487 = int_to_ptr.vmem [resolvable:$true] %s486
      %489 = dma.hbm_to_vmem [thread:$0]  %s105, 16, %s487, [#allocation36]
    $region213: #{double_gn_forward.1} parent=1 // pred_fallthru
      _
    // Predicated region
    $region214: #{double_gn_forward.1} parent=1 // pred_check
      _
    $region215: #{double_gn_forward.1} parent=1 // pred_check_branch
      %491 = sbr.rel (0) target = $region217
    $region216: #{double_gn_forward.1} parent=1 // pred_region
      _
    $region217: #{double_gn_forward.1} parent=1 // pred_fallthru
      _
    // Predicated region
    $region218: #{double_gn_forward.1} parent=1 // pred_check
      _
    $region219: #{double_gn_forward.1} parent=1 // pred_check_branch
      %493 = sbr.rel (0) target = $region221
    $region220: #{double_gn_forward.1} parent=1 // pred_region
      %s495 = ssub.s32 16, 16
      %496 = vsyncadd [#allocation39], %s495
      %s498 = sshll.u32 [#allocation38], 4
      %s499 = int_to_ptr.vmem [resolvable:$true] %s498
      %501 = dma.hbm_to_vmem [thread:$0]  %s109, 16, %s499, [#allocation39]
    $region221: #{double_gn_forward.1} parent=1 // pred_fallthru
      _
    // Predicated region
    $region222: #{double_gn_forward.1} parent=1 // pred_check
      _
    $region223: #{double_gn_forward.1} parent=1 // pred_check_branch
      %503 = sbr.rel (0) target = $region225
    $region224: #{double_gn_forward.1} parent=1 // pred_region
      _
    $region225: #{double_gn_forward.1} parent=1 // pred_fallthru
      _
    // Predicated region
    $region226: #{double_gn_forward.1} parent=1 // pred_check
      _
    $region227: #{double_gn_forward.1} parent=1 // pred_check_branch
      %505 = sbr.rel (0) target = $region229
    $region228: #{double_gn_forward.1} parent=1 // pred_region
      _
    $region229: #{double_gn_forward.1} parent=1 // pred_fallthru
      _
    // Predicated region
    $region230: #{double_gn_forward.1} parent=1 // pred_check
      _
    $region231: #{double_gn_forward.1} parent=1 // pred_check_branch
      %507 = sbr.rel (0) target = $region233
    $region232: #{double_gn_forward.1} parent=1 // pred_region
      _
    $region233: #{double_gn_forward.1} parent=1 // pred_fallthru
      _
    // Predicated region
    $region234: #{double_gn_forward.1} parent=1 // pred_check
      _
    $region235: #{double_gn_forward.1} parent=1 // pred_check_branch
      %509 = sbr.rel (0) target = $region237
    $region236: #{double_gn_forward.1} parent=1 // pred_region
      %s511 = ssub.s32 16, 16
      %512 = vsyncadd [#allocation39], %s511
      %s514 = sshll.u32 [#allocation40], 4
      %s515 = int_to_ptr.vmem [resolvable:$true] %s514
      %517 = dma.hbm_to_vmem [thread:$0]  %s117, 16, %s515, [#allocation39]
    $region237: #{double_gn_forward.1} parent=1 // pred_fallthru
      _
    // Predicated region
    $region238: #{double_gn_forward.1} parent=1 // pred_check
      _
    $region239: #{double_gn_forward.1} parent=1 // pred_check_branch
      %519 = sbr.rel (0) target = $region241
    $region240: #{double_gn_forward.1} parent=1 // pred_region
      _
    $region241: #{double_gn_forward.1} parent=1 // pred_fallthru
      _
    // Predicated region
    $region242: #{double_gn_forward.1} parent=1 // pred_check
      _
    $region243: #{double_gn_forward.1} parent=1 // pred_check_branch
      %521 = sbr.rel (0) target = $region245
    $region244: #{double_gn_forward.1} parent=1 // pred_region
      %s523 = ssub.s32 16, 16
      %524 = vsyncadd [#allocation42], %s523
      %s526 = sshll.u32 [#allocation41], 4
      %s527 = int_to_ptr.vmem [resolvable:$true] %s526
      %529 = dma.hbm_to_vmem [thread:$0]  %s121, 16, %s527, [#allocation42]
    $region245: #{double_gn_forward.1} parent=1 // pred_fallthru
      _
    // Predicated region
    $region246: #{double_gn_forward.1} parent=1 // pred_check
      _
    $region247: #{double_gn_forward.1} parent=1 // pred_check_branch
      %531 = sbr.rel (0) target = $region249
    $region248: #{double_gn_forward.1} parent=1 // pred_region
      _
    $region249: #{double_gn_forward.1} parent=1 // pred_fallthru
      _
    // Predicated region
    $region250: #{double_gn_forward.1} parent=1 // pred_check
      _
    $region251: #{double_gn_forward.1} parent=1 // pred_check_branch
      %533 = sbr.rel (0) target = $region253
    $region252: #{double_gn_forward.1} parent=1 // pred_region
      %s535 = ssub.s32 16, 16
      %536 = vsyncadd [#allocation42], %s535
      %s538 = sshll.u32 [#allocation43], 4
      %s539 = int_to_ptr.vmem [resolvable:$true] %s538
      %541 = dma.hbm_to_vmem [thread:$0]  %s125, 16, %s539, [#allocation42]
    $region253: #{double_gn_forward.1} parent=1 // pred_fallthru
      _
    // Predicated region
    $region254: #{double_gn_forward.1} parent=1 // pred_check
      _
    $region255: #{double_gn_forward.1} parent=1 // pred_check_branch
      %543 = sbr.rel (0) target = $region257
    $region256: #{double_gn_forward.1} parent=1 // pred_region
      _
    $region257: #{double_gn_forward.1} parent=1 // pred_fallthru
      _
    // Predicated region
    $region258: #{double_gn_forward.1} parent=1 // pred_check
      _
    $region259: #{double_gn_forward.1} parent=1 // pred_check_branch
      %545 = sbr.rel (0) target = $region261
    $region260: #{double_gn_forward.1} parent=1 // pred_region
      %s547 = ssub.s32 16, 16
      %548 = vsyncadd [#allocation45], %s547
      %s550 = sshll.u32 [#allocation44], 4
      %s551 = int_to_ptr.vmem [resolvable:$true] %s550
      %553 = dma.hbm_to_vmem [thread:$0]  %s129, 16, %s551, [#allocation45]
    $region261: #{double_gn_forward.1} parent=1 // pred_fallthru
      _
    // Predicated region
    $region262: #{double_gn_forward.1} parent=1 // pred_check
      _
    $region263: #{double_gn_forward.1} parent=1 // pred_check_branch
      %555 = sbr.rel (0) target = $region265
    $region264: #{double_gn_forward.1} parent=1 // pred_region
      _
    $region265: #{double_gn_forward.1} parent=1 // pred_fallthru
      _
    // Predicated region
    $region266: #{double_gn_forward.1} parent=1 // pred_check
      _
    $region267: #{double_gn_forward.1} parent=1 // pred_check_branch
      %557 = sbr.rel (0) target = $region269
    $region268: #{double_gn_forward.1} parent=1 // pred_region
      %s559 = ssub.s32 32, 32
      %560 = vsyncadd [#allocation45], %s559
      %s562 = sshll.u32 [#allocation46], 4
      %s563 = int_to_ptr.vmem [resolvable:$true] %s562
      %565 = dma.hbm_to_vmem [thread:$0]  %s133, 32, %s563, [#allocation45]
    $region269: #{double_gn_forward.1} parent=1 // pred_fallthru
      _
    // Predicated region
    $region270: #{double_gn_forward.1} parent=1 // pred_check
      _
    $region271: #{double_gn_forward.1} parent=1 // pred_check_branch
      %567 = sbr.rel (0) target = $region273
    $region272: #{double_gn_forward.1} parent=1 // pred_region
      _
    $region273: #{double_gn_forward.1} parent=1 // pred_fallthru
      _
    // Predicated region
    $region274: #{double_gn_forward.1} parent=1 // pred_check
      _
    $region275: #{double_gn_forward.1} parent=1 // pred_check_branch
      %569 = sbr.rel (0) target = $region277
    $region276: #{double_gn_forward.1} parent=1 // pred_region
      %s571 = ssub.s32 16, 16
      %572 = vsyncadd [#allocation48], %s571
      %s574 = sshll.u32 [#allocation47], 4
      %s575 = int_to_ptr.vmem [resolvable:$true] %s574
      %577 = dma.hbm_to_vmem [thread:$0]  %s137, 16, %s575, [#allocation48]
    $region277: #{double_gn_forward.1} parent=1 // pred_fallthru
      _
    // Predicated region
    $region278: #{double_gn_forward.1} parent=1 // pred_check
      _
    $region279: #{double_gn_forward.1} parent=1 // pred_check_branch
      %579 = sbr.rel (0) target = $region281
    $region280: #{double_gn_forward.1} parent=1 // pred_region
      _
    $region281: #{double_gn_forward.1} parent=1 // pred_fallthru
      _
    // Predicated region
    $region282: #{double_gn_forward.1} parent=1 // pred_check
      _
    $region283: #{double_gn_forward.1} parent=1 // pred_check_branch
      %581 = sbr.rel (0) target = $region285
    $region284: #{double_gn_forward.1} parent=1 // pred_region
      %s583 = ssub.s32 16, 16
      %584 = vsyncadd [#allocation48], %s583
      %s586 = sshll.u32 [#allocation49], 4
      %s587 = int_to_ptr.vmem [resolvable:$true] %s586
      %589 = dma.hbm_to_vmem [thread:$0]  %s141, 16, %s587, [#allocation48]
    $region285: #{double_gn_forward.1} parent=1 // pred_fallthru
      _
    // Predicated region
    $region286: #{double_gn_forward.1} parent=1 // pred_check
      _
    $region287: #{double_gn_forward.1} parent=1 // pred_check_branch
      %591 = sbr.rel (0) target = $region289
    $region288: #{double_gn_forward.1} parent=1 // pred_region
      _
    $region289: #{double_gn_forward.1} parent=1 // pred_fallthru
      _
    // Predicated region
    $region290: #{double_gn_forward.1} parent=1 // pred_check
      _
    $region291: #{double_gn_forward.1} parent=1 // pred_check_branch
      %593 = sbr.rel (0) target = $region293
    $region292: #{double_gn_forward.1} parent=1 // pred_region
      %s595 = ssub.s32 16, 16
      %596 = vsyncadd [#allocation51], %s595
      %s598 = sshll.u32 [#allocation50], 4
      %s599 = int_to_ptr.vmem [resolvable:$true] %s598
      %601 = dma.hbm_to_vmem [thread:$0]  %s145, 16, %s599, [#allocation51]
    $region293: #{double_gn_forward.1} parent=1 // pred_fallthru
      _
    // Predicated region
    $region294: #{double_gn_forward.1} parent=1 // pred_check
      _
    $region295: #{double_gn_forward.1} parent=1 // pred_check_branch
      %603 = sbr.rel (0) target = $region297
    $region296: #{double_gn_forward.1} parent=1 // pred_region
      _
    $region297: #{double_gn_forward.1} parent=1 // pred_fallthru
      _
    // Predicated region
    $region298: #{double_gn_forward.1} parent=1 // pred_check
      _
    $region299: #{double_gn_forward.1} parent=1 // pred_check_branch
      %605 = sbr.rel (0) target = $region301
    $region300: #{double_gn_forward.1} parent=1 // pred_region
      %s607 = ssub.s32 16, 16
      %608 = vsyncadd [#allocation51], %s607
      %s610 = sshll.u32 [#allocation52], 4
      %s611 = int_to_ptr.vmem [resolvable:$true] %s610
      %613 = dma.hbm_to_vmem [thread:$0]  %s149, 16, %s611, [#allocation51]
    $region301: #{double_gn_forward.1} parent=1 // pred_fallthru
      _
    // Predicated region
    $region302: #{double_gn_forward.1} parent=1 // pred_check
      _
    $region303: #{double_gn_forward.1} parent=1 // pred_check_branch
      %615 = sbr.rel (0) target = $region305
    $region304: #{double_gn_forward.1} parent=1 // pred_region
      _
    $region305: #{double_gn_forward.1} parent=1 // pred_fallthru
      _
    // Predicated region
    $region306: #{double_gn_forward.1} parent=1 // pred_check
      _
    $region307: #{double_gn_forward.1} parent=1 // pred_check_branch
      %617 = sbr.rel (0) target = $region309
    $region308: #{double_gn_forward.1} parent=1 // pred_region
      %s619 = ssub.s32 16, 16
      %620 = vsyncadd [#allocation54], %s619
      %s622 = sshll.u32 [#allocation53], 4
      %s623 = int_to_ptr.vmem [resolvable:$true] %s622
      %625 = dma.hbm_to_vmem [thread:$0]  %s153, 16, %s623, [#allocation54]
    $region309: #{double_gn_forward.1} parent=1 // pred_fallthru
      _
    // Predicated region
    $region310: #{double_gn_forward.1} parent=1 // pred_check
      _
    $region311: #{double_gn_forward.1} parent=1 // pred_check_branch
      %627 = sbr.rel (0) target = $region313
    $region312: #{double_gn_forward.1} parent=1 // pred_region
      _
    $region313: #{double_gn_forward.1} parent=1 // pred_fallthru
      _
    // Predicated region
    $region314: #{double_gn_forward.1} parent=1 // pred_check
      _
    $region315: #{double_gn_forward.1} parent=1 // pred_check_branch
      %629 = sbr.rel (0) target = $region317
    $region316: #{double_gn_forward.1} parent=1 // pred_region
      %s631 = ssub.s32 16, 16
      %632 = vsyncadd [#allocation54], %s631
      %s634 = sshll.u32 [#allocation55], 4
      %s635 = int_to_ptr.vmem [resolvable:$true] %s634
      %637 = dma.hbm_to_vmem [thread:$0]  %s157, 16, %s635, [#allocation54]
    $region317: #{double_gn_forward.1} parent=1 // pred_fallthru
      _
    // Predicated region
    $region318: #{double_gn_forward.1} parent=1 // pred_check
      _
    $region319: #{double_gn_forward.1} parent=1 // pred_check_branch
      %639 = sbr.rel (0) target = $region321
    $region320: #{double_gn_forward.1} parent=1 // pred_region
      _
    $region321: #{double_gn_forward.1} parent=1 // pred_fallthru
      _
    // Predicated region
    $region322: #{double_gn_forward.1} parent=1 // pred_check
      _
    $region323: #{double_gn_forward.1} parent=1 // pred_check_branch
      %641 = sbr.rel (0) target = $region325
    $region324: #{double_gn_forward.1} parent=1 // pred_region
      %s643 = ssub.s32 16, 16
      %644 = vsyncadd [#allocation57], %s643
      %s646 = sshll.u32 [#allocation56], 4
      %s647 = int_to_ptr.vmem [resolvable:$true] %s646
      %649 = dma.hbm_to_vmem [thread:$0]  %s161, 16, %s647, [#allocation57]
    $region325: #{double_gn_forward.1} parent=1 // pred_fallthru
      _
    // Predicated region
    $region326: #{double_gn_forward.1} parent=1 // pred_check
      _
    $region327: #{double_gn_forward.1} parent=1 // pred_check_branch
      %651 = sbr.rel (0) target = $region329
    $region328: #{double_gn_forward.1} parent=1 // pred_region
      _
    $region329: #{double_gn_forward.1} parent=1 // pred_fallthru
      _
    // Predicated region
    $region330: #{double_gn_forward.1} parent=1 // pred_check
      _
    $region331: #{double_gn_forward.1} parent=1 // pred_check_branch
      %653 = sbr.rel (0) target = $region333
    $region332: #{double_gn_forward.1} parent=1 // pred_region
      %s655 = ssub.s32 16, 16
      %656 = vsyncadd [#allocation57], %s655
      %s658 = sshll.u32 [#allocation58], 4
      %s659 = int_to_ptr.vmem [resolvable:$true] %s658
      %661 = dma.hbm_to_vmem [thread:$0]  %s165, 16, %s659, [#allocation57]
    $region333: #{double_gn_forward.1} parent=1 // pred_fallthru
      _
    // Predicated region
    $region334: #{double_gn_forward.1} parent=1 // pred_check
      _
    $region335: #{double_gn_forward.1} parent=1 // pred_check_branch
      %663 = sbr.rel (0) target = $region337
    $region336: #{double_gn_forward.1} parent=1 // pred_region
      _
    $region337: #{double_gn_forward.1} parent=1 // pred_fallthru
      _
    // Predicated region
    $region338: #{double_gn_forward.1} parent=1 // pred_check
      _
    $region339: #{double_gn_forward.1} parent=1 // pred_check_branch
      %665 = sbr.rel (0) target = $region341
    $region340: #{double_gn_forward.1} parent=1 // pred_region
      %s667 = ssub.s32 16, 16
      %668 = vsyncadd [#allocation60], %s667
      %s670 = sshll.u32 [#allocation59], 4
      %s671 = int_to_ptr.vmem [resolvable:$true] %s670
      %673 = dma.hbm_to_vmem [thread:$0]  %s169, 16, %s671, [#allocation60]
    $region341: #{double_gn_forward.1} parent=1 // pred_fallthru
      _
    // Predicated region
    $region342: #{double_gn_forward.1} parent=1 // pred_check
      _
    $region343: #{double_gn_forward.1} parent=1 // pred_check_branch
      %675 = sbr.rel (0) target = $region345
    $region344: #{double_gn_forward.1} parent=1 // pred_region
      %676 = dma.done [#allocation3], 16
    $region345: #{double_gn_forward.1} parent=1 // pred_fallthru
      _
    // Predicated region
    $region346: #{double_gn_forward.1} parent=1 // pred_check
      _
    $region347: #{double_gn_forward.1} parent=1 // pred_check_branch
      %678 = sbr.rel (0) target = $region349
    $region348: #{double_gn_forward.1} parent=1 // pred_region
      %679 = dma.done [#allocation6], 16
    $region349: #{double_gn_forward.1} parent=1 // pred_fallthru
      _
    // Predicated region
    $region350: #{double_gn_forward.1} parent=1 // pred_check
      _
    $region351: #{double_gn_forward.1} parent=1 // pred_check_branch
      %681 = sbr.rel (0) target = $region353
    $region352: #{double_gn_forward.1} parent=1 // pred_region
      %682 = dma.done [#allocation6], 16
    $region353: #{double_gn_forward.1} parent=1 // pred_fallthru
      _
    // Predicated region
    $region354: #{double_gn_forward.1} parent=1 // pred_check
      _
    $region355: #{double_gn_forward.1} parent=1 // pred_check_branch
      %684 = sbr.rel (0) target = $region357
    $region356: #{double_gn_forward.1} parent=1 // pred_region
      %685 = dma.done [#allocation9], 16
    $region357: #{double_gn_forward.1} parent=1 // pred_fallthru
      _
    // Predicated region
    $region358: #{double_gn_forward.1} parent=1 // pred_check
      _
    $region359: #{double_gn_forward.1} parent=1 // pred_check_branch
      %687 = sbr.rel (0) target = $region361
    $region360: #{double_gn_forward.1} parent=1 // pred_region
      %688 = dma.done [#allocation9], 16
    $region361: #{double_gn_forward.1} parent=1 // pred_fallthru
      _
    // Predicated region
    $region362: #{double_gn_forward.1} parent=1 // pred_check
      _
    $region363: #{double_gn_forward.1} parent=1 // pred_check_branch
      %690 = sbr.rel (0) target = $region365
    $region364: #{double_gn_forward.1} parent=1 // pred_region
      %691 = dma.done [#allocation12], 16
    $region365: #{double_gn_forward.1} parent=1 // pred_fallthru
      _
    // Predicated region
    $region366: #{double_gn_forward.1} parent=1 // pred_check
      _
    $region367: #{double_gn_forward.1} parent=1 // pred_check_branch
      %693 = sbr.rel (0) target = $region369
    $region368: #{double_gn_forward.1} parent=1 // pred_region
      %694 = dma.done [#allocation12], 16
    $region369: #{double_gn_forward.1} parent=1 // pred_fallthru
      _
    // Predicated region
    $region370: #{double_gn_forward.1} parent=1 // pred_check
      _
    $region371: #{double_gn_forward.1} parent=1 // pred_check_branch
      %696 = sbr.rel (0) target = $region373
    $region372: #{double_gn_forward.1} parent=1 // pred_region
      %697 = dma.done [#allocation15], 16
    $region373: #{double_gn_forward.1} parent=1 // pred_fallthru
      _
    // Predicated region
    $region374: #{double_gn_forward.1} parent=1 // pred_check
      _
    $region375: #{double_gn_forward.1} parent=1 // pred_check_branch
      %699 = sbr.rel (0) target = $region377
    $region376: #{double_gn_forward.1} parent=1 // pred_region
      %700 = dma.done [#allocation15], 16
    $region377: #{double_gn_forward.1} parent=1 // pred_fallthru
      _
    // Predicated region
    $region378: #{double_gn_forward.1} parent=1 // pred_check
      _
    $region379: #{double_gn_forward.1} parent=1 // pred_check_branch
      %702 = sbr.rel (0) target = $region381
    $region380: #{double_gn_forward.1} parent=1 // pred_region
      %703 = dma.done [#allocation18], 16
    $region381: #{double_gn_forward.1} parent=1 // pred_fallthru
      _
    // Predicated region
    $region382: #{double_gn_forward.1} parent=1 // pred_check
      _
    $region383: #{double_gn_forward.1} parent=1 // pred_check_branch
      %705 = sbr.rel (0) target = $region385
    $region384: #{double_gn_forward.1} parent=1 // pred_region
      %706 = dma.done [#allocation18], 16
    $region385: #{double_gn_forward.1} parent=1 // pred_fallthru
      _
    // Predicated region
    $region386: #{double_gn_forward.1} parent=1 // pred_check
      _
    $region387: #{double_gn_forward.1} parent=1 // pred_check_branch
      %708 = sbr.rel (0) target = $region389
    $region388: #{double_gn_forward.1} parent=1 // pred_region
      %709 = dma.done [#allocation21], 16
    $region389: #{double_gn_forward.1} parent=1 // pred_fallthru
      _
    // Predicated region
    $region390: #{double_gn_forward.1} parent=1 // pred_check
      _
    $region391: #{double_gn_forward.1} parent=1 // pred_check_branch
      %711 = sbr.rel (0) target = $region393
    $region392: #{double_gn_forward.1} parent=1 // pred_region
      %712 = dma.done [#allocation21], 16
    $region393: #{double_gn_forward.1} parent=1 // pred_fallthru
      _
    // Predicated region
    $region394: #{double_gn_forward.1} parent=1 // pred_check
      _
    $region395: #{double_gn_forward.1} parent=1 // pred_check_branch
      %714 = sbr.rel (0) target = $region397
    $region396: #{double_gn_forward.1} parent=1 // pred_region
      %715 = dma.done [#allocation24], 16
    $region397: #{double_gn_forward.1} parent=1 // pred_fallthru
      _
    // Predicated region
    $region398: #{double_gn_forward.1} parent=1 // pred_check
      _
    $region399: #{double_gn_forward.1} parent=1 // pred_check_branch
      %717 = sbr.rel (0) target = $region401
    $region400: #{double_gn_forward.1} parent=1 // pred_region
      %718 = dma.done [#allocation24], 16
    $region401: #{double_gn_forward.1} parent=1 // pred_fallthru
      _
    // Predicated region
    $region402: #{double_gn_forward.1} parent=1 // pred_check
      _
    $region403: #{double_gn_forward.1} parent=1 // pred_check_branch
      %720 = sbr.rel (0) target = $region405
    $region404: #{double_gn_forward.1} parent=1 // pred_region
      %721 = dma.done [#allocation27], 16
    $region405: #{double_gn_forward.1} parent=1 // pred_fallthru
      _
    // Predicated region
    $region406: #{double_gn_forward.1} parent=1 // pred_check
      _
    $region407: #{double_gn_forward.1} parent=1 // pred_check_branch
      %723 = sbr.rel (0) target = $region409
    $region408: #{double_gn_forward.1} parent=1 // pred_region
      %724 = dma.done [#allocation27], 16
    $region409: #{double_gn_forward.1} parent=1 // pred_fallthru
      _
    // Predicated region
    $region410: #{double_gn_forward.1} parent=1 // pred_check
      _
    $region411: #{double_gn_forward.1} parent=1 // pred_check_branch
      %726 = sbr.rel (0) target = $region413
    $region412: #{double_gn_forward.1} parent=1 // pred_region
      %727 = dma.done [#allocation30], 16
    $region413: #{double_gn_forward.1} parent=1 // pred_fallthru
      _
    // Predicated region
    $region414: #{double_gn_forward.1} parent=1 // pred_check
      _
    $region415: #{double_gn_forward.1} parent=1 // pred_check_branch
      %729 = sbr.rel (0) target = $region417
    $region416: #{double_gn_forward.1} parent=1 // pred_region
      %730 = dma.done [#allocation30], 16
    $region417: #{double_gn_forward.1} parent=1 // pred_fallthru
      _
    // Predicated region
    $region418: #{double_gn_forward.1} parent=1 // pred_check
      _
    $region419: #{double_gn_forward.1} parent=1 // pred_check_branch
      %732 = sbr.rel (0) target = $region421
    $region420: #{double_gn_forward.1} parent=1 // pred_region
      %733 = dma.done [#allocation33], 16
    $region421: #{double_gn_forward.1} parent=1 // pred_fallthru
      _
    // Predicated region
    $region422: #{double_gn_forward.1} parent=1 // pred_check
      _
    $region423: #{double_gn_forward.1} parent=1 // pred_check_branch
      %735 = sbr.rel (0) target = $region425
    $region424: #{double_gn_forward.1} parent=1 // pred_region
      %736 = dma.done [#allocation33], 16
    $region425: #{double_gn_forward.1} parent=1 // pred_fallthru
      _
    // Predicated region
    $region426: #{double_gn_forward.1} parent=1 // pred_check
      _
    $region427: #{double_gn_forward.1} parent=1 // pred_check_branch
      %738 = sbr.rel (0) target = $region429
    $region428: #{double_gn_forward.1} parent=1 // pred_region
      %739 = dma.done [#allocation36], 16
    $region429: #{double_gn_forward.1} parent=1 // pred_fallthru
      _
    // Predicated region
    $region430: #{double_gn_forward.1} parent=1 // pred_check
      _
    $region431: #{double_gn_forward.1} parent=1 // pred_check_branch
      %741 = sbr.rel (0) target = $region433
    $region432: #{double_gn_forward.1} parent=1 // pred_region
      %742 = dma.done [#allocation36], 16
    $region433: #{double_gn_forward.1} parent=1 // pred_fallthru
      _
    // Predicated region
    $region434: #{double_gn_forward.1} parent=1 // pred_check
      _
    $region435: #{double_gn_forward.1} parent=1 // pred_check_branch
      %744 = sbr.rel (0) target = $region437
    $region436: #{double_gn_forward.1} parent=1 // pred_region
      %745 = dma.done [#allocation39], 16
    $region437: #{double_gn_forward.1} parent=1 // pred_fallthru
      _
    // Predicated region
    $region438: #{double_gn_forward.1} parent=1 // pred_check
      _
    $region439: #{double_gn_forward.1} parent=1 // pred_check_branch
      %747 = sbr.rel (0) target = $region441
    $region440: #{double_gn_forward.1} parent=1 // pred_region
      %748 = dma.done [#allocation39], 16
    $region441: #{double_gn_forward.1} parent=1 // pred_fallthru
      _
    // Predicated region
    $region442: #{double_gn_forward.1} parent=1 // pred_check
      _
    $region443: #{double_gn_forward.1} parent=1 // pred_check_branch
      %750 = sbr.rel (0) target = $region445
    $region444: #{double_gn_forward.1} parent=1 // pred_region
      %751 = dma.done [#allocation42], 16
    $region445: #{double_gn_forward.1} parent=1 // pred_fallthru
      _
    // Predicated region
    $region446: #{double_gn_forward.1} parent=1 // pred_check
      _
    $region447: #{double_gn_forward.1} parent=1 // pred_check_branch
      %753 = sbr.rel (0) target = $region449
    $region448: #{double_gn_forward.1} parent=1 // pred_region
      %754 = dma.done [#allocation42], 16
    $region449: #{double_gn_forward.1} parent=1 // pred_fallthru
      _
    // Predicated region
    $region450: #{double_gn_forward.1} parent=1 // pred_check
      _
    $region451: #{double_gn_forward.1} parent=1 // pred_check_branch
      %756 = sbr.rel (0) target = $region453
    $region452: #{double_gn_forward.1} parent=1 // pred_region
      %757 = dma.done [#allocation45], 16
    $region453: #{double_gn_forward.1} parent=1 // pred_fallthru
      _
    // Predicated region
    $region454: #{double_gn_forward.1} parent=1 // pred_check
      _
    $region455: #{double_gn_forward.1} parent=1 // pred_check_branch
      %759 = sbr.rel (0) target = $region457
    $region456: #{double_gn_forward.1} parent=1 // pred_region
      %760 = dma.done [#allocation45], 32
    $region457: #{double_gn_forward.1} parent=1 // pred_fallthru
      _
    // Predicated region
    $region458: #{double_gn_forward.1} parent=1 // pred_check
      _
    $region459: #{double_gn_forward.1} parent=1 // pred_check_branch
      %762 = sbr.rel (0) target = $region461
    $region460: #{double_gn_forward.1} parent=1 // pred_region
      %763 = dma.done [#allocation48], 16
    $region461: #{double_gn_forward.1} parent=1 // pred_fallthru
      _
    // Predicated region
    $region462: #{double_gn_forward.1} parent=1 // pred_check
      _
    $region463: #{double_gn_forward.1} parent=1 // pred_check_branch
      %765 = sbr.rel (0) target = $region465
    $region464: #{double_gn_forward.1} parent=1 // pred_region
      %766 = dma.done [#allocation48], 16
    $region465: #{double_gn_forward.1} parent=1 // pred_fallthru
      _
    // Predicated region
    $region466: #{double_gn_forward.1} parent=1 // pred_check
      _
    $region467: #{double_gn_forward.1} parent=1 // pred_check_branch
      %768 = sbr.rel (0) target = $region469
    $region468: #{double_gn_forward.1} parent=1 // pred_region
      %769 = dma.done [#allocation51], 16
    $region469: #{double_gn_forward.1} parent=1 // pred_fallthru
      _
    // Predicated region
    $region470: #{double_gn_forward.1} parent=1 // pred_check
      _
    $region471: #{double_gn_forward.1} parent=1 // pred_check_branch
      %771 = sbr.rel (0) target = $region473
    $region472: #{double_gn_forward.1} parent=1 // pred_region
      %772 = dma.done [#allocation51], 16
    $region473: #{double_gn_forward.1} parent=1 // pred_fallthru
      _
    // Predicated region
    $region474: #{double_gn_forward.1} parent=1 // pred_check
      _
    $region475: #{double_gn_forward.1} parent=1 // pred_check_branch
      %774 = sbr.rel (0) target = $region477
    $region476: #{double_gn_forward.1} parent=1 // pred_region
      %775 = dma.done [#allocation54], 16
    $region477: #{double_gn_forward.1} parent=1 // pred_fallthru
      _
    // Predicated region
    $region478: #{double_gn_forward.1} parent=1 // pred_check
      _
    $region479: #{double_gn_forward.1} parent=1 // pred_check_branch
      %777 = sbr.rel (0) target = $region481
    $region480: #{double_gn_forward.1} parent=1 // pred_region
      %778 = dma.done [#allocation54], 16
    $region481: #{double_gn_forward.1} parent=1 // pred_fallthru
      _
    // Predicated region
    $region482: #{double_gn_forward.1} parent=1 // pred_check
      _
    $region483: #{double_gn_forward.1} parent=1 // pred_check_branch
      %780 = sbr.rel (0) target = $region485
    $region484: #{double_gn_forward.1} parent=1 // pred_region
      %781 = dma.done [#allocation57], 16
    $region485: #{double_gn_forward.1} parent=1 // pred_fallthru
      _
    // Predicated region
    $region486: #{double_gn_forward.1} parent=1 // pred_check
      _
    $region487: #{double_gn_forward.1} parent=1 // pred_check_branch
      %783 = sbr.rel (0) target = $region489
    $region488: #{double_gn_forward.1} parent=1 // pred_region
      %784 = dma.done [#allocation57], 16
    $region489: #{double_gn_forward.1} parent=1 // pred_fallthru
      _
    // Predicated region
    $region490: #{double_gn_forward.1} parent=1 // pred_check
      _
    $region491: #{double_gn_forward.1} parent=1 // pred_check_branch
      %786 = sbr.rel (0) target = $region493
    $region492: #{double_gn_forward.1} parent=1 // pred_region
      %787 = dma.done [#allocation60], 16
    $region493: #{double_gn_forward.1} parent=1 // pred_fallthru
      _
    %v788 = vld [vmem:[%s11] sm:$0xff]
    %v789 = vld [vmem:[%s11 + $0x8] sm:$0xff]
    %v790 = vld [vmem:[%s11 + $0x10] sm:$0xff]
    %v791 = vld [vmem:[#allocation2] sm:$0x1]
    %v792 = vld [vmem:[%s15] sm:$0xff]
    %v793 = vld [vmem:[%s15 + $0x8] sm:$0xff]
    %v794 = vld [vmem:[%s15 + $0x10] sm:$0xff]
    %v795 = vld [vmem:[%s15 + $0x18] sm:$0xff]
    %v796 = vld [vmem:[%s15 + $0x20] sm:$0xff]
    %v797 = vld [vmem:[%s15 + $0x28] sm:$0xff]
    %v798 = vld [vmem:[%s15 + $0x30] sm:$0xff]
    %v799 = vld [vmem:[%s15 + $0x38] sm:$0xff]
    %v800 = vld [vmem:[%s15 + $0x40] sm:$0xff]
    %v801 = vld [vmem:[%s15 + $0x48] sm:$0xff]
    %v802 = vld [vmem:[%s15 + $0x50] sm:$0xff]
    %v803 = vld [vmem:[%s15 + $0x58] sm:$0xff]
    %v804 = vld [vmem:[%s15 + $0x60] sm:$0xff]
    %v805 = vld [vmem:[%s15 + $0x68] sm:$0xff]
    %v806 = vld [vmem:[%s15 + $0x70] sm:$0xff]
    %v807 = vld [vmem:[%s15 + $0x78] sm:$0xff]
    %v808 = vld [vmem:[#allocation5] sm:$0x1]
    %v809 = vld [vmem:[%s19] sm:$0xff]
    %v810 = vld [vmem:[%s19 + $0x8] sm:$0xff]
    %v811 = vld [vmem:[%s19 + $0x10] sm:$0xff]
    %v812 = vld [vmem:[%s19 + $0x18] sm:$0xff]
    %v813 = vld [vmem:[%s19 + $0x20] sm:$0xff]
    %v814 = vld [vmem:[%s19 + $0x28] sm:$0xff]
    %v815 = vld [vmem:[%s19 + $0x30] sm:$0xff]
    %v816 = vld [vmem:[%s19 + $0x38] sm:$0xff]
    %v817 = vld [vmem:[#allocation7] sm:$0x1]
    %v818 = vld [vmem:[%s23] sm:$0xff]
    %v819 = vld [vmem:[%s23 + $0x8] sm:$0xff]
    %v820 = vld [vmem:[%s23 + $0x10] sm:$0xff]
    %v821 = vld [vmem:[%s23 + $0x18] sm:$0xff]
    %v822 = vld [vmem:[#allocation8] sm:$0x1]
    %v823 = vld [vmem:[%s27] sm:$0xff]
    %v824 = vld [vmem:[%s27 + $0x8] sm:$0xff]
    %v825 = vld [vmem:[#allocation10] sm:$0x1]
    %v826 = vld [vmem:[%s31] sm:$0xff]
    %v827 = vld [vmem:[%s31 + $0x8] sm:$0xff]
    %v828 = vld [vmem:[%s31 + $0x10] sm:$0xff]
    %v829 = vld [vmem:[#allocation11] sm:$0x1]
    %v830 = vld [vmem:[%s35] sm:$0xff]
    %v831 = vld [vmem:[%s35 + $0x8] sm:$0xff]
    %v832 = vld [vmem:[%s35 + $0x10] sm:$0xff]
    %v833 = vld [vmem:[%s35 + $0x18] sm:$0xff]
    %v834 = vld [vmem:[%s35 + $0x20] sm:$0xff]
    %v835 = vld [vmem:[%s35 + $0x28] sm:$0xff]
    %v836 = vld [vmem:[%s35 + $0x30] sm:$0xff]
    %v837 = vld [vmem:[%s35 + $0x38] sm:$0xff]
    %v838 = vld [vmem:[%s35 + $0x40] sm:$0xff]
    %v839 = vld [vmem:[%s35 + $0x48] sm:$0xff]
    %v840 = vld [vmem:[%s35 + $0x50] sm:$0xff]
    %v841 = vld [vmem:[%s35 + $0x58] sm:$0xff]
    %v842 = vld [vmem:[%s35 + $0x60] sm:$0xff]
    %v843 = vld [vmem:[%s35 + $0x68] sm:$0xff]
    %v844 = vld [vmem:[%s35 + $0x70] sm:$0xff]
    %v845 = vld [vmem:[%s35 + $0x78] sm:$0xff]
    %v846 = vld [vmem:[#allocation13] sm:$0x1]
    %v847 = vld [vmem:[%s39] sm:$0xff]
    %v848 = vld [vmem:[%s39 + $0x8] sm:$0xff]
    %v849 = vld [vmem:[%s39 + $0x10] sm:$0xff]
    %v850 = vld [vmem:[%s39 + $0x18] sm:$0xff]
    %v851 = vld [vmem:[%s39 + $0x20] sm:$0xff]
    %v852 = vld [vmem:[%s39 + $0x28] sm:$0xff]
    %v853 = vld [vmem:[%s39 + $0x30] sm:$0xff]
    %v854 = vld [vmem:[%s39 + $0x38] sm:$0xff]
    %v855 = vld [vmem:[#allocation14] sm:$0x1]
    %v856 = vld [vmem:[%s43] sm:$0xff]
    %v857 = vld [vmem:[%s43 + $0x8] sm:$0xff]
    %v858 = vld [vmem:[%s43 + $0x10] sm:$0xff]
    %v859 = vld [vmem:[%s43 + $0x18] sm:$0xff]
    %v860 = vld [vmem:[#allocation16] sm:$0x1]
    %v861 = vld [vmem:[%s47] sm:$0xff]
    %v862 = vld [vmem:[%s47 + $0x8] sm:$0xff]
    %v863 = vld [vmem:[#allocation17] sm:$0x1]
    %v864 = vld [vmem:[%s51] sm:$0xff]
    %v865 = vld [vmem:[%s51 + $0x8] sm:$0xff]
    %v866 = vld [vmem:[#allocation19] sm:$0x1]
    %v867 = vld [vmem:[%s55] sm:$0xff]
    %v868 = vld [vmem:[%s55 + $0x8] sm:$0xff]
    %v869 = vld [vmem:[%s55 + $0x10] sm:$0xff]
    %v870 = vld [vmem:[%s55 + $0x18] sm:$0xff]
    %v871 = vld [vmem:[%s55 + $0x20] sm:$0xff]
    %v872 = vld [vmem:[%s55 + $0x28] sm:$0xff]
    %v873 = vld [vmem:[%s55 + $0x30] sm:$0xff]
    %v874 = vld [vmem:[%s55 + $0x38] sm:$0xff]
    %v875 = vld [vmem:[%s55 + $0x40] sm:$0xff]
    %v876 = vld [vmem:[%s55 + $0x48] sm:$0xff]
    %v877 = vld [vmem:[%s55 + $0x50] sm:$0xff]
    %v878 = vld [vmem:[%s55 + $0x58] sm:$0xff]
    %v879 = vld [vmem:[%s55 + $0x60] sm:$0xff]
    %v880 = vld [vmem:[%s55 + $0x68] sm:$0xff]
    %v881 = vld [vmem:[%s55 + $0x70] sm:$0xff]
    %v882 = vld [vmem:[%s55 + $0x78] sm:$0xff]
    %v883 = vld [vmem:[#allocation20] sm:$0x1]
    %v884 = vld [vmem:[%s59] sm:$0xff]
    %v885 = vld [vmem:[%s59 + $0x8] sm:$0xff]
    %v886 = vld [vmem:[%s59 + $0x10] sm:$0xff]
    %v887 = vld [vmem:[%s59 + $0x18] sm:$0xff]
    %v888 = vld [vmem:[%s59 + $0x20] sm:$0xff]
    %v889 = vld [vmem:[%s59 + $0x28] sm:$0xff]
    %v890 = vld [vmem:[%s59 + $0x30] sm:$0xff]
    %v891 = vld [vmem:[%s59 + $0x38] sm:$0xff]
    %v892 = vld [vmem:[#allocation22] sm:$0x1]
    %v893 = vld [vmem:[%s63] sm:$0xff]
    %v894 = vld [vmem:[%s63 + $0x8] sm:$0xff]
    %v895 = vld [vmem:[%s63 + $0x10] sm:$0xff]
    %v896 = vld [vmem:[%s63 + $0x18] sm:$0xff]
    %v897 = vld [vmem:[#allocation23] sm:$0x1]
    %v898 = vld [vmem:[%s67] sm:$0xff]
    %v899 = vld [vmem:[%s67 + $0x8] sm:$0xff]
    %v900 = vld [vmem:[#allocation25] sm:$0x1]
    %v901 = vld [vmem:[%s71] sm:$0xff]
    %v902 = vld [vmem:[%s71 + $0x8] sm:$0xff]
    %v903 = vld [vmem:[#allocation26] sm:$0x1]
    %v904 = vld [vmem:[%s75] sm:$0xff]
    %v905 = vld [vmem:[%s75 + $0x8] sm:$0xff]
    %v906 = vld [vmem:[%s75 + $0x10] sm:$0xff]
    %v907 = vld [vmem:[%s75 + $0x18] sm:$0xff]
    %v908 = vld [vmem:[%s75 + $0x20] sm:$0xff]
    %v909 = vld [vmem:[%s75 + $0x28] sm:$0xff]
    %v910 = vld [vmem:[%s75 + $0x30] sm:$0xff]
    %v911 = vld [vmem:[%s75 + $0x38] sm:$0xff]
    %v912 = vld [vmem:[#allocation28] sm:$0x1]
    %v913 = vld [vmem:[%s79] sm:$0xff]
    %v914 = vld [vmem:[%s79 + $0x8] sm:$0xff]
    %v915 = vld [vmem:[%s79 + $0x10] sm:$0xff]
    %v916 = vld [vmem:[%s79 + $0x18] sm:$0xff]
    %v917 = vld [vmem:[#allocation29] sm:$0x1]
    %v918 = vld [vmem:[%s83] sm:$0xff]
    %v919 = vld [vmem:[%s83 + $0x8] sm:$0xff]
    %v920 = vld [vmem:[#allocation31] sm:$0x1]
    %v921 = vld [vmem:[%s87] sm:$0xff]
    %v922 = vld [vmem:[#allocation32] sm:$0x1]
    %v923 = vld [vmem:[%s91] sm:$0xff]
    %v924 = vld [vmem:[%s91 + $0x8] sm:$0xff]
    %v925 = vld [vmem:[%s91 + $0x10] sm:$0xff]
    %v926 = vld [vmem:[%s91 + $0x18] sm:$0xff]
    %v927 = vld [vmem:[%s91 + $0x20] sm:$0xff]
    %v928 = vld [vmem:[%s91 + $0x28] sm:$0xff]
    %v929 = vld [vmem:[%s91 + $0x30] sm:$0xff]
    %v930 = vld [vmem:[%s91 + $0x38] sm:$0xff]
    %v931 = vld [vmem:[%s91 + $0x40] sm:$0xff]
    %v932 = vld [vmem:[%s91 + $0x48] sm:$0xff]
    %v933 = vld [vmem:[%s91 + $0x50] sm:$0xff]
    %v934 = vld [vmem:[%s91 + $0x58] sm:$0xff]
    %v935 = vld [vmem:[%s93] sm:$0x3]
    %v936 = vld [vmem:[%s95] sm:$0xff]
    %v937 = vld [vmem:[%s95 + $0x8] sm:$0xff]
    %v938 = vld [vmem:[%s95 + $0x10] sm:$0xff]
    %v939 = vld [vmem:[%s95 + $0x18] sm:$0xff]
    %v940 = vld [vmem:[%s95 + $0x20] sm:$0xff]
    %v941 = vld [vmem:[%s95 + $0x28] sm:$0xff]
    %v942 = vld [vmem:[%s95 + $0x30] sm:$0xff]
    %v943 = vld [vmem:[%s95 + $0x38] sm:$0xff]
    %v944 = vld [vmem:[%s95 + $0x40] sm:$0xff]
    %v945 = vld [vmem:[%s95 + $0x48] sm:$0xff]
    %v946 = vld [vmem:[%s95 + $0x50] sm:$0xff]
    %v947 = vld [vmem:[%s95 + $0x58] sm:$0xff]
    %v948 = vld [vmem:[%s95 + $0x60] sm:$0xff]
    %v949 = vld [vmem:[%s95 + $0x68] sm:$0xff]
    %v950 = vld [vmem:[%s95 + $0x70] sm:$0xff]
    %v951 = vld [vmem:[%s95 + $0x78] sm:$0xff]
    %v952 = vld [vmem:[%s95 + $0x80] sm:$0xff]
    %v953 = vld [vmem:[%s95 + $0x88] sm:$0xff]
    %v954 = vld [vmem:[%s95 + $0x90] sm:$0xff]
    %v955 = vld [vmem:[%s95 + $0x98] sm:$0xff]
    %v956 = vld [vmem:[%s95 + $0xa0] sm:$0xff]
    %v957 = vld [vmem:[%s95 + $0xa8] sm:$0xff]
    %v958 = vld [vmem:[%s95 + $0xb0] sm:$0xff]
    %v959 = vld [vmem:[%s95 + $0xb8] sm:$0xff]
    %v960 = vld [vmem:[%s95 + $0xc0] sm:$0xff]
    %v961 = vld [vmem:[%s95 + $0xc8] sm:$0xff]
    %v962 = vld [vmem:[%s95 + $0xd0] sm:$0xff]
    %v963 = vld [vmem:[%s95 + $0xd8] sm:$0xff]
    %v964 = vld [vmem:[%s95 + $0xe0] sm:$0xff]
    %v965 = vld [vmem:[%s95 + $0xe8] sm:$0xff]
    %v966 = vld [vmem:[%s95 + $0xf0] sm:$0xff]
    %v967 = vld [vmem:[%s95 + $0xf8] sm:$0xff]
    %v968 = vld [vmem:[#allocation34] sm:$0x1]
    %v969 = vld [vmem:[%s99] sm:$0xff]
    %v970 = vld [vmem:[%s99 + $0x8] sm:$0xff]
    %v971 = vld [vmem:[%s99 + $0x10] sm:$0xff]
    %v972 = vld [vmem:[%s99 + $0x18] sm:$0xff]
    %v973 = vld [vmem:[%s99 + $0x20] sm:$0xff]
    %v974 = vld [vmem:[%s99 + $0x28] sm:$0xff]
    %v975 = vld [vmem:[%s99 + $0x30] sm:$0xff]
    %v976 = vld [vmem:[%s99 + $0x38] sm:$0xff]
    %v977 = vld [vmem:[%s99 + $0x40] sm:$0xff]
    %v978 = vld [vmem:[%s99 + $0x48] sm:$0xff]
    %v979 = vld [vmem:[%s99 + $0x50] sm:$0xff]
    %v980 = vld [vmem:[%s99 + $0x58] sm:$0xff]
    %v981 = vld [vmem:[%s99 + $0x60] sm:$0xff]
    %v982 = vld [vmem:[%s99 + $0x68] sm:$0xff]
    %v983 = vld [vmem:[%s99 + $0x70] sm:$0xff]
    %v984 = vld [vmem:[%s99 + $0x78] sm:$0xff]
    %v985 = vld [vmem:[#allocation35] sm:$0x1]
    %v986 = vld [vmem:[%s103] sm:$0xff]
    %v987 = vld [vmem:[%s103 + $0x8] sm:$0xff]
    %v988 = vld [vmem:[%s103 + $0x10] sm:$0xff]
    %v989 = vld [vmem:[%s103 + $0x18] sm:$0xff]
    %v990 = vld [vmem:[%s103 + $0x20] sm:$0xff]
    %v991 = vld [vmem:[%s103 + $0x28] sm:$0xff]
    %v992 = vld [vmem:[%s103 + $0x30] sm:$0xff]
    %v993 = vld [vmem:[%s103 + $0x38] sm:$0xff]
    %v994 = vld [vmem:[#allocation37] sm:$0x1]
    %v995 = vld [vmem:[%s107] sm:$0xff]
    %v996 = vld [vmem:[%s107 + $0x8] sm:$0xff]
    %v997 = vld [vmem:[%s107 + $0x10] sm:$0xff]
    %v998 = vld [vmem:[%s107 + $0x18] sm:$0xff]
    %v999 = vld [vmem:[#allocation38] sm:$0x1]
    %v1000 = vld [vmem:[%s111] sm:$0xff]
    %v1001 = vld [vmem:[%s111 + $0x8] sm:$0xff]
    %v1002 = vld [vmem:[%s111 + $0x10] sm:$0xff]
    %v1003 = vld [vmem:[%s111 + $0x18] sm:$0xff]
    %v1004 = vld [vmem:[%s111 + $0x20] sm:$0xff]
    %v1005 = vld [vmem:[%s111 + $0x28] sm:$0xff]
    %v1006 = vld [vmem:[%s111 + $0x30] sm:$0xff]
    %v1007 = vld [vmem:[%s111 + $0x38] sm:$0xff]
    %v1008 = vld [vmem:[%s111 + $0x40] sm:$0xff]
    %v1009 = vld [vmem:[%s111 + $0x48] sm:$0xff]
    %v1010 = vld [vmem:[%s111 + $0x50] sm:$0xff]
    %v1011 = vld [vmem:[%s111 + $0x58] sm:$0xff]
    %v1012 = vld [vmem:[%s113] sm:$0x3]
    %v1013 = vld [vmem:[%s115] sm:$0xff]
    %v1014 = vld [vmem:[%s115 + $0x8] sm:$0xff]
    %v1015 = vld [vmem:[%s115 + $0x10] sm:$0xff]
    %v1016 = vld [vmem:[%s115 + $0x18] sm:$0xff]
    %v1017 = vld [vmem:[%s115 + $0x20] sm:$0xff]
    %v1018 = vld [vmem:[%s115 + $0x28] sm:$0xff]
    %v1019 = vld [vmem:[%s115 + $0x30] sm:$0xff]
    %v1020 = vld [vmem:[%s115 + $0x38] sm:$0xff]
    %v1021 = vld [vmem:[%s115 + $0x40] sm:$0xff]
    %v1022 = vld [vmem:[%s115 + $0x48] sm:$0xff]
    %v1023 = vld [vmem:[%s115 + $0x50] sm:$0xff]
    %v1024 = vld [vmem:[%s115 + $0x58] sm:$0xff]
    %v1025 = vld [vmem:[%s115 + $0x60] sm:$0xff]
    %v1026 = vld [vmem:[%s115 + $0x68] sm:$0xff]
    %v1027 = vld [vmem:[%s115 + $0x70] sm:$0xff]
    %v1028 = vld [vmem:[%s115 + $0x78] sm:$0xff]
    %v1029 = vld [vmem:[%s115 + $0x80] sm:$0xff]
    %v1030 = vld [vmem:[%s115 + $0x88] sm:$0xff]
    %v1031 = vld [vmem:[%s115 + $0x90] sm:$0xff]
    %v1032 = vld [vmem:[%s115 + $0x98] sm:$0xff]
    %v1033 = vld [vmem:[%s115 + $0xa0] sm:$0xff]
    %v1034 = vld [vmem:[%s115 + $0xa8] sm:$0xff]
    %v1035 = vld [vmem:[%s115 + $0xb0] sm:$0xff]
    %v1036 = vld [vmem:[%s115 + $0xb8] sm:$0xff]
    %v1037 = vld [vmem:[%s115 + $0xc0] sm:$0xff]
    %v1038 = vld [vmem:[%s115 + $0xc8] sm:$0xff]
    %v1039 = vld [vmem:[%s115 + $0xd0] sm:$0xff]
    %v1040 = vld [vmem:[%s115 + $0xd8] sm:$0xff]
    %v1041 = vld [vmem:[%s115 + $0xe0] sm:$0xff]
    %v1042 = vld [vmem:[%s115 + $0xe8] sm:$0xff]
    %v1043 = vld [vmem:[%s115 + $0xf0] sm:$0xff]
    %v1044 = vld [vmem:[%s115 + $0xf8] sm:$0xff]
    %v1045 = vld [vmem:[#allocation40] sm:$0x1]
    %v1046 = vld [vmem:[%s119] sm:$0xff]
    %v1047 = vld [vmem:[%s119 + $0x8] sm:$0xff]
    %v1048 = vld [vmem:[%s119 + $0x10] sm:$0xff]
    %v1049 = vld [vmem:[%s119 + $0x18] sm:$0xff]
    %v1050 = vld [vmem:[%s119 + $0x20] sm:$0xff]
    %v1051 = vld [vmem:[%s119 + $0x28] sm:$0xff]
    %v1052 = vld [vmem:[%s119 + $0x30] sm:$0xff]
    %v1053 = vld [vmem:[%s119 + $0x38] sm:$0xff]
    %v1054 = vld [vmem:[%s119 + $0x40] sm:$0xff]
    %v1055 = vld [vmem:[%s119 + $0x48] sm:$0xff]
    %v1056 = vld [vmem:[%s119 + $0x50] sm:$0xff]
    %v1057 = vld [vmem:[%s119 + $0x58] sm:$0xff]
    %v1058 = vld [vmem:[%s119 + $0x60] sm:$0xff]
    %v1059 = vld [vmem:[%s119 + $0x68] sm:$0xff]
    %v1060 = vld [vmem:[%s119 + $0x70] sm:$0xff]
    %v1061 = vld [vmem:[%s119 + $0x78] sm:$0xff]
    %v1062 = vld [vmem:[#allocation41] sm:$0x1]
    %v1063 = vld [vmem:[%s123] sm:$0xff]
    %v1064 = vld [vmem:[%s123 + $0x8] sm:$0xff]
    %v1065 = vld [vmem:[%s123 + $0x10] sm:$0xff]
    %v1066 = vld [vmem:[%s123 + $0x18] sm:$0xff]
    %v1067 = vld [vmem:[%s123 + $0x20] sm:$0xff]
    %v1068 = vld [vmem:[%s123 + $0x28] sm:$0xff]
    %v1069 = vld [vmem:[%s123 + $0x30] sm:$0xff]
    %v1070 = vld [vmem:[%s123 + $0x38] sm:$0xff]
    %v1071 = vld [vmem:[#allocation43] sm:$0x1]
    %v1072 = vld [vmem:[%s127] sm:$0xff]
    %v1073 = vld [vmem:[%s127 + $0x8] sm:$0xff]
    %v1074 = vld [vmem:[%s127 + $0x10] sm:$0xff]
    %v1075 = vld [vmem:[%s127 + $0x18] sm:$0xff]
    %v1076 = vld [vmem:[#allocation44] sm:$0x1]
    %v1077 = vld [vmem:[%s131] sm:$0xff]
    %v1078 = vld [vmem:[%s131 + $0x8] sm:$0xff]
    %v1079 = vld [vmem:[%s131 + $0x10] sm:$0xff]
    %v1080 = vld [vmem:[%s131 + $0x18] sm:$0xff]
    %v1081 = vld [vmem:[%s131 + $0x20] sm:$0xff]
    %v1082 = vld [vmem:[%s131 + $0x28] sm:$0xff]
    %v1083 = vld [vmem:[#allocation46] sm:$0x3]
    %v1084 = vld [vmem:[%s135] sm:$0xff]
    %v1085 = vld [vmem:[%s135 + $0x8] sm:$0xff]
    %v1086 = vld [vmem:[%s135 + $0x10] sm:$0xff]
    %v1087 = vld [vmem:[%s135 + $0x18] sm:$0xff]
    %v1088 = vld [vmem:[%s135 + $0x20] sm:$0xff]
    %v1089 = vld [vmem:[%s135 + $0x28] sm:$0xff]
    %v1090 = vld [vmem:[%s135 + $0x30] sm:$0xff]
    %v1091 = vld [vmem:[%s135 + $0x38] sm:$0xff]
    %v1092 = vld [vmem:[%s135 + $0x40] sm:$0xff]
    %v1093 = vld [vmem:[%s135 + $0x48] sm:$0xff]
    %v1094 = vld [vmem:[%s135 + $0x50] sm:$0xff]
    %v1095 = vld [vmem:[%s135 + $0x58] sm:$0xff]
    %v1096 = vld [vmem:[%s135 + $0x60] sm:$0xff]
    %v1097 = vld [vmem:[%s135 + $0x68] sm:$0xff]
    %v1098 = vld [vmem:[%s135 + $0x70] sm:$0xff]
    %v1099 = vld [vmem:[%s135 + $0x78] sm:$0xff]
    %v1100 = vld [vmem:[%s135 + $0x80] sm:$0xff]
    %v1101 = vld [vmem:[%s135 + $0x88] sm:$0xff]
    %v1102 = vld [vmem:[%s135 + $0x90] sm:$0xff]
    %v1103 = vld [vmem:[%s135 + $0x98] sm:$0xff]
    %v1104 = vld [vmem:[%s135 + $0xa0] sm:$0xff]
    %v1105 = vld [vmem:[%s135 + $0xa8] sm:$0xff]
    %v1106 = vld [vmem:[%s135 + $0xb0] sm:$0xff]
    %v1107 = vld [vmem:[%s135 + $0xb8] sm:$0xff]
    %v1108 = vld [vmem:[%s135 + $0xc0] sm:$0xff]
    %v1109 = vld [vmem:[%s135 + $0xc8] sm:$0xff]
    %v1110 = vld [vmem:[%s135 + $0xd0] sm:$0xff]
    %v1111 = vld [vmem:[%s135 + $0xd8] sm:$0xff]
    %v1112 = vld [vmem:[%s135 + $0xe0] sm:$0xff]
    %v1113 = vld [vmem:[%s135 + $0xe8] sm:$0xff]
    %v1114 = vld [vmem:[%s135 + $0xf0] sm:$0xff]
    %v1115 = vld [vmem:[%s135 + $0xf8] sm:$0xff]
    %v1116 = vld [vmem:[#allocation47] sm:$0x1]
    %v1117 = vld [vmem:[%s139] sm:$0xff]
    %v1118 = vld [vmem:[%s139 + $0x8] sm:$0xff]
    %v1119 = vld [vmem:[%s139 + $0x10] sm:$0xff]
    %v1120 = vld [vmem:[%s139 + $0x18] sm:$0xff]
    %v1121 = vld [vmem:[%s139 + $0x20] sm:$0xff]
    %v1122 = vld [vmem:[%s139 + $0x28] sm:$0xff]
    %v1123 = vld [vmem:[%s139 + $0x30] sm:$0xff]
    %v1124 = vld [vmem:[%s139 + $0x38] sm:$0xff]
    %v1125 = vld [vmem:[%s139 + $0x40] sm:$0xff]
    %v1126 = vld [vmem:[%s139 + $0x48] sm:$0xff]
    %v1127 = vld [vmem:[%s139 + $0x50] sm:$0xff]
    %v1128 = vld [vmem:[%s139 + $0x58] sm:$0xff]
    %v1129 = vld [vmem:[%s139 + $0x60] sm:$0xff]
    %v1130 = vld [vmem:[%s139 + $0x68] sm:$0xff]
    %v1131 = vld [vmem:[%s139 + $0x70] sm:$0xff]
    %v1132 = vld [vmem:[%s139 + $0x78] sm:$0xff]
    %v1133 = vld [vmem:[#allocation49] sm:$0x1]
    %v1134 = vld [vmem:[%s143] sm:$0xff]
    %v1135 = vld [vmem:[%s143 + $0x8] sm:$0xff]
    %v1136 = vld [vmem:[%s143 + $0x10] sm:$0xff]
    %v1137 = vld [vmem:[%s143 + $0x18] sm:$0xff]
    %v1138 = vld [vmem:[%s143 + $0x20] sm:$0xff]
    %v1139 = vld [vmem:[%s143 + $0x28] sm:$0xff]
    %v1140 = vld [vmem:[%s143 + $0x30] sm:$0xff]
    %v1141 = vld [vmem:[%s143 + $0x38] sm:$0xff]
    %v1142 = vld [vmem:[#allocation50] sm:$0x1]
    %v1143 = vld [vmem:[%s147] sm:$0xff]
    %v1144 = vld [vmem:[%s147 + $0x8] sm:$0xff]
    %v1145 = vld [vmem:[%s147 + $0x10] sm:$0xff]
    %v1146 = vld [vmem:[%s147 + $0x18] sm:$0xff]
    %v1147 = vld [vmem:[#allocation52] sm:$0x1]
    %v1148 = vld [vmem:[%s151] sm:$0xff]
    %v1149 = vld [vmem:[%s151 + $0x8] sm:$0xff]
    %v1150 = vld [vmem:[%s151 + $0x10] sm:$0xff]
    %v1151 = vld [vmem:[#allocation53] sm:$0x1]
    %v1152 = vld [vmem:[%s155] sm:$0xff]
    %v1153 = vld [vmem:[%s155 + $0x8] sm:$0xff]
    %v1154 = vld [vmem:[%s155 + $0x10] sm:$0xff]
    %v1155 = vld [vmem:[%s155 + $0x18] sm:$0xff]
    %v1156 = vld [vmem:[%s155 + $0x20] sm:$0xff]
    %v1157 = vld [vmem:[%s155 + $0x28] sm:$0xff]
    %v1158 = vld [vmem:[%s155 + $0x30] sm:$0xff]
    %v1159 = vld [vmem:[%s155 + $0x38] sm:$0xff]
    %v1160 = vld [vmem:[%s155 + $0x40] sm:$0xff]
    %v1161 = vld [vmem:[%s155 + $0x48] sm:$0xff]
    %v1162 = vld [vmem:[%s155 + $0x50] sm:$0xff]
    %v1163 = vld [vmem:[%s155 + $0x58] sm:$0xff]
    %v1164 = vld [vmem:[%s155 + $0x60] sm:$0xff]
    %v1165 = vld [vmem:[%s155 + $0x68] sm:$0xff]
    %v1166 = vld [vmem:[%s155 + $0x70] sm:$0xff]
    %v1167 = vld [vmem:[%s155 + $0x78] sm:$0xff]
    %v1168 = vld [vmem:[#allocation55] sm:$0x1]
    %v1169 = vld [vmem:[%s159] sm:$0xff]
    %v1170 = vld [vmem:[%s159 + $0x8] sm:$0xff]
    %v1171 = vld [vmem:[%s159 + $0x10] sm:$0xff]
    %v1172 = vld [vmem:[%s159 + $0x18] sm:$0xff]
    %v1173 = vld [vmem:[%s159 + $0x20] sm:$0xff]
    %v1174 = vld [vmem:[%s159 + $0x28] sm:$0xff]
    %v1175 = vld [vmem:[%s159 + $0x30] sm:$0xff]
    %v1176 = vld [vmem:[%s159 + $0x38] sm:$0xff]
    %v1177 = vld [vmem:[#allocation56] sm:$0x1]
    %v1178 = vld [vmem:[%s163] sm:$0xff]
    %v1179 = vld [vmem:[%s163 + $0x8] sm:$0xff]
    %v1180 = vld [vmem:[%s163 + $0x10] sm:$0xff]
    %v1181 = vld [vmem:[%s163 + $0x18] sm:$0xff]
    %v1182 = vld [vmem:[#allocation58] sm:$0x1]
    %v1183 = vld [vmem:[%s167] sm:$0xff]
    %v1184 = vld [vmem:[%s167 + $0x8] sm:$0xff]
    %v1185 = vld [vmem:[#allocation59] sm:$0x1]
    %v1186 = vld [vmem:[%s1] sm:$0xff]
    %v1187 = vld [vmem:[%s3] sm:$0xff]
    %v1188 = vld [vmem:[%s3 + $0x8] sm:$0xff]
    %v1189 = vlaneseq
    %v1190 = vand.u32 %v1189, 127
    %v1191 = vld [vmem:[%s5] sm:$0xff]
    %v1192 = vld [vmem:[%s5 + $0x8] sm:$0xff]
    %1193 = vset.pattern.permute.xlu0 0
    %1194 = vperm.xlu0 %1193, %v1191
    %v1195 = vpop.permute.xlu0 %1194
    %1196 = vset.pattern.permute.xlu0 0
    %1197 = vperm.xlu0 %1196, %v1192
    %v1198 = vpop.permute.xlu0 %1197
    %vm1199 = vcmp.eq.s32.totalorder %v1190, %v1195
    %vm1200 = vcmp.eq.s32.totalorder %v1190, %v1198
    %v1201 = vsel %vm1199, 1, 0
    %v1202 = vsel %vm1200, 1, 0
    %v1203 = vcvt.s32.f32 %v1201
    %v1204 = vcvt.s32.f32 %v1202
    %v1205 = vld [vmem:[%s7] sm:$0xff]
    %v1206 = vld [vmem:[%s7 + $0x8] sm:$0xff]
    %1207 = vset.pattern.permute.xlu0 0
    %1208 = vperm.xlu0 %1207, %v1205
    %v1209 = vpop.permute.xlu0 %1208
    %1210 = vset.pattern.permute.xlu0 0
    %1211 = vperm.xlu0 %1210, %v1206
    %v1212 = vpop.permute.xlu0 %1211
    %vm1213 = vcmp.eq.s32.totalorder %v1190, %v1209
    %vm1214 = vcmp.eq.s32.totalorder %v1190, %v1212
    %v1215 = vsel %vm1213, 1, 0
    %v1216 = vsel %vm1214, 1, 0
    %v1217 = vcvt.s32.f32 %v1215
    %v1218 = vcvt.s32.f32 %v1216
    %v1219 = vld [vmem:[%s9] sm:$0xff]
    %v1220 = vld [vmem:[%s9 + $0x8] sm:$0xff]
    %1221 = vset.pattern.permute.xlu0 0
    %1222 = vperm.xlu0 %1221, %v1219
    %v1223 = vpop.permute.xlu0 %1222
    %1224 = vset.pattern.permute.xlu0 0
    %1225 = vperm.xlu0 %1224, %v1220
    %v1226 = vpop.permute.xlu0 %1225
    %vm1227 = vcmp.eq.s32.totalorder %v1190, %v1223
    %vm1228 = vcmp.eq.s32.totalorder %v1190, %v1226
    %v1229 = vsel %vm1227, 1, 0
    %v1230 = vsel %vm1228, 1, 0
    %v1231 = vcvt.s32.f32 %v1229
    %v1232 = vcvt.s32.f32 %v1230
    %vm1233 = vcmask 64512
    %v1235 = vsel %vm1233, %v1203, 0
    %v1238 = vsel %vm1233, %v1204, 0
    %1240 = vmatprep.subr.mxu0 0.0
    %1241 = vmatpush1.msra.mxu0 0.0
    %1242 = vmatprep.subr.mxu0 0.0
    %1243 = vmatpush1.msra.mxu0 0.0
    %1244 = vmatprep.subr.mxu0 0.0
    %1245 = vmatpush1.msra.mxu0 0.0
    %1246 = vmatprep.subr.mxu0 0.0
    %1247 = vmatpush1.msra.mxu0 0.0
    %1248 = vmatprep.subr.mxu0 0.0
    %1249 = vmatpush1.msra.mxu0 0.0
    %1250 = vmatprep.subr.mxu0 0.0
    %1251 = vmatpush1.msra.mxu0 0.0
    %1252 = vmatprep.subr.mxu0 0.0
    %1253 = vmatpush1.msra.mxu0 0.0
    %1254 = vmatprep.subr.mxu0 0.0
    %1255 = vmatpush1.msra.mxu0 0.0
    %1256 = vmatprep.subr.mxu0 0.0
    %1257 = vmatpush1.msra.mxu0 0.0
    %1258 = vmatprep.subr.mxu0 0.0
    %1259 = vmatpush1.msra.mxu0 0.0
    %1260 = vmatprep.subr.mxu0 0.0
    %1261 = vmatpush1.msra.mxu0 0.0
    %1262 = vmatprep.subr.mxu0 0.0
    %1263 = vmatpush1.msra.mxu0 0.0
    %1264 = vmatprep.subr.mxu0 0.0
    %1265 = vmatpush1.msra.mxu0 0.0
    %1266 = vmatprep.subr.mxu0 0.0
    %1267 = vmatpush1.msra.mxu0 0.0
    %1268 = vmatprep.subr.mxu0 0.0
    %1269 = vmatpush1.msra.mxu0 0.0
    %1270 = vmatprep.subr.mxu0 0.0
    %1271 = vmatpush1.msra.mxu0 %v1186
    %1272 = vmatprep.subr.mxu0 0.0
    %1273 = vmatpush2.msra.mxu0 0.0
    %1274 = vmatprep.subr.mxu0 0.0
    %1275 = vmatpush2.msra.mxu0 0.0
    %1276 = vmatprep.subr.mxu0 0.0
    %1277 = vmatpush2.msra.mxu0 0.0
    %1278 = vmatprep.subr.mxu0 0.0
    %1279 = vmatpush2.msra.mxu0 0.0
    %1280 = vmatprep.subr.mxu0 0.0
    %1281 = vmatpush2.msra.mxu0 0.0
    %1282 = vmatprep.subr.mxu0 0.0
    %1283 = vmatpush2.msra.mxu0 0.0
    %1284 = vmatprep.subr.mxu0 0.0
    %1285 = vmatpush2.msra.mxu0 0.0
    %1286 = vmatprep.subr.mxu0 0.0
    %1287 = vmatpush2.msra.mxu0 0.0
    %1288 = vmatprep.subr.mxu0 0.0
    %1289 = vmatpush2.msra.mxu0 0.0
    %1290 = vmatprep.subr.mxu0 0.0
    %1291 = vmatpush2.msra.mxu0 0.0
    %1292 = vmatprep.subr.mxu0 0.0
    %1293 = vmatpush2.msra.mxu0 0.0
    %1294 = vmatprep.subr.mxu0 0.0
    %1295 = vmatpush2.msra.mxu0 0.0
    %1296 = vmatprep.subr.mxu0 0.0
    %1297 = vmatpush2.msra.mxu0 0.0
    %1298 = vmatprep.subr.mxu0 0.0
    %1299 = vmatpush2.msra.mxu0 0.0
    %1300 = vmatprep.subr.mxu0 0.0
    %1301 = vmatpush2.msra.mxu0 0.0
    %1302 = vmatprep.subr.mxu0 0.0
    %1303 = vmatpush2.msra.mxu0 0.0
    %1304 = vmatprep.mubr.f32.mxu0 0.0
    %1305 = vmatmul.mubr.f32.gmra.mxu0 %v1235
    %v1306 = vpop.f32.mrf.mxu0
    %v1307 = vadd.f32 0.0, %v1306
    %v1308 = vpop.f32.mrf.mxu0
    %1309 = vmatprep.mubr.f32.mxu0 0.0
    %1310 = vmatmul.mubr.f32.gmra.mxu0 %v1238
    %v1311 = vpop.f32.mrf.mxu0
    %v1312 = vadd.f32 0.0, %v1311
    %v1313 = vpop.f32.mrf.mxu0
    %1314 = vdwg.mxu0
    %v1316 = vsel %vm1233, %v1217, 0
    %v1319 = vsel %vm1233, %v1218, 0
    %1321 = vmatprep.subr.mxu0 0.0
    %1322 = vmatpush1.msra.mxu0 0.0
    %1323 = vmatprep.subr.mxu0 0.0
    %1324 = vmatpush1.msra.mxu0 0.0
    %1325 = vmatprep.subr.mxu0 0.0
    %1326 = vmatpush1.msra.mxu0 0.0
    %1327 = vmatprep.subr.mxu0 0.0
    %1328 = vmatpush1.msra.mxu0 0.0
    %1329 = vmatprep.subr.mxu0 0.0
    %1330 = vmatpush1.msra.mxu0 0.0
    %1331 = vmatprep.subr.mxu0 0.0
    %1332 = vmatpush1.msra.mxu0 0.0
    %1333 = vmatprep.subr.mxu0 0.0
    %1334 = vmatpush1.msra.mxu0 0.0
    %1335 = vmatprep.subr.mxu0 0.0
    %1336 = vmatpush1.msra.mxu0 0.0
    %1337 = vmatprep.subr.mxu0 0.0
    %1338 = vmatpush1.msra.mxu0 0.0
    %1339 = vmatprep.subr.mxu0 0.0
    %1340 = vmatpush1.msra.mxu0 0.0
    %1341 = vmatprep.subr.mxu0 0.0
    %1342 = vmatpush1.msra.mxu0 0.0
    %1343 = vmatprep.subr.mxu0 0.0
    %1344 = vmatpush1.msra.mxu0 0.0
    %1345 = vmatprep.subr.mxu0 0.0
    %1346 = vmatpush1.msra.mxu0 0.0
    %1347 = vmatprep.subr.mxu0 0.0
    %1348 = vmatpush1.msra.mxu0 0.0
    %1349 = vmatprep.subr.mxu0 0.0
    %1350 = vmatpush1.msra.mxu0 0.0
    %1351 = vmatprep.subr.mxu0 0.0
    %1352 = vmatpush1.msra.mxu0 %v1186
    %1353 = vmatprep.subr.mxu0 0.0
    %1354 = vmatpush2.msra.mxu0 0.0
    %1355 = vmatprep.subr.mxu0 0.0
    %1356 = vmatpush2.msra.mxu0 0.0
    %1357 = vmatprep.subr.mxu0 0.0
    %1358 = vmatpush2.msra.mxu0 0.0
    %1359 = vmatprep.subr.mxu0 0.0
    %1360 = vmatpush2.msra.mxu0 0.0
    %1361 = vmatprep.subr.mxu0 0.0
    %1362 = vmatpush2.msra.mxu0 0.0
    %1363 = vmatprep.subr.mxu0 0.0
    %1364 = vmatpush2.msra.mxu0 0.0
    %1365 = vmatprep.subr.mxu0 0.0
    %1366 = vmatpush2.msra.mxu0 0.0
    %1367 = vmatprep.subr.mxu0 0.0
    %1368 = vmatpush2.msra.mxu0 0.0
    %1369 = vmatprep.subr.mxu0 0.0
    %1370 = vmatpush2.msra.mxu0 0.0
    %1371 = vmatprep.subr.mxu0 0.0
    %1372 = vmatpush2.msra.mxu0 0.0
    %1373 = vmatprep.subr.mxu0 0.0
    %1374 = vmatpush2.msra.mxu0 0.0
    %1375 = vmatprep.subr.mxu0 0.0
    %1376 = vmatpush2.msra.mxu0 0.0
    %1377 = vmatprep.subr.mxu0 0.0
    %1378 = vmatpush2.msra.mxu0 0.0
    %1379 = vmatprep.subr.mxu0 0.0
    %1380 = vmatpush2.msra.mxu0 0.0
    %1381 = vmatprep.subr.mxu0 0.0
    %1382 = vmatpush2.msra.mxu0 0.0
    %1383 = vmatprep.subr.mxu0 0.0
    %1384 = vmatpush2.msra.mxu0 0.0
    %1385 = vmatprep.mubr.f32.mxu0 0.0
    %1386 = vmatmul.mubr.f32.gmra.mxu0 %v1316
    %v1387 = vpop.f32.mrf.mxu0
    %v1388 = vadd.f32 0.0, %v1387
    %v1389 = vpop.f32.mrf.mxu0
    %1390 = vmatprep.mubr.f32.mxu0 0.0
    %1391 = vmatmul.mubr.f32.gmra.mxu0 %v1319
    %v1392 = vpop.f32.mrf.mxu0
    %v1393 = vadd.f32 0.0, %v1392
    %v1394 = vpop.f32.mrf.mxu0
    %1395 = vdwg.mxu0
    %vm1396 = vcmask 130048
    %v1398 = vsel %vm1396, %v1231, 0
    %v1401 = vsel %vm1396, %v1232, 0
    %1403 = vmatprep.subr.mxu0 0.0
    %1404 = vmatpush1.msra.mxu0 0.0
    %1405 = vmatprep.subr.mxu0 0.0
    %1406 = vmatpush1.msra.mxu0 0.0
    %1407 = vmatprep.subr.mxu0 0.0
    %1408 = vmatpush1.msra.mxu0 0.0
    %1409 = vmatprep.subr.mxu0 0.0
    %1410 = vmatpush1.msra.mxu0 0.0
    %1411 = vmatprep.subr.mxu0 0.0
    %1412 = vmatpush1.msra.mxu0 0.0
    %1413 = vmatprep.subr.mxu0 0.0
    %1414 = vmatpush1.msra.mxu0 0.0
    %1415 = vmatprep.subr.mxu0 0.0
    %1416 = vmatpush1.msra.mxu0 0.0
    %1417 = vmatprep.subr.mxu0 0.0
    %1418 = vmatpush1.msra.mxu0 0.0
    %1419 = vmatprep.subr.mxu0 0.0
    %1420 = vmatpush1.msra.mxu0 0.0
    %1421 = vmatprep.subr.mxu0 0.0
    %1422 = vmatpush1.msra.mxu0 0.0
    %1423 = vmatprep.subr.mxu0 0.0
    %1424 = vmatpush1.msra.mxu0 0.0
    %1425 = vmatprep.subr.mxu0 0.0
    %1426 = vmatpush1.msra.mxu0 0.0
    %1427 = vmatprep.subr.mxu0 0.0
    %1428 = vmatpush1.msra.mxu0 0.0
    %1429 = vmatprep.subr.mxu0 0.0
    %1430 = vmatpush1.msra.mxu0 0.0
    %1431 = vmatprep.subr.mxu0 0.0
    %1432 = vmatpush1.msra.mxu0 %v1188
    %1433 = vmatprep.subr.mxu0 0.0
    %1434 = vmatpush1.msra.mxu0 %v1187
    %1435 = vmatprep.subr.mxu0 0.0
    %1436 = vmatpush2.msra.mxu0 0.0
    %1437 = vmatprep.subr.mxu0 0.0
    %1438 = vmatpush2.msra.mxu0 0.0
    %1439 = vmatprep.subr.mxu0 0.0
    %1440 = vmatpush2.msra.mxu0 0.0
    %1441 = vmatprep.subr.mxu0 0.0
    %1442 = vmatpush2.msra.mxu0 0.0
    %1443 = vmatprep.subr.mxu0 0.0
    %1444 = vmatpush2.msra.mxu0 0.0
    %1445 = vmatprep.subr.mxu0 0.0
    %1446 = vmatpush2.msra.mxu0 0.0
    %1447 = vmatprep.subr.mxu0 0.0
    %1448 = vmatpush2.msra.mxu0 0.0
    %1449 = vmatprep.subr.mxu0 0.0
    %1450 = vmatpush2.msra.mxu0 0.0
    %1451 = vmatprep.subr.mxu0 0.0
    %1452 = vmatpush2.msra.mxu0 0.0
    %1453 = vmatprep.subr.mxu0 0.0
    %1454 = vmatpush2.msra.mxu0 0.0
    %1455 = vmatprep.subr.mxu0 0.0
    %1456 = vmatpush2.msra.mxu0 0.0
    %1457 = vmatprep.subr.mxu0 0.0
    %1458 = vmatpush2.msra.mxu0 0.0
    %1459 = vmatprep.subr.mxu0 0.0
    %1460 = vmatpush2.msra.mxu0 0.0
    %1461 = vmatprep.subr.mxu0 0.0
    %1462 = vmatpush2.msra.mxu0 0.0
    %1463 = vmatprep.subr.mxu0 0.0
    %1464 = vmatpush2.msra.mxu0 0.0
    %1465 = vmatprep.subr.mxu0 0.0
    %1466 = vmatpush2.msra.mxu0 0.0
    %1467 = vmatprep.mubr.f32.mxu0 0.0
    %1468 = vmatmul.mubr.f32.gmra.mxu0 %v1398
    %v1469 = vpop.f32.mrf.mxu0
    %v1470 = vadd.f32 0.0, %v1469
    %v1471 = vpop.f32.mrf.mxu0
    %1472 = vmatprep.mubr.f32.mxu0 0.0
    %1473 = vmatmul.mubr.f32.gmra.mxu0 %v1401
    %v1474 = vpop.f32.mrf.mxu0
    %v1475 = vadd.f32 0.0, %v1474
    %v1476 = vpop.f32.mrf.mxu0
    %1477 = vdwg.mxu0
    %1480 = vrot.lane.b32.xlu0 %v1388, 8
    %v1481 = vpop.permute.xlu0 %1480
    %1482 = vrot.lane.b32.xlu0 %v1393, 8
    %v1483 = vpop.permute.xlu0 %1482
    %1488 = vrot.lane.b32.xlu0 %v1187, 16
    %v1489 = vpop.permute.xlu0 %1488
    %1490 = vrot.lane.b32.xlu0 %v1188, 16
    %v1491 = vpop.permute.xlu0 %1490
    %v1494 = vsel %vm1233, %v1307, %v1481
    %v1495 = vsel %vm1233, %v1312, %v1483
    %v1496 = vsel %vm1396, %v1494, %v1489
    %v1497 = vsel %vm1396, %v1495, %v1491
    %1500 = vrot.lane.b32.xlu0 %v1470, 8
    %v1501 = vpop.permute.xlu0 %1500
    %1502 = vrot.lane.b32.xlu0 %v1475, 8
    %v1503 = vpop.permute.xlu0 %1502
    %1508 = vrot.lane.b32.xlu0 %v1307, 16
    %v1509 = vpop.permute.xlu0 %1508
    %1510 = vrot.lane.b32.xlu0 %v1312, 16
    %v1511 = vpop.permute.xlu0 %1510
    %v1514 = vsel %vm1233, %v1187, %v1501
    %v1515 = vsel %vm1233, %v1188, %v1503
    %v1516 = vsel %vm1396, %v1514, %v1509
    %v1517 = vsel %vm1396, %v1515, %v1511
    %v1519 = vlaneseq
    %v1520 = vshrl.u32 %v1519, 7
    %v1521 = vsub.s32 0, %v1520
    %v1522 = vrot.slane %v829, %v1521
    %vm1524 = vcmask 195584
    %v1526 = vsel %vm1524, %v1496, 0
    %v1529 = vsel %vm1524, %v1497, 0
    %1531 = vmatprep.subr.mxu0 0.0
    %1532 = vmatpush1.msra.mxu0 0.0
    %1533 = vmatprep.subr.mxu0 0.0
    %1534 = vmatpush1.msra.mxu0 0.0
    %1535 = vmatprep.subr.mxu0 0.0
    %1536 = vmatpush1.msra.mxu0 0.0
    %1537 = vmatprep.subr.mxu0 0.0
    %1538 = vmatpush1.msra.mxu0 0.0
    %1539 = vmatprep.subr.mxu0 0.0
    %1540 = vmatpush1.msra.mxu0 0.0
    %1541 = vmatprep.subr.mxu0 0.0
    %1542 = vmatpush1.msra.mxu0 0.0
    %1543 = vmatprep.subr.mxu0 0.0
    %1544 = vmatpush1.msra.mxu0 0.0
    %1545 = vmatprep.subr.mxu0 0.0
    %1546 = vmatpush1.msra.mxu0 0.0
    %1547 = vmatprep.subr.mxu0 0.0
    %1548 = vmatpush1.msra.mxu0 0.0
    %1549 = vmatprep.subr.mxu0 0.0
    %1550 = vmatpush1.msra.mxu0 0.0
    %1551 = vmatprep.subr.mxu0 0.0
    %1552 = vmatpush1.msra.mxu0 0.0
    %1553 = vmatprep.subr.mxu0 0.0
    %1554 = vmatpush1.msra.mxu0 0.0
    %1555 = vmatprep.subr.mxu0 0.0
    %1556 = vmatpush1.msra.mxu0 0.0
    %1557 = vmatprep.subr.mxu0 0.0
    %1558 = vmatpush1.msra.mxu0 %v828
    %1559 = vmatprep.subr.mxu0 0.0
    %1560 = vmatpush1.msra.mxu0 %v827
    %1561 = vmatprep.subr.mxu0 0.0
    %1562 = vmatpush1.msra.mxu0 %v826
    %1563 = vmatprep.subr.mxu0 0.0
    %1564 = vmatpush2.msra.mxu0 0.0
    %1565 = vmatprep.subr.mxu0 0.0
    %1566 = vmatpush2.msra.mxu0 0.0
    %1567 = vmatprep.subr.mxu0 0.0
    %1568 = vmatpush2.msra.mxu0 0.0
    %1569 = vmatprep.subr.mxu0 0.0
    %1570 = vmatpush2.msra.mxu0 0.0
    %1571 = vmatprep.subr.mxu0 0.0
    %1572 = vmatpush2.msra.mxu0 0.0
    %1573 = vmatprep.subr.mxu0 0.0
    %1574 = vmatpush2.msra.mxu0 0.0
    %1575 = vmatprep.subr.mxu0 0.0
    %1576 = vmatpush2.msra.mxu0 0.0
    %1577 = vmatprep.subr.mxu0 0.0
    %1578 = vmatpush2.msra.mxu0 0.0
    %1579 = vmatprep.subr.mxu0 0.0
    %1580 = vmatpush2.msra.mxu0 0.0
    %1581 = vmatprep.subr.mxu0 0.0
    %1582 = vmatpush2.msra.mxu0 0.0
    %1583 = vmatprep.subr.mxu0 0.0
    %1584 = vmatpush2.msra.mxu0 0.0
    %1585 = vmatprep.subr.mxu0 0.0
    %1586 = vmatpush2.msra.mxu0 0.0
    %1587 = vmatprep.subr.mxu0 0.0
    %1588 = vmatpush2.msra.mxu0 0.0
    %1589 = vmatprep.subr.mxu0 0.0
    %1590 = vmatpush2.msra.mxu0 0.0
    %1591 = vmatprep.subr.mxu0 0.0
    %1592 = vmatpush2.msra.mxu0 0.0
    %1593 = vmatprep.subr.mxu0 0.0
    %1594 = vmatpush2.msra.mxu0 0.0
    %1595 = vmatprep.mubr.f32.mxu0 0.0
    %1596 = vmatmul.mubr.f32.gmra.mxu0 %v1526
    %v1597 = vpop.f32.mrf.mxu0
    %v1598 = vadd.f32 %v1522, %v1597
    %v1599 = vpop.f32.mrf.mxu0
    %1600 = vmatprep.mubr.f32.mxu0 0.0
    %1601 = vmatmul.mubr.f32.gmra.mxu0 %v1529
    %v1602 = vpop.f32.mrf.mxu0
    %v1603 = vadd.f32 %v1522, %v1602
    %v1604 = vpop.f32.mrf.mxu0
    %1605 = vdwg.mxu0
    %v1606 = vmax.f32 %v1598, 0.0
    %v1607 = vmax.f32 %v1603, 0.0
    %v1609 = vlaneseq
    %v1610 = vshrl.u32 %v1609, 7
    %v1611 = vsub.s32 0, %v1610
    %v1612 = vrot.slane %v846, %v1611
    %1614 = vmatprep.subr.mxu0 0.0
    %1615 = vmatpush1.msra.mxu0 %v845
    %1616 = vmatprep.subr.mxu0 0.0
    %1617 = vmatpush1.msra.mxu0 %v844
    %1618 = vmatprep.subr.mxu0 0.0
    %1619 = vmatpush1.msra.mxu0 %v843
    %1620 = vmatprep.subr.mxu0 0.0
    %1621 = vmatpush1.msra.mxu0 %v842
    %1622 = vmatprep.subr.mxu0 0.0
    %1623 = vmatpush1.msra.mxu0 %v841
    %1624 = vmatprep.subr.mxu0 0.0
    %1625 = vmatpush1.msra.mxu0 %v840
    %1626 = vmatprep.subr.mxu0 0.0
    %1627 = vmatpush1.msra.mxu0 %v839
    %1628 = vmatprep.subr.mxu0 0.0
    %1629 = vmatpush1.msra.mxu0 %v838
    %1630 = vmatprep.subr.mxu0 0.0
    %1631 = vmatpush1.msra.mxu0 %v837
    %1632 = vmatprep.subr.mxu0 0.0
    %1633 = vmatpush1.msra.mxu0 %v836
    %1634 = vmatprep.subr.mxu0 0.0
    %1635 = vmatpush1.msra.mxu0 %v835
    %1636 = vmatprep.subr.mxu0 0.0
    %1637 = vmatpush1.msra.mxu0 %v834
    %1638 = vmatprep.subr.mxu0 0.0
    %1639 = vmatpush1.msra.mxu0 %v833
    %1640 = vmatprep.subr.mxu0 0.0
    %1641 = vmatpush1.msra.mxu0 %v832
    %1642 = vmatprep.subr.mxu0 0.0
    %1643 = vmatpush1.msra.mxu0 %v831
    %1644 = vmatprep.subr.mxu0 0.0
    %1645 = vmatpush1.msra.mxu0 %v830
    %1646 = vmatprep.subr.mxu0 0.0
    %1647 = vmatpush2.msra.mxu0 0.0
    %1648 = vmatprep.subr.mxu0 0.0
    %1649 = vmatpush2.msra.mxu0 0.0
    %1650 = vmatprep.subr.mxu0 0.0
    %1651 = vmatpush2.msra.mxu0 0.0
    %1652 = vmatprep.subr.mxu0 0.0
    %1653 = vmatpush2.msra.mxu0 0.0
    %1654 = vmatprep.subr.mxu0 0.0
    %1655 = vmatpush2.msra.mxu0 0.0
    %1656 = vmatprep.subr.mxu0 0.0
    %1657 = vmatpush2.msra.mxu0 0.0
    %1658 = vmatprep.subr.mxu0 0.0
    %1659 = vmatpush2.msra.mxu0 0.0
    %1660 = vmatprep.subr.mxu0 0.0
    %1661 = vmatpush2.msra.mxu0 0.0
    %1662 = vmatprep.subr.mxu0 0.0
    %1663 = vmatpush2.msra.mxu0 0.0
    %1664 = vmatprep.subr.mxu0 0.0
    %1665 = vmatpush2.msra.mxu0 0.0
    %1666 = vmatprep.subr.mxu0 0.0
    %1667 = vmatpush2.msra.mxu0 0.0
    %1668 = vmatprep.subr.mxu0 0.0
    %1669 = vmatpush2.msra.mxu0 0.0
    %1670 = vmatprep.subr.mxu0 0.0
    %1671 = vmatpush2.msra.mxu0 0.0
    %1672 = vmatprep.subr.mxu0 0.0
    %1673 = vmatpush2.msra.mxu0 0.0
    %1674 = vmatprep.subr.mxu0 0.0
    %1675 = vmatpush2.msra.mxu0 0.0
    %1676 = vmatprep.subr.mxu0 0.0
    %1677 = vmatpush2.msra.mxu0 0.0
    %1678 = vmatprep.mubr.f32.mxu0 0.0
    %1679 = vmatmul.mubr.f32.gmra.mxu0 %v1606
    %v1680 = vpop.f32.mrf.mxu0
    %v1681 = vadd.f32 %v1612, %v1680
    %v1682 = vpop.f32.mrf.mxu0
    %1683 = vmatprep.mubr.f32.mxu0 0.0
    %1684 = vmatmul.mubr.f32.gmra.mxu0 %v1607
    %v1685 = vpop.f32.mrf.mxu0
    %v1686 = vadd.f32 %v1612, %v1685
    %v1687 = vpop.f32.mrf.mxu0
    %1688 = vdwg.mxu0
    %v1689 = vmax.f32 %v1681, 0.0
    %v1690 = vmax.f32 %v1686, 0.0
    %v1692 = vlaneseq
    %v1693 = vshrl.u32 %v1692, 7
    %v1694 = vsub.s32 0, %v1693
    %v1695 = vrot.slane %v855, %v1694
    %vm1697 = vcmask 523264
    %v1699 = vsel %vm1697, %v1689, 0
    %v1702 = vsel %vm1697, %v1690, 0
    %1704 = vmatprep.subr.mxu0 0.0
    %1705 = vmatpush1.msra.mxu0 0.0
    %1706 = vmatprep.subr.mxu0 0.0
    %1707 = vmatpush1.msra.mxu0 0.0
    %1708 = vmatprep.subr.mxu0 0.0
    %1709 = vmatpush1.msra.mxu0 0.0
    %1710 = vmatprep.subr.mxu0 0.0
    %1711 = vmatpush1.msra.mxu0 0.0
    %1712 = vmatprep.subr.mxu0 0.0
    %1713 = vmatpush1.msra.mxu0 0.0
    %1714 = vmatprep.subr.mxu0 0.0
    %1715 = vmatpush1.msra.mxu0 0.0
    %1716 = vmatprep.subr.mxu0 0.0
    %1717 = vmatpush1.msra.mxu0 0.0
    %1718 = vmatprep.subr.mxu0 0.0
    %1719 = vmatpush1.msra.mxu0 0.0
    %1720 = vmatprep.subr.mxu0 0.0
    %1721 = vmatpush1.msra.mxu0 %v854
    %1722 = vmatprep.subr.mxu0 0.0
    %1723 = vmatpush1.msra.mxu0 %v853
    %1724 = vmatprep.subr.mxu0 0.0
    %1725 = vmatpush1.msra.mxu0 %v852
    %1726 = vmatprep.subr.mxu0 0.0
    %1727 = vmatpush1.msra.mxu0 %v851
    %1728 = vmatprep.subr.mxu0 0.0
    %1729 = vmatpush1.msra.mxu0 %v850
    %1730 = vmatprep.subr.mxu0 0.0
    %1731 = vmatpush1.msra.mxu0 %v849
    %1732 = vmatprep.subr.mxu0 0.0
    %1733 = vmatpush1.msra.mxu0 %v848
    %1734 = vmatprep.subr.mxu0 0.0
    %1735 = vmatpush1.msra.mxu0 %v847
    %1736 = vmatprep.subr.mxu0 0.0
    %1737 = vmatpush2.msra.mxu0 0.0
    %1738 = vmatprep.subr.mxu0 0.0
    %1739 = vmatpush2.msra.mxu0 0.0
    %1740 = vmatprep.subr.mxu0 0.0
    %1741 = vmatpush2.msra.mxu0 0.0
    %1742 = vmatprep.subr.mxu0 0.0
    %1743 = vmatpush2.msra.mxu0 0.0
    %1744 = vmatprep.subr.mxu0 0.0
    %1745 = vmatpush2.msra.mxu0 0.0
    %1746 = vmatprep.subr.mxu0 0.0
    %1747 = vmatpush2.msra.mxu0 0.0
    %1748 = vmatprep.subr.mxu0 0.0
    %1749 = vmatpush2.msra.mxu0 0.0
    %1750 = vmatprep.subr.mxu0 0.0
    %1751 = vmatpush2.msra.mxu0 0.0
    %1752 = vmatprep.subr.mxu0 0.0
    %1753 = vmatpush2.msra.mxu0 0.0
    %1754 = vmatprep.subr.mxu0 0.0
    %1755 = vmatpush2.msra.mxu0 0.0
    %1756 = vmatprep.subr.mxu0 0.0
    %1757 = vmatpush2.msra.mxu0 0.0
    %1758 = vmatprep.subr.mxu0 0.0
    %1759 = vmatpush2.msra.mxu0 0.0
    %1760 = vmatprep.subr.mxu0 0.0
    %1761 = vmatpush2.msra.mxu0 0.0
    %1762 = vmatprep.subr.mxu0 0.0
    %1763 = vmatpush2.msra.mxu0 0.0
    %1764 = vmatprep.subr.mxu0 0.0
    %1765 = vmatpush2.msra.mxu0 0.0
    %1766 = vmatprep.subr.mxu0 0.0
    %1767 = vmatpush2.msra.mxu0 0.0
    %1768 = vmatprep.mubr.f32.mxu0 0.0
    %1769 = vmatmul.mubr.f32.gmra.mxu0 %v1699
    %v1770 = vpop.f32.mrf.mxu0
    %v1771 = vadd.f32 %v1695, %v1770
    %v1772 = vpop.f32.mrf.mxu0
    %1773 = vmatprep.mubr.f32.mxu0 0.0
    %1774 = vmatmul.mubr.f32.gmra.mxu0 %v1702
    %v1775 = vpop.f32.mrf.mxu0
    %v1776 = vadd.f32 %v1695, %v1775
    %v1777 = vpop.f32.mrf.mxu0
    %1778 = vdwg.mxu0
    %v1779 = vmax.f32 %v1771, 0.0
    %v1780 = vmax.f32 %v1776, 0.0
    %v1782 = vlaneseq
    %v1783 = vshrl.u32 %v1782, 7
    %v1784 = vsub.s32 0, %v1783
    %v1785 = vrot.slane %v860, %v1784
    %vm1787 = vcmask 261120
    %v1789 = vsel %vm1787, %v1779, 0
    %v1792 = vsel %vm1787, %v1780, 0
    %1794 = vmatprep.subr.mxu0 0.0
    %1795 = vmatpush1.msra.mxu0 0.0
    %1796 = vmatprep.subr.mxu0 0.0
    %1797 = vmatpush1.msra.mxu0 0.0
    %1798 = vmatprep.subr.mxu0 0.0
    %1799 = vmatpush1.msra.mxu0 0.0
    %1800 = vmatprep.subr.mxu0 0.0
    %1801 = vmatpush1.msra.mxu0 0.0
    %1802 = vmatprep.subr.mxu0 0.0
    %1803 = vmatpush1.msra.mxu0 0.0
    %1804 = vmatprep.subr.mxu0 0.0
    %1805 = vmatpush1.msra.mxu0 0.0
    %1806 = vmatprep.subr.mxu0 0.0
    %1807 = vmatpush1.msra.mxu0 0.0
    %1808 = vmatprep.subr.mxu0 0.0
    %1809 = vmatpush1.msra.mxu0 0.0
    %1810 = vmatprep.subr.mxu0 0.0
    %1811 = vmatpush1.msra.mxu0 0.0
    %1812 = vmatprep.subr.mxu0 0.0
    %1813 = vmatpush1.msra.mxu0 0.0
    %1814 = vmatprep.subr.mxu0 0.0
    %1815 = vmatpush1.msra.mxu0 0.0
    %1816 = vmatprep.subr.mxu0 0.0
    %1817 = vmatpush1.msra.mxu0 0.0
    %1818 = vmatprep.subr.mxu0 0.0
    %1819 = vmatpush1.msra.mxu0 %v859
    %1820 = vmatprep.subr.mxu0 0.0
    %1821 = vmatpush1.msra.mxu0 %v858
    %1822 = vmatprep.subr.mxu0 0.0
    %1823 = vmatpush1.msra.mxu0 %v857
    %1824 = vmatprep.subr.mxu0 0.0
    %1825 = vmatpush1.msra.mxu0 %v856
    %1826 = vmatprep.subr.mxu0 0.0
    %1827 = vmatpush2.msra.mxu0 0.0
    %1828 = vmatprep.subr.mxu0 0.0
    %1829 = vmatpush2.msra.mxu0 0.0
    %1830 = vmatprep.subr.mxu0 0.0
    %1831 = vmatpush2.msra.mxu0 0.0
    %1832 = vmatprep.subr.mxu0 0.0
    %1833 = vmatpush2.msra.mxu0 0.0
    %1834 = vmatprep.subr.mxu0 0.0
    %1835 = vmatpush2.msra.mxu0 0.0
    %1836 = vmatprep.subr.mxu0 0.0
    %1837 = vmatpush2.msra.mxu0 0.0
    %1838 = vmatprep.subr.mxu0 0.0
    %1839 = vmatpush2.msra.mxu0 0.0
    %1840 = vmatprep.subr.mxu0 0.0
    %1841 = vmatpush2.msra.mxu0 0.0
    %1842 = vmatprep.subr.mxu0 0.0
    %1843 = vmatpush2.msra.mxu0 0.0
    %1844 = vmatprep.subr.mxu0 0.0
    %1845 = vmatpush2.msra.mxu0 0.0
    %1846 = vmatprep.subr.mxu0 0.0
    %1847 = vmatpush2.msra.mxu0 0.0
    %1848 = vmatprep.subr.mxu0 0.0
    %1849 = vmatpush2.msra.mxu0 0.0
    %1850 = vmatprep.subr.mxu0 0.0
    %1851 = vmatpush2.msra.mxu0 0.0
    %1852 = vmatprep.subr.mxu0 0.0
    %1853 = vmatpush2.msra.mxu0 0.0
    %1854 = vmatprep.subr.mxu0 0.0
    %1855 = vmatpush2.msra.mxu0 0.0
    %1856 = vmatprep.subr.mxu0 0.0
    %1857 = vmatpush2.msra.mxu0 0.0
    %1858 = vmatprep.mubr.f32.mxu0 0.0
    %1859 = vmatmul.mubr.f32.gmra.mxu0 %v1789
    %v1860 = vpop.f32.mrf.mxu0
    %v1861 = vadd.f32 %v1785, %v1860
    %v1862 = vpop.f32.mrf.mxu0
    %1863 = vmatprep.mubr.f32.mxu0 0.0
    %1864 = vmatmul.mubr.f32.gmra.mxu0 %v1792
    %v1865 = vpop.f32.mrf.mxu0
    %v1866 = vadd.f32 %v1785, %v1865
    %v1867 = vpop.f32.mrf.mxu0
    %1868 = vdwg.mxu0
    %v1869 = vmax.f32 %v1861, 0.0
    %v1870 = vmax.f32 %v1866, 0.0
    %v1872 = vlaneseq
    %v1873 = vshrl.u32 %v1872, 7
    %v1874 = vsub.s32 0, %v1873
    %v1875 = vrot.slane %v863, %v1874
    %v1878 = vsel %vm1396, %v1869, 0
    %v1881 = vsel %vm1396, %v1870, 0
    %1883 = vmatprep.subr.mxu0 0.0
    %1884 = vmatpush1.msra.mxu0 0.0
    %1885 = vmatprep.subr.mxu0 0.0
    %1886 = vmatpush1.msra.mxu0 0.0
    %1887 = vmatprep.subr.mxu0 0.0
    %1888 = vmatpush1.msra.mxu0 0.0
    %1889 = vmatprep.subr.mxu0 0.0
    %1890 = vmatpush1.msra.mxu0 0.0
    %1891 = vmatprep.subr.mxu0 0.0
    %1892 = vmatpush1.msra.mxu0 0.0
    %1893 = vmatprep.subr.mxu0 0.0
    %1894 = vmatpush1.msra.mxu0 0.0
    %1895 = vmatprep.subr.mxu0 0.0
    %1896 = vmatpush1.msra.mxu0 0.0
    %1897 = vmatprep.subr.mxu0 0.0
    %1898 = vmatpush1.msra.mxu0 0.0
    %1899 = vmatprep.subr.mxu0 0.0
    %1900 = vmatpush1.msra.mxu0 0.0
    %1901 = vmatprep.subr.mxu0 0.0
    %1902 = vmatpush1.msra.mxu0 0.0
    %1903 = vmatprep.subr.mxu0 0.0
    %1904 = vmatpush1.msra.mxu0 0.0
    %1905 = vmatprep.subr.mxu0 0.0
    %1906 = vmatpush1.msra.mxu0 0.0
    %1907 = vmatprep.subr.mxu0 0.0
    %1908 = vmatpush1.msra.mxu0 0.0
    %1909 = vmatprep.subr.mxu0 0.0
    %1910 = vmatpush1.msra.mxu0 0.0
    %1911 = vmatprep.subr.mxu0 0.0
    %1912 = vmatpush1.msra.mxu0 %v862
    %1913 = vmatprep.subr.mxu0 0.0
    %1914 = vmatpush1.msra.mxu0 %v861
    %1915 = vmatprep.subr.mxu0 0.0
    %1916 = vmatpush2.msra.mxu0 0.0
    %1917 = vmatprep.subr.mxu0 0.0
    %1918 = vmatpush2.msra.mxu0 0.0
    %1919 = vmatprep.subr.mxu0 0.0
    %1920 = vmatpush2.msra.mxu0 0.0
    %1921 = vmatprep.subr.mxu0 0.0
    %1922 = vmatpush2.msra.mxu0 0.0
    %1923 = vmatprep.subr.mxu0 0.0
    %1924 = vmatpush2.msra.mxu0 0.0
    %1925 = vmatprep.subr.mxu0 0.0
    %1926 = vmatpush2.msra.mxu0 0.0
    %1927 = vmatprep.subr.mxu0 0.0
    %1928 = vmatpush2.msra.mxu0 0.0
    %1929 = vmatprep.subr.mxu0 0.0
    %1930 = vmatpush2.msra.mxu0 0.0
    %1931 = vmatprep.subr.mxu0 0.0
    %1932 = vmatpush2.msra.mxu0 0.0
    %1933 = vmatprep.subr.mxu0 0.0
    %1934 = vmatpush2.msra.mxu0 0.0
    %1935 = vmatprep.subr.mxu0 0.0
    %1936 = vmatpush2.msra.mxu0 0.0
    %1937 = vmatprep.subr.mxu0 0.0
    %1938 = vmatpush2.msra.mxu0 0.0
    %1939 = vmatprep.subr.mxu0 0.0
    %1940 = vmatpush2.msra.mxu0 0.0
    %1941 = vmatprep.subr.mxu0 0.0
    %1942 = vmatpush2.msra.mxu0 0.0
    %1943 = vmatprep.subr.mxu0 0.0
    %1944 = vmatpush2.msra.mxu0 0.0
    %1945 = vmatprep.subr.mxu0 0.0
    %1946 = vmatpush2.msra.mxu0 0.0
    %1947 = vmatprep.mubr.f32.mxu0 0.0
    %1948 = vmatmul.mubr.f32.gmra.mxu0 %v1878
    %v1949 = vpop.f32.mrf.mxu0
    %v1950 = vadd.f32 %v1875, %v1949
    %v1951 = vpop.f32.mrf.mxu0
    %1952 = vmatprep.mubr.f32.mxu0 0.0
    %1953 = vmatmul.mubr.f32.gmra.mxu0 %v1881
    %v1954 = vpop.f32.mrf.mxu0
    %v1955 = vadd.f32 %v1875, %v1954
    %v1956 = vpop.f32.mrf.mxu0
    %1957 = vdwg.mxu0
    %v1959 = vlaneseq
    %v1960 = vshrl.u32 %v1959, 7
    %v1961 = vsub.s32 0, %v1960
    %v1962 = vrot.slane %v791, %v1961
    %v1965 = vsel %vm1524, %v1516, 0
    %v1968 = vsel %vm1524, %v1517, 0
    %1970 = vmatprep.subr.mxu0 0.0
    %1971 = vmatpush1.msra.mxu0 0.0
    %1972 = vmatprep.subr.mxu0 0.0
    %1973 = vmatpush1.msra.mxu0 0.0
    %1974 = vmatprep.subr.mxu0 0.0
    %1975 = vmatpush1.msra.mxu0 0.0
    %1976 = vmatprep.subr.mxu0 0.0
    %1977 = vmatpush1.msra.mxu0 0.0
    %1978 = vmatprep.subr.mxu0 0.0
    %1979 = vmatpush1.msra.mxu0 0.0
    %1980 = vmatprep.subr.mxu0 0.0
    %1981 = vmatpush1.msra.mxu0 0.0
    %1982 = vmatprep.subr.mxu0 0.0
    %1983 = vmatpush1.msra.mxu0 0.0
    %1984 = vmatprep.subr.mxu0 0.0
    %1985 = vmatpush1.msra.mxu0 0.0
    %1986 = vmatprep.subr.mxu0 0.0
    %1987 = vmatpush1.msra.mxu0 0.0
    %1988 = vmatprep.subr.mxu0 0.0
    %1989 = vmatpush1.msra.mxu0 0.0
    %1990 = vmatprep.subr.mxu0 0.0
    %1991 = vmatpush1.msra.mxu0 0.0
    %1992 = vmatprep.subr.mxu0 0.0
    %1993 = vmatpush1.msra.mxu0 0.0
    %1994 = vmatprep.subr.mxu0 0.0
    %1995 = vmatpush1.msra.mxu0 0.0
    %1996 = vmatprep.subr.mxu0 0.0
    %1997 = vmatpush1.msra.mxu0 %v790
    %1998 = vmatprep.subr.mxu0 0.0
    %1999 = vmatpush1.msra.mxu0 %v789
    %2000 = vmatprep.subr.mxu0 0.0
    %2001 = vmatpush1.msra.mxu0 %v788
    %2002 = vmatprep.subr.mxu0 0.0
    %2003 = vmatpush2.msra.mxu0 0.0
    %2004 = vmatprep.subr.mxu0 0.0
    %2005 = vmatpush2.msra.mxu0 0.0
    %2006 = vmatprep.subr.mxu0 0.0
    %2007 = vmatpush2.msra.mxu0 0.0
    %2008 = vmatprep.subr.mxu0 0.0
    %2009 = vmatpush2.msra.mxu0 0.0
    %2010 = vmatprep.subr.mxu0 0.0
    %2011 = vmatpush2.msra.mxu0 0.0
    %2012 = vmatprep.subr.mxu0 0.0
    %2013 = vmatpush2.msra.mxu0 0.0
    %2014 = vmatprep.subr.mxu0 0.0
    %2015 = vmatpush2.msra.mxu0 0.0
    %2016 = vmatprep.subr.mxu0 0.0
    %2017 = vmatpush2.msra.mxu0 0.0
    %2018 = vmatprep.subr.mxu0 0.0
    %2019 = vmatpush2.msra.mxu0 0.0
    %2020 = vmatprep.subr.mxu0 0.0
    %2021 = vmatpush2.msra.mxu0 0.0
    %2022 = vmatprep.subr.mxu0 0.0
    %2023 = vmatpush2.msra.mxu0 0.0
    %2024 = vmatprep.subr.mxu0 0.0
    %2025 = vmatpush2.msra.mxu0 0.0
    %2026 = vmatprep.subr.mxu0 0.0
    %2027 = vmatpush2.msra.mxu0 0.0
    %2028 = vmatprep.subr.mxu0 0.0
    %2029 = vmatpush2.msra.mxu0 0.0
    %2030 = vmatprep.subr.mxu0 0.0
    %2031 = vmatpush2.msra.mxu0 0.0
    %2032 = vmatprep.subr.mxu0 0.0
    %2033 = vmatpush2.msra.mxu0 0.0
    %2034 = vmatprep.mubr.f32.mxu0 0.0
    %2035 = vmatmul.mubr.f32.gmra.mxu0 %v1965
    %v2036 = vpop.f32.mrf.mxu0
    %v2037 = vadd.f32 %v1962, %v2036
    %v2038 = vpop.f32.mrf.mxu0
    %2039 = vmatprep.mubr.f32.mxu0 0.0
    %2040 = vmatmul.mubr.f32.gmra.mxu0 %v1968
    %v2041 = vpop.f32.mrf.mxu0
    %v2042 = vadd.f32 %v1962, %v2041
    %v2043 = vpop.f32.mrf.mxu0
    %2044 = vdwg.mxu0
    %v2045 = vmax.f32 %v2037, 0.0
    %v2046 = vmax.f32 %v2042, 0.0
    %v2048 = vlaneseq
    %v2049 = vshrl.u32 %v2048, 7
    %v2050 = vsub.s32 0, %v2049
    %v2051 = vrot.slane %v808, %v2050
    %2053 = vmatprep.subr.mxu0 0.0
    %2054 = vmatpush1.msra.mxu0 %v807
    %2055 = vmatprep.subr.mxu0 0.0
    %2056 = vmatpush1.msra.mxu0 %v806
    %2057 = vmatprep.subr.mxu0 0.0
    %2058 = vmatpush1.msra.mxu0 %v805
    %2059 = vmatprep.subr.mxu0 0.0
    %2060 = vmatpush1.msra.mxu0 %v804
    %2061 = vmatprep.subr.mxu0 0.0
    %2062 = vmatpush1.msra.mxu0 %v803
    %2063 = vmatprep.subr.mxu0 0.0
    %2064 = vmatpush1.msra.mxu0 %v802
    %2065 = vmatprep.subr.mxu0 0.0
    %2066 = vmatpush1.msra.mxu0 %v801
    %2067 = vmatprep.subr.mxu0 0.0
    %2068 = vmatpush1.msra.mxu0 %v800
    %2069 = vmatprep.subr.mxu0 0.0
    %2070 = vmatpush1.msra.mxu0 %v799
    %2071 = vmatprep.subr.mxu0 0.0
    %2072 = vmatpush1.msra.mxu0 %v798
    %2073 = vmatprep.subr.mxu0 0.0
    %2074 = vmatpush1.msra.mxu0 %v797
    %2075 = vmatprep.subr.mxu0 0.0
    %2076 = vmatpush1.msra.mxu0 %v796
    %2077 = vmatprep.subr.mxu0 0.0
    %2078 = vmatpush1.msra.mxu0 %v795
    %2079 = vmatprep.subr.mxu0 0.0
    %2080 = vmatpush1.msra.mxu0 %v794
    %2081 = vmatprep.subr.mxu0 0.0
    %2082 = vmatpush1.msra.mxu0 %v793
    %2083 = vmatprep.subr.mxu0 0.0
    %2084 = vmatpush1.msra.mxu0 %v792
    %2085 = vmatprep.subr.mxu0 0.0
    %2086 = vmatpush2.msra.mxu0 0.0
    %2087 = vmatprep.subr.mxu0 0.0
    %2088 = vmatpush2.msra.mxu0 0.0
    %2089 = vmatprep.subr.mxu0 0.0
    %2090 = vmatpush2.msra.mxu0 0.0
    %2091 = vmatprep.subr.mxu0 0.0
    %2092 = vmatpush2.msra.mxu0 0.0
    %2093 = vmatprep.subr.mxu0 0.0
    %2094 = vmatpush2.msra.mxu0 0.0
    %2095 = vmatprep.subr.mxu0 0.0
    %2096 = vmatpush2.msra.mxu0 0.0
    %2097 = vmatprep.subr.mxu0 0.0
    %2098 = vmatpush2.msra.mxu0 0.0
    %2099 = vmatprep.subr.mxu0 0.0
    %2100 = vmatpush2.msra.mxu0 0.0
    %2101 = vmatprep.subr.mxu0 0.0
    %2102 = vmatpush2.msra.mxu0 0.0
    %2103 = vmatprep.subr.mxu0 0.0
    %2104 = vmatpush2.msra.mxu0 0.0
    %2105 = vmatprep.subr.mxu0 0.0
    %2106 = vmatpush2.msra.mxu0 0.0
    %2107 = vmatprep.subr.mxu0 0.0
    %2108 = vmatpush2.msra.mxu0 0.0
    %2109 = vmatprep.subr.mxu0 0.0
    %2110 = vmatpush2.msra.mxu0 0.0
    %2111 = vmatprep.subr.mxu0 0.0
    %2112 = vmatpush2.msra.mxu0 0.0
    %2113 = vmatprep.subr.mxu0 0.0
    %2114 = vmatpush2.msra.mxu0 0.0
    %2115 = vmatprep.subr.mxu0 0.0
    %2116 = vmatpush2.msra.mxu0 0.0
    %2117 = vmatprep.mubr.f32.mxu0 0.0
    %2118 = vmatmul.mubr.f32.gmra.mxu0 %v2045
    %v2119 = vpop.f32.mrf.mxu0
    %v2120 = vadd.f32 %v2051, %v2119
    %v2121 = vpop.f32.mrf.mxu0
    %2122 = vmatprep.mubr.f32.mxu0 0.0
    %2123 = vmatmul.mubr.f32.gmra.mxu0 %v2046
    %v2124 = vpop.f32.mrf.mxu0
    %v2125 = vadd.f32 %v2051, %v2124
    %v2126 = vpop.f32.mrf.mxu0
    %2127 = vdwg.mxu0
    %v2128 = vmax.f32 %v2120, 0.0
    %v2129 = vmax.f32 %v2125, 0.0
    %v2131 = vlaneseq
    %v2132 = vshrl.u32 %v2131, 7
    %v2133 = vsub.s32 0, %v2132
    %v2134 = vrot.slane %v817, %v2133
    %v2137 = vsel %vm1697, %v2128, 0
    %v2140 = vsel %vm1697, %v2129, 0
    %2142 = vmatprep.subr.mxu0 0.0
    %2143 = vmatpush1.msra.mxu0 0.0
    %2144 = vmatprep.subr.mxu0 0.0
    %2145 = vmatpush1.msra.mxu0 0.0
    %2146 = vmatprep.subr.mxu0 0.0
    %2147 = vmatpush1.msra.mxu0 0.0
    %2148 = vmatprep.subr.mxu0 0.0
    %2149 = vmatpush1.msra.mxu0 0.0
    %2150 = vmatprep.subr.mxu0 0.0
    %2151 = vmatpush1.msra.mxu0 0.0
    %2152 = vmatprep.subr.mxu0 0.0
    %2153 = vmatpush1.msra.mxu0 0.0
    %2154 = vmatprep.subr.mxu0 0.0
    %2155 = vmatpush1.msra.mxu0 0.0
    %2156 = vmatprep.subr.mxu0 0.0
    %2157 = vmatpush1.msra.mxu0 0.0
    %2158 = vmatprep.subr.mxu0 0.0
    %2159 = vmatpush1.msra.mxu0 %v816
    %2160 = vmatprep.subr.mxu0 0.0
    %2161 = vmatpush1.msra.mxu0 %v815
    %2162 = vmatprep.subr.mxu0 0.0
    %2163 = vmatpush1.msra.mxu0 %v814
    %2164 = vmatprep.subr.mxu0 0.0
    %2165 = vmatpush1.msra.mxu0 %v813
    %2166 = vmatprep.subr.mxu0 0.0
    %2167 = vmatpush1.msra.mxu0 %v812
    %2168 = vmatprep.subr.mxu0 0.0
    %2169 = vmatpush1.msra.mxu0 %v811
    %2170 = vmatprep.subr.mxu0 0.0
    %2171 = vmatpush1.msra.mxu0 %v810
    %2172 = vmatprep.subr.mxu0 0.0
    %2173 = vmatpush1.msra.mxu0 %v809
    %2174 = vmatprep.subr.mxu0 0.0
    %2175 = vmatpush2.msra.mxu0 0.0
    %2176 = vmatprep.subr.mxu0 0.0
    %2177 = vmatpush2.msra.mxu0 0.0
    %2178 = vmatprep.subr.mxu0 0.0
    %2179 = vmatpush2.msra.mxu0 0.0
    %2180 = vmatprep.subr.mxu0 0.0
    %2181 = vmatpush2.msra.mxu0 0.0
    %2182 = vmatprep.subr.mxu0 0.0
    %2183 = vmatpush2.msra.mxu0 0.0
    %2184 = vmatprep.subr.mxu0 0.0
    %2185 = vmatpush2.msra.mxu0 0.0
    %2186 = vmatprep.subr.mxu0 0.0
    %2187 = vmatpush2.msra.mxu0 0.0
    %2188 = vmatprep.subr.mxu0 0.0
    %2189 = vmatpush2.msra.mxu0 0.0
    %2190 = vmatprep.subr.mxu0 0.0
    %2191 = vmatpush2.msra.mxu0 0.0
    %2192 = vmatprep.subr.mxu0 0.0
    %2193 = vmatpush2.msra.mxu0 0.0
    %2194 = vmatprep.subr.mxu0 0.0
    %2195 = vmatpush2.msra.mxu0 0.0
    %2196 = vmatprep.subr.mxu0 0.0
    %2197 = vmatpush2.msra.mxu0 0.0
    %2198 = vmatprep.subr.mxu0 0.0
    %2199 = vmatpush2.msra.mxu0 0.0
    %2200 = vmatprep.subr.mxu0 0.0
    %2201 = vmatpush2.msra.mxu0 0.0
    %2202 = vmatprep.subr.mxu0 0.0
    %2203 = vmatpush2.msra.mxu0 0.0
    %2204 = vmatprep.subr.mxu0 0.0
    %2205 = vmatpush2.msra.mxu0 0.0
    %2206 = vmatprep.mubr.f32.mxu0 0.0
    %2207 = vmatmul.mubr.f32.gmra.mxu0 %v2137
    %v2208 = vpop.f32.mrf.mxu0
    %v2209 = vadd.f32 %v2134, %v2208
    %v2210 = vpop.f32.mrf.mxu0
    %2211 = vmatprep.mubr.f32.mxu0 0.0
    %2212 = vmatmul.mubr.f32.gmra.mxu0 %v2140
    %v2213 = vpop.f32.mrf.mxu0
    %v2214 = vadd.f32 %v2134, %v2213
    %v2215 = vpop.f32.mrf.mxu0
    %2216 = vdwg.mxu0
    %v2217 = vmax.f32 %v2209, 0.0
    %v2218 = vmax.f32 %v2214, 0.0
    %v2220 = vlaneseq
    %v2221 = vshrl.u32 %v2220, 7
    %v2222 = vsub.s32 0, %v2221
    %v2223 = vrot.slane %v822, %v2222
    %v2226 = vsel %vm1787, %v2217, 0
    %v2229 = vsel %vm1787, %v2218, 0
    %2231 = vmatprep.subr.mxu0 0.0
    %2232 = vmatpush1.msra.mxu0 0.0
    %2233 = vmatprep.subr.mxu0 0.0
    %2234 = vmatpush1.msra.mxu0 0.0
    %2235 = vmatprep.subr.mxu0 0.0
    %2236 = vmatpush1.msra.mxu0 0.0
    %2237 = vmatprep.subr.mxu0 0.0
    %2238 = vmatpush1.msra.mxu0 0.0
    %2239 = vmatprep.subr.mxu0 0.0
    %2240 = vmatpush1.msra.mxu0 0.0
    %2241 = vmatprep.subr.mxu0 0.0
    %2242 = vmatpush1.msra.mxu0 0.0
    %2243 = vmatprep.subr.mxu0 0.0
    %2244 = vmatpush1.msra.mxu0 0.0
    %2245 = vmatprep.subr.mxu0 0.0
    %2246 = vmatpush1.msra.mxu0 0.0
    %2247 = vmatprep.subr.mxu0 0.0
    %2248 = vmatpush1.msra.mxu0 0.0
    %2249 = vmatprep.subr.mxu0 0.0
    %2250 = vmatpush1.msra.mxu0 0.0
    %2251 = vmatprep.subr.mxu0 0.0
    %2252 = vmatpush1.msra.mxu0 0.0
    %2253 = vmatprep.subr.mxu0 0.0
    %2254 = vmatpush1.msra.mxu0 0.0
    %2255 = vmatprep.subr.mxu0 0.0
    %2256 = vmatpush1.msra.mxu0 %v821
    %2257 = vmatprep.subr.mxu0 0.0
    %2258 = vmatpush1.msra.mxu0 %v820
    %2259 = vmatprep.subr.mxu0 0.0
    %2260 = vmatpush1.msra.mxu0 %v819
    %2261 = vmatprep.subr.mxu0 0.0
    %2262 = vmatpush1.msra.mxu0 %v818
    %2263 = vmatprep.subr.mxu0 0.0
    %2264 = vmatpush2.msra.mxu0 0.0
    %2265 = vmatprep.subr.mxu0 0.0
    %2266 = vmatpush2.msra.mxu0 0.0
    %2267 = vmatprep.subr.mxu0 0.0
    %2268 = vmatpush2.msra.mxu0 0.0
    %2269 = vmatprep.subr.mxu0 0.0
    %2270 = vmatpush2.msra.mxu0 0.0
    %2271 = vmatprep.subr.mxu0 0.0
    %2272 = vmatpush2.msra.mxu0 0.0
    %2273 = vmatprep.subr.mxu0 0.0
    %2274 = vmatpush2.msra.mxu0 0.0
    %2275 = vmatprep.subr.mxu0 0.0
    %2276 = vmatpush2.msra.mxu0 0.0
    %2277 = vmatprep.subr.mxu0 0.0
    %2278 = vmatpush2.msra.mxu0 0.0
    %2279 = vmatprep.subr.mxu0 0.0
    %2280 = vmatpush2.msra.mxu0 0.0
    %2281 = vmatprep.subr.mxu0 0.0
    %2282 = vmatpush2.msra.mxu0 0.0
    %2283 = vmatprep.subr.mxu0 0.0
    %2284 = vmatpush2.msra.mxu0 0.0
    %2285 = vmatprep.subr.mxu0 0.0
    %2286 = vmatpush2.msra.mxu0 0.0
    %2287 = vmatprep.subr.mxu0 0.0
    %2288 = vmatpush2.msra.mxu0 0.0
    %2289 = vmatprep.subr.mxu0 0.0
    %2290 = vmatpush2.msra.mxu0 0.0
    %2291 = vmatprep.subr.mxu0 0.0
    %2292 = vmatpush2.msra.mxu0 0.0
    %2293 = vmatprep.subr.mxu0 0.0
    %2294 = vmatpush2.msra.mxu0 0.0
    %2295 = vmatprep.mubr.f32.mxu0 0.0
    %2296 = vmatmul.mubr.f32.gmra.mxu0 %v2226
    %v2297 = vpop.f32.mrf.mxu0
    %v2298 = vadd.f32 %v2223, %v2297
    %v2299 = vpop.f32.mrf.mxu0
    %2300 = vmatprep.mubr.f32.mxu0 0.0
    %2301 = vmatmul.mubr.f32.gmra.mxu0 %v2229
    %v2302 = vpop.f32.mrf.mxu0
    %v2303 = vadd.f32 %v2223, %v2302
    %v2304 = vpop.f32.mrf.mxu0
    %2305 = vdwg.mxu0
    %v2306 = vmax.f32 %v2298, 0.0
    %v2307 = vmax.f32 %v2303, 0.0
    %v2309 = vlaneseq
    %v2310 = vshrl.u32 %v2309, 7
    %v2311 = vsub.s32 0, %v2310
    %v2312 = vrot.slane %v825, %v2311
    %v2315 = vsel %vm1396, %v2306, 0
    %v2318 = vsel %vm1396, %v2307, 0
    %2320 = vmatprep.subr.mxu0 0.0
    %2321 = vmatpush1.msra.mxu0 0.0
    %2322 = vmatprep.subr.mxu0 0.0
    %2323 = vmatpush1.msra.mxu0 0.0
    %2324 = vmatprep.subr.mxu0 0.0
    %2325 = vmatpush1.msra.mxu0 0.0
    %2326 = vmatprep.subr.mxu0 0.0
    %2327 = vmatpush1.msra.mxu0 0.0
    %2328 = vmatprep.subr.mxu0 0.0
    %2329 = vmatpush1.msra.mxu0 0.0
    %2330 = vmatprep.subr.mxu0 0.0
    %2331 = vmatpush1.msra.mxu0 0.0
    %2332 = vmatprep.subr.mxu0 0.0
    %2333 = vmatpush1.msra.mxu0 0.0
    %2334 = vmatprep.subr.mxu0 0.0
    %2335 = vmatpush1.msra.mxu0 0.0
    %2336 = vmatprep.subr.mxu0 0.0
    %2337 = vmatpush1.msra.mxu0 0.0
    %2338 = vmatprep.subr.mxu0 0.0
    %2339 = vmatpush1.msra.mxu0 0.0
    %2340 = vmatprep.subr.mxu0 0.0
    %2341 = vmatpush1.msra.mxu0 0.0
    %2342 = vmatprep.subr.mxu0 0.0
    %2343 = vmatpush1.msra.mxu0 0.0
    %2344 = vmatprep.subr.mxu0 0.0
    %2345 = vmatpush1.msra.mxu0 0.0
    %2346 = vmatprep.subr.mxu0 0.0
    %2347 = vmatpush1.msra.mxu0 0.0
    %2348 = vmatprep.subr.mxu0 0.0
    %2349 = vmatpush1.msra.mxu0 %v824
    %2350 = vmatprep.subr.mxu0 0.0
    %2351 = vmatpush1.msra.mxu0 %v823
    %2352 = vmatprep.subr.mxu0 0.0
    %2353 = vmatpush2.msra.mxu0 0.0
    %2354 = vmatprep.subr.mxu0 0.0
    %2355 = vmatpush2.msra.mxu0 0.0
    %2356 = vmatprep.subr.mxu0 0.0
    %2357 = vmatpush2.msra.mxu0 0.0
    %2358 = vmatprep.subr.mxu0 0.0
    %2359 = vmatpush2.msra.mxu0 0.0
    %2360 = vmatprep.subr.mxu0 0.0
    %2361 = vmatpush2.msra.mxu0 0.0
    %2362 = vmatprep.subr.mxu0 0.0
    %2363 = vmatpush2.msra.mxu0 0.0
    %2364 = vmatprep.subr.mxu0 0.0
    %2365 = vmatpush2.msra.mxu0 0.0
    %2366 = vmatprep.subr.mxu0 0.0
    %2367 = vmatpush2.msra.mxu0 0.0
    %2368 = vmatprep.subr.mxu0 0.0
    %2369 = vmatpush2.msra.mxu0 0.0
    %2370 = vmatprep.subr.mxu0 0.0
    %2371 = vmatpush2.msra.mxu0 0.0
    %2372 = vmatprep.subr.mxu0 0.0
    %2373 = vmatpush2.msra.mxu0 0.0
    %2374 = vmatprep.subr.mxu0 0.0
    %2375 = vmatpush2.msra.mxu0 0.0
    %2376 = vmatprep.subr.mxu0 0.0
    %2377 = vmatpush2.msra.mxu0 0.0
    %2378 = vmatprep.subr.mxu0 0.0
    %2379 = vmatpush2.msra.mxu0 0.0
    %2380 = vmatprep.subr.mxu0 0.0
    %2381 = vmatpush2.msra.mxu0 0.0
    %2382 = vmatprep.subr.mxu0 0.0
    %2383 = vmatpush2.msra.mxu0 0.0
    %2384 = vmatprep.mubr.f32.mxu0 0.0
    %2385 = vmatmul.mubr.f32.gmra.mxu0 %v2315
    %v2386 = vpop.f32.mrf.mxu0
    %v2387 = vadd.f32 %v2312, %v2386
    %v2388 = vpop.f32.mrf.mxu0
    %2389 = vmatprep.mubr.f32.mxu0 0.0
    %2390 = vmatmul.mubr.f32.gmra.mxu0 %v2318
    %v2391 = vpop.f32.mrf.mxu0
    %v2392 = vadd.f32 %v2312, %v2391
    %v2393 = vpop.f32.mrf.mxu0
    %2394 = vdwg.mxu0
    %2395 = vxpose.xlu0.b32.start [1/16] %v1217, 128
    %2396 = vxpose.xlu0.b32.cont [2/16] %v1218, 128
    %2397 = vxpose.xlu0.b32.cont [3/16] 0.0, 128
    %2398 = vxpose.xlu0.b32.cont [4/16] 0.0, 128
    %2399 = vxpose.xlu0.b32.cont [5/16] 0.0, 128
    %2400 = vxpose.xlu0.b32.cont [6/16] 0.0, 128
    %2401 = vxpose.xlu0.b32.cont [7/16] 0.0, 128
    %2402 = vxpose.xlu0.b32.cont [8/16] 0.0, 128
    %2403 = vxpose.xlu0.b32.cont [9/16] 0.0, 128
    %2404 = vxpose.xlu0.b32.cont [10/16] 0.0, 128
    %2405 = vxpose.xlu0.b32.cont [11/16] 0.0, 128
    %2406 = vxpose.xlu0.b32.cont [12/16] 0.0, 128
    %2407 = vxpose.xlu0.b32.cont [13/16] 0.0, 128
    %2408 = vxpose.xlu0.b32.cont [14/16] 0.0, 128
    %2409 = vxpose.xlu0.b32.cont [15/16] 0.0, 128
    %2410 = vxpose.xlu0.b32.end [16/16] 0.0, 128
    %v2411 = vpop.trf.xlu0
    %v2412 = vpop.trf.xlu0
    %v2413 = vpop.trf.xlu0
    %v2414 = vpop.trf.xlu0
    %v2415 = vpop.trf.xlu0
    %v2416 = vpop.trf.xlu0
    %v2417 = vpop.trf.xlu0
    %v2418 = vpop.trf.xlu0
    %v2419 = vpop.trf.xlu0
    %v2420 = vpop.trf.xlu0
    %v2421 = vpop.trf.xlu0
    %v2422 = vpop.trf.xlu0
    %v2423 = vpop.trf.xlu0
    %v2424 = vpop.trf.xlu0
    %v2425 = vpop.trf.xlu0
    %v2426 = vpop.trf.xlu0
    %v2428 = vsel %vm1396, %v2411, 0
    %2430 = vmatprep.subr.mxu0 0.0
    %2431 = vmatpush1.msra.mxu0 0.0
    %2432 = vmatprep.subr.mxu0 0.0
    %2433 = vmatpush1.msra.mxu0 0.0
    %2434 = vmatprep.subr.mxu0 0.0
    %2435 = vmatpush1.msra.mxu0 0.0
    %2436 = vmatprep.subr.mxu0 0.0
    %2437 = vmatpush1.msra.mxu0 0.0
    %2438 = vmatprep.subr.mxu0 0.0
    %2439 = vmatpush1.msra.mxu0 0.0
    %2440 = vmatprep.subr.mxu0 0.0
    %2441 = vmatpush1.msra.mxu0 0.0
    %2442 = vmatprep.subr.mxu0 0.0
    %2443 = vmatpush1.msra.mxu0 0.0
    %2444 = vmatprep.subr.mxu0 0.0
    %2445 = vmatpush1.msra.mxu0 0.0
    %2446 = vmatprep.subr.mxu0 0.0
    %2447 = vmatpush1.msra.mxu0 0.0
    %2448 = vmatprep.subr.mxu0 0.0
    %2449 = vmatpush1.msra.mxu0 0.0
    %2450 = vmatprep.subr.mxu0 0.0
    %2451 = vmatpush1.msra.mxu0 0.0
    %2452 = vmatprep.subr.mxu0 0.0
    %2453 = vmatpush1.msra.mxu0 0.0
    %2454 = vmatprep.subr.mxu0 0.0
    %2455 = vmatpush1.msra.mxu0 0.0
    %2456 = vmatprep.subr.mxu0 0.0
    %2457 = vmatpush1.msra.mxu0 0.0
    %2458 = vmatprep.subr.mxu0 0.0
    %2459 = vmatpush1.msra.mxu0 %v1955
    %2460 = vmatprep.subr.mxu0 0.0
    %2461 = vmatpush1.msra.mxu0 %v1950
    %2462 = vmatprep.subr.mxu0 0.0
    %2463 = vmatpush2.msra.mxu0 0.0
    %2464 = vmatprep.subr.mxu0 0.0
    %2465 = vmatpush2.msra.mxu0 0.0
    %2466 = vmatprep.subr.mxu0 0.0
    %2467 = vmatpush2.msra.mxu0 0.0
    %2468 = vmatprep.subr.mxu0 0.0
    %2469 = vmatpush2.msra.mxu0 0.0
    %2470 = vmatprep.subr.mxu0 0.0
    %2471 = vmatpush2.msra.mxu0 0.0
    %2472 = vmatprep.subr.mxu0 0.0
    %2473 = vmatpush2.msra.mxu0 0.0
    %2474 = vmatprep.subr.mxu0 0.0
    %2475 = vmatpush2.msra.mxu0 0.0
    %2476 = vmatprep.subr.mxu0 0.0
    %2477 = vmatpush2.msra.mxu0 0.0
    %2478 = vmatprep.subr.mxu0 0.0
    %2479 = vmatpush2.msra.mxu0 0.0
    %2480 = vmatprep.subr.mxu0 0.0
    %2481 = vmatpush2.msra.mxu0 0.0
    %2482 = vmatprep.subr.mxu0 0.0
    %2483 = vmatpush2.msra.mxu0 0.0
    %2484 = vmatprep.subr.mxu0 0.0
    %2485 = vmatpush2.msra.mxu0 0.0
    %2486 = vmatprep.subr.mxu0 0.0
    %2487 = vmatpush2.msra.mxu0 0.0
    %2488 = vmatprep.subr.mxu0 0.0
    %2489 = vmatpush2.msra.mxu0 0.0
    %2490 = vmatprep.subr.mxu0 0.0
    %2491 = vmatpush2.msra.mxu0 0.0
    %2492 = vmatprep.subr.mxu0 0.0
    %2493 = vmatpush2.msra.mxu0 0.0
    %2494 = vmatprep.mubr.f32.mxu0 0.0
    %2495 = vmatmul.mubr.f32.gmra.mxu0 %v2428
    %v2496 = vpop.f32.mrf.mxu0
    %v2497 = vadd.f32 0.0, %v2496
    %v2498 = vpop.f32.mrf.mxu0
    %2499 = vdwg.mxu0
    %2501 = vrot.lane.b32.xlu0 %v2497, 8
    %v2502 = vpop.permute.xlu0 %2501
    %v2504 = vsel %vm1233, %v1186, %v2502
    %v2506 = vlaneseq
    %v2507 = vshrl.u32 %v2506, 7
    %v2508 = vsub.s32 0, %v2507
    %v2509 = vrot.slane %v903, %v2508
    %v2512 = vsel %vm1396, %v2504, 0
    %2514 = vmatprep.subr.mxu0 0.0
    %2515 = vmatpush1.msra.mxu0 0.0
    %2516 = vmatprep.subr.mxu0 0.0
    %2517 = vmatpush1.msra.mxu0 0.0
    %2518 = vmatprep.subr.mxu0 0.0
    %2519 = vmatpush1.msra.mxu0 0.0
    %2520 = vmatprep.subr.mxu0 0.0
    %2521 = vmatpush1.msra.mxu0 0.0
    %2522 = vmatprep.subr.mxu0 0.0
    %2523 = vmatpush1.msra.mxu0 0.0
    %2524 = vmatprep.subr.mxu0 0.0
    %2525 = vmatpush1.msra.mxu0 0.0
    %2526 = vmatprep.subr.mxu0 0.0
    %2527 = vmatpush1.msra.mxu0 0.0
    %2528 = vmatprep.subr.mxu0 0.0
    %2529 = vmatpush1.msra.mxu0 0.0
    %2530 = vmatprep.subr.mxu0 0.0
    %2531 = vmatpush1.msra.mxu0 0.0
    %2532 = vmatprep.subr.mxu0 0.0
    %2533 = vmatpush1.msra.mxu0 0.0
    %2534 = vmatprep.subr.mxu0 0.0
    %2535 = vmatpush1.msra.mxu0 0.0
    %2536 = vmatprep.subr.mxu0 0.0
    %2537 = vmatpush1.msra.mxu0 0.0
    %2538 = vmatprep.subr.mxu0 0.0
    %2539 = vmatpush1.msra.mxu0 0.0
    %2540 = vmatprep.subr.mxu0 0.0
    %2541 = vmatpush1.msra.mxu0 0.0
    %2542 = vmatprep.subr.mxu0 0.0
    %2543 = vmatpush1.msra.mxu0 %v902
    %2544 = vmatprep.subr.mxu0 0.0
    %2545 = vmatpush1.msra.mxu0 %v901
    %2546 = vmatprep.subr.mxu0 0.0
    %2547 = vmatpush2.msra.mxu0 0.0
    %2548 = vmatprep.subr.mxu0 0.0
    %2549 = vmatpush2.msra.mxu0 0.0
    %2550 = vmatprep.subr.mxu0 0.0
    %2551 = vmatpush2.msra.mxu0 0.0
    %2552 = vmatprep.subr.mxu0 0.0
    %2553 = vmatpush2.msra.mxu0 0.0
    %2554 = vmatprep.subr.mxu0 0.0
    %2555 = vmatpush2.msra.mxu0 0.0
    %2556 = vmatprep.subr.mxu0 0.0
    %2557 = vmatpush2.msra.mxu0 0.0
    %2558 = vmatprep.subr.mxu0 0.0
    %2559 = vmatpush2.msra.mxu0 0.0
    %2560 = vmatprep.subr.mxu0 0.0
    %2561 = vmatpush2.msra.mxu0 0.0
    %2562 = vmatprep.subr.mxu0 0.0
    %2563 = vmatpush2.msra.mxu0 0.0
    %2564 = vmatprep.subr.mxu0 0.0
    %2565 = vmatpush2.msra.mxu0 0.0
    %2566 = vmatprep.subr.mxu0 0.0
    %2567 = vmatpush2.msra.mxu0 0.0
    %2568 = vmatprep.subr.mxu0 0.0
    %2569 = vmatpush2.msra.mxu0 0.0
    %2570 = vmatprep.subr.mxu0 0.0
    %2571 = vmatpush2.msra.mxu0 0.0
    %2572 = vmatprep.subr.mxu0 0.0
    %2573 = vmatpush2.msra.mxu0 0.0
    %2574 = vmatprep.subr.mxu0 0.0
    %2575 = vmatpush2.msra.mxu0 0.0
    %2576 = vmatprep.subr.mxu0 0.0
    %2577 = vmatpush2.msra.mxu0 0.0
    %2578 = vmatprep.mubr.f32.mxu0 0.0
    %2579 = vmatmul.mubr.f32.gmra.mxu0 %v2512
    %v2580 = vpop.f32.mrf.mxu0
    %v2581 = vadd.f32 %v2509, %v2580
    %v2582 = vpop.f32.mrf.mxu0
    %2583 = vdwg.mxu0
    %v2584 = vmax.f32 %v2581, 0.0
    %v2586 = vlaneseq
    %v2587 = vshrl.u32 %v2586, 7
    %v2588 = vsub.s32 0, %v2587
    %v2589 = vrot.slane %v912, %v2588
    %v2592 = vsel %vm1697, %v2584, 0
    %2594 = vmatprep.subr.mxu0 0.0
    %2595 = vmatpush1.msra.mxu0 0.0
    %2596 = vmatprep.subr.mxu0 0.0
    %2597 = vmatpush1.msra.mxu0 0.0
    %2598 = vmatprep.subr.mxu0 0.0
    %2599 = vmatpush1.msra.mxu0 0.0
    %2600 = vmatprep.subr.mxu0 0.0
    %2601 = vmatpush1.msra.mxu0 0.0
    %2602 = vmatprep.subr.mxu0 0.0
    %2603 = vmatpush1.msra.mxu0 0.0
    %2604 = vmatprep.subr.mxu0 0.0
    %2605 = vmatpush1.msra.mxu0 0.0
    %2606 = vmatprep.subr.mxu0 0.0
    %2607 = vmatpush1.msra.mxu0 0.0
    %2608 = vmatprep.subr.mxu0 0.0
    %2609 = vmatpush1.msra.mxu0 0.0
    %2610 = vmatprep.subr.mxu0 0.0
    %2611 = vmatpush1.msra.mxu0 %v911
    %2612 = vmatprep.subr.mxu0 0.0
    %2613 = vmatpush1.msra.mxu0 %v910
    %2614 = vmatprep.subr.mxu0 0.0
    %2615 = vmatpush1.msra.mxu0 %v909
    %2616 = vmatprep.subr.mxu0 0.0
    %2617 = vmatpush1.msra.mxu0 %v908
    %2618 = vmatprep.subr.mxu0 0.0
    %2619 = vmatpush1.msra.mxu0 %v907
    %2620 = vmatprep.subr.mxu0 0.0
    %2621 = vmatpush1.msra.mxu0 %v906
    %2622 = vmatprep.subr.mxu0 0.0
    %2623 = vmatpush1.msra.mxu0 %v905
    %2624 = vmatprep.subr.mxu0 0.0
    %2625 = vmatpush1.msra.mxu0 %v904
    %2626 = vmatprep.subr.mxu0 0.0
    %2627 = vmatpush2.msra.mxu0 0.0
    %2628 = vmatprep.subr.mxu0 0.0
    %2629 = vmatpush2.msra.mxu0 0.0
    %2630 = vmatprep.subr.mxu0 0.0
    %2631 = vmatpush2.msra.mxu0 0.0
    %2632 = vmatprep.subr.mxu0 0.0
    %2633 = vmatpush2.msra.mxu0 0.0
    %2634 = vmatprep.subr.mxu0 0.0
    %2635 = vmatpush2.msra.mxu0 0.0
    %2636 = vmatprep.subr.mxu0 0.0
    %2637 = vmatpush2.msra.mxu0 0.0
    %2638 = vmatprep.subr.mxu0 0.0
    %2639 = vmatpush2.msra.mxu0 0.0
    %2640 = vmatprep.subr.mxu0 0.0
    %2641 = vmatpush2.msra.mxu0 0.0
    %2642 = vmatprep.subr.mxu0 0.0
    %2643 = vmatpush2.msra.mxu0 0.0
    %2644 = vmatprep.subr.mxu0 0.0
    %2645 = vmatpush2.msra.mxu0 0.0
    %2646 = vmatprep.subr.mxu0 0.0
    %2647 = vmatpush2.msra.mxu0 0.0
    %2648 = vmatprep.subr.mxu0 0.0
    %2649 = vmatpush2.msra.mxu0 0.0
    %2650 = vmatprep.subr.mxu0 0.0
    %2651 = vmatpush2.msra.mxu0 0.0
    %2652 = vmatprep.subr.mxu0 0.0
    %2653 = vmatpush2.msra.mxu0 0.0
    %2654 = vmatprep.subr.mxu0 0.0
    %2655 = vmatpush2.msra.mxu0 0.0
    %2656 = vmatprep.subr.mxu0 0.0
    %2657 = vmatpush2.msra.mxu0 0.0
    %2658 = vmatprep.mubr.f32.mxu0 0.0
    %2659 = vmatmul.mubr.f32.gmra.mxu0 %v2592
    %v2660 = vpop.f32.mrf.mxu0
    %v2661 = vadd.f32 %v2589, %v2660
    %v2662 = vpop.f32.mrf.mxu0
    %2663 = vdwg.mxu0
    %v2664 = vmax.f32 %v2661, 0.0
    %v2666 = vlaneseq
    %v2667 = vshrl.u32 %v2666, 7
    %v2668 = vsub.s32 0, %v2667
    %v2669 = vrot.slane %v917, %v2668
    %v2672 = vsel %vm1787, %v2664, 0
    %2674 = vmatprep.subr.mxu0 0.0
    %2675 = vmatpush1.msra.mxu0 0.0
    %2676 = vmatprep.subr.mxu0 0.0
    %2677 = vmatpush1.msra.mxu0 0.0
    %2678 = vmatprep.subr.mxu0 0.0
    %2679 = vmatpush1.msra.mxu0 0.0
    %2680 = vmatprep.subr.mxu0 0.0
    %2681 = vmatpush1.msra.mxu0 0.0
    %2682 = vmatprep.subr.mxu0 0.0
    %2683 = vmatpush1.msra.mxu0 0.0
    %2684 = vmatprep.subr.mxu0 0.0
    %2685 = vmatpush1.msra.mxu0 0.0
    %2686 = vmatprep.subr.mxu0 0.0
    %2687 = vmatpush1.msra.mxu0 0.0
    %2688 = vmatprep.subr.mxu0 0.0
    %2689 = vmatpush1.msra.mxu0 0.0
    %2690 = vmatprep.subr.mxu0 0.0
    %2691 = vmatpush1.msra.mxu0 0.0
    %2692 = vmatprep.subr.mxu0 0.0
    %2693 = vmatpush1.msra.mxu0 0.0
    %2694 = vmatprep.subr.mxu0 0.0
    %2695 = vmatpush1.msra.mxu0 0.0
    %2696 = vmatprep.subr.mxu0 0.0
    %2697 = vmatpush1.msra.mxu0 0.0
    %2698 = vmatprep.subr.mxu0 0.0
    %2699 = vmatpush1.msra.mxu0 %v916
    %2700 = vmatprep.subr.mxu0 0.0
    %2701 = vmatpush1.msra.mxu0 %v915
    %2702 = vmatprep.subr.mxu0 0.0
    %2703 = vmatpush1.msra.mxu0 %v914
    %2704 = vmatprep.subr.mxu0 0.0
    %2705 = vmatpush1.msra.mxu0 %v913
    %2706 = vmatprep.subr.mxu0 0.0
    %2707 = vmatpush2.msra.mxu0 0.0
    %2708 = vmatprep.subr.mxu0 0.0
    %2709 = vmatpush2.msra.mxu0 0.0
    %2710 = vmatprep.subr.mxu0 0.0
    %2711 = vmatpush2.msra.mxu0 0.0
    %2712 = vmatprep.subr.mxu0 0.0
    %2713 = vmatpush2.msra.mxu0 0.0
    %2714 = vmatprep.subr.mxu0 0.0
    %2715 = vmatpush2.msra.mxu0 0.0
    %2716 = vmatprep.subr.mxu0 0.0
    %2717 = vmatpush2.msra.mxu0 0.0
    %2718 = vmatprep.subr.mxu0 0.0
    %2719 = vmatpush2.msra.mxu0 0.0
    %2720 = vmatprep.subr.mxu0 0.0
    %2721 = vmatpush2.msra.mxu0 0.0
    %2722 = vmatprep.subr.mxu0 0.0
    %2723 = vmatpush2.msra.mxu0 0.0
    %2724 = vmatprep.subr.mxu0 0.0
    %2725 = vmatpush2.msra.mxu0 0.0
    %2726 = vmatprep.subr.mxu0 0.0
    %2727 = vmatpush2.msra.mxu0 0.0
    %2728 = vmatprep.subr.mxu0 0.0
    %2729 = vmatpush2.msra.mxu0 0.0
    %2730 = vmatprep.subr.mxu0 0.0
    %2731 = vmatpush2.msra.mxu0 0.0
    %2732 = vmatprep.subr.mxu0 0.0
    %2733 = vmatpush2.msra.mxu0 0.0
    %2734 = vmatprep.subr.mxu0 0.0
    %2735 = vmatpush2.msra.mxu0 0.0
    %2736 = vmatprep.subr.mxu0 0.0
    %2737 = vmatpush2.msra.mxu0 0.0
    %2738 = vmatprep.mubr.f32.mxu0 0.0
    %2739 = vmatmul.mubr.f32.gmra.mxu0 %v2672
    %v2740 = vpop.f32.mrf.mxu0
    %v2741 = vadd.f32 %v2669, %v2740
    %v2742 = vpop.f32.mrf.mxu0
    %2743 = vdwg.mxu0
    %v2744 = vmax.f32 %v2741, 0.0
    %v2746 = vlaneseq
    %v2747 = vshrl.u32 %v2746, 7
    %v2748 = vsub.s32 0, %v2747
    %v2749 = vrot.slane %v920, %v2748
    %v2752 = vsel %vm1396, %v2744, 0
    %2754 = vmatprep.subr.mxu0 0.0
    %2755 = vmatpush1.msra.mxu0 0.0
    %2756 = vmatprep.subr.mxu0 0.0
    %2757 = vmatpush1.msra.mxu0 0.0
    %2758 = vmatprep.subr.mxu0 0.0
    %2759 = vmatpush1.msra.mxu0 0.0
    %2760 = vmatprep.subr.mxu0 0.0
    %2761 = vmatpush1.msra.mxu0 0.0
    %2762 = vmatprep.subr.mxu0 0.0
    %2763 = vmatpush1.msra.mxu0 0.0
    %2764 = vmatprep.subr.mxu0 0.0
    %2765 = vmatpush1.msra.mxu0 0.0
    %2766 = vmatprep.subr.mxu0 0.0
    %2767 = vmatpush1.msra.mxu0 0.0
    %2768 = vmatprep.subr.mxu0 0.0
    %2769 = vmatpush1.msra.mxu0 0.0
    %2770 = vmatprep.subr.mxu0 0.0
    %2771 = vmatpush1.msra.mxu0 0.0
    %2772 = vmatprep.subr.mxu0 0.0
    %2773 = vmatpush1.msra.mxu0 0.0
    %2774 = vmatprep.subr.mxu0 0.0
    %2775 = vmatpush1.msra.mxu0 0.0
    %2776 = vmatprep.subr.mxu0 0.0
    %2777 = vmatpush1.msra.mxu0 0.0
    %2778 = vmatprep.subr.mxu0 0.0
    %2779 = vmatpush1.msra.mxu0 0.0
    %2780 = vmatprep.subr.mxu0 0.0
    %2781 = vmatpush1.msra.mxu0 0.0
    %2782 = vmatprep.subr.mxu0 0.0
    %2783 = vmatpush1.msra.mxu0 %v919
    %2784 = vmatprep.subr.mxu0 0.0
    %2785 = vmatpush1.msra.mxu0 %v918
    %2786 = vmatprep.subr.mxu0 0.0
    %2787 = vmatpush2.msra.mxu0 0.0
    %2788 = vmatprep.subr.mxu0 0.0
    %2789 = vmatpush2.msra.mxu0 0.0
    %2790 = vmatprep.subr.mxu0 0.0
    %2791 = vmatpush2.msra.mxu0 0.0
    %2792 = vmatprep.subr.mxu0 0.0
    %2793 = vmatpush2.msra.mxu0 0.0
    %2794 = vmatprep.subr.mxu0 0.0
    %2795 = vmatpush2.msra.mxu0 0.0
    %2796 = vmatprep.subr.mxu0 0.0
    %2797 = vmatpush2.msra.mxu0 0.0
    %2798 = vmatprep.subr.mxu0 0.0
    %2799 = vmatpush2.msra.mxu0 0.0
    %2800 = vmatprep.subr.mxu0 0.0
    %2801 = vmatpush2.msra.mxu0 0.0
    %2802 = vmatprep.subr.mxu0 0.0
    %2803 = vmatpush2.msra.mxu0 0.0
    %2804 = vmatprep.subr.mxu0 0.0
    %2805 = vmatpush2.msra.mxu0 0.0
    %2806 = vmatprep.subr.mxu0 0.0
    %2807 = vmatpush2.msra.mxu0 0.0
    %2808 = vmatprep.subr.mxu0 0.0
    %2809 = vmatpush2.msra.mxu0 0.0
    %2810 = vmatprep.subr.mxu0 0.0
    %2811 = vmatpush2.msra.mxu0 0.0
    %2812 = vmatprep.subr.mxu0 0.0
    %2813 = vmatpush2.msra.mxu0 0.0
    %2814 = vmatprep.subr.mxu0 0.0
    %2815 = vmatpush2.msra.mxu0 0.0
    %2816 = vmatprep.subr.mxu0 0.0
    %2817 = vmatpush2.msra.mxu0 0.0
    %2818 = vmatprep.mubr.f32.mxu0 0.0
    %2819 = vmatmul.mubr.f32.gmra.mxu0 %v2752
    %v2820 = vpop.f32.mrf.mxu0
    %v2821 = vadd.f32 %v2749, %v2820
    %v2822 = vpop.f32.mrf.mxu0
    %2823 = vdwg.mxu0
    %v2824 = vmax.f32 %v2821, 0.0
    %v2826 = vlaneseq
    %v2827 = vshrl.u32 %v2826, 7
    %v2828 = vsub.s32 0, %v2827
    %v2829 = vrot.slane %v922, %v2828
    %v2832 = vsel %vm1233, %v2824, 0
    %2834 = vmatprep.subr.mxu0 0.0
    %2835 = vmatpush1.msra.mxu0 0.0
    %2836 = vmatprep.subr.mxu0 0.0
    %2837 = vmatpush1.msra.mxu0 0.0
    %2838 = vmatprep.subr.mxu0 0.0
    %2839 = vmatpush1.msra.mxu0 0.0
    %2840 = vmatprep.subr.mxu0 0.0
    %2841 = vmatpush1.msra.mxu0 0.0
    %2842 = vmatprep.subr.mxu0 0.0
    %2843 = vmatpush1.msra.mxu0 0.0
    %2844 = vmatprep.subr.mxu0 0.0
    %2845 = vmatpush1.msra.mxu0 0.0
    %2846 = vmatprep.subr.mxu0 0.0
    %2847 = vmatpush1.msra.mxu0 0.0
    %2848 = vmatprep.subr.mxu0 0.0
    %2849 = vmatpush1.msra.mxu0 0.0
    %2850 = vmatprep.subr.mxu0 0.0
    %2851 = vmatpush1.msra.mxu0 0.0
    %2852 = vmatprep.subr.mxu0 0.0
    %2853 = vmatpush1.msra.mxu0 0.0
    %2854 = vmatprep.subr.mxu0 0.0
    %2855 = vmatpush1.msra.mxu0 0.0
    %2856 = vmatprep.subr.mxu0 0.0
    %2857 = vmatpush1.msra.mxu0 0.0
    %2858 = vmatprep.subr.mxu0 0.0
    %2859 = vmatpush1.msra.mxu0 0.0
    %2860 = vmatprep.subr.mxu0 0.0
    %2861 = vmatpush1.msra.mxu0 0.0
    %2862 = vmatprep.subr.mxu0 0.0
    %2863 = vmatpush1.msra.mxu0 0.0
    %2864 = vmatprep.subr.mxu0 0.0
    %2865 = vmatpush1.msra.mxu0 %v921
    %2866 = vmatprep.subr.mxu0 0.0
    %2867 = vmatpush2.msra.mxu0 0.0
    %2868 = vmatprep.subr.mxu0 0.0
    %2869 = vmatpush2.msra.mxu0 0.0
    %2870 = vmatprep.subr.mxu0 0.0
    %2871 = vmatpush2.msra.mxu0 0.0
    %2872 = vmatprep.subr.mxu0 0.0
    %2873 = vmatpush2.msra.mxu0 0.0
    %2874 = vmatprep.subr.mxu0 0.0
    %2875 = vmatpush2.msra.mxu0 0.0
    %2876 = vmatprep.subr.mxu0 0.0
    %2877 = vmatpush2.msra.mxu0 0.0
    %2878 = vmatprep.subr.mxu0 0.0
    %2879 = vmatpush2.msra.mxu0 0.0
    %2880 = vmatprep.subr.mxu0 0.0
    %2881 = vmatpush2.msra.mxu0 0.0
    %2882 = vmatprep.subr.mxu0 0.0
    %2883 = vmatpush2.msra.mxu0 0.0
    %2884 = vmatprep.subr.mxu0 0.0
    %2885 = vmatpush2.msra.mxu0 0.0
    %2886 = vmatprep.subr.mxu0 0.0
    %2887 = vmatpush2.msra.mxu0 0.0
    %2888 = vmatprep.subr.mxu0 0.0
    %2889 = vmatpush2.msra.mxu0 0.0
    %2890 = vmatprep.subr.mxu0 0.0
    %2891 = vmatpush2.msra.mxu0 0.0
    %2892 = vmatprep.subr.mxu0 0.0
    %2893 = vmatpush2.msra.mxu0 0.0
    %2894 = vmatprep.subr.mxu0 0.0
    %2895 = vmatpush2.msra.mxu0 0.0
    %2896 = vmatprep.subr.mxu0 0.0
    %2897 = vmatpush2.msra.mxu0 0.0
    %2898 = vmatprep.mubr.f32.mxu0 0.0
    %2899 = vmatmul.mubr.f32.gmra.mxu0 %v2832
    %v2900 = vpop.f32.mrf.mxu0
    %v2901 = vadd.f32 %v2829, %v2900
    %v2902 = vpop.f32.mrf.mxu0
    %2903 = vdwg.mxu0
    %2906 = vrot.lane.b32.xlu0 %v2387, 8
    %v2907 = vpop.permute.xlu0 %2906
    %2908 = vrot.lane.b32.xlu0 %v2392, 8
    %v2909 = vpop.permute.xlu0 %2908
    %v2912 = vsel %vm1233, %v1187, %v2907
    %v2913 = vsel %vm1233, %v1188, %v2909
    %v2915 = vlaneseq
    %v2916 = vshrl.u32 %v2915, 7
    %v2917 = vsub.s32 0, %v2916
    %v2918 = vrot.slane %v866, %v2917
    %v2921 = vsel %vm1396, %v2912, 0
    %v2924 = vsel %vm1396, %v2913, 0
    %2926 = vmatprep.subr.mxu0 0.0
    %2927 = vmatpush1.msra.mxu0 0.0
    %2928 = vmatprep.subr.mxu0 0.0
    %2929 = vmatpush1.msra.mxu0 0.0
    %2930 = vmatprep.subr.mxu0 0.0
    %2931 = vmatpush1.msra.mxu0 0.0
    %2932 = vmatprep.subr.mxu0 0.0
    %2933 = vmatpush1.msra.mxu0 0.0
    %2934 = vmatprep.subr.mxu0 0.0
    %2935 = vmatpush1.msra.mxu0 0.0
    %2936 = vmatprep.subr.mxu0 0.0
    %2937 = vmatpush1.msra.mxu0 0.0
    %2938 = vmatprep.subr.mxu0 0.0
    %2939 = vmatpush1.msra.mxu0 0.0
    %2940 = vmatprep.subr.mxu0 0.0
    %2941 = vmatpush1.msra.mxu0 0.0
    %2942 = vmatprep.subr.mxu0 0.0
    %2943 = vmatpush1.msra.mxu0 0.0
    %2944 = vmatprep.subr.mxu0 0.0
    %2945 = vmatpush1.msra.mxu0 0.0
    %2946 = vmatprep.subr.mxu0 0.0
    %2947 = vmatpush1.msra.mxu0 0.0
    %2948 = vmatprep.subr.mxu0 0.0
    %2949 = vmatpush1.msra.mxu0 0.0
    %2950 = vmatprep.subr.mxu0 0.0
    %2951 = vmatpush1.msra.mxu0 0.0
    %2952 = vmatprep.subr.mxu0 0.0
    %2953 = vmatpush1.msra.mxu0 0.0
    %2954 = vmatprep.subr.mxu0 0.0
    %2955 = vmatpush1.msra.mxu0 %v865
    %2956 = vmatprep.subr.mxu0 0.0
    %2957 = vmatpush1.msra.mxu0 %v864
    %2958 = vmatprep.subr.mxu0 0.0
    %2959 = vmatpush2.msra.mxu0 0.0
    %2960 = vmatprep.subr.mxu0 0.0
    %2961 = vmatpush2.msra.mxu0 0.0
    %2962 = vmatprep.subr.mxu0 0.0
    %2963 = vmatpush2.msra.mxu0 0.0
    %2964 = vmatprep.subr.mxu0 0.0
    %2965 = vmatpush2.msra.mxu0 0.0
    %2966 = vmatprep.subr.mxu0 0.0
    %2967 = vmatpush2.msra.mxu0 0.0
    %2968 = vmatprep.subr.mxu0 0.0
    %2969 = vmatpush2.msra.mxu0 0.0
    %2970 = vmatprep.subr.mxu0 0.0
    %2971 = vmatpush2.msra.mxu0 0.0
    %2972 = vmatprep.subr.mxu0 0.0
    %2973 = vmatpush2.msra.mxu0 0.0
    %2974 = vmatprep.subr.mxu0 0.0
    %2975 = vmatpush2.msra.mxu0 0.0
    %2976 = vmatprep.subr.mxu0 0.0
    %2977 = vmatpush2.msra.mxu0 0.0
    %2978 = vmatprep.subr.mxu0 0.0
    %2979 = vmatpush2.msra.mxu0 0.0
    %2980 = vmatprep.subr.mxu0 0.0
    %2981 = vmatpush2.msra.mxu0 0.0
    %2982 = vmatprep.subr.mxu0 0.0
    %2983 = vmatpush2.msra.mxu0 0.0
    %2984 = vmatprep.subr.mxu0 0.0
    %2985 = vmatpush2.msra.mxu0 0.0
    %2986 = vmatprep.subr.mxu0 0.0
    %2987 = vmatpush2.msra.mxu0 0.0
    %2988 = vmatprep.subr.mxu0 0.0
    %2989 = vmatpush2.msra.mxu0 0.0
    %2990 = vmatprep.mubr.f32.mxu0 0.0
    %2991 = vmatmul.mubr.f32.gmra.mxu0 %v2921
    %v2992 = vpop.f32.mrf.mxu0
    %v2993 = vadd.f32 %v2918, %v2992
    %v2994 = vpop.f32.mrf.mxu0
    %2995 = vmatprep.mubr.f32.mxu0 0.0
    %2996 = vmatmul.mubr.f32.gmra.mxu0 %v2924
    %v2997 = vpop.f32.mrf.mxu0
    %v2998 = vadd.f32 %v2918, %v2997
    %v2999 = vpop.f32.mrf.mxu0
    %3000 = vdwg.mxu0
    %v3001 = vmax.f32 %v2993, 0.0
    %v3002 = vmax.f32 %v2998, 0.0
    %v3004 = vlaneseq
    %v3005 = vshrl.u32 %v3004, 7
    %v3006 = vsub.s32 0, %v3005
    %v3007 = vrot.slane %v883, %v3006
    %3009 = vmatprep.subr.mxu0 0.0
    %3010 = vmatpush1.msra.mxu0 %v882
    %3011 = vmatprep.subr.mxu0 0.0
    %3012 = vmatpush1.msra.mxu0 %v881
    %3013 = vmatprep.subr.mxu0 0.0
    %3014 = vmatpush1.msra.mxu0 %v880
    %3015 = vmatprep.subr.mxu0 0.0
    %3016 = vmatpush1.msra.mxu0 %v879
    %3017 = vmatprep.subr.mxu0 0.0
    %3018 = vmatpush1.msra.mxu0 %v878
    %3019 = vmatprep.subr.mxu0 0.0
    %3020 = vmatpush1.msra.mxu0 %v877
    %3021 = vmatprep.subr.mxu0 0.0
    %3022 = vmatpush1.msra.mxu0 %v876
    %3023 = vmatprep.subr.mxu0 0.0
    %3024 = vmatpush1.msra.mxu0 %v875
    %3025 = vmatprep.subr.mxu0 0.0
    %3026 = vmatpush1.msra.mxu0 %v874
    %3027 = vmatprep.subr.mxu0 0.0
    %3028 = vmatpush1.msra.mxu0 %v873
    %3029 = vmatprep.subr.mxu0 0.0
    %3030 = vmatpush1.msra.mxu0 %v872
    %3031 = vmatprep.subr.mxu0 0.0
    %3032 = vmatpush1.msra.mxu0 %v871
    %3033 = vmatprep.subr.mxu0 0.0
    %3034 = vmatpush1.msra.mxu0 %v870
    %3035 = vmatprep.subr.mxu0 0.0
    %3036 = vmatpush1.msra.mxu0 %v869
    %3037 = vmatprep.subr.mxu0 0.0
    %3038 = vmatpush1.msra.mxu0 %v868
    %3039 = vmatprep.subr.mxu0 0.0
    %3040 = vmatpush1.msra.mxu0 %v867
    %3041 = vmatprep.subr.mxu0 0.0
    %3042 = vmatpush2.msra.mxu0 0.0
    %3043 = vmatprep.subr.mxu0 0.0
    %3044 = vmatpush2.msra.mxu0 0.0
    %3045 = vmatprep.subr.mxu0 0.0
    %3046 = vmatpush2.msra.mxu0 0.0
    %3047 = vmatprep.subr.mxu0 0.0
    %3048 = vmatpush2.msra.mxu0 0.0
    %3049 = vmatprep.subr.mxu0 0.0
    %3050 = vmatpush2.msra.mxu0 0.0
    %3051 = vmatprep.subr.mxu0 0.0
    %3052 = vmatpush2.msra.mxu0 0.0
    %3053 = vmatprep.subr.mxu0 0.0
    %3054 = vmatpush2.msra.mxu0 0.0
    %3055 = vmatprep.subr.mxu0 0.0
    %3056 = vmatpush2.msra.mxu0 0.0
    %3057 = vmatprep.subr.mxu0 0.0
    %3058 = vmatpush2.msra.mxu0 0.0
    %3059 = vmatprep.subr.mxu0 0.0
    %3060 = vmatpush2.msra.mxu0 0.0
    %3061 = vmatprep.subr.mxu0 0.0
    %3062 = vmatpush2.msra.mxu0 0.0
    %3063 = vmatprep.subr.mxu0 0.0
    %3064 = vmatpush2.msra.mxu0 0.0
    %3065 = vmatprep.subr.mxu0 0.0
    %3066 = vmatpush2.msra.mxu0 0.0
    %3067 = vmatprep.subr.mxu0 0.0
    %3068 = vmatpush2.msra.mxu0 0.0
    %3069 = vmatprep.subr.mxu0 0.0
    %3070 = vmatpush2.msra.mxu0 0.0
    %3071 = vmatprep.subr.mxu0 0.0
    %3072 = vmatpush2.msra.mxu0 0.0
    %3073 = vmatprep.mubr.f32.mxu0 0.0
    %3074 = vmatmul.mubr.f32.gmra.mxu0 %v3001
    %v3075 = vpop.f32.mrf.mxu0
    %v3076 = vadd.f32 %v3007, %v3075
    %v3077 = vpop.f32.mrf.mxu0
    %3078 = vmatprep.mubr.f32.mxu0 0.0
    %3079 = vmatmul.mubr.f32.gmra.mxu0 %v3002
    %v3080 = vpop.f32.mrf.mxu0
    %v3081 = vadd.f32 %v3007, %v3080
    %v3082 = vpop.f32.mrf.mxu0
    %3083 = vdwg.mxu0
    %v3084 = vmax.f32 %v3076, 0.0
    %v3085 = vmax.f32 %v3081, 0.0
    %v3087 = vlaneseq
    %v3088 = vshrl.u32 %v3087, 7
    %v3089 = vsub.s32 0, %v3088
    %v3090 = vrot.slane %v892, %v3089
    %v3093 = vsel %vm1697, %v3084, 0
    %v3096 = vsel %vm1697, %v3085, 0
    %3098 = vmatprep.subr.mxu0 0.0
    %3099 = vmatpush1.msra.mxu0 0.0
    %3100 = vmatprep.subr.mxu0 0.0
    %3101 = vmatpush1.msra.mxu0 0.0
    %3102 = vmatprep.subr.mxu0 0.0
    %3103 = vmatpush1.msra.mxu0 0.0
    %3104 = vmatprep.subr.mxu0 0.0
    %3105 = vmatpush1.msra.mxu0 0.0
    %3106 = vmatprep.subr.mxu0 0.0
    %3107 = vmatpush1.msra.mxu0 0.0
    %3108 = vmatprep.subr.mxu0 0.0
    %3109 = vmatpush1.msra.mxu0 0.0
    %3110 = vmatprep.subr.mxu0 0.0
    %3111 = vmatpush1.msra.mxu0 0.0
    %3112 = vmatprep.subr.mxu0 0.0
    %3113 = vmatpush1.msra.mxu0 0.0
    %3114 = vmatprep.subr.mxu0 0.0
    %3115 = vmatpush1.msra.mxu0 %v891
    %3116 = vmatprep.subr.mxu0 0.0
    %3117 = vmatpush1.msra.mxu0 %v890
    %3118 = vmatprep.subr.mxu0 0.0
    %3119 = vmatpush1.msra.mxu0 %v889
    %3120 = vmatprep.subr.mxu0 0.0
    %3121 = vmatpush1.msra.mxu0 %v888
    %3122 = vmatprep.subr.mxu0 0.0
    %3123 = vmatpush1.msra.mxu0 %v887
    %3124 = vmatprep.subr.mxu0 0.0
    %3125 = vmatpush1.msra.mxu0 %v886
    %3126 = vmatprep.subr.mxu0 0.0
    %3127 = vmatpush1.msra.mxu0 %v885
    %3128 = vmatprep.subr.mxu0 0.0
    %3129 = vmatpush1.msra.mxu0 %v884
    %3130 = vmatprep.subr.mxu0 0.0
    %3131 = vmatpush2.msra.mxu0 0.0
    %3132 = vmatprep.subr.mxu0 0.0
    %3133 = vmatpush2.msra.mxu0 0.0
    %3134 = vmatprep.subr.mxu0 0.0
    %3135 = vmatpush2.msra.mxu0 0.0
    %3136 = vmatprep.subr.mxu0 0.0
    %3137 = vmatpush2.msra.mxu0 0.0
    %3138 = vmatprep.subr.mxu0 0.0
    %3139 = vmatpush2.msra.mxu0 0.0
    %3140 = vmatprep.subr.mxu0 0.0
    %3141 = vmatpush2.msra.mxu0 0.0
    %3142 = vmatprep.subr.mxu0 0.0
    %3143 = vmatpush2.msra.mxu0 0.0
    %3144 = vmatprep.subr.mxu0 0.0
    %3145 = vmatpush2.msra.mxu0 0.0
    %3146 = vmatprep.subr.mxu0 0.0
    %3147 = vmatpush2.msra.mxu0 0.0
    %3148 = vmatprep.subr.mxu0 0.0
    %3149 = vmatpush2.msra.mxu0 0.0
    %3150 = vmatprep.subr.mxu0 0.0
    %3151 = vmatpush2.msra.mxu0 0.0
    %3152 = vmatprep.subr.mxu0 0.0
    %3153 = vmatpush2.msra.mxu0 0.0
    %3154 = vmatprep.subr.mxu0 0.0
    %3155 = vmatpush2.msra.mxu0 0.0
    %3156 = vmatprep.subr.mxu0 0.0
    %3157 = vmatpush2.msra.mxu0 0.0
    %3158 = vmatprep.subr.mxu0 0.0
    %3159 = vmatpush2.msra.mxu0 0.0
    %3160 = vmatprep.subr.mxu0 0.0
    %3161 = vmatpush2.msra.mxu0 0.0
    %3162 = vmatprep.mubr.f32.mxu0 0.0
    %3163 = vmatmul.mubr.f32.gmra.mxu0 %v3093
    %v3164 = vpop.f32.mrf.mxu0
    %v3165 = vadd.f32 %v3090, %v3164
    %v3166 = vpop.f32.mrf.mxu0
    %3167 = vmatprep.mubr.f32.mxu0 0.0
    %3168 = vmatmul.mubr.f32.gmra.mxu0 %v3096
    %v3169 = vpop.f32.mrf.mxu0
    %v3170 = vadd.f32 %v3090, %v3169
    %v3171 = vpop.f32.mrf.mxu0
    %3172 = vdwg.mxu0
    %v3173 = vmax.f32 %v3165, 0.0
    %v3174 = vmax.f32 %v3170, 0.0
    %v3176 = vlaneseq
    %v3177 = vshrl.u32 %v3176, 7
    %v3178 = vsub.s32 0, %v3177
    %v3179 = vrot.slane %v897, %v3178
    %v3182 = vsel %vm1787, %v3173, 0
    %v3185 = vsel %vm1787, %v3174, 0
    %3187 = vmatprep.subr.mxu0 0.0
    %3188 = vmatpush1.msra.mxu0 0.0
    %3189 = vmatprep.subr.mxu0 0.0
    %3190 = vmatpush1.msra.mxu0 0.0
    %3191 = vmatprep.subr.mxu0 0.0
    %3192 = vmatpush1.msra.mxu0 0.0
    %3193 = vmatprep.subr.mxu0 0.0
    %3194 = vmatpush1.msra.mxu0 0.0
    %3195 = vmatprep.subr.mxu0 0.0
    %3196 = vmatpush1.msra.mxu0 0.0
    %3197 = vmatprep.subr.mxu0 0.0
    %3198 = vmatpush1.msra.mxu0 0.0
    %3199 = vmatprep.subr.mxu0 0.0
    %3200 = vmatpush1.msra.mxu0 0.0
    %3201 = vmatprep.subr.mxu0 0.0
    %3202 = vmatpush1.msra.mxu0 0.0
    %3203 = vmatprep.subr.mxu0 0.0
    %3204 = vmatpush1.msra.mxu0 0.0
    %3205 = vmatprep.subr.mxu0 0.0
    %3206 = vmatpush1.msra.mxu0 0.0
    %3207 = vmatprep.subr.mxu0 0.0
    %3208 = vmatpush1.msra.mxu0 0.0
    %3209 = vmatprep.subr.mxu0 0.0
    %3210 = vmatpush1.msra.mxu0 0.0
    %3211 = vmatprep.subr.mxu0 0.0
    %3212 = vmatpush1.msra.mxu0 %v896
    %3213 = vmatprep.subr.mxu0 0.0
    %3214 = vmatpush1.msra.mxu0 %v895
    %3215 = vmatprep.subr.mxu0 0.0
    %3216 = vmatpush1.msra.mxu0 %v894
    %3217 = vmatprep.subr.mxu0 0.0
    %3218 = vmatpush1.msra.mxu0 %v893
    %3219 = vmatprep.subr.mxu0 0.0
    %3220 = vmatpush2.msra.mxu0 0.0
    %3221 = vmatprep.subr.mxu0 0.0
    %3222 = vmatpush2.msra.mxu0 0.0
    %3223 = vmatprep.subr.mxu0 0.0
    %3224 = vmatpush2.msra.mxu0 0.0
    %3225 = vmatprep.subr.mxu0 0.0
    %3226 = vmatpush2.msra.mxu0 0.0
    %3227 = vmatprep.subr.mxu0 0.0
    %3228 = vmatpush2.msra.mxu0 0.0
    %3229 = vmatprep.subr.mxu0 0.0
    %3230 = vmatpush2.msra.mxu0 0.0
    %3231 = vmatprep.subr.mxu0 0.0
    %3232 = vmatpush2.msra.mxu0 0.0
    %3233 = vmatprep.subr.mxu0 0.0
    %3234 = vmatpush2.msra.mxu0 0.0
    %3235 = vmatprep.subr.mxu0 0.0
    %3236 = vmatpush2.msra.mxu0 0.0
    %3237 = vmatprep.subr.mxu0 0.0
    %3238 = vmatpush2.msra.mxu0 0.0
    %3239 = vmatprep.subr.mxu0 0.0
    %3240 = vmatpush2.msra.mxu0 0.0
    %3241 = vmatprep.subr.mxu0 0.0
    %3242 = vmatpush2.msra.mxu0 0.0
    %3243 = vmatprep.subr.mxu0 0.0
    %3244 = vmatpush2.msra.mxu0 0.0
    %3245 = vmatprep.subr.mxu0 0.0
    %3246 = vmatpush2.msra.mxu0 0.0
    %3247 = vmatprep.subr.mxu0 0.0
    %3248 = vmatpush2.msra.mxu0 0.0
    %3249 = vmatprep.subr.mxu0 0.0
    %3250 = vmatpush2.msra.mxu0 0.0
    %3251 = vmatprep.mubr.f32.mxu0 0.0
    %3252 = vmatmul.mubr.f32.gmra.mxu0 %v3182
    %v3253 = vpop.f32.mrf.mxu0
    %v3254 = vadd.f32 %v3179, %v3253
    %v3255 = vpop.f32.mrf.mxu0
    %3256 = vmatprep.mubr.f32.mxu0 0.0
    %3257 = vmatmul.mubr.f32.gmra.mxu0 %v3185
    %v3258 = vpop.f32.mrf.mxu0
    %v3259 = vadd.f32 %v3179, %v3258
    %v3260 = vpop.f32.mrf.mxu0
    %3261 = vdwg.mxu0
    %v3262 = vmax.f32 %v3254, 0.0
    %v3263 = vmax.f32 %v3259, 0.0
    %v3265 = vlaneseq
    %v3266 = vshrl.u32 %v3265, 7
    %v3267 = vsub.s32 0, %v3266
    %v3268 = vrot.slane %v900, %v3267
    %v3271 = vsel %vm1396, %v3262, 0
    %v3274 = vsel %vm1396, %v3263, 0
    %3276 = vmatprep.subr.mxu0 0.0
    %3277 = vmatpush1.msra.mxu0 0.0
    %3278 = vmatprep.subr.mxu0 0.0
    %3279 = vmatpush1.msra.mxu0 0.0
    %3280 = vmatprep.subr.mxu0 0.0
    %3281 = vmatpush1.msra.mxu0 0.0
    %3282 = vmatprep.subr.mxu0 0.0
    %3283 = vmatpush1.msra.mxu0 0.0
    %3284 = vmatprep.subr.mxu0 0.0
    %3285 = vmatpush1.msra.mxu0 0.0
    %3286 = vmatprep.subr.mxu0 0.0
    %3287 = vmatpush1.msra.mxu0 0.0
    %3288 = vmatprep.subr.mxu0 0.0
    %3289 = vmatpush1.msra.mxu0 0.0
    %3290 = vmatprep.subr.mxu0 0.0
    %3291 = vmatpush1.msra.mxu0 0.0
    %3292 = vmatprep.subr.mxu0 0.0
    %3293 = vmatpush1.msra.mxu0 0.0
    %3294 = vmatprep.subr.mxu0 0.0
    %3295 = vmatpush1.msra.mxu0 0.0
    %3296 = vmatprep.subr.mxu0 0.0
    %3297 = vmatpush1.msra.mxu0 0.0
    %3298 = vmatprep.subr.mxu0 0.0
    %3299 = vmatpush1.msra.mxu0 0.0
    %3300 = vmatprep.subr.mxu0 0.0
    %3301 = vmatpush1.msra.mxu0 0.0
    %3302 = vmatprep.subr.mxu0 0.0
    %3303 = vmatpush1.msra.mxu0 0.0
    %3304 = vmatprep.subr.mxu0 0.0
    %3305 = vmatpush1.msra.mxu0 %v899
    %3306 = vmatprep.subr.mxu0 0.0
    %3307 = vmatpush1.msra.mxu0 %v898
    %3308 = vmatprep.subr.mxu0 0.0
    %3309 = vmatpush2.msra.mxu0 0.0
    %3310 = vmatprep.subr.mxu0 0.0
    %3311 = vmatpush2.msra.mxu0 0.0
    %3312 = vmatprep.subr.mxu0 0.0
    %3313 = vmatpush2.msra.mxu0 0.0
    %3314 = vmatprep.subr.mxu0 0.0
    %3315 = vmatpush2.msra.mxu0 0.0
    %3316 = vmatprep.subr.mxu0 0.0
    %3317 = vmatpush2.msra.mxu0 0.0
    %3318 = vmatprep.subr.mxu0 0.0
    %3319 = vmatpush2.msra.mxu0 0.0
    %3320 = vmatprep.subr.mxu0 0.0
    %3321 = vmatpush2.msra.mxu0 0.0
    %3322 = vmatprep.subr.mxu0 0.0
    %3323 = vmatpush2.msra.mxu0 0.0
    %3324 = vmatprep.subr.mxu0 0.0
    %3325 = vmatpush2.msra.mxu0 0.0
    %3326 = vmatprep.subr.mxu0 0.0
    %3327 = vmatpush2.msra.mxu0 0.0
    %3328 = vmatprep.subr.mxu0 0.0
    %3329 = vmatpush2.msra.mxu0 0.0
    %3330 = vmatprep.subr.mxu0 0.0
    %3331 = vmatpush2.msra.mxu0 0.0
    %3332 = vmatprep.subr.mxu0 0.0
    %3333 = vmatpush2.msra.mxu0 0.0
    %3334 = vmatprep.subr.mxu0 0.0
    %3335 = vmatpush2.msra.mxu0 0.0
    %3336 = vmatprep.subr.mxu0 0.0
    %3337 = vmatpush2.msra.mxu0 0.0
    %3338 = vmatprep.subr.mxu0 0.0
    %3339 = vmatpush2.msra.mxu0 0.0
    %3340 = vmatprep.mubr.f32.mxu0 0.0
    %3341 = vmatmul.mubr.f32.gmra.mxu0 %v3271
    %v3342 = vpop.f32.mrf.mxu0
    %v3343 = vadd.f32 %v3268, %v3342
    %v3344 = vpop.f32.mrf.mxu0
    %3345 = vmatprep.mubr.f32.mxu0 0.0
    %3346 = vmatmul.mubr.f32.gmra.mxu0 %v3274
    %v3347 = vpop.f32.mrf.mxu0
    %v3348 = vadd.f32 %v3268, %v3347
    %v3349 = vpop.f32.mrf.mxu0
    %3350 = vdwg.mxu0
    %3352 = vrot.lane.b32.xlu0 %v2901, 8
    %v3353 = vpop.permute.xlu0 %3352
    %v3355 = vsel %vm1233, %v1186, %v3353
    %3358 = vrot.lane.b32.xlu0 %v3343, 8
    %v3359 = vpop.permute.xlu0 %3358
    %3360 = vrot.lane.b32.xlu0 %v3348, 8
    %v3361 = vpop.permute.xlu0 %3360
    %v3364 = vsel %vm1233, %v1187, %v3359
    %v3365 = vsel %vm1233, %v1188, %v3361
    %3366 = vmatprep.subr.mxu0 0.0
    %3367 = vmatpush1.msra.mxu0 0.0
    %3368 = vmatprep.subr.mxu0 0.0
    %3369 = vmatpush1.msra.mxu0 0.0
    %3370 = vmatprep.subr.mxu0 0.0
    %3371 = vmatpush1.msra.mxu0 0.0
    %3372 = vmatprep.subr.mxu0 0.0
    %3373 = vmatpush1.msra.mxu0 0.0
    %3374 = vmatprep.subr.mxu0 0.0
    %3375 = vmatpush1.msra.mxu0 0.0
    %3376 = vmatprep.subr.mxu0 0.0
    %3377 = vmatpush1.msra.mxu0 0.0
    %3378 = vmatprep.subr.mxu0 0.0
    %3379 = vmatpush1.msra.mxu0 0.0
    %3380 = vmatprep.subr.mxu0 0.0
    %3381 = vmatpush1.msra.mxu0 0.0
    %3382 = vmatprep.subr.mxu0 0.0
    %3383 = vmatpush1.msra.mxu0 0.0
    %3384 = vmatprep.subr.mxu0 0.0
    %3385 = vmatpush1.msra.mxu0 0.0
    %3386 = vmatprep.subr.mxu0 0.0
    %3387 = vmatpush1.msra.mxu0 0.0
    %3388 = vmatprep.subr.mxu0 0.0
    %3389 = vmatpush1.msra.mxu0 0.0
    %3390 = vmatprep.subr.mxu0 0.0
    %3391 = vmatpush1.msra.mxu0 0.0
    %3392 = vmatprep.subr.mxu0 0.0
    %3393 = vmatpush1.msra.mxu0 0.0
    %3394 = vmatprep.subr.mxu0 0.0
    %3395 = vmatpush1.msra.mxu0 0.0
    %3396 = vmatprep.subr.mxu0 0.0
    %3397 = vmatpush1.msra.mxu0 %v3355
    %3398 = vmatprep.subr.mxu0 0.0
    %3399 = vmatpush2.msra.mxu0 0.0
    %3400 = vmatprep.subr.mxu0 0.0
    %3401 = vmatpush2.msra.mxu0 0.0
    %3402 = vmatprep.subr.mxu0 0.0
    %3403 = vmatpush2.msra.mxu0 0.0
    %3404 = vmatprep.subr.mxu0 0.0
    %3405 = vmatpush2.msra.mxu0 0.0
    %3406 = vmatprep.subr.mxu0 0.0
    %3407 = vmatpush2.msra.mxu0 0.0
    %3408 = vmatprep.subr.mxu0 0.0
    %3409 = vmatpush2.msra.mxu0 0.0
    %3410 = vmatprep.subr.mxu0 0.0
    %3411 = vmatpush2.msra.mxu0 0.0
    %3412 = vmatprep.subr.mxu0 0.0
    %3413 = vmatpush2.msra.mxu0 0.0
    %3414 = vmatprep.subr.mxu0 0.0
    %3415 = vmatpush2.msra.mxu0 0.0
    %3416 = vmatprep.subr.mxu0 0.0
    %3417 = vmatpush2.msra.mxu0 0.0
    %3418 = vmatprep.subr.mxu0 0.0
    %3419 = vmatpush2.msra.mxu0 0.0
    %3420 = vmatprep.subr.mxu0 0.0
    %3421 = vmatpush2.msra.mxu0 0.0
    %3422 = vmatprep.subr.mxu0 0.0
    %3423 = vmatpush2.msra.mxu0 0.0
    %3424 = vmatprep.subr.mxu0 0.0
    %3425 = vmatpush2.msra.mxu0 0.0
    %3426 = vmatprep.subr.mxu0 0.0
    %3427 = vmatpush2.msra.mxu0 0.0
    %3428 = vmatprep.subr.mxu0 0.0
    %3429 = vmatpush2.msra.mxu0 0.0
    %3430 = vmatprep.mubr.f32.mxu0 0.0
    %3431 = vmatmul.mubr.f32.gmra.mxu0 %v1235
    %v3432 = vpop.f32.mrf.mxu0
    %v3433 = vadd.f32 0.0, %v3432
    %v3434 = vpop.f32.mrf.mxu0
    %3435 = vmatprep.mubr.f32.mxu0 0.0
    %3436 = vmatmul.mubr.f32.gmra.mxu0 %v1238
    %v3437 = vpop.f32.mrf.mxu0
    %v3438 = vadd.f32 0.0, %v3437
    %v3439 = vpop.f32.mrf.mxu0
    %3440 = vdwg.mxu0
    %3441 = vmatprep.subr.mxu0 0.0
    %3442 = vmatpush1.msra.mxu0 0.0
    %3443 = vmatprep.subr.mxu0 0.0
    %3444 = vmatpush1.msra.mxu0 0.0
    %3445 = vmatprep.subr.mxu0 0.0
    %3446 = vmatpush1.msra.mxu0 0.0
    %3447 = vmatprep.subr.mxu0 0.0
    %3448 = vmatpush1.msra.mxu0 0.0
    %3449 = vmatprep.subr.mxu0 0.0
    %3450 = vmatpush1.msra.mxu0 0.0
    %3451 = vmatprep.subr.mxu0 0.0
    %3452 = vmatpush1.msra.mxu0 0.0
    %3453 = vmatprep.subr.mxu0 0.0
    %3454 = vmatpush1.msra.mxu0 0.0
    %3455 = vmatprep.subr.mxu0 0.0
    %3456 = vmatpush1.msra.mxu0 0.0
    %3457 = vmatprep.subr.mxu0 0.0
    %3458 = vmatpush1.msra.mxu0 0.0
    %3459 = vmatprep.subr.mxu0 0.0
    %3460 = vmatpush1.msra.mxu0 0.0
    %3461 = vmatprep.subr.mxu0 0.0
    %3462 = vmatpush1.msra.mxu0 0.0
    %3463 = vmatprep.subr.mxu0 0.0
    %3464 = vmatpush1.msra.mxu0 0.0
    %3465 = vmatprep.subr.mxu0 0.0
    %3466 = vmatpush1.msra.mxu0 0.0
    %3467 = vmatprep.subr.mxu0 0.0
    %3468 = vmatpush1.msra.mxu0 0.0
    %3469 = vmatprep.subr.mxu0 0.0
    %3470 = vmatpush1.msra.mxu0 0.0
    %3471 = vmatprep.subr.mxu0 0.0
    %3472 = vmatpush1.msra.mxu0 %v3355
    %3473 = vmatprep.subr.mxu0 0.0
    %3474 = vmatpush2.msra.mxu0 0.0
    %3475 = vmatprep.subr.mxu0 0.0
    %3476 = vmatpush2.msra.mxu0 0.0
    %3477 = vmatprep.subr.mxu0 0.0
    %3478 = vmatpush2.msra.mxu0 0.0
    %3479 = vmatprep.subr.mxu0 0.0
    %3480 = vmatpush2.msra.mxu0 0.0
    %3481 = vmatprep.subr.mxu0 0.0
    %3482 = vmatpush2.msra.mxu0 0.0
    %3483 = vmatprep.subr.mxu0 0.0
    %3484 = vmatpush2.msra.mxu0 0.0
    %3485 = vmatprep.subr.mxu0 0.0
    %3486 = vmatpush2.msra.mxu0 0.0
    %3487 = vmatprep.subr.mxu0 0.0
    %3488 = vmatpush2.msra.mxu0 0.0
    %3489 = vmatprep.subr.mxu0 0.0
    %3490 = vmatpush2.msra.mxu0 0.0
    %3491 = vmatprep.subr.mxu0 0.0
    %3492 = vmatpush2.msra.mxu0 0.0
    %3493 = vmatprep.subr.mxu0 0.0
    %3494 = vmatpush2.msra.mxu0 0.0
    %3495 = vmatprep.subr.mxu0 0.0
    %3496 = vmatpush2.msra.mxu0 0.0
    %3497 = vmatprep.subr.mxu0 0.0
    %3498 = vmatpush2.msra.mxu0 0.0
    %3499 = vmatprep.subr.mxu0 0.0
    %3500 = vmatpush2.msra.mxu0 0.0
    %3501 = vmatprep.subr.mxu0 0.0
    %3502 = vmatpush2.msra.mxu0 0.0
    %3503 = vmatprep.subr.mxu0 0.0
    %3504 = vmatpush2.msra.mxu0 0.0
    %3505 = vmatprep.mubr.f32.mxu0 0.0
    %3506 = vmatmul.mubr.f32.gmra.mxu0 %v1316
    %v3507 = vpop.f32.mrf.mxu0
    %v3508 = vadd.f32 0.0, %v3507
    %v3509 = vpop.f32.mrf.mxu0
    %3510 = vmatprep.mubr.f32.mxu0 0.0
    %3511 = vmatmul.mubr.f32.gmra.mxu0 %v1319
    %v3512 = vpop.f32.mrf.mxu0
    %v3513 = vadd.f32 0.0, %v3512
    %v3514 = vpop.f32.mrf.mxu0
    %3515 = vdwg.mxu0
    %3516 = vmatprep.subr.mxu0 0.0
    %3517 = vmatpush1.msra.mxu0 0.0
    %3518 = vmatprep.subr.mxu0 0.0
    %3519 = vmatpush1.msra.mxu0 0.0
    %3520 = vmatprep.subr.mxu0 0.0
    %3521 = vmatpush1.msra.mxu0 0.0
    %3522 = vmatprep.subr.mxu0 0.0
    %3523 = vmatpush1.msra.mxu0 0.0
    %3524 = vmatprep.subr.mxu0 0.0
    %3525 = vmatpush1.msra.mxu0 0.0
    %3526 = vmatprep.subr.mxu0 0.0
    %3527 = vmatpush1.msra.mxu0 0.0
    %3528 = vmatprep.subr.mxu0 0.0
    %3529 = vmatpush1.msra.mxu0 0.0
    %3530 = vmatprep.subr.mxu0 0.0
    %3531 = vmatpush1.msra.mxu0 0.0
    %3532 = vmatprep.subr.mxu0 0.0
    %3533 = vmatpush1.msra.mxu0 0.0
    %3534 = vmatprep.subr.mxu0 0.0
    %3535 = vmatpush1.msra.mxu0 0.0
    %3536 = vmatprep.subr.mxu0 0.0
    %3537 = vmatpush1.msra.mxu0 0.0
    %3538 = vmatprep.subr.mxu0 0.0
    %3539 = vmatpush1.msra.mxu0 0.0
    %3540 = vmatprep.subr.mxu0 0.0
    %3541 = vmatpush1.msra.mxu0 0.0
    %3542 = vmatprep.subr.mxu0 0.0
    %3543 = vmatpush1.msra.mxu0 0.0
    %3544 = vmatprep.subr.mxu0 0.0
    %3545 = vmatpush1.msra.mxu0 %v3365
    %3546 = vmatprep.subr.mxu0 0.0
    %3547 = vmatpush1.msra.mxu0 %v3364
    %3548 = vmatprep.subr.mxu0 0.0
    %3549 = vmatpush2.msra.mxu0 0.0
    %3550 = vmatprep.subr.mxu0 0.0
    %3551 = vmatpush2.msra.mxu0 0.0
    %3552 = vmatprep.subr.mxu0 0.0
    %3553 = vmatpush2.msra.mxu0 0.0
    %3554 = vmatprep.subr.mxu0 0.0
    %3555 = vmatpush2.msra.mxu0 0.0
    %3556 = vmatprep.subr.mxu0 0.0
    %3557 = vmatpush2.msra.mxu0 0.0
    %3558 = vmatprep.subr.mxu0 0.0
    %3559 = vmatpush2.msra.mxu0 0.0
    %3560 = vmatprep.subr.mxu0 0.0
    %3561 = vmatpush2.msra.mxu0 0.0
    %3562 = vmatprep.subr.mxu0 0.0
    %3563 = vmatpush2.msra.mxu0 0.0
    %3564 = vmatprep.subr.mxu0 0.0
    %3565 = vmatpush2.msra.mxu0 0.0
    %3566 = vmatprep.subr.mxu0 0.0
    %3567 = vmatpush2.msra.mxu0 0.0
    %3568 = vmatprep.subr.mxu0 0.0
    %3569 = vmatpush2.msra.mxu0 0.0
    %3570 = vmatprep.subr.mxu0 0.0
    %3571 = vmatpush2.msra.mxu0 0.0
    %3572 = vmatprep.subr.mxu0 0.0
    %3573 = vmatpush2.msra.mxu0 0.0
    %3574 = vmatprep.subr.mxu0 0.0
    %3575 = vmatpush2.msra.mxu0 0.0
    %3576 = vmatprep.subr.mxu0 0.0
    %3577 = vmatpush2.msra.mxu0 0.0
    %3578 = vmatprep.subr.mxu0 0.0
    %3579 = vmatpush2.msra.mxu0 0.0
    %3580 = vmatprep.mubr.f32.mxu0 0.0
    %3581 = vmatmul.mubr.f32.gmra.mxu0 %v1398
    %v3582 = vpop.f32.mrf.mxu0
    %v3583 = vadd.f32 0.0, %v3582
    %v3584 = vpop.f32.mrf.mxu0
    %3585 = vmatprep.mubr.f32.mxu0 0.0
    %3586 = vmatmul.mubr.f32.gmra.mxu0 %v1401
    %v3587 = vpop.f32.mrf.mxu0
    %v3588 = vadd.f32 0.0, %v3587
    %v3589 = vpop.f32.mrf.mxu0
    %3590 = vdwg.mxu0
    %3593 = vrot.lane.b32.xlu0 %v3508, 16
    %v3594 = vpop.permute.xlu0 %3593
    %3595 = vrot.lane.b32.xlu0 %v3513, 16
    %v3596 = vpop.permute.xlu0 %3595
    %3601 = vrot.lane.b32.xlu0 %v3364, 32
    %v3602 = vpop.permute.xlu0 %3601
    %3603 = vrot.lane.b32.xlu0 %v3365, 32
    %v3604 = vpop.permute.xlu0 %3603
    %v3607 = vsel %vm1396, %v3433, %v3594
    %v3608 = vsel %vm1396, %v3438, %v3596
    %v3609 = vsel %vm1787, %v3607, %v3602
    %v3610 = vsel %vm1787, %v3608, %v3604
    %3613 = vrot.lane.b32.xlu0 %v3583, 16
    %v3614 = vpop.permute.xlu0 %3613
    %3615 = vrot.lane.b32.xlu0 %v3588, 16
    %v3616 = vpop.permute.xlu0 %3615
    %3621 = vrot.lane.b32.xlu0 %v3433, 32
    %v3622 = vpop.permute.xlu0 %3621
    %3623 = vrot.lane.b32.xlu0 %v3438, 32
    %v3624 = vpop.permute.xlu0 %3623
    %v3627 = vsel %vm1396, %v3364, %v3614
    %v3628 = vsel %vm1396, %v3365, %v3616
    %v3629 = vsel %vm1787, %v3627, %v3622
    %v3630 = vsel %vm1787, %v3628, %v3624
    %v3632 = vlaneseq
    %v3633 = vshrl.u32 %v3632, 7
    %v3634 = vsub.s32 0, %v3633
    %v3635 = vrot.slane %v1012, %v3634
    %v3636 = vlaneseq
    %v3637 = vshrl.u32 %v3636, 7
    %v3638 = vsub.s32 1, %v3637
    %v3639 = vrot.slane %v1012, %v3638
    %vm3642 = vcmask 392192
    %v3644 = vsel %vm3642, %v3609, 0
    %v3647 = vsel %vm3642, %v3610, 0
    %3649 = vmatprep.subr.mxu0 0.0
    %3650 = vmatpush1.msra.mxu0 0.0
    %3651 = vmatprep.subr.mxu0 0.0
    %3652 = vmatpush1.msra.mxu0 0.0
    %3653 = vmatprep.subr.mxu0 0.0
    %3654 = vmatpush1.msra.mxu0 0.0
    %3655 = vmatprep.subr.mxu0 0.0
    %3656 = vmatpush1.msra.mxu0 0.0
    %3657 = vmatprep.subr.mxu0 0.0
    %3658 = vmatpush1.msra.mxu0 0.0
    %3659 = vmatprep.subr.mxu0 0.0
    %3660 = vmatpush1.msra.mxu0 0.0
    %3661 = vmatprep.subr.mxu0 0.0
    %3662 = vmatpush1.msra.mxu0 0.0
    %3663 = vmatprep.subr.mxu0 0.0
    %3664 = vmatpush1.msra.mxu0 0.0
    %3665 = vmatprep.subr.mxu0 0.0
    %3666 = vmatpush1.msra.mxu0 0.0
    %3667 = vmatprep.subr.mxu0 0.0
    %3668 = vmatpush1.msra.mxu0 0.0
    %3669 = vmatprep.subr.mxu0 %v1011
    %3670 = vmatpush1.msra.mxu0 %v1010
    %3671 = vmatprep.subr.mxu0 %v1009
    %3672 = vmatpush1.msra.mxu0 %v1008
    %3673 = vmatprep.subr.mxu0 %v1007
    %3674 = vmatpush1.msra.mxu0 %v1006
    %3675 = vmatprep.subr.mxu0 %v1005
    %3676 = vmatpush1.msra.mxu0 %v1004
    %3677 = vmatprep.subr.mxu0 %v1003
    %3678 = vmatpush1.msra.mxu0 %v1002
    %3679 = vmatprep.subr.mxu0 %v1001
    %3680 = vmatpush1.msra.mxu0 %v1000
    %3681 = vmatprep.subr.mxu0 0.0
    %3682 = vmatpush2.msra.mxu0 0.0
    %3683 = vmatprep.subr.mxu0 0.0
    %3684 = vmatpush2.msra.mxu0 0.0
    %3685 = vmatprep.subr.mxu0 0.0
    %3686 = vmatpush2.msra.mxu0 0.0
    %3687 = vmatprep.subr.mxu0 0.0
    %3688 = vmatpush2.msra.mxu0 0.0
    %3689 = vmatprep.subr.mxu0 0.0
    %3690 = vmatpush2.msra.mxu0 0.0
    %3691 = vmatprep.subr.mxu0 0.0
    %3692 = vmatpush2.msra.mxu0 0.0
    %3693 = vmatprep.subr.mxu0 0.0
    %3694 = vmatpush2.msra.mxu0 0.0
    %3695 = vmatprep.subr.mxu0 0.0
    %3696 = vmatpush2.msra.mxu0 0.0
    %3697 = vmatprep.subr.mxu0 0.0
    %3698 = vmatpush2.msra.mxu0 0.0
    %3699 = vmatprep.subr.mxu0 0.0
    %3700 = vmatpush2.msra.mxu0 0.0
    %3701 = vmatprep.subr.mxu0 0.0
    %3702 = vmatpush2.msra.mxu0 0.0
    %3703 = vmatprep.subr.mxu0 0.0
    %3704 = vmatpush2.msra.mxu0 0.0
    %3705 = vmatprep.subr.mxu0 0.0
    %3706 = vmatpush2.msra.mxu0 0.0
    %3707 = vmatprep.subr.mxu0 0.0
    %3708 = vmatpush2.msra.mxu0 0.0
    %3709 = vmatprep.subr.mxu0 0.0
    %3710 = vmatpush2.msra.mxu0 0.0
    %3711 = vmatprep.subr.mxu0 0.0
    %3712 = vmatpush2.msra.mxu0 0.0
    %3713 = vmatprep.mubr.f32.mxu0 0.0
    %3714 = vmatmul.mubr.f32.gmra.mxu0 %v3644
    %v3715 = vpop.f32.mrf.mxu0
    %v3716 = vadd.f32 %v3635, %v3715
    %v3717 = vpop.f32.mrf.mxu0
    %v3718 = vadd.f32 %v3639, %v3717
    %3719 = vmatprep.mubr.f32.mxu0 0.0
    %3720 = vmatmul.mubr.f32.gmra.mxu0 %v3647
    %v3721 = vpop.f32.mrf.mxu0
    %v3722 = vadd.f32 %v3635, %v3721
    %v3723 = vpop.f32.mrf.mxu0
    %v3724 = vadd.f32 %v3639, %v3723
    %3725 = vdwg.mxu0
    %v3726 = vmax.f32 %v3716, 0.0
    %v3727 = vmax.f32 %v3718, 0.0
    %v3728 = vmax.f32 %v3722, 0.0
    %v3729 = vmax.f32 %v3724, 0.0
    %v3731 = vlaneseq
    %v3732 = vshrl.u32 %v3731, 7
    %v3733 = vsub.s32 0, %v3732
    %v3734 = vrot.slane %v1045, %v3733
    %3736 = vmatprep.subr.mxu0 0.0
    %3737 = vmatpush1.msra.mxu0 %v1028
    %3738 = vmatprep.subr.mxu0 0.0
    %3739 = vmatpush1.msra.mxu0 %v1027
    %3740 = vmatprep.subr.mxu0 0.0
    %3741 = vmatpush1.msra.mxu0 %v1026
    %3742 = vmatprep.subr.mxu0 0.0
    %3743 = vmatpush1.msra.mxu0 %v1025
    %3744 = vmatprep.subr.mxu0 0.0
    %3745 = vmatpush1.msra.mxu0 %v1024
    %3746 = vmatprep.subr.mxu0 0.0
    %3747 = vmatpush1.msra.mxu0 %v1023
    %3748 = vmatprep.subr.mxu0 0.0
    %3749 = vmatpush1.msra.mxu0 %v1022
    %3750 = vmatprep.subr.mxu0 0.0
    %3751 = vmatpush1.msra.mxu0 %v1021
    %3752 = vmatprep.subr.mxu0 0.0
    %3753 = vmatpush1.msra.mxu0 %v1020
    %3754 = vmatprep.subr.mxu0 0.0
    %3755 = vmatpush1.msra.mxu0 %v1019
    %3756 = vmatprep.subr.mxu0 0.0
    %3757 = vmatpush1.msra.mxu0 %v1018
    %3758 = vmatprep.subr.mxu0 0.0
    %3759 = vmatpush1.msra.mxu0 %v1017
    %3760 = vmatprep.subr.mxu0 0.0
    %3761 = vmatpush1.msra.mxu0 %v1016
    %3762 = vmatprep.subr.mxu0 0.0
    %3763 = vmatpush1.msra.mxu0 %v1015
    %3764 = vmatprep.subr.mxu0 0.0
    %3765 = vmatpush1.msra.mxu0 %v1014
    %3766 = vmatprep.subr.mxu0 0.0
    %3767 = vmatpush1.msra.mxu0 %v1013
    %3768 = vmatprep.subr.mxu0 0.0
    %3769 = vmatpush2.msra.mxu0 %v1044
    %3770 = vmatprep.subr.mxu0 0.0
    %3771 = vmatpush2.msra.mxu0 %v1043
    %3772 = vmatprep.subr.mxu0 0.0
    %3773 = vmatpush2.msra.mxu0 %v1042
    %3774 = vmatprep.subr.mxu0 0.0
    %3775 = vmatpush2.msra.mxu0 %v1041
    %3776 = vmatprep.subr.mxu0 0.0
    %3777 = vmatpush2.msra.mxu0 %v1040
    %3778 = vmatprep.subr.mxu0 0.0
    %3779 = vmatpush2.msra.mxu0 %v1039
    %3780 = vmatprep.subr.mxu0 0.0
    %3781 = vmatpush2.msra.mxu0 %v1038
    %3782 = vmatprep.subr.mxu0 0.0
    %3783 = vmatpush2.msra.mxu0 %v1037
    %3784 = vmatprep.subr.mxu0 0.0
    %3785 = vmatpush2.msra.mxu0 %v1036
    %3786 = vmatprep.subr.mxu0 0.0
    %3787 = vmatpush2.msra.mxu0 %v1035
    %3788 = vmatprep.subr.mxu0 0.0
    %3789 = vmatpush2.msra.mxu0 %v1034
    %3790 = vmatprep.subr.mxu0 0.0
    %3791 = vmatpush2.msra.mxu0 %v1033
    %3792 = vmatprep.subr.mxu0 0.0
    %3793 = vmatpush2.msra.mxu0 %v1032
    %3794 = vmatprep.subr.mxu0 0.0
    %3795 = vmatpush2.msra.mxu0 %v1031
    %3796 = vmatprep.subr.mxu0 0.0
    %3797 = vmatpush2.msra.mxu0 %v1030
    %3798 = vmatprep.subr.mxu0 0.0
    %3799 = vmatpush2.msra.mxu0 %v1029
    %3800 = vmatprep.mubr.f32.mxu0 %v3727
    %3801 = vmatmul.mubr.f32.gmra.mxu0 %v3726
    %v3802 = vpop.f32.mrf.mxu0
    %v3803 = vadd.f32 %v3734, %v3802
    %v3804 = vpop.f32.mrf.mxu0
    %3805 = vmatprep.mubr.f32.mxu0 %v3729
    %3806 = vmatmul.mubr.f32.gmra.mxu0 %v3728
    %v3807 = vpop.f32.mrf.mxu0
    %v3808 = vadd.f32 %v3734, %v3807
    %v3809 = vpop.f32.mrf.mxu0
    %3810 = vdwg.mxu0
    %v3811 = vmax.f32 %v3803, 0.0
    %v3812 = vmax.f32 %v3808, 0.0
    %v3814 = vlaneseq
    %v3815 = vshrl.u32 %v3814, 7
    %v3816 = vsub.s32 0, %v3815
    %v3817 = vrot.slane %v1062, %v3816
    %3819 = vmatprep.subr.mxu0 0.0
    %3820 = vmatpush1.msra.mxu0 %v1061
    %3821 = vmatprep.subr.mxu0 0.0
    %3822 = vmatpush1.msra.mxu0 %v1060
    %3823 = vmatprep.subr.mxu0 0.0
    %3824 = vmatpush1.msra.mxu0 %v1059
    %3825 = vmatprep.subr.mxu0 0.0
    %3826 = vmatpush1.msra.mxu0 %v1058
    %3827 = vmatprep.subr.mxu0 0.0
    %3828 = vmatpush1.msra.mxu0 %v1057
    %3829 = vmatprep.subr.mxu0 0.0
    %3830 = vmatpush1.msra.mxu0 %v1056
    %3831 = vmatprep.subr.mxu0 0.0
    %3832 = vmatpush1.msra.mxu0 %v1055
    %3833 = vmatprep.subr.mxu0 0.0
    %3834 = vmatpush1.msra.mxu0 %v1054
    %3835 = vmatprep.subr.mxu0 0.0
    %3836 = vmatpush1.msra.mxu0 %v1053
    %3837 = vmatprep.subr.mxu0 0.0
    %3838 = vmatpush1.msra.mxu0 %v1052
    %3839 = vmatprep.subr.mxu0 0.0
    %3840 = vmatpush1.msra.mxu0 %v1051
    %3841 = vmatprep.subr.mxu0 0.0
    %3842 = vmatpush1.msra.mxu0 %v1050
    %3843 = vmatprep.subr.mxu0 0.0
    %3844 = vmatpush1.msra.mxu0 %v1049
    %3845 = vmatprep.subr.mxu0 0.0
    %3846 = vmatpush1.msra.mxu0 %v1048
    %3847 = vmatprep.subr.mxu0 0.0
    %3848 = vmatpush1.msra.mxu0 %v1047
    %3849 = vmatprep.subr.mxu0 0.0
    %3850 = vmatpush1.msra.mxu0 %v1046
    %3851 = vmatprep.subr.mxu0 0.0
    %3852 = vmatpush2.msra.mxu0 0.0
    %3853 = vmatprep.subr.mxu0 0.0
    %3854 = vmatpush2.msra.mxu0 0.0
    %3855 = vmatprep.subr.mxu0 0.0
    %3856 = vmatpush2.msra.mxu0 0.0
    %3857 = vmatprep.subr.mxu0 0.0
    %3858 = vmatpush2.msra.mxu0 0.0
    %3859 = vmatprep.subr.mxu0 0.0
    %3860 = vmatpush2.msra.mxu0 0.0
    %3861 = vmatprep.subr.mxu0 0.0
    %3862 = vmatpush2.msra.mxu0 0.0
    %3863 = vmatprep.subr.mxu0 0.0
    %3864 = vmatpush2.msra.mxu0 0.0
    %3865 = vmatprep.subr.mxu0 0.0
    %3866 = vmatpush2.msra.mxu0 0.0
    %3867 = vmatprep.subr.mxu0 0.0
    %3868 = vmatpush2.msra.mxu0 0.0
    %3869 = vmatprep.subr.mxu0 0.0
    %3870 = vmatpush2.msra.mxu0 0.0
    %3871 = vmatprep.subr.mxu0 0.0
    %3872 = vmatpush2.msra.mxu0 0.0
    %3873 = vmatprep.subr.mxu0 0.0
    %3874 = vmatpush2.msra.mxu0 0.0
    %3875 = vmatprep.subr.mxu0 0.0
    %3876 = vmatpush2.msra.mxu0 0.0
    %3877 = vmatprep.subr.mxu0 0.0
    %3878 = vmatpush2.msra.mxu0 0.0
    %3879 = vmatprep.subr.mxu0 0.0
    %3880 = vmatpush2.msra.mxu0 0.0
    %3881 = vmatprep.subr.mxu0 0.0
    %3882 = vmatpush2.msra.mxu0 0.0
    %3883 = vmatprep.mubr.f32.mxu0 0.0
    %3884 = vmatmul.mubr.f32.gmra.mxu0 %v3811
    %v3885 = vpop.f32.mrf.mxu0
    %v3886 = vadd.f32 %v3817, %v3885
    %v3887 = vpop.f32.mrf.mxu0
    %3888 = vmatprep.mubr.f32.mxu0 0.0
    %3889 = vmatmul.mubr.f32.gmra.mxu0 %v3812
    %v3890 = vpop.f32.mrf.mxu0
    %v3891 = vadd.f32 %v3817, %v3890
    %v3892 = vpop.f32.mrf.mxu0
    %3893 = vdwg.mxu0
    %v3894 = vmax.f32 %v3886, 0.0
    %v3895 = vmax.f32 %v3891, 0.0
    %v3897 = vlaneseq
    %v3898 = vshrl.u32 %v3897, 7
    %v3899 = vsub.s32 0, %v3898
    %v3900 = vrot.slane %v1071, %v3899
    %v3903 = vsel %vm1697, %v3894, 0
    %v3906 = vsel %vm1697, %v3895, 0
    %3908 = vmatprep.subr.mxu0 0.0
    %3909 = vmatpush1.msra.mxu0 0.0
    %3910 = vmatprep.subr.mxu0 0.0
    %3911 = vmatpush1.msra.mxu0 0.0
    %3912 = vmatprep.subr.mxu0 0.0
    %3913 = vmatpush1.msra.mxu0 0.0
    %3914 = vmatprep.subr.mxu0 0.0
    %3915 = vmatpush1.msra.mxu0 0.0
    %3916 = vmatprep.subr.mxu0 0.0
    %3917 = vmatpush1.msra.mxu0 0.0
    %3918 = vmatprep.subr.mxu0 0.0
    %3919 = vmatpush1.msra.mxu0 0.0
    %3920 = vmatprep.subr.mxu0 0.0
    %3921 = vmatpush1.msra.mxu0 0.0
    %3922 = vmatprep.subr.mxu0 0.0
    %3923 = vmatpush1.msra.mxu0 0.0
    %3924 = vmatprep.subr.mxu0 0.0
    %3925 = vmatpush1.msra.mxu0 %v1070
    %3926 = vmatprep.subr.mxu0 0.0
    %3927 = vmatpush1.msra.mxu0 %v1069
    %3928 = vmatprep.subr.mxu0 0.0
    %3929 = vmatpush1.msra.mxu0 %v1068
    %3930 = vmatprep.subr.mxu0 0.0
    %3931 = vmatpush1.msra.mxu0 %v1067
    %3932 = vmatprep.subr.mxu0 0.0
    %3933 = vmatpush1.msra.mxu0 %v1066
    %3934 = vmatprep.subr.mxu0 0.0
    %3935 = vmatpush1.msra.mxu0 %v1065
    %3936 = vmatprep.subr.mxu0 0.0
    %3937 = vmatpush1.msra.mxu0 %v1064
    %3938 = vmatprep.subr.mxu0 0.0
    %3939 = vmatpush1.msra.mxu0 %v1063
    %3940 = vmatprep.subr.mxu0 0.0
    %3941 = vmatpush2.msra.mxu0 0.0
    %3942 = vmatprep.subr.mxu0 0.0
    %3943 = vmatpush2.msra.mxu0 0.0
    %3944 = vmatprep.subr.mxu0 0.0
    %3945 = vmatpush2.msra.mxu0 0.0
    %3946 = vmatprep.subr.mxu0 0.0
    %3947 = vmatpush2.msra.mxu0 0.0
    %3948 = vmatprep.subr.mxu0 0.0
    %3949 = vmatpush2.msra.mxu0 0.0
    %3950 = vmatprep.subr.mxu0 0.0
    %3951 = vmatpush2.msra.mxu0 0.0
    %3952 = vmatprep.subr.mxu0 0.0
    %3953 = vmatpush2.msra.mxu0 0.0
    %3954 = vmatprep.subr.mxu0 0.0
    %3955 = vmatpush2.msra.mxu0 0.0
    %3956 = vmatprep.subr.mxu0 0.0
    %3957 = vmatpush2.msra.mxu0 0.0
    %3958 = vmatprep.subr.mxu0 0.0
    %3959 = vmatpush2.msra.mxu0 0.0
    %3960 = vmatprep.subr.mxu0 0.0
    %3961 = vmatpush2.msra.mxu0 0.0
    %3962 = vmatprep.subr.mxu0 0.0
    %3963 = vmatpush2.msra.mxu0 0.0
    %3964 = vmatprep.subr.mxu0 0.0
    %3965 = vmatpush2.msra.mxu0 0.0
    %3966 = vmatprep.subr.mxu0 0.0
    %3967 = vmatpush2.msra.mxu0 0.0
    %3968 = vmatprep.subr.mxu0 0.0
    %3969 = vmatpush2.msra.mxu0 0.0
    %3970 = vmatprep.subr.mxu0 0.0
    %3971 = vmatpush2.msra.mxu0 0.0
    %3972 = vmatprep.mubr.f32.mxu0 0.0
    %3973 = vmatmul.mubr.f32.gmra.mxu0 %v3903
    %v3974 = vpop.f32.mrf.mxu0
    %v3975 = vadd.f32 %v3900, %v3974
    %v3976 = vpop.f32.mrf.mxu0
    %3977 = vmatprep.mubr.f32.mxu0 0.0
    %3978 = vmatmul.mubr.f32.gmra.mxu0 %v3906
    %v3979 = vpop.f32.mrf.mxu0
    %v3980 = vadd.f32 %v3900, %v3979
    %v3981 = vpop.f32.mrf.mxu0
    %3982 = vdwg.mxu0
    %v3983 = vmax.f32 %v3975, 0.0
    %v3984 = vmax.f32 %v3980, 0.0
    %v3986 = vlaneseq
    %v3987 = vshrl.u32 %v3986, 7
    %v3988 = vsub.s32 0, %v3987
    %v3989 = vrot.slane %v1076, %v3988
    %v3992 = vsel %vm1787, %v3983, 0
    %v3995 = vsel %vm1787, %v3984, 0
    %3997 = vmatprep.subr.mxu0 0.0
    %3998 = vmatpush1.msra.mxu0 0.0
    %3999 = vmatprep.subr.mxu0 0.0
    %4000 = vmatpush1.msra.mxu0 0.0
    %4001 = vmatprep.subr.mxu0 0.0
    %4002 = vmatpush1.msra.mxu0 0.0
    %4003 = vmatprep.subr.mxu0 0.0
    %4004 = vmatpush1.msra.mxu0 0.0
    %4005 = vmatprep.subr.mxu0 0.0
    %4006 = vmatpush1.msra.mxu0 0.0
    %4007 = vmatprep.subr.mxu0 0.0
    %4008 = vmatpush1.msra.mxu0 0.0
    %4009 = vmatprep.subr.mxu0 0.0
    %4010 = vmatpush1.msra.mxu0 0.0
    %4011 = vmatprep.subr.mxu0 0.0
    %4012 = vmatpush1.msra.mxu0 0.0
    %4013 = vmatprep.subr.mxu0 0.0
    %4014 = vmatpush1.msra.mxu0 0.0
    %4015 = vmatprep.subr.mxu0 0.0
    %4016 = vmatpush1.msra.mxu0 0.0
    %4017 = vmatprep.subr.mxu0 0.0
    %4018 = vmatpush1.msra.mxu0 0.0
    %4019 = vmatprep.subr.mxu0 0.0
    %4020 = vmatpush1.msra.mxu0 0.0
    %4021 = vmatprep.subr.mxu0 0.0
    %4022 = vmatpush1.msra.mxu0 %v1075
    %4023 = vmatprep.subr.mxu0 0.0
    %4024 = vmatpush1.msra.mxu0 %v1074
    %4025 = vmatprep.subr.mxu0 0.0
    %4026 = vmatpush1.msra.mxu0 %v1073
    %4027 = vmatprep.subr.mxu0 0.0
    %4028 = vmatpush1.msra.mxu0 %v1072
    %4029 = vmatprep.subr.mxu0 0.0
    %4030 = vmatpush2.msra.mxu0 0.0
    %4031 = vmatprep.subr.mxu0 0.0
    %4032 = vmatpush2.msra.mxu0 0.0
    %4033 = vmatprep.subr.mxu0 0.0
    %4034 = vmatpush2.msra.mxu0 0.0
    %4035 = vmatprep.subr.mxu0 0.0
    %4036 = vmatpush2.msra.mxu0 0.0
    %4037 = vmatprep.subr.mxu0 0.0
    %4038 = vmatpush2.msra.mxu0 0.0
    %4039 = vmatprep.subr.mxu0 0.0
    %4040 = vmatpush2.msra.mxu0 0.0
    %4041 = vmatprep.subr.mxu0 0.0
    %4042 = vmatpush2.msra.mxu0 0.0
    %4043 = vmatprep.subr.mxu0 0.0
    %4044 = vmatpush2.msra.mxu0 0.0
    %4045 = vmatprep.subr.mxu0 0.0
    %4046 = vmatpush2.msra.mxu0 0.0
    %4047 = vmatprep.subr.mxu0 0.0
    %4048 = vmatpush2.msra.mxu0 0.0
    %4049 = vmatprep.subr.mxu0 0.0
    %4050 = vmatpush2.msra.mxu0 0.0
    %4051 = vmatprep.subr.mxu0 0.0
    %4052 = vmatpush2.msra.mxu0 0.0
    %4053 = vmatprep.subr.mxu0 0.0
    %4054 = vmatpush2.msra.mxu0 0.0
    %4055 = vmatprep.subr.mxu0 0.0
    %4056 = vmatpush2.msra.mxu0 0.0
    %4057 = vmatprep.subr.mxu0 0.0
    %4058 = vmatpush2.msra.mxu0 0.0
    %4059 = vmatprep.subr.mxu0 0.0
    %4060 = vmatpush2.msra.mxu0 0.0
    %4061 = vmatprep.mubr.f32.mxu0 0.0
    %4062 = vmatmul.mubr.f32.gmra.mxu0 %v3992
    %v4063 = vpop.f32.mrf.mxu0
    %v4064 = vadd.f32 %v3989, %v4063
    %v4065 = vpop.f32.mrf.mxu0
    %4066 = vmatprep.mubr.f32.mxu0 0.0
    %4067 = vmatmul.mubr.f32.gmra.mxu0 %v3995
    %v4068 = vpop.f32.mrf.mxu0
    %v4069 = vadd.f32 %v3989, %v4068
    %v4070 = vpop.f32.mrf.mxu0
    %4071 = vdwg.mxu0
    %v4073 = vlaneseq
    %v4074 = vshrl.u32 %v4073, 7
    %v4075 = vsub.s32 0, %v4074
    %v4076 = vrot.slane %v935, %v4075
    %v4077 = vlaneseq
    %v4078 = vshrl.u32 %v4077, 7
    %v4079 = vsub.s32 1, %v4078
    %v4080 = vrot.slane %v935, %v4079
    %v4084 = vsel %vm3642, %v3629, 0
    %v4087 = vsel %vm3642, %v3630, 0
    %4089 = vmatprep.subr.mxu0 0.0
    %4090 = vmatpush1.msra.mxu0 0.0
    %4091 = vmatprep.subr.mxu0 0.0
    %4092 = vmatpush1.msra.mxu0 0.0
    %4093 = vmatprep.subr.mxu0 0.0
    %4094 = vmatpush1.msra.mxu0 0.0
    %4095 = vmatprep.subr.mxu0 0.0
    %4096 = vmatpush1.msra.mxu0 0.0
    %4097 = vmatprep.subr.mxu0 0.0
    %4098 = vmatpush1.msra.mxu0 0.0
    %4099 = vmatprep.subr.mxu0 0.0
    %4100 = vmatpush1.msra.mxu0 0.0
    %4101 = vmatprep.subr.mxu0 0.0
    %4102 = vmatpush1.msra.mxu0 0.0
    %4103 = vmatprep.subr.mxu0 0.0
    %4104 = vmatpush1.msra.mxu0 0.0
    %4105 = vmatprep.subr.mxu0 0.0
    %4106 = vmatpush1.msra.mxu0 0.0
    %4107 = vmatprep.subr.mxu0 0.0
    %4108 = vmatpush1.msra.mxu0 0.0
    %4109 = vmatprep.subr.mxu0 %v934
    %4110 = vmatpush1.msra.mxu0 %v933
    %4111 = vmatprep.subr.mxu0 %v932
    %4112 = vmatpush1.msra.mxu0 %v931
    %4113 = vmatprep.subr.mxu0 %v930
    %4114 = vmatpush1.msra.mxu0 %v929
    %4115 = vmatprep.subr.mxu0 %v928
    %4116 = vmatpush1.msra.mxu0 %v927
    %4117 = vmatprep.subr.mxu0 %v926
    %4118 = vmatpush1.msra.mxu0 %v925
    %4119 = vmatprep.subr.mxu0 %v924
    %4120 = vmatpush1.msra.mxu0 %v923
    %4121 = vmatprep.subr.mxu0 0.0
    %4122 = vmatpush2.msra.mxu0 0.0
    %4123 = vmatprep.subr.mxu0 0.0
    %4124 = vmatpush2.msra.mxu0 0.0
    %4125 = vmatprep.subr.mxu0 0.0
    %4126 = vmatpush2.msra.mxu0 0.0
    %4127 = vmatprep.subr.mxu0 0.0
    %4128 = vmatpush2.msra.mxu0 0.0
    %4129 = vmatprep.subr.mxu0 0.0
    %4130 = vmatpush2.msra.mxu0 0.0
    %4131 = vmatprep.subr.mxu0 0.0
    %4132 = vmatpush2.msra.mxu0 0.0
    %4133 = vmatprep.subr.mxu0 0.0
    %4134 = vmatpush2.msra.mxu0 0.0
    %4135 = vmatprep.subr.mxu0 0.0
    %4136 = vmatpush2.msra.mxu0 0.0
    %4137 = vmatprep.subr.mxu0 0.0
    %4138 = vmatpush2.msra.mxu0 0.0
    %4139 = vmatprep.subr.mxu0 0.0
    %4140 = vmatpush2.msra.mxu0 0.0
    %4141 = vmatprep.subr.mxu0 0.0
    %4142 = vmatpush2.msra.mxu0 0.0
    %4143 = vmatprep.subr.mxu0 0.0
    %4144 = vmatpush2.msra.mxu0 0.0
    %4145 = vmatprep.subr.mxu0 0.0
    %4146 = vmatpush2.msra.mxu0 0.0
    %4147 = vmatprep.subr.mxu0 0.0
    %4148 = vmatpush2.msra.mxu0 0.0
    %4149 = vmatprep.subr.mxu0 0.0
    %4150 = vmatpush2.msra.mxu0 0.0
    %4151 = vmatprep.subr.mxu0 0.0
    %4152 = vmatpush2.msra.mxu0 0.0
    %4153 = vmatprep.mubr.f32.mxu0 0.0
    %4154 = vmatmul.mubr.f32.gmra.mxu0 %v4084
    %v4155 = vpop.f32.mrf.mxu0
    %v4156 = vadd.f32 %v4076, %v4155
    %v4157 = vpop.f32.mrf.mxu0
    %v4158 = vadd.f32 %v4080, %v4157
    %4159 = vmatprep.mubr.f32.mxu0 0.0
    %4160 = vmatmul.mubr.f32.gmra.mxu0 %v4087
    %v4161 = vpop.f32.mrf.mxu0
    %v4162 = vadd.f32 %v4076, %v4161
    %v4163 = vpop.f32.mrf.mxu0
    %v4164 = vadd.f32 %v4080, %v4163
    %4165 = vdwg.mxu0
    %v4166 = vmax.f32 %v4156, 0.0
    %v4167 = vmax.f32 %v4158, 0.0
    %v4168 = vmax.f32 %v4162, 0.0
    %v4169 = vmax.f32 %v4164, 0.0
    %v4171 = vlaneseq
    %v4172 = vshrl.u32 %v4171, 7
    %v4173 = vsub.s32 0, %v4172
    %v4174 = vrot.slane %v968, %v4173
    %4176 = vmatprep.subr.mxu0 0.0
    %4177 = vmatpush1.msra.mxu0 %v951
    %4178 = vmatprep.subr.mxu0 0.0
    %4179 = vmatpush1.msra.mxu0 %v950
    %4180 = vmatprep.subr.mxu0 0.0
    %4181 = vmatpush1.msra.mxu0 %v949
    %4182 = vmatprep.subr.mxu0 0.0
    %4183 = vmatpush1.msra.mxu0 %v948
    %4184 = vmatprep.subr.mxu0 0.0
    %4185 = vmatpush1.msra.mxu0 %v947
    %4186 = vmatprep.subr.mxu0 0.0
    %4187 = vmatpush1.msra.mxu0 %v946
    %4188 = vmatprep.subr.mxu0 0.0
    %4189 = vmatpush1.msra.mxu0 %v945
    %4190 = vmatprep.subr.mxu0 0.0
    %4191 = vmatpush1.msra.mxu0 %v944
    %4192 = vmatprep.subr.mxu0 0.0
    %4193 = vmatpush1.msra.mxu0 %v943
    %4194 = vmatprep.subr.mxu0 0.0
    %4195 = vmatpush1.msra.mxu0 %v942
    %4196 = vmatprep.subr.mxu0 0.0
    %4197 = vmatpush1.msra.mxu0 %v941
    %4198 = vmatprep.subr.mxu0 0.0
    %4199 = vmatpush1.msra.mxu0 %v940
    %4200 = vmatprep.subr.mxu0 0.0
    %4201 = vmatpush1.msra.mxu0 %v939
    %4202 = vmatprep.subr.mxu0 0.0
    %4203 = vmatpush1.msra.mxu0 %v938
    %4204 = vmatprep.subr.mxu0 0.0
    %4205 = vmatpush1.msra.mxu0 %v937
    %4206 = vmatprep.subr.mxu0 0.0
    %4207 = vmatpush1.msra.mxu0 %v936
    %4208 = vmatprep.subr.mxu0 0.0
    %4209 = vmatpush2.msra.mxu0 %v967
    %4210 = vmatprep.subr.mxu0 0.0
    %4211 = vmatpush2.msra.mxu0 %v966
    %4212 = vmatprep.subr.mxu0 0.0
    %4213 = vmatpush2.msra.mxu0 %v965
    %4214 = vmatprep.subr.mxu0 0.0
    %4215 = vmatpush2.msra.mxu0 %v964
    %4216 = vmatprep.subr.mxu0 0.0
    %4217 = vmatpush2.msra.mxu0 %v963
    %4218 = vmatprep.subr.mxu0 0.0
    %4219 = vmatpush2.msra.mxu0 %v962
    %4220 = vmatprep.subr.mxu0 0.0
    %4221 = vmatpush2.msra.mxu0 %v961
    %4222 = vmatprep.subr.mxu0 0.0
    %4223 = vmatpush2.msra.mxu0 %v960
    %4224 = vmatprep.subr.mxu0 0.0
    %4225 = vmatpush2.msra.mxu0 %v959
    %4226 = vmatprep.subr.mxu0 0.0
    %4227 = vmatpush2.msra.mxu0 %v958
    %4228 = vmatprep.subr.mxu0 0.0
    %4229 = vmatpush2.msra.mxu0 %v957
    %4230 = vmatprep.subr.mxu0 0.0
    %4231 = vmatpush2.msra.mxu0 %v956
    %4232 = vmatprep.subr.mxu0 0.0
    %4233 = vmatpush2.msra.mxu0 %v955
    %4234 = vmatprep.subr.mxu0 0.0
    %4235 = vmatpush2.msra.mxu0 %v954
    %4236 = vmatprep.subr.mxu0 0.0
    %4237 = vmatpush2.msra.mxu0 %v953
    %4238 = vmatprep.subr.mxu0 0.0
    %4239 = vmatpush2.msra.mxu0 %v952
    %4240 = vmatprep.mubr.f32.mxu0 %v4167
    %4241 = vmatmul.mubr.f32.gmra.mxu0 %v4166
    %v4242 = vpop.f32.mrf.mxu0
    %v4243 = vadd.f32 %v4174, %v4242
    %v4244 = vpop.f32.mrf.mxu0
    %4245 = vmatprep.mubr.f32.mxu0 %v4169
    %4246 = vmatmul.mubr.f32.gmra.mxu0 %v4168
    %v4247 = vpop.f32.mrf.mxu0
    %v4248 = vadd.f32 %v4174, %v4247
    %v4249 = vpop.f32.mrf.mxu0
    %4250 = vdwg.mxu0
    %v4251 = vmax.f32 %v4243, 0.0
    %v4252 = vmax.f32 %v4248, 0.0
    %v4254 = vlaneseq
    %v4255 = vshrl.u32 %v4254, 7
    %v4256 = vsub.s32 0, %v4255
    %v4257 = vrot.slane %v985, %v4256
    %4259 = vmatprep.subr.mxu0 0.0
    %4260 = vmatpush1.msra.mxu0 %v984
    %4261 = vmatprep.subr.mxu0 0.0
    %4262 = vmatpush1.msra.mxu0 %v983
    %4263 = vmatprep.subr.mxu0 0.0
    %4264 = vmatpush1.msra.mxu0 %v982
    %4265 = vmatprep.subr.mxu0 0.0
    %4266 = vmatpush1.msra.mxu0 %v981
    %4267 = vmatprep.subr.mxu0 0.0
    %4268 = vmatpush1.msra.mxu0 %v980
    %4269 = vmatprep.subr.mxu0 0.0
    %4270 = vmatpush1.msra.mxu0 %v979
    %4271 = vmatprep.subr.mxu0 0.0
    %4272 = vmatpush1.msra.mxu0 %v978
    %4273 = vmatprep.subr.mxu0 0.0
    %4274 = vmatpush1.msra.mxu0 %v977
    %4275 = vmatprep.subr.mxu0 0.0
    %4276 = vmatpush1.msra.mxu0 %v976
    %4277 = vmatprep.subr.mxu0 0.0
    %4278 = vmatpush1.msra.mxu0 %v975
    %4279 = vmatprep.subr.mxu0 0.0
    %4280 = vmatpush1.msra.mxu0 %v974
    %4281 = vmatprep.subr.mxu0 0.0
    %4282 = vmatpush1.msra.mxu0 %v973
    %4283 = vmatprep.subr.mxu0 0.0
    %4284 = vmatpush1.msra.mxu0 %v972
    %4285 = vmatprep.subr.mxu0 0.0
    %4286 = vmatpush1.msra.mxu0 %v971
    %4287 = vmatprep.subr.mxu0 0.0
    %4288 = vmatpush1.msra.mxu0 %v970
    %4289 = vmatprep.subr.mxu0 0.0
    %4290 = vmatpush1.msra.mxu0 %v969
    %4291 = vmatprep.subr.mxu0 0.0
    %4292 = vmatpush2.msra.mxu0 0.0
    %4293 = vmatprep.subr.mxu0 0.0
    %4294 = vmatpush2.msra.mxu0 0.0
    %4295 = vmatprep.subr.mxu0 0.0
    %4296 = vmatpush2.msra.mxu0 0.0
    %4297 = vmatprep.subr.mxu0 0.0
    %4298 = vmatpush2.msra.mxu0 0.0
    %4299 = vmatprep.subr.mxu0 0.0
    %4300 = vmatpush2.msra.mxu0 0.0
    %4301 = vmatprep.subr.mxu0 0.0
    %4302 = vmatpush2.msra.mxu0 0.0
    %4303 = vmatprep.subr.mxu0 0.0
    %4304 = vmatpush2.msra.mxu0 0.0
    %4305 = vmatprep.subr.mxu0 0.0
    %4306 = vmatpush2.msra.mxu0 0.0
    %4307 = vmatprep.subr.mxu0 0.0
    %4308 = vmatpush2.msra.mxu0 0.0
    %4309 = vmatprep.subr.mxu0 0.0
    %4310 = vmatpush2.msra.mxu0 0.0
    %4311 = vmatprep.subr.mxu0 0.0
    %4312 = vmatpush2.msra.mxu0 0.0
    %4313 = vmatprep.subr.mxu0 0.0
    %4314 = vmatpush2.msra.mxu0 0.0
    %4315 = vmatprep.subr.mxu0 0.0
    %4316 = vmatpush2.msra.mxu0 0.0
    %4317 = vmatprep.subr.mxu0 0.0
    %4318 = vmatpush2.msra.mxu0 0.0
    %4319 = vmatprep.subr.mxu0 0.0
    %4320 = vmatpush2.msra.mxu0 0.0
    %4321 = vmatprep.subr.mxu0 0.0
    %4322 = vmatpush2.msra.mxu0 0.0
    %4323 = vmatprep.mubr.f32.mxu0 0.0
    %4324 = vmatmul.mubr.f32.gmra.mxu0 %v4251
    %v4325 = vpop.f32.mrf.mxu0
    %v4326 = vadd.f32 %v4257, %v4325
    %v4327 = vpop.f32.mrf.mxu0
    %4328 = vmatprep.mubr.f32.mxu0 0.0
    %4329 = vmatmul.mubr.f32.gmra.mxu0 %v4252
    %v4330 = vpop.f32.mrf.mxu0
    %v4331 = vadd.f32 %v4257, %v4330
    %v4332 = vpop.f32.mrf.mxu0
    %4333 = vdwg.mxu0
    %v4334 = vmax.f32 %v4326, 0.0
    %v4335 = vmax.f32 %v4331, 0.0
    %v4337 = vlaneseq
    %v4338 = vshrl.u32 %v4337, 7
    %v4339 = vsub.s32 0, %v4338
    %v4340 = vrot.slane %v994, %v4339
    %v4343 = vsel %vm1697, %v4334, 0
    %v4346 = vsel %vm1697, %v4335, 0
    %4348 = vmatprep.subr.mxu0 0.0
    %4349 = vmatpush1.msra.mxu0 0.0
    %4350 = vmatprep.subr.mxu0 0.0
    %4351 = vmatpush1.msra.mxu0 0.0
    %4352 = vmatprep.subr.mxu0 0.0
    %4353 = vmatpush1.msra.mxu0 0.0
    %4354 = vmatprep.subr.mxu0 0.0
    %4355 = vmatpush1.msra.mxu0 0.0
    %4356 = vmatprep.subr.mxu0 0.0
    %4357 = vmatpush1.msra.mxu0 0.0
    %4358 = vmatprep.subr.mxu0 0.0
    %4359 = vmatpush1.msra.mxu0 0.0
    %4360 = vmatprep.subr.mxu0 0.0
    %4361 = vmatpush1.msra.mxu0 0.0
    %4362 = vmatprep.subr.mxu0 0.0
    %4363 = vmatpush1.msra.mxu0 0.0
    %4364 = vmatprep.subr.mxu0 0.0
    %4365 = vmatpush1.msra.mxu0 %v993
    %4366 = vmatprep.subr.mxu0 0.0
    %4367 = vmatpush1.msra.mxu0 %v992
    %4368 = vmatprep.subr.mxu0 0.0
    %4369 = vmatpush1.msra.mxu0 %v991
    %4370 = vmatprep.subr.mxu0 0.0
    %4371 = vmatpush1.msra.mxu0 %v990
    %4372 = vmatprep.subr.mxu0 0.0
    %4373 = vmatpush1.msra.mxu0 %v989
    %4374 = vmatprep.subr.mxu0 0.0
    %4375 = vmatpush1.msra.mxu0 %v988
    %4376 = vmatprep.subr.mxu0 0.0
    %4377 = vmatpush1.msra.mxu0 %v987
    %4378 = vmatprep.subr.mxu0 0.0
    %4379 = vmatpush1.msra.mxu0 %v986
    %4380 = vmatprep.subr.mxu0 0.0
    %4381 = vmatpush2.msra.mxu0 0.0
    %4382 = vmatprep.subr.mxu0 0.0
    %4383 = vmatpush2.msra.mxu0 0.0
    %4384 = vmatprep.subr.mxu0 0.0
    %4385 = vmatpush2.msra.mxu0 0.0
    %4386 = vmatprep.subr.mxu0 0.0
    %4387 = vmatpush2.msra.mxu0 0.0
    %4388 = vmatprep.subr.mxu0 0.0
    %4389 = vmatpush2.msra.mxu0 0.0
    %4390 = vmatprep.subr.mxu0 0.0
    %4391 = vmatpush2.msra.mxu0 0.0
    %4392 = vmatprep.subr.mxu0 0.0
    %4393 = vmatpush2.msra.mxu0 0.0
    %4394 = vmatprep.subr.mxu0 0.0
    %4395 = vmatpush2.msra.mxu0 0.0
    %4396 = vmatprep.subr.mxu0 0.0
    %4397 = vmatpush2.msra.mxu0 0.0
    %4398 = vmatprep.subr.mxu0 0.0
    %4399 = vmatpush2.msra.mxu0 0.0
    %4400 = vmatprep.subr.mxu0 0.0
    %4401 = vmatpush2.msra.mxu0 0.0
    %4402 = vmatprep.subr.mxu0 0.0
    %4403 = vmatpush2.msra.mxu0 0.0
    %4404 = vmatprep.subr.mxu0 0.0
    %4405 = vmatpush2.msra.mxu0 0.0
    %4406 = vmatprep.subr.mxu0 0.0
    %4407 = vmatpush2.msra.mxu0 0.0
    %4408 = vmatprep.subr.mxu0 0.0
    %4409 = vmatpush2.msra.mxu0 0.0
    %4410 = vmatprep.subr.mxu0 0.0
    %4411 = vmatpush2.msra.mxu0 0.0
    %4412 = vmatprep.mubr.f32.mxu0 0.0
    %4413 = vmatmul.mubr.f32.gmra.mxu0 %v4343
    %v4414 = vpop.f32.mrf.mxu0
    %v4415 = vadd.f32 %v4340, %v4414
    %v4416 = vpop.f32.mrf.mxu0
    %4417 = vmatprep.mubr.f32.mxu0 0.0
    %4418 = vmatmul.mubr.f32.gmra.mxu0 %v4346
    %v4419 = vpop.f32.mrf.mxu0
    %v4420 = vadd.f32 %v4340, %v4419
    %v4421 = vpop.f32.mrf.mxu0
    %4422 = vdwg.mxu0
    %v4423 = vmax.f32 %v4415, 0.0
    %v4424 = vmax.f32 %v4420, 0.0
    %v4426 = vlaneseq
    %v4427 = vshrl.u32 %v4426, 7
    %v4428 = vsub.s32 0, %v4427
    %v4429 = vrot.slane %v999, %v4428
    %v4432 = vsel %vm1787, %v4423, 0
    %v4435 = vsel %vm1787, %v4424, 0
    %4437 = vmatprep.subr.mxu0 0.0
    %4438 = vmatpush1.msra.mxu0 0.0
    %4439 = vmatprep.subr.mxu0 0.0
    %4440 = vmatpush1.msra.mxu0 0.0
    %4441 = vmatprep.subr.mxu0 0.0
    %4442 = vmatpush1.msra.mxu0 0.0
    %4443 = vmatprep.subr.mxu0 0.0
    %4444 = vmatpush1.msra.mxu0 0.0
    %4445 = vmatprep.subr.mxu0 0.0
    %4446 = vmatpush1.msra.mxu0 0.0
    %4447 = vmatprep.subr.mxu0 0.0
    %4448 = vmatpush1.msra.mxu0 0.0
    %4449 = vmatprep.subr.mxu0 0.0
    %4450 = vmatpush1.msra.mxu0 0.0
    %4451 = vmatprep.subr.mxu0 0.0
    %4452 = vmatpush1.msra.mxu0 0.0
    %4453 = vmatprep.subr.mxu0 0.0
    %4454 = vmatpush1.msra.mxu0 0.0
    %4455 = vmatprep.subr.mxu0 0.0
    %4456 = vmatpush1.msra.mxu0 0.0
    %4457 = vmatprep.subr.mxu0 0.0
    %4458 = vmatpush1.msra.mxu0 0.0
    %4459 = vmatprep.subr.mxu0 0.0
    %4460 = vmatpush1.msra.mxu0 0.0
    %4461 = vmatprep.subr.mxu0 0.0
    %4462 = vmatpush1.msra.mxu0 %v998
    %4463 = vmatprep.subr.mxu0 0.0
    %4464 = vmatpush1.msra.mxu0 %v997
    %4465 = vmatprep.subr.mxu0 0.0
    %4466 = vmatpush1.msra.mxu0 %v996
    %4467 = vmatprep.subr.mxu0 0.0
    %4468 = vmatpush1.msra.mxu0 %v995
    %4469 = vmatprep.subr.mxu0 0.0
    %4470 = vmatpush2.msra.mxu0 0.0
    %4471 = vmatprep.subr.mxu0 0.0
    %4472 = vmatpush2.msra.mxu0 0.0
    %4473 = vmatprep.subr.mxu0 0.0
    %4474 = vmatpush2.msra.mxu0 0.0
    %4475 = vmatprep.subr.mxu0 0.0
    %4476 = vmatpush2.msra.mxu0 0.0
    %4477 = vmatprep.subr.mxu0 0.0
    %4478 = vmatpush2.msra.mxu0 0.0
    %4479 = vmatprep.subr.mxu0 0.0
    %4480 = vmatpush2.msra.mxu0 0.0
    %4481 = vmatprep.subr.mxu0 0.0
    %4482 = vmatpush2.msra.mxu0 0.0
    %4483 = vmatprep.subr.mxu0 0.0
    %4484 = vmatpush2.msra.mxu0 0.0
    %4485 = vmatprep.subr.mxu0 0.0
    %4486 = vmatpush2.msra.mxu0 0.0
    %4487 = vmatprep.subr.mxu0 0.0
    %4488 = vmatpush2.msra.mxu0 0.0
    %4489 = vmatprep.subr.mxu0 0.0
    %4490 = vmatpush2.msra.mxu0 0.0
    %4491 = vmatprep.subr.mxu0 0.0
    %4492 = vmatpush2.msra.mxu0 0.0
    %4493 = vmatprep.subr.mxu0 0.0
    %4494 = vmatpush2.msra.mxu0 0.0
    %4495 = vmatprep.subr.mxu0 0.0
    %4496 = vmatpush2.msra.mxu0 0.0
    %4497 = vmatprep.subr.mxu0 0.0
    %4498 = vmatpush2.msra.mxu0 0.0
    %4499 = vmatprep.subr.mxu0 0.0
    %4500 = vmatpush2.msra.mxu0 0.0
    %4501 = vmatprep.mubr.f32.mxu0 0.0
    %4502 = vmatmul.mubr.f32.gmra.mxu0 %v4432
    %v4503 = vpop.f32.mrf.mxu0
    %v4504 = vadd.f32 %v4429, %v4503
    %v4505 = vpop.f32.mrf.mxu0
    %4506 = vmatprep.mubr.f32.mxu0 0.0
    %4507 = vmatmul.mubr.f32.gmra.mxu0 %v4435
    %v4508 = vpop.f32.mrf.mxu0
    %v4509 = vadd.f32 %v4429, %v4508
    %v4510 = vpop.f32.mrf.mxu0
    %4511 = vdwg.mxu0
    %4512 = vmatprep.subr.mxu0 0.0
    %4513 = vmatpush1.msra.mxu0 0.0
    %4514 = vmatprep.subr.mxu0 0.0
    %4515 = vmatpush1.msra.mxu0 0.0
    %4516 = vmatprep.subr.mxu0 0.0
    %4517 = vmatpush1.msra.mxu0 0.0
    %4518 = vmatprep.subr.mxu0 0.0
    %4519 = vmatpush1.msra.mxu0 0.0
    %4520 = vmatprep.subr.mxu0 0.0
    %4521 = vmatpush1.msra.mxu0 0.0
    %4522 = vmatprep.subr.mxu0 0.0
    %4523 = vmatpush1.msra.mxu0 0.0
    %4524 = vmatprep.subr.mxu0 0.0
    %4525 = vmatpush1.msra.mxu0 0.0
    %4526 = vmatprep.subr.mxu0 0.0
    %4527 = vmatpush1.msra.mxu0 0.0
    %4528 = vmatprep.subr.mxu0 0.0
    %4529 = vmatpush1.msra.mxu0 0.0
    %4530 = vmatprep.subr.mxu0 0.0
    %4531 = vmatpush1.msra.mxu0 0.0
    %4532 = vmatprep.subr.mxu0 0.0
    %4533 = vmatpush1.msra.mxu0 0.0
    %4534 = vmatprep.subr.mxu0 0.0
    %4535 = vmatpush1.msra.mxu0 0.0
    %4536 = vmatprep.subr.mxu0 0.0
    %4537 = vmatpush1.msra.mxu0 0.0
    %4538 = vmatprep.subr.mxu0 0.0
    %4539 = vmatpush1.msra.mxu0 0.0
    %4540 = vmatprep.subr.mxu0 0.0
    %4541 = vmatpush1.msra.mxu0 %v4069
    %4542 = vmatprep.subr.mxu0 0.0
    %4543 = vmatpush1.msra.mxu0 %v4064
    %4544 = vmatprep.subr.mxu0 0.0
    %4545 = vmatpush2.msra.mxu0 0.0
    %4546 = vmatprep.subr.mxu0 0.0
    %4547 = vmatpush2.msra.mxu0 0.0
    %4548 = vmatprep.subr.mxu0 0.0
    %4549 = vmatpush2.msra.mxu0 0.0
    %4550 = vmatprep.subr.mxu0 0.0
    %4551 = vmatpush2.msra.mxu0 0.0
    %4552 = vmatprep.subr.mxu0 0.0
    %4553 = vmatpush2.msra.mxu0 0.0
    %4554 = vmatprep.subr.mxu0 0.0
    %4555 = vmatpush2.msra.mxu0 0.0
    %4556 = vmatprep.subr.mxu0 0.0
    %4557 = vmatpush2.msra.mxu0 0.0
    %4558 = vmatprep.subr.mxu0 0.0
    %4559 = vmatpush2.msra.mxu0 0.0
    %4560 = vmatprep.subr.mxu0 0.0
    %4561 = vmatpush2.msra.mxu0 0.0
    %4562 = vmatprep.subr.mxu0 0.0
    %4563 = vmatpush2.msra.mxu0 0.0
    %4564 = vmatprep.subr.mxu0 0.0
    %4565 = vmatpush2.msra.mxu0 0.0
    %4566 = vmatprep.subr.mxu0 0.0
    %4567 = vmatpush2.msra.mxu0 0.0
    %4568 = vmatprep.subr.mxu0 0.0
    %4569 = vmatpush2.msra.mxu0 0.0
    %4570 = vmatprep.subr.mxu0 0.0
    %4571 = vmatpush2.msra.mxu0 0.0
    %4572 = vmatprep.subr.mxu0 0.0
    %4573 = vmatpush2.msra.mxu0 0.0
    %4574 = vmatprep.subr.mxu0 0.0
    %4575 = vmatpush2.msra.mxu0 0.0
    %4576 = vmatprep.mubr.f32.mxu0 0.0
    %4577 = vmatmul.mubr.f32.gmra.mxu0 %v2428
    %v4578 = vpop.f32.mrf.mxu0
    %v4579 = vadd.f32 0.0, %v4578
    %v4580 = vpop.f32.mrf.mxu0
    %4581 = vdwg.mxu0
    %4583 = vrot.lane.b32.xlu0 %v4579, 16
    %v4584 = vpop.permute.xlu0 %4583
    %v4586 = vsel %vm1396, %v3355, %v4584
    %v4588 = vlaneseq
    %v4589 = vshrl.u32 %v4588, 7
    %v4590 = vsub.s32 0, %v4589
    %v4591 = vrot.slane %v1151, %v4590
    %v4594 = vsel %vm1524, %v4586, 0
    %4596 = vmatprep.subr.mxu0 0.0
    %4597 = vmatpush1.msra.mxu0 0.0
    %4598 = vmatprep.subr.mxu0 0.0
    %4599 = vmatpush1.msra.mxu0 0.0
    %4600 = vmatprep.subr.mxu0 0.0
    %4601 = vmatpush1.msra.mxu0 0.0
    %4602 = vmatprep.subr.mxu0 0.0
    %4603 = vmatpush1.msra.mxu0 0.0
    %4604 = vmatprep.subr.mxu0 0.0
    %4605 = vmatpush1.msra.mxu0 0.0
    %4606 = vmatprep.subr.mxu0 0.0
    %4607 = vmatpush1.msra.mxu0 0.0
    %4608 = vmatprep.subr.mxu0 0.0
    %4609 = vmatpush1.msra.mxu0 0.0
    %4610 = vmatprep.subr.mxu0 0.0
    %4611 = vmatpush1.msra.mxu0 0.0
    %4612 = vmatprep.subr.mxu0 0.0
    %4613 = vmatpush1.msra.mxu0 0.0
    %4614 = vmatprep.subr.mxu0 0.0
    %4615 = vmatpush1.msra.mxu0 0.0
    %4616 = vmatprep.subr.mxu0 0.0
    %4617 = vmatpush1.msra.mxu0 0.0
    %4618 = vmatprep.subr.mxu0 0.0
    %4619 = vmatpush1.msra.mxu0 0.0
    %4620 = vmatprep.subr.mxu0 0.0
    %4621 = vmatpush1.msra.mxu0 0.0
    %4622 = vmatprep.subr.mxu0 0.0
    %4623 = vmatpush1.msra.mxu0 %v1150
    %4624 = vmatprep.subr.mxu0 0.0
    %4625 = vmatpush1.msra.mxu0 %v1149
    %4626 = vmatprep.subr.mxu0 0.0
    %4627 = vmatpush1.msra.mxu0 %v1148
    %4628 = vmatprep.subr.mxu0 0.0
    %4629 = vmatpush2.msra.mxu0 0.0
    %4630 = vmatprep.subr.mxu0 0.0
    %4631 = vmatpush2.msra.mxu0 0.0
    %4632 = vmatprep.subr.mxu0 0.0
    %4633 = vmatpush2.msra.mxu0 0.0
    %4634 = vmatprep.subr.mxu0 0.0
    %4635 = vmatpush2.msra.mxu0 0.0
    %4636 = vmatprep.subr.mxu0 0.0
    %4637 = vmatpush2.msra.mxu0 0.0
    %4638 = vmatprep.subr.mxu0 0.0
    %4639 = vmatpush2.msra.mxu0 0.0
    %4640 = vmatprep.subr.mxu0 0.0
    %4641 = vmatpush2.msra.mxu0 0.0
    %4642 = vmatprep.subr.mxu0 0.0
    %4643 = vmatpush2.msra.mxu0 0.0
    %4644 = vmatprep.subr.mxu0 0.0
    %4645 = vmatpush2.msra.mxu0 0.0
    %4646 = vmatprep.subr.mxu0 0.0
    %4647 = vmatpush2.msra.mxu0 0.0
    %4648 = vmatprep.subr.mxu0 0.0
    %4649 = vmatpush2.msra.mxu0 0.0
    %4650 = vmatprep.subr.mxu0 0.0
    %4651 = vmatpush2.msra.mxu0 0.0
    %4652 = vmatprep.subr.mxu0 0.0
    %4653 = vmatpush2.msra.mxu0 0.0
    %4654 = vmatprep.subr.mxu0 0.0
    %4655 = vmatpush2.msra.mxu0 0.0
    %4656 = vmatprep.subr.mxu0 0.0
    %4657 = vmatpush2.msra.mxu0 0.0
    %4658 = vmatprep.subr.mxu0 0.0
    %4659 = vmatpush2.msra.mxu0 0.0
    %4660 = vmatprep.mubr.f32.mxu0 0.0
    %4661 = vmatmul.mubr.f32.gmra.mxu0 %v4594
    %v4662 = vpop.f32.mrf.mxu0
    %v4663 = vadd.f32 %v4591, %v4662
    %v4664 = vpop.f32.mrf.mxu0
    %4665 = vdwg.mxu0
    %v4666 = vmax.f32 %v4663, 0.0
    %v4668 = vlaneseq
    %v4669 = vshrl.u32 %v4668, 7
    %v4670 = vsub.s32 0, %v4669
    %v4671 = vrot.slane %v1168, %v4670
    %4673 = vmatprep.subr.mxu0 0.0
    %4674 = vmatpush1.msra.mxu0 %v1167
    %4675 = vmatprep.subr.mxu0 0.0
    %4676 = vmatpush1.msra.mxu0 %v1166
    %4677 = vmatprep.subr.mxu0 0.0
    %4678 = vmatpush1.msra.mxu0 %v1165
    %4679 = vmatprep.subr.mxu0 0.0
    %4680 = vmatpush1.msra.mxu0 %v1164
    %4681 = vmatprep.subr.mxu0 0.0
    %4682 = vmatpush1.msra.mxu0 %v1163
    %4683 = vmatprep.subr.mxu0 0.0
    %4684 = vmatpush1.msra.mxu0 %v1162
    %4685 = vmatprep.subr.mxu0 0.0
    %4686 = vmatpush1.msra.mxu0 %v1161
    %4687 = vmatprep.subr.mxu0 0.0
    %4688 = vmatpush1.msra.mxu0 %v1160
    %4689 = vmatprep.subr.mxu0 0.0
    %4690 = vmatpush1.msra.mxu0 %v1159
    %4691 = vmatprep.subr.mxu0 0.0
    %4692 = vmatpush1.msra.mxu0 %v1158
    %4693 = vmatprep.subr.mxu0 0.0
    %4694 = vmatpush1.msra.mxu0 %v1157
    %4695 = vmatprep.subr.mxu0 0.0
    %4696 = vmatpush1.msra.mxu0 %v1156
    %4697 = vmatprep.subr.mxu0 0.0
    %4698 = vmatpush1.msra.mxu0 %v1155
    %4699 = vmatprep.subr.mxu0 0.0
    %4700 = vmatpush1.msra.mxu0 %v1154
    %4701 = vmatprep.subr.mxu0 0.0
    %4702 = vmatpush1.msra.mxu0 %v1153
    %4703 = vmatprep.subr.mxu0 0.0
    %4704 = vmatpush1.msra.mxu0 %v1152
    %4705 = vmatprep.subr.mxu0 0.0
    %4706 = vmatpush2.msra.mxu0 0.0
    %4707 = vmatprep.subr.mxu0 0.0
    %4708 = vmatpush2.msra.mxu0 0.0
    %4709 = vmatprep.subr.mxu0 0.0
    %4710 = vmatpush2.msra.mxu0 0.0
    %4711 = vmatprep.subr.mxu0 0.0
    %4712 = vmatpush2.msra.mxu0 0.0
    %4713 = vmatprep.subr.mxu0 0.0
    %4714 = vmatpush2.msra.mxu0 0.0
    %4715 = vmatprep.subr.mxu0 0.0
    %4716 = vmatpush2.msra.mxu0 0.0
    %4717 = vmatprep.subr.mxu0 0.0
    %4718 = vmatpush2.msra.mxu0 0.0
    %4719 = vmatprep.subr.mxu0 0.0
    %4720 = vmatpush2.msra.mxu0 0.0
    %4721 = vmatprep.subr.mxu0 0.0
    %4722 = vmatpush2.msra.mxu0 0.0
    %4723 = vmatprep.subr.mxu0 0.0
    %4724 = vmatpush2.msra.mxu0 0.0
    %4725 = vmatprep.subr.mxu0 0.0
    %4726 = vmatpush2.msra.mxu0 0.0
    %4727 = vmatprep.subr.mxu0 0.0
    %4728 = vmatpush2.msra.mxu0 0.0
    %4729 = vmatprep.subr.mxu0 0.0
    %4730 = vmatpush2.msra.mxu0 0.0
    %4731 = vmatprep.subr.mxu0 0.0
    %4732 = vmatpush2.msra.mxu0 0.0
    %4733 = vmatprep.subr.mxu0 0.0
    %4734 = vmatpush2.msra.mxu0 0.0
    %4735 = vmatprep.subr.mxu0 0.0
    %4736 = vmatpush2.msra.mxu0 0.0
    %4737 = vmatprep.mubr.f32.mxu0 0.0
    %4738 = vmatmul.mubr.f32.gmra.mxu0 %v4666
    %v4739 = vpop.f32.mrf.mxu0
    %v4740 = vadd.f32 %v4671, %v4739
    %v4741 = vpop.f32.mrf.mxu0
    %4742 = vdwg.mxu0
    %v4743 = vmax.f32 %v4740, 0.0
    %v4745 = vlaneseq
    %v4746 = vshrl.u32 %v4745, 7
    %v4747 = vsub.s32 0, %v4746
    %v4748 = vrot.slane %v1177, %v4747
    %v4751 = vsel %vm1697, %v4743, 0
    %4753 = vmatprep.subr.mxu0 0.0
    %4754 = vmatpush1.msra.mxu0 0.0
    %4755 = vmatprep.subr.mxu0 0.0
    %4756 = vmatpush1.msra.mxu0 0.0
    %4757 = vmatprep.subr.mxu0 0.0
    %4758 = vmatpush1.msra.mxu0 0.0
    %4759 = vmatprep.subr.mxu0 0.0
    %4760 = vmatpush1.msra.mxu0 0.0
    %4761 = vmatprep.subr.mxu0 0.0
    %4762 = vmatpush1.msra.mxu0 0.0
    %4763 = vmatprep.subr.mxu0 0.0
    %4764 = vmatpush1.msra.mxu0 0.0
    %4765 = vmatprep.subr.mxu0 0.0
    %4766 = vmatpush1.msra.mxu0 0.0
    %4767 = vmatprep.subr.mxu0 0.0
    %4768 = vmatpush1.msra.mxu0 0.0
    %4769 = vmatprep.subr.mxu0 0.0
    %4770 = vmatpush1.msra.mxu0 %v1176
    %4771 = vmatprep.subr.mxu0 0.0
    %4772 = vmatpush1.msra.mxu0 %v1175
    %4773 = vmatprep.subr.mxu0 0.0
    %4774 = vmatpush1.msra.mxu0 %v1174
    %4775 = vmatprep.subr.mxu0 0.0
    %4776 = vmatpush1.msra.mxu0 %v1173
    %4777 = vmatprep.subr.mxu0 0.0
    %4778 = vmatpush1.msra.mxu0 %v1172
    %4779 = vmatprep.subr.mxu0 0.0
    %4780 = vmatpush1.msra.mxu0 %v1171
    %4781 = vmatprep.subr.mxu0 0.0
    %4782 = vmatpush1.msra.mxu0 %v1170
    %4783 = vmatprep.subr.mxu0 0.0
    %4784 = vmatpush1.msra.mxu0 %v1169
    %4785 = vmatprep.subr.mxu0 0.0
    %4786 = vmatpush2.msra.mxu0 0.0
    %4787 = vmatprep.subr.mxu0 0.0
    %4788 = vmatpush2.msra.mxu0 0.0
    %4789 = vmatprep.subr.mxu0 0.0
    %4790 = vmatpush2.msra.mxu0 0.0
    %4791 = vmatprep.subr.mxu0 0.0
    %4792 = vmatpush2.msra.mxu0 0.0
    %4793 = vmatprep.subr.mxu0 0.0
    %4794 = vmatpush2.msra.mxu0 0.0
    %4795 = vmatprep.subr.mxu0 0.0
    %4796 = vmatpush2.msra.mxu0 0.0
    %4797 = vmatprep.subr.mxu0 0.0
    %4798 = vmatpush2.msra.mxu0 0.0
    %4799 = vmatprep.subr.mxu0 0.0
    %4800 = vmatpush2.msra.mxu0 0.0
    %4801 = vmatprep.subr.mxu0 0.0
    %4802 = vmatpush2.msra.mxu0 0.0
    %4803 = vmatprep.subr.mxu0 0.0
    %4804 = vmatpush2.msra.mxu0 0.0
    %4805 = vmatprep.subr.mxu0 0.0
    %4806 = vmatpush2.msra.mxu0 0.0
    %4807 = vmatprep.subr.mxu0 0.0
    %4808 = vmatpush2.msra.mxu0 0.0
    %4809 = vmatprep.subr.mxu0 0.0
    %4810 = vmatpush2.msra.mxu0 0.0
    %4811 = vmatprep.subr.mxu0 0.0
    %4812 = vmatpush2.msra.mxu0 0.0
    %4813 = vmatprep.subr.mxu0 0.0
    %4814 = vmatpush2.msra.mxu0 0.0
    %4815 = vmatprep.subr.mxu0 0.0
    %4816 = vmatpush2.msra.mxu0 0.0
    %4817 = vmatprep.mubr.f32.mxu0 0.0
    %4818 = vmatmul.mubr.f32.gmra.mxu0 %v4751
    %v4819 = vpop.f32.mrf.mxu0
    %v4820 = vadd.f32 %v4748, %v4819
    %v4821 = vpop.f32.mrf.mxu0
    %4822 = vdwg.mxu0
    %v4823 = vmax.f32 %v4820, 0.0
    %v4825 = vlaneseq
    %v4826 = vshrl.u32 %v4825, 7
    %v4827 = vsub.s32 0, %v4826
    %v4828 = vrot.slane %v1182, %v4827
    %v4831 = vsel %vm1787, %v4823, 0
    %4833 = vmatprep.subr.mxu0 0.0
    %4834 = vmatpush1.msra.mxu0 0.0
    %4835 = vmatprep.subr.mxu0 0.0
    %4836 = vmatpush1.msra.mxu0 0.0
    %4837 = vmatprep.subr.mxu0 0.0
    %4838 = vmatpush1.msra.mxu0 0.0
    %4839 = vmatprep.subr.mxu0 0.0
    %4840 = vmatpush1.msra.mxu0 0.0
    %4841 = vmatprep.subr.mxu0 0.0
    %4842 = vmatpush1.msra.mxu0 0.0
    %4843 = vmatprep.subr.mxu0 0.0
    %4844 = vmatpush1.msra.mxu0 0.0
    %4845 = vmatprep.subr.mxu0 0.0
    %4846 = vmatpush1.msra.mxu0 0.0
    %4847 = vmatprep.subr.mxu0 0.0
    %4848 = vmatpush1.msra.mxu0 0.0
    %4849 = vmatprep.subr.mxu0 0.0
    %4850 = vmatpush1.msra.mxu0 0.0
    %4851 = vmatprep.subr.mxu0 0.0
    %4852 = vmatpush1.msra.mxu0 0.0
    %4853 = vmatprep.subr.mxu0 0.0
    %4854 = vmatpush1.msra.mxu0 0.0
    %4855 = vmatprep.subr.mxu0 0.0
    %4856 = vmatpush1.msra.mxu0 0.0
    %4857 = vmatprep.subr.mxu0 0.0
    %4858 = vmatpush1.msra.mxu0 %v1181
    %4859 = vmatprep.subr.mxu0 0.0
    %4860 = vmatpush1.msra.mxu0 %v1180
    %4861 = vmatprep.subr.mxu0 0.0
    %4862 = vmatpush1.msra.mxu0 %v1179
    %4863 = vmatprep.subr.mxu0 0.0
    %4864 = vmatpush1.msra.mxu0 %v1178
    %4865 = vmatprep.subr.mxu0 0.0
    %4866 = vmatpush2.msra.mxu0 0.0
    %4867 = vmatprep.subr.mxu0 0.0
    %4868 = vmatpush2.msra.mxu0 0.0
    %4869 = vmatprep.subr.mxu0 0.0
    %4870 = vmatpush2.msra.mxu0 0.0
    %4871 = vmatprep.subr.mxu0 0.0
    %4872 = vmatpush2.msra.mxu0 0.0
    %4873 = vmatprep.subr.mxu0 0.0
    %4874 = vmatpush2.msra.mxu0 0.0
    %4875 = vmatprep.subr.mxu0 0.0
    %4876 = vmatpush2.msra.mxu0 0.0
    %4877 = vmatprep.subr.mxu0 0.0
    %4878 = vmatpush2.msra.mxu0 0.0
    %4879 = vmatprep.subr.mxu0 0.0
    %4880 = vmatpush2.msra.mxu0 0.0
    %4881 = vmatprep.subr.mxu0 0.0
    %4882 = vmatpush2.msra.mxu0 0.0
    %4883 = vmatprep.subr.mxu0 0.0
    %4884 = vmatpush2.msra.mxu0 0.0
    %4885 = vmatprep.subr.mxu0 0.0
    %4886 = vmatpush2.msra.mxu0 0.0
    %4887 = vmatprep.subr.mxu0 0.0
    %4888 = vmatpush2.msra.mxu0 0.0
    %4889 = vmatprep.subr.mxu0 0.0
    %4890 = vmatpush2.msra.mxu0 0.0
    %4891 = vmatprep.subr.mxu0 0.0
    %4892 = vmatpush2.msra.mxu0 0.0
    %4893 = vmatprep.subr.mxu0 0.0
    %4894 = vmatpush2.msra.mxu0 0.0
    %4895 = vmatprep.subr.mxu0 0.0
    %4896 = vmatpush2.msra.mxu0 0.0
    %4897 = vmatprep.mubr.f32.mxu0 0.0
    %4898 = vmatmul.mubr.f32.gmra.mxu0 %v4831
    %v4899 = vpop.f32.mrf.mxu0
    %v4900 = vadd.f32 %v4828, %v4899
    %v4901 = vpop.f32.mrf.mxu0
    %4902 = vdwg.mxu0
    %v4903 = vmax.f32 %v4900, 0.0
    %v4905 = vlaneseq
    %v4906 = vshrl.u32 %v4905, 7
    %v4907 = vsub.s32 0, %v4906
    %v4908 = vrot.slane %v1185, %v4907
    %v4911 = vsel %vm1396, %v4903, 0
    %4913 = vmatprep.subr.mxu0 0.0
    %4914 = vmatpush1.msra.mxu0 0.0
    %4915 = vmatprep.subr.mxu0 0.0
    %4916 = vmatpush1.msra.mxu0 0.0
    %4917 = vmatprep.subr.mxu0 0.0
    %4918 = vmatpush1.msra.mxu0 0.0
    %4919 = vmatprep.subr.mxu0 0.0
    %4920 = vmatpush1.msra.mxu0 0.0
    %4921 = vmatprep.subr.mxu0 0.0
    %4922 = vmatpush1.msra.mxu0 0.0
    %4923 = vmatprep.subr.mxu0 0.0
    %4924 = vmatpush1.msra.mxu0 0.0
    %4925 = vmatprep.subr.mxu0 0.0
    %4926 = vmatpush1.msra.mxu0 0.0
    %4927 = vmatprep.subr.mxu0 0.0
    %4928 = vmatpush1.msra.mxu0 0.0
    %4929 = vmatprep.subr.mxu0 0.0
    %4930 = vmatpush1.msra.mxu0 0.0
    %4931 = vmatprep.subr.mxu0 0.0
    %4932 = vmatpush1.msra.mxu0 0.0
    %4933 = vmatprep.subr.mxu0 0.0
    %4934 = vmatpush1.msra.mxu0 0.0
    %4935 = vmatprep.subr.mxu0 0.0
    %4936 = vmatpush1.msra.mxu0 0.0
    %4937 = vmatprep.subr.mxu0 0.0
    %4938 = vmatpush1.msra.mxu0 0.0
    %4939 = vmatprep.subr.mxu0 0.0
    %4940 = vmatpush1.msra.mxu0 0.0
    %4941 = vmatprep.subr.mxu0 0.0
    %4942 = vmatpush1.msra.mxu0 %v1184
    %4943 = vmatprep.subr.mxu0 0.0
    %4944 = vmatpush1.msra.mxu0 %v1183
    %4945 = vmatprep.subr.mxu0 0.0
    %4946 = vmatpush2.msra.mxu0 0.0
    %4947 = vmatprep.subr.mxu0 0.0
    %4948 = vmatpush2.msra.mxu0 0.0
    %4949 = vmatprep.subr.mxu0 0.0
    %4950 = vmatpush2.msra.mxu0 0.0
    %4951 = vmatprep.subr.mxu0 0.0
    %4952 = vmatpush2.msra.mxu0 0.0
    %4953 = vmatprep.subr.mxu0 0.0
    %4954 = vmatpush2.msra.mxu0 0.0
    %4955 = vmatprep.subr.mxu0 0.0
    %4956 = vmatpush2.msra.mxu0 0.0
    %4957 = vmatprep.subr.mxu0 0.0
    %4958 = vmatpush2.msra.mxu0 0.0
    %4959 = vmatprep.subr.mxu0 0.0
    %4960 = vmatpush2.msra.mxu0 0.0
    %4961 = vmatprep.subr.mxu0 0.0
    %4962 = vmatpush2.msra.mxu0 0.0
    %4963 = vmatprep.subr.mxu0 0.0
    %4964 = vmatpush2.msra.mxu0 0.0
    %4965 = vmatprep.subr.mxu0 0.0
    %4966 = vmatpush2.msra.mxu0 0.0
    %4967 = vmatprep.subr.mxu0 0.0
    %4968 = vmatpush2.msra.mxu0 0.0
    %4969 = vmatprep.subr.mxu0 0.0
    %4970 = vmatpush2.msra.mxu0 0.0
    %4971 = vmatprep.subr.mxu0 0.0
    %4972 = vmatpush2.msra.mxu0 0.0
    %4973 = vmatprep.subr.mxu0 0.0
    %4974 = vmatpush2.msra.mxu0 0.0
    %4975 = vmatprep.subr.mxu0 0.0
    %4976 = vmatpush2.msra.mxu0 0.0
    %4977 = vmatprep.mubr.f32.mxu0 0.0
    %4978 = vmatmul.mubr.f32.gmra.mxu0 %v4911
    %v4979 = vpop.f32.mrf.mxu0
    %v4980 = vadd.f32 %v4908, %v4979
    %v4981 = vpop.f32.mrf.mxu0
    %4982 = vdwg.mxu0
    %4985 = vrot.lane.b32.xlu0 %v4504, 16
    %v4986 = vpop.permute.xlu0 %4985
    %4987 = vrot.lane.b32.xlu0 %v4509, 16
    %v4988 = vpop.permute.xlu0 %4987
    %v4991 = vsel %vm1396, %v3364, %v4986
    %v4992 = vsel %vm1396, %v3365, %v4988
    %v4994 = vlaneseq
    %v4995 = vshrl.u32 %v4994, 7
    %v4996 = vsub.s32 0, %v4995
    %v4997 = vrot.slane %v1083, %v4996
    %v4998 = vlaneseq
    %v4999 = vshrl.u32 %v4998, 7
    %v5000 = vsub.s32 1, %v4999
    %v5001 = vrot.slane %v1083, %v5000
    %v5005 = vsel %vm1524, %v4991, 0
    %v5008 = vsel %vm1524, %v4992, 0
    %5010 = vmatprep.subr.mxu0 0.0
    %5011 = vmatpush1.msra.mxu0 0.0
    %5012 = vmatprep.subr.mxu0 0.0
    %5013 = vmatpush1.msra.mxu0 0.0
    %5014 = vmatprep.subr.mxu0 0.0
    %5015 = vmatpush1.msra.mxu0 0.0
    %5016 = vmatprep.subr.mxu0 0.0
    %5017 = vmatpush1.msra.mxu0 0.0
    %5018 = vmatprep.subr.mxu0 0.0
    %5019 = vmatpush1.msra.mxu0 0.0
    %5020 = vmatprep.subr.mxu0 0.0
    %5021 = vmatpush1.msra.mxu0 0.0
    %5022 = vmatprep.subr.mxu0 0.0
    %5023 = vmatpush1.msra.mxu0 0.0
    %5024 = vmatprep.subr.mxu0 0.0
    %5025 = vmatpush1.msra.mxu0 0.0
    %5026 = vmatprep.subr.mxu0 0.0
    %5027 = vmatpush1.msra.mxu0 0.0
    %5028 = vmatprep.subr.mxu0 0.0
    %5029 = vmatpush1.msra.mxu0 0.0
    %5030 = vmatprep.subr.mxu0 0.0
    %5031 = vmatpush1.msra.mxu0 0.0
    %5032 = vmatprep.subr.mxu0 0.0
    %5033 = vmatpush1.msra.mxu0 0.0
    %5034 = vmatprep.subr.mxu0 0.0
    %5035 = vmatpush1.msra.mxu0 0.0
    %5036 = vmatprep.subr.mxu0 %v1082
    %5037 = vmatpush1.msra.mxu0 %v1081
    %5038 = vmatprep.subr.mxu0 %v1080
    %5039 = vmatpush1.msra.mxu0 %v1079
    %5040 = vmatprep.subr.mxu0 %v1078
    %5041 = vmatpush1.msra.mxu0 %v1077
    %5042 = vmatprep.subr.mxu0 0.0
    %5043 = vmatpush2.msra.mxu0 0.0
    %5044 = vmatprep.subr.mxu0 0.0
    %5045 = vmatpush2.msra.mxu0 0.0
    %5046 = vmatprep.subr.mxu0 0.0
    %5047 = vmatpush2.msra.mxu0 0.0
    %5048 = vmatprep.subr.mxu0 0.0
    %5049 = vmatpush2.msra.mxu0 0.0
    %5050 = vmatprep.subr.mxu0 0.0
    %5051 = vmatpush2.msra.mxu0 0.0
    %5052 = vmatprep.subr.mxu0 0.0
    %5053 = vmatpush2.msra.mxu0 0.0
    %5054 = vmatprep.subr.mxu0 0.0
    %5055 = vmatpush2.msra.mxu0 0.0
    %5056 = vmatprep.subr.mxu0 0.0
    %5057 = vmatpush2.msra.mxu0 0.0
    %5058 = vmatprep.subr.mxu0 0.0
    %5059 = vmatpush2.msra.mxu0 0.0
    %5060 = vmatprep.subr.mxu0 0.0
    %5061 = vmatpush2.msra.mxu0 0.0
    %5062 = vmatprep.subr.mxu0 0.0
    %5063 = vmatpush2.msra.mxu0 0.0
    %5064 = vmatprep.subr.mxu0 0.0
    %5065 = vmatpush2.msra.mxu0 0.0
    %5066 = vmatprep.subr.mxu0 0.0
    %5067 = vmatpush2.msra.mxu0 0.0
    %5068 = vmatprep.subr.mxu0 0.0
    %5069 = vmatpush2.msra.mxu0 0.0
    %5070 = vmatprep.subr.mxu0 0.0
    %5071 = vmatpush2.msra.mxu0 0.0
    %5072 = vmatprep.subr.mxu0 0.0
    %5073 = vmatpush2.msra.mxu0 0.0
    %5074 = vmatprep.mubr.f32.mxu0 0.0
    %5075 = vmatmul.mubr.f32.gmra.mxu0 %v5005
    %v5076 = vpop.f32.mrf.mxu0
    %v5077 = vadd.f32 %v4997, %v5076
    %v5078 = vpop.f32.mrf.mxu0
    %v5079 = vadd.f32 %v5001, %v5078
    %5080 = vmatprep.mubr.f32.mxu0 0.0
    %5081 = vmatmul.mubr.f32.gmra.mxu0 %v5008
    %v5082 = vpop.f32.mrf.mxu0
    %v5083 = vadd.f32 %v4997, %v5082
    %v5084 = vpop.f32.mrf.mxu0
    %v5085 = vadd.f32 %v5001, %v5084
    %5086 = vdwg.mxu0
    %v5087 = vmax.f32 %v5077, 0.0
    %v5088 = vmax.f32 %v5079, 0.0
    %v5089 = vmax.f32 %v5083, 0.0
    %v5090 = vmax.f32 %v5085, 0.0
    %v5092 = vlaneseq
    %v5093 = vshrl.u32 %v5092, 7
    %v5094 = vsub.s32 0, %v5093
    %v5095 = vrot.slane %v1116, %v5094
    %5097 = vmatprep.subr.mxu0 0.0
    %5098 = vmatpush1.msra.mxu0 %v1099
    %5099 = vmatprep.subr.mxu0 0.0
    %5100 = vmatpush1.msra.mxu0 %v1098
    %5101 = vmatprep.subr.mxu0 0.0
    %5102 = vmatpush1.msra.mxu0 %v1097
    %5103 = vmatprep.subr.mxu0 0.0
    %5104 = vmatpush1.msra.mxu0 %v1096
    %5105 = vmatprep.subr.mxu0 0.0
    %5106 = vmatpush1.msra.mxu0 %v1095
    %5107 = vmatprep.subr.mxu0 0.0
    %5108 = vmatpush1.msra.mxu0 %v1094
    %5109 = vmatprep.subr.mxu0 0.0
    %5110 = vmatpush1.msra.mxu0 %v1093
    %5111 = vmatprep.subr.mxu0 0.0
    %5112 = vmatpush1.msra.mxu0 %v1092
    %5113 = vmatprep.subr.mxu0 0.0
    %5114 = vmatpush1.msra.mxu0 %v1091
    %5115 = vmatprep.subr.mxu0 0.0
    %5116 = vmatpush1.msra.mxu0 %v1090
    %5117 = vmatprep.subr.mxu0 0.0
    %5118 = vmatpush1.msra.mxu0 %v1089
    %5119 = vmatprep.subr.mxu0 0.0
    %5120 = vmatpush1.msra.mxu0 %v1088
    %5121 = vmatprep.subr.mxu0 0.0
    %5122 = vmatpush1.msra.mxu0 %v1087
    %5123 = vmatprep.subr.mxu0 0.0
    %5124 = vmatpush1.msra.mxu0 %v1086
    %5125 = vmatprep.subr.mxu0 0.0
    %5126 = vmatpush1.msra.mxu0 %v1085
    %5127 = vmatprep.subr.mxu0 0.0
    %5128 = vmatpush1.msra.mxu0 %v1084
    %5129 = vmatprep.subr.mxu0 0.0
    %5130 = vmatpush2.msra.mxu0 %v1115
    %5131 = vmatprep.subr.mxu0 0.0
    %5132 = vmatpush2.msra.mxu0 %v1114
    %5133 = vmatprep.subr.mxu0 0.0
    %5134 = vmatpush2.msra.mxu0 %v1113
    %5135 = vmatprep.subr.mxu0 0.0
    %5136 = vmatpush2.msra.mxu0 %v1112
    %5137 = vmatprep.subr.mxu0 0.0
    %5138 = vmatpush2.msra.mxu0 %v1111
    %5139 = vmatprep.subr.mxu0 0.0
    %5140 = vmatpush2.msra.mxu0 %v1110
    %5141 = vmatprep.subr.mxu0 0.0
    %5142 = vmatpush2.msra.mxu0 %v1109
    %5143 = vmatprep.subr.mxu0 0.0
    %5144 = vmatpush2.msra.mxu0 %v1108
    %5145 = vmatprep.subr.mxu0 0.0
    %5146 = vmatpush2.msra.mxu0 %v1107
    %5147 = vmatprep.subr.mxu0 0.0
    %5148 = vmatpush2.msra.mxu0 %v1106
    %5149 = vmatprep.subr.mxu0 0.0
    %5150 = vmatpush2.msra.mxu0 %v1105
    %5151 = vmatprep.subr.mxu0 0.0
    %5152 = vmatpush2.msra.mxu0 %v1104
    %5153 = vmatprep.subr.mxu0 0.0
    %5154 = vmatpush2.msra.mxu0 %v1103
    %5155 = vmatprep.subr.mxu0 0.0
    %5156 = vmatpush2.msra.mxu0 %v1102
    %5157 = vmatprep.subr.mxu0 0.0
    %5158 = vmatpush2.msra.mxu0 %v1101
    %5159 = vmatprep.subr.mxu0 0.0
    %5160 = vmatpush2.msra.mxu0 %v1100
    %5161 = vmatprep.mubr.f32.mxu0 %v5088
    %5162 = vmatmul.mubr.f32.gmra.mxu0 %v5087
    %v5163 = vpop.f32.mrf.mxu0
    %v5164 = vadd.f32 %v5095, %v5163
    %v5165 = vpop.f32.mrf.mxu0
    %5166 = vmatprep.mubr.f32.mxu0 %v5090
    %5167 = vmatmul.mubr.f32.gmra.mxu0 %v5089
    %v5168 = vpop.f32.mrf.mxu0
    %v5169 = vadd.f32 %v5095, %v5168
    %v5170 = vpop.f32.mrf.mxu0
    %5171 = vdwg.mxu0
    %v5172 = vmax.f32 %v5164, 0.0
    %v5173 = vmax.f32 %v5169, 0.0
    %v5175 = vlaneseq
    %v5176 = vshrl.u32 %v5175, 7
    %v5177 = vsub.s32 0, %v5176
    %v5178 = vrot.slane %v1133, %v5177
    %5180 = vmatprep.subr.mxu0 0.0
    %5181 = vmatpush1.msra.mxu0 %v1132
    %5182 = vmatprep.subr.mxu0 0.0
    %5183 = vmatpush1.msra.mxu0 %v1131
    %5184 = vmatprep.subr.mxu0 0.0
    %5185 = vmatpush1.msra.mxu0 %v1130
    %5186 = vmatprep.subr.mxu0 0.0
    %5187 = vmatpush1.msra.mxu0 %v1129
    %5188 = vmatprep.subr.mxu0 0.0
    %5189 = vmatpush1.msra.mxu0 %v1128
    %5190 = vmatprep.subr.mxu0 0.0
    %5191 = vmatpush1.msra.mxu0 %v1127
    %5192 = vmatprep.subr.mxu0 0.0
    %5193 = vmatpush1.msra.mxu0 %v1126
    %5194 = vmatprep.subr.mxu0 0.0
    %5195 = vmatpush1.msra.mxu0 %v1125
    %5196 = vmatprep.subr.mxu0 0.0
    %5197 = vmatpush1.msra.mxu0 %v1124
    %5198 = vmatprep.subr.mxu0 0.0
    %5199 = vmatpush1.msra.mxu0 %v1123
    %5200 = vmatprep.subr.mxu0 0.0
    %5201 = vmatpush1.msra.mxu0 %v1122
    %5202 = vmatprep.subr.mxu0 0.0
    %5203 = vmatpush1.msra.mxu0 %v1121
    %5204 = vmatprep.subr.mxu0 0.0
    %5205 = vmatpush1.msra.mxu0 %v1120
    %5206 = vmatprep.subr.mxu0 0.0
    %5207 = vmatpush1.msra.mxu0 %v1119
    %5208 = vmatprep.subr.mxu0 0.0
    %5209 = vmatpush1.msra.mxu0 %v1118
    %5210 = vmatprep.subr.mxu0 0.0
    %5211 = vmatpush1.msra.mxu0 %v1117
    %5212 = vmatprep.subr.mxu0 0.0
    %5213 = vmatpush2.msra.mxu0 0.0
    %5214 = vmatprep.subr.mxu0 0.0
    %5215 = vmatpush2.msra.mxu0 0.0
    %5216 = vmatprep.subr.mxu0 0.0
    %5217 = vmatpush2.msra.mxu0 0.0
    %5218 = vmatprep.subr.mxu0 0.0
    %5219 = vmatpush2.msra.mxu0 0.0
    %5220 = vmatprep.subr.mxu0 0.0
    %5221 = vmatpush2.msra.mxu0 0.0
    %5222 = vmatprep.subr.mxu0 0.0
    %5223 = vmatpush2.msra.mxu0 0.0
    %5224 = vmatprep.subr.mxu0 0.0
    %5225 = vmatpush2.msra.mxu0 0.0
    %5226 = vmatprep.subr.mxu0 0.0
    %5227 = vmatpush2.msra.mxu0 0.0
    %5228 = vmatprep.subr.mxu0 0.0
    %5229 = vmatpush2.msra.mxu0 0.0
    %5230 = vmatprep.subr.mxu0 0.0
    %5231 = vmatpush2.msra.mxu0 0.0
    %5232 = vmatprep.subr.mxu0 0.0
    %5233 = vmatpush2.msra.mxu0 0.0
    %5234 = vmatprep.subr.mxu0 0.0
    %5235 = vmatpush2.msra.mxu0 0.0
    %5236 = vmatprep.subr.mxu0 0.0
    %5237 = vmatpush2.msra.mxu0 0.0
    %5238 = vmatprep.subr.mxu0 0.0
    %5239 = vmatpush2.msra.mxu0 0.0
    %5240 = vmatprep.subr.mxu0 0.0
    %5241 = vmatpush2.msra.mxu0 0.0
    %5242 = vmatprep.subr.mxu0 0.0
    %5243 = vmatpush2.msra.mxu0 0.0
    %5244 = vmatprep.mubr.f32.mxu0 0.0
    %5245 = vmatmul.mubr.f32.gmra.mxu0 %v5172
    %v5246 = vpop.f32.mrf.mxu0
    %v5247 = vadd.f32 %v5178, %v5246
    %v5248 = vpop.f32.mrf.mxu0
    %5249 = vmatprep.mubr.f32.mxu0 0.0
    %5250 = vmatmul.mubr.f32.gmra.mxu0 %v5173
    %v5251 = vpop.f32.mrf.mxu0
    %v5252 = vadd.f32 %v5178, %v5251
    %v5253 = vpop.f32.mrf.mxu0
    %5254 = vdwg.mxu0
    %v5255 = vmax.f32 %v5247, 0.0
    %v5256 = vmax.f32 %v5252, 0.0
    %v5258 = vlaneseq
    %v5259 = vshrl.u32 %v5258, 7
    %v5260 = vsub.s32 0, %v5259
    %v5261 = vrot.slane %v1142, %v5260
    %v5264 = vsel %vm1697, %v5255, 0
    %v5267 = vsel %vm1697, %v5256, 0
    %5269 = vmatprep.subr.mxu0 0.0
    %5270 = vmatpush1.msra.mxu0 0.0
    %5271 = vmatprep.subr.mxu0 0.0
    %5272 = vmatpush1.msra.mxu0 0.0
    %5273 = vmatprep.subr.mxu0 0.0
    %5274 = vmatpush1.msra.mxu0 0.0
    %5275 = vmatprep.subr.mxu0 0.0
    %5276 = vmatpush1.msra.mxu0 0.0
    %5277 = vmatprep.subr.mxu0 0.0
    %5278 = vmatpush1.msra.mxu0 0.0
    %5279 = vmatprep.subr.mxu0 0.0
    %5280 = vmatpush1.msra.mxu0 0.0
    %5281 = vmatprep.subr.mxu0 0.0
    %5282 = vmatpush1.msra.mxu0 0.0
    %5283 = vmatprep.subr.mxu0 0.0
    %5284 = vmatpush1.msra.mxu0 0.0
    %5285 = vmatprep.subr.mxu0 0.0
    %5286 = vmatpush1.msra.mxu0 %v1141
    %5287 = vmatprep.subr.mxu0 0.0
    %5288 = vmatpush1.msra.mxu0 %v1140
    %5289 = vmatprep.subr.mxu0 0.0
    %5290 = vmatpush1.msra.mxu0 %v1139
    %5291 = vmatprep.subr.mxu0 0.0
    %5292 = vmatpush1.msra.mxu0 %v1138
    %5293 = vmatprep.subr.mxu0 0.0
    %5294 = vmatpush1.msra.mxu0 %v1137
    %5295 = vmatprep.subr.mxu0 0.0
    %5296 = vmatpush1.msra.mxu0 %v1136
    %5297 = vmatprep.subr.mxu0 0.0
    %5298 = vmatpush1.msra.mxu0 %v1135
    %5299 = vmatprep.subr.mxu0 0.0
    %5300 = vmatpush1.msra.mxu0 %v1134
    %5301 = vmatprep.subr.mxu0 0.0
    %5302 = vmatpush2.msra.mxu0 0.0
    %5303 = vmatprep.subr.mxu0 0.0
    %5304 = vmatpush2.msra.mxu0 0.0
    %5305 = vmatprep.subr.mxu0 0.0
    %5306 = vmatpush2.msra.mxu0 0.0
    %5307 = vmatprep.subr.mxu0 0.0
    %5308 = vmatpush2.msra.mxu0 0.0
    %5309 = vmatprep.subr.mxu0 0.0
    %5310 = vmatpush2.msra.mxu0 0.0
    %5311 = vmatprep.subr.mxu0 0.0
    %5312 = vmatpush2.msra.mxu0 0.0
    %5313 = vmatprep.subr.mxu0 0.0
    %5314 = vmatpush2.msra.mxu0 0.0
    %5315 = vmatprep.subr.mxu0 0.0
    %5316 = vmatpush2.msra.mxu0 0.0
    %5317 = vmatprep.subr.mxu0 0.0
    %5318 = vmatpush2.msra.mxu0 0.0
    %5319 = vmatprep.subr.mxu0 0.0
    %5320 = vmatpush2.msra.mxu0 0.0
    %5321 = vmatprep.subr.mxu0 0.0
    %5322 = vmatpush2.msra.mxu0 0.0
    %5323 = vmatprep.subr.mxu0 0.0
    %5324 = vmatpush2.msra.mxu0 0.0
    %5325 = vmatprep.subr.mxu0 0.0
    %5326 = vmatpush2.msra.mxu0 0.0
    %5327 = vmatprep.subr.mxu0 0.0
    %5328 = vmatpush2.msra.mxu0 0.0
    %5329 = vmatprep.subr.mxu0 0.0
    %5330 = vmatpush2.msra.mxu0 0.0
    %5331 = vmatprep.subr.mxu0 0.0
    %5332 = vmatpush2.msra.mxu0 0.0
    %5333 = vmatprep.mubr.f32.mxu0 0.0
    %5334 = vmatmul.mubr.f32.gmra.mxu0 %v5264
    %v5335 = vpop.f32.mrf.mxu0
    %v5336 = vadd.f32 %v5261, %v5335
    %v5337 = vpop.f32.mrf.mxu0
    %5338 = vmatprep.mubr.f32.mxu0 0.0
    %5339 = vmatmul.mubr.f32.gmra.mxu0 %v5267
    %v5340 = vpop.f32.mrf.mxu0
    %v5341 = vadd.f32 %v5261, %v5340
    %v5342 = vpop.f32.mrf.mxu0
    %5343 = vdwg.mxu0
    %v5344 = vmax.f32 %v5336, 0.0
    %v5345 = vmax.f32 %v5341, 0.0
    %v5347 = vlaneseq
    %v5348 = vshrl.u32 %v5347, 7
    %v5349 = vsub.s32 0, %v5348
    %v5350 = vrot.slane %v1147, %v5349
    %v5353 = vsel %vm1787, %v5344, 0
    %v5356 = vsel %vm1787, %v5345, 0
    %5358 = vmatprep.subr.mxu0 0.0
    %5359 = vmatpush1.msra.mxu0 0.0
    %5360 = vmatprep.subr.mxu0 0.0
    %5361 = vmatpush1.msra.mxu0 0.0
    %5362 = vmatprep.subr.mxu0 0.0
    %5363 = vmatpush1.msra.mxu0 0.0
    %5364 = vmatprep.subr.mxu0 0.0
    %5365 = vmatpush1.msra.mxu0 0.0
    %5366 = vmatprep.subr.mxu0 0.0
    %5367 = vmatpush1.msra.mxu0 0.0
    %5368 = vmatprep.subr.mxu0 0.0
    %5369 = vmatpush1.msra.mxu0 0.0
    %5370 = vmatprep.subr.mxu0 0.0
    %5371 = vmatpush1.msra.mxu0 0.0
    %5372 = vmatprep.subr.mxu0 0.0
    %5373 = vmatpush1.msra.mxu0 0.0
    %5374 = vmatprep.subr.mxu0 0.0
    %5375 = vmatpush1.msra.mxu0 0.0
    %5376 = vmatprep.subr.mxu0 0.0
    %5377 = vmatpush1.msra.mxu0 0.0
    %5378 = vmatprep.subr.mxu0 0.0
    %5379 = vmatpush1.msra.mxu0 0.0
    %5380 = vmatprep.subr.mxu0 0.0
    %5381 = vmatpush1.msra.mxu0 0.0
    %5382 = vmatprep.subr.mxu0 0.0
    %5383 = vmatpush1.msra.mxu0 %v1146
    %5384 = vmatprep.subr.mxu0 0.0
    %5385 = vmatpush1.msra.mxu0 %v1145
    %5386 = vmatprep.subr.mxu0 0.0
    %5387 = vmatpush1.msra.mxu0 %v1144
    %5388 = vmatprep.subr.mxu0 0.0
    %5389 = vmatpush1.msra.mxu0 %v1143
    %5390 = vmatprep.subr.mxu0 0.0
    %5391 = vmatpush2.msra.mxu0 0.0
    %5392 = vmatprep.subr.mxu0 0.0
    %5393 = vmatpush2.msra.mxu0 0.0
    %5394 = vmatprep.subr.mxu0 0.0
    %5395 = vmatpush2.msra.mxu0 0.0
    %5396 = vmatprep.subr.mxu0 0.0
    %5397 = vmatpush2.msra.mxu0 0.0
    %5398 = vmatprep.subr.mxu0 0.0
    %5399 = vmatpush2.msra.mxu0 0.0
    %5400 = vmatprep.subr.mxu0 0.0
    %5401 = vmatpush2.msra.mxu0 0.0
    %5402 = vmatprep.subr.mxu0 0.0
    %5403 = vmatpush2.msra.mxu0 0.0
    %5404 = vmatprep.subr.mxu0 0.0
    %5405 = vmatpush2.msra.mxu0 0.0
    %5406 = vmatprep.subr.mxu0 0.0
    %5407 = vmatpush2.msra.mxu0 0.0
    %5408 = vmatprep.subr.mxu0 0.0
    %5409 = vmatpush2.msra.mxu0 0.0
    %5410 = vmatprep.subr.mxu0 0.0
    %5411 = vmatpush2.msra.mxu0 0.0
    %5412 = vmatprep.subr.mxu0 0.0
    %5413 = vmatpush2.msra.mxu0 0.0
    %5414 = vmatprep.subr.mxu0 0.0
    %5415 = vmatpush2.msra.mxu0 0.0
    %5416 = vmatprep.subr.mxu0 0.0
    %5417 = vmatpush2.msra.mxu0 0.0
    %5418 = vmatprep.subr.mxu0 0.0
    %5419 = vmatpush2.msra.mxu0 0.0
    %5420 = vmatprep.subr.mxu0 0.0
    %5421 = vmatpush2.msra.mxu0 0.0
    %5422 = vmatprep.mubr.f32.mxu0 0.0
    %5423 = vmatmul.mubr.f32.gmra.mxu0 %v5353
    %v5424 = vpop.f32.mrf.mxu0
    %v5425 = vadd.f32 %v5350, %v5424
    %v5426 = vpop.f32.mrf.mxu0
    %5427 = vmatprep.mubr.f32.mxu0 0.0
    %5428 = vmatmul.mubr.f32.gmra.mxu0 %v5356
    %v5429 = vpop.f32.mrf.mxu0
    %v5430 = vadd.f32 %v5350, %v5429
    %v5431 = vpop.f32.mrf.mxu0
    %5432 = vdwg.mxu0
    %5433 = vst.msk [vmem:[#allocation61] sm:$0xff] %vm1233, %v4980
    %5434 = vst.msk [vmem:[%s173] sm:$0xff] %vm1233, %v5425
    %5435 = vst.msk [vmem:[%s173 + $0x8] sm:$0xff] %vm1233, %v5430
    // Predicated region
    $region494: #{double_gn_forward.1} parent=1 // pred_check
      _
    $region495: #{double_gn_forward.1} parent=1 // pred_check_branch
      %5437 = sbr.rel (0) target = $region497
    $region496: #{double_gn_forward.1} parent=1 // pred_region
      %s5439 = ssub.s32 128, 128
      %5440 = vsyncadd [#allocation4], %s5439
      %s5442 = sshll.u32 [#allocation61], 4
      %s5443 = int_to_ptr.vmem [resolvable:$true] %s5442
      %5445 = dma.vmem_to_hbm [thread:$0]  %s5443, 128, %s171, [#allocation4]
    $region497: #{double_gn_forward.1} parent=1 // pred_fallthru
      _
    // Predicated region
    $region498: #{double_gn_forward.1} parent=1 // pred_check
      _
    $region499: #{double_gn_forward.1} parent=1 // pred_check_branch
      %5447 = sbr.rel (0) target = $region501
    $region500: #{double_gn_forward.1} parent=1 // pred_region
      _
    $region501: #{double_gn_forward.1} parent=1 // pred_fallthru
      _
    // Predicated region
    $region502: #{double_gn_forward.1} parent=1 // pred_check
      _
    $region503: #{double_gn_forward.1} parent=1 // pred_check_branch
      %5449 = sbr.rel (0) target = $region505
    $region504: #{double_gn_forward.1} parent=1 // pred_region
      %5450 = dma.done [#allocation4], 128
    $region505: #{double_gn_forward.1} parent=1 // pred_fallthru
      _
    // Predicated region
    $region506: #{double_gn_forward.1} parent=1 // pred_check
      _
    $region507: #{double_gn_forward.1} parent=1 // pred_check_branch
      %5452 = sbr.rel (0) target = $region509
    $region508: #{double_gn_forward.1} parent=1 // pred_region
      _
    $region509: #{double_gn_forward.1} parent=1 // pred_fallthru
      _
    %5453 = vsyncpa [#allocation3], 1
    %5454 = vsyncpa [#allocation6], 1
    %5455 = vsyncpa [#allocation9], 1
    %5456 = vsyncpa [#allocation12], 1
    %5457 = vsyncpa [#allocation15], 1
    %5458 = vsyncpa [#allocation18], 1
    %5459 = vsyncpa [#allocation21], 1
    %5460 = vsyncpa [#allocation24], 1
    %5461 = vsyncpa [#allocation27], 1
    %5462 = vsyncpa [#allocation30], 1
    %5463 = vsyncpa [#allocation33], 1
    %5464 = vsyncpa [#allocation36], 1
    %5465 = vsyncpa [#allocation39], 1
    %5466 = vsyncpa [#allocation42], 1
    %5467 = vsyncpa [#allocation45], 1
    %5468 = vsyncpa [#allocation48], 1
    %5469 = vsyncpa [#allocation51], 1
    %5470 = vsyncpa [#allocation54], 1
    %5471 = vsyncpa [#allocation57], 1
    %5472 = vsyncpa [#allocation60], 1
    %5473 = vsyncpa [#allocation4], 1

</llo_original>
